<compile_context>
chip_gen: v7x
topology: tpu7x:2x2x1
jax: 0.10.0
libtpu: 0.0.40
codegen_flags: <defaults>
</compile_context>

<pallas_src>
import math
from functools import partial

import jax
import jax.numpy as jnp
from jax.experimental import pallas as pl
from jax.experimental.pallas import tpu as pltpu


def _round_up(n, m):
    return ((n + m - 1) // m) * m


# ----------------------------------------------------------------------------
# glue: im2col / F.unfold equivalent (pure index shuffling, stays in plain JAX)
# TODO(synk): F.unfold is pure data movement; kept as JAX glue.  For large
#             inputs, gather the KxK windows in-kernel via pl.ANY + manual DMA.
# ----------------------------------------------------------------------------
def unfold(x, K, stride, pad):
    if pad > 0:
        x = jnp.pad(x, ((0, 0), (0, 0), (pad, pad), (pad, pad)))
    b, c, h, w = x.shape
    oh = (h - K) // stride + 1
    ow = (w - K) // stride + 1
    cols = []
    for ki in range(K):
        for kj in range(K):
            cols.append(
                x[:, :, ki:ki + stride * (oh - 1) + 1:stride,
                        kj:kj + stride * (ow - 1) + 1:stride])
    patches = jnp.stack(cols, axis=2)                 # (b, c, kk, oh, ow)
    return patches.reshape(b, c, K * K, oh * ow), oh, ow


# ----------------------------------------------------------------------------
# kernel A: fused (pose transform ∘ k/v projection) + PMA routing core,
#           tiled over BL = batch*spatial rows ("parallel" grid axis).
#   pose_ref : (kkA, tl, psize)       per-tile pose, grouped by kernel position i
#   wpkv_ref : (kkA, psize, 2*BD)     Wp[i] @ [Wk_bd | Wv_bd]; k-half absorbs
#                                     sqrt(0.5)/sigma column scaling
#   bkv_ref  : (1, 2*BD)              k-half = (bk - mu)*sqrt(0.5)/sigma, v-half = bv
#   mu_ref   : (1, BD)                unscaled mu (for the output)
#   lbias_ref: (1, BD)                (sum_head(c1) + logp) / sqrt(dim), per lane
#   s_ref    : (BD, BD)               block-diag per-head selector / sqrt(dim)
#   outs     : o_ref (tl, BD), stats_ref (1, 2, BD) masked BN0 partials
# ----------------------------------------------------------------------------
def _pose_route_kernel(pose_ref, wpkv_ref, bkv_ref, mu_ref, lbias_ref, s_ref,
                       o_ref, stats_ref, vp_ref, ll_ref,
                       *, kkA, tl, bd, bl_valid, needs_mask):
    bkv = bkv_ref[...]
    lbias = lbias_ref[...]
    s_mat = s_ref[...]

    # --- folded pose + k/v projection, k consumed per kernel position i ---
    # TODO(synk): switch to a dynamic pl.loop for very large kkA (e.g. A=32 -> 288).
    for i in range(kkA):
        kv = jnp.dot(pose_ref[i], wpkv_ref[i],
                     preferred_element_type=jnp.float32) + bkv       # (tl, 2*bd)
        dsc = kv[:, :bd]                   # (k - mu) * sqrt(0.5)/sigma (pre-folded)
        vp_ref[i] = kv[:, bd:]
        q = (dsc * dsc).astype(s_ref.dtype)
        ll_ref[i] = lbias - jnp.dot(q, s_mat, preferred_element_type=jnp.float32)

    # --- softmax over kernel positions (leading axis -> cheap cross-vreg reduce) ---
    ll = ll_ref[...]                                                 # (kkA, tl, bd)
    m = jnp.max(ll, axis=0, keepdims=True)
    e = jnp.exp(ll - m)
    ssum = jnp.sum(e, axis=0, keepdims=True)
    aw = e / ssum        # exact divide: approx-rcp error gets amplified by BN 1/std
    o_pre = mu_ref[...] + jnp.sum(aw * vp_ref[...], axis=0)          # (tl, bd)
    o_ref[...] = o_pre

    # --- masked partial sums for BatchNorm-0 (padded rows excluded) ---
    if needs_mask:
        rows = jax.lax.broadcasted_iota(jnp.int32, (tl, 1), 0) + pl.program_id(0) * tl
        om = o_pre * (rows < bl_valid).astype(jnp.float32)
    else:
        om = o_pre
    stats_ref[0] = jnp.concatenate(
        [jnp.sum(om, axis=0, keepdims=True),
         jnp.sum(om * o_pre, axis=0, keepdims=True)], axis=0)        # (2, bd)


# ----------------------------------------------------------------------------
# kernel B: apply BN0 -> O + relu(fc_o(O)) (block-diag fc_o, lane-dense) ->
#           masked partial sums for BN1.
# ----------------------------------------------------------------------------
def _bn_fc_kernel(x_ref, sc_ref, sh_ref, wo_ref, bo_ref, y_ref, stats_ref,
                  *, tl, bl_valid, needs_mask):
    x = x_ref[...] * sc_ref[...] + sh_ref[...]                       # BN0 applied
    h = jnp.maximum(
        jnp.dot(x.astype(wo_ref.dtype), wo_ref[...],
                preferred_element_type=jnp.float32) + bo_ref[...], 0.0)
    y = x + h
    y_ref[...] = y

    if needs_mask:
        rows = jax.lax.broadcasted_iota(jnp.int32, (tl, 1), 0) + pl.program_id(0) * tl
        ym = y * (rows < bl_valid).astype(jnp.float32)
    else:
        ym = y
    stats_ref[0] = jnp.concatenate(
        [jnp.sum(ym, axis=0, keepdims=True),
         jnp.sum(ym * y, axis=0, keepdims=True)], axis=0)


# ----------------------------------------------------------------------------
# full ConvCaps forward (Pallas path)
# ----------------------------------------------------------------------------
def conv_caps_forward(x, params, *, A, B, K, P, stride, pad, num_heads,
                      block_rows=None, eps=1e-5, compute_dtype=jnp.float32):
    b = x.shape[0]
    psize, kk, kkA = P * P, K * K, K * K * A
    D, H = psize, num_heads
    ds_ = D // H
    BD = B * D

    patches, oh, ow = unfold(x, K, stride, pad)                 # (b, A*psize, kk, l)
    l = patches.shape[-1]
    BL = b * l

    # pose in (kkA, BL, psize) layout: i = kk_idx*A + a, lane = p*P + q
    pose = patches.reshape(b, A, psize, kk, l)
    poseT = jnp.transpose(pose, (3, 1, 0, 4, 2)).reshape(kkA, BL, psize)

    # ---- row-tile size: VMEM-budget aware (two (kkA, tl, BD) f32 scratches are
    #      the dominant residents); keep >= 2 grid steps for v7x megacore ----
    if block_rows is None:
        tl_cap = max(8, ((16 * 2 ** 20) // (2 * kkA * BD * 4)) // 8 * 8)
        tl = min(512, tl_cap, _round_up(BL, 8))
        tl = min(tl, max(8, _round_up(-(-BL // 2), 8)))
    else:
        tl = block_rows
    assert tl % 8 == 0
    BLp = _round_up(BL, tl)
    nt = BLp // tl
    if BLp > BL:
        poseT = jnp.pad(poseT, ((0, 0), (0, BLp - BL), (0, 0)))
    needs_mask = BLp > BL

    # ---- one-time parameter prep (all per-step invariants hoisted here) ----
    f32 = jnp.float32
    W = params['W'].astype(f32)                                 # (kkA, B, P, P)
    eyeP = jnp.eye(P, dtype=f32)
    eyeB = jnp.eye(B, dtype=f32)
    # Wp[i, p*P+q, j*psize + p'*P + r] = W[i, j, q, r] * delta(p, p')
    Wp = jnp.einsum('pk,ijqr->ipqjkr', eyeP, W).reshape(kkA, psize, BD)
    Wk_bd = jnp.einsum('jk,de->jdke', eyeB, params['Wk']).reshape(BD, BD)
    Wv_bd = jnp.einsum('jk,de->jdke', eyeB, params['Wv']).reshape(BD, BD)
    Wo_bd = jnp.einsum('jk,de->jdke', eyeB, params['Wo']).reshape(BD, BD)
    bo_l = jnp.tile(params['bo'], B).reshape(1, BD)

    sigma = jax.nn.softplus(params['S'])                        # (B, D)
    mu_flat = params['M'].reshape(BD)
    sqrtc2 = (math.sqrt(0.5) / sigma).reshape(BD)               # sqrt(0.5)/sigma
    c1 = (-0.5 * math.log(2.0 * math.pi) - jnp.log(sigma)).reshape(BD)
    logp = jax.nn.log_softmax(params['p'])                      # (B,)
    inv_sqrt_dim = 1.0 / math.sqrt(D)

    # fused (pose-transform @ [k|v]); k-half absorbs sqrt(c2) column scaling
    Wpk = (Wp @ Wk_bd) * sqrtc2[None, None, :]
    Wpv = Wp @ Wv_bd
    Wpkv = jnp.concatenate([Wpk, Wpv], axis=-1)                 # (kkA, psize, 2*BD)
    bk_s = (jnp.tile(params['bk'], B) - mu_flat) * sqrtc2
    bkv = jnp.concatenate([bk_s, jnp.tile(params['bv'], B)]).reshape(1, 2 * BD)

    # single lane-dense head selector (reduce + broadcast fused), pre-scaled
    head_same = (jnp.arange(D)[:, None] // ds_ ==
                 jnp.arange(D)[None, :] // ds_).astype(f32)     # (D, D)
    S_bd = jnp.einsum('jk,de->jdke', eyeB, head_same).reshape(BD, BD)
    S_scaled = S_bd * inv_sqrt_dim
    lbias = (((c1 @ S_bd) + jnp.repeat(logp, D)) * inv_sqrt_dim).reshape(1, BD)
    mu_l = mu_flat.reshape(1, BD)

    # optional low-precision matmul operands (f32 accumulate) — demo keeps f32
    poseT = poseT.astype(compute_dtype)
    Wpkv = Wpkv.astype(compute_dtype)
    S_scaled = S_scaled.astype(compute_dtype)
    Wo_bd = Wo_bd.astype(compute_dtype)

    vec_spec = pl.BlockSpec((1, BD), lambda t: (0, 0))
    row_spec = pl.BlockSpec((tl, BD), lambda t: (t, 0))
    stat_spec = pl.BlockSpec((1, 2, BD), lambda t: (t, 0, 0))
    par = pltpu.CompilerParams(dimension_semantics=("parallel",),
                               vmem_limit_bytes=64 * 1024 * 1024)

    # ---- kernel A: fused pose transform + routing ----
    kern_a = partial(_pose_route_kernel, kkA=kkA, tl=tl, bd=BD,
                     bl_valid=BL, needs_mask=needs_mask)
    o_pre, stats0 = pl.pallas_call(
        kern_a,
        grid=(nt,),
        in_specs=[
            pl.BlockSpec((kkA, tl, psize), lambda t: (0, t, 0)),
            pl.BlockSpec((kkA, psize, 2 * BD), lambda t: (0, 0, 0)),
            pl.BlockSpec((1, 2 * BD), lambda t: (0, 0)),
            vec_spec, vec_spec,
            pl.BlockSpec((BD, BD), lambda t: (0, 0)),
        ],
        out_specs=[row_spec, stat_spec],
        out_shape=[jax.ShapeDtypeStruct((BLp, BD), jnp.float32),
                   jax.ShapeDtypeStruct((nt, 2, BD), jnp.float32)],
        scratch_shapes=[pltpu.VMEM((kkA, tl, BD), jnp.float32),
                        pltpu.VMEM((kkA, tl, BD), jnp.float32)],
        compiler_params=par,
    )(poseT, Wpkv, bkv, mu_l, lbias, S_scaled)

    # ---- BN0 global stats from masked per-tile partials (tiny wrapper reduce) ----
    s0 = jnp.sum(stats0, axis=0)
    mean0 = s0[0] / BL
    var0 = s0[1] / BL - mean0 * mean0
    scale0 = params['g0'] / jnp.sqrt(var0 + eps)
    shift0 = params['b0'] - mean0 * scale0

    # ---- kernel B: BN0 apply -> fc_o + relu + residual -> BN1 partial stats ----
    kern_b = partial(_bn_fc_kernel, tl=tl, bl_valid=BL, needs_mask=needs_mask)
    y, stats1 = pl.pallas_call(
        kern_b,
        grid=(nt,),
        in_specs=[row_spec, vec_spec, vec_spec,
                  pl.BlockSpec((BD, BD), lambda t: (0, 0)), vec_spec],
        out_specs=[row_spec, stat_spec],
        out_shape=[jax.ShapeDtypeStruct((BLp, BD), jnp.float32),
                   jax.ShapeDtypeStruct((nt, 2, BD), jnp.float32)],
        compiler_params=par,
    )(o_pre, scale0.reshape(1, BD), shift0.reshape(1, BD), Wo_bd, bo_l)

    # ---- BN1 affine in plain JAX (fuses with the output reshape/transpose) ----
    s1 = jnp.sum(stats1, axis=0)
    mean1 = s1[0] / BL
    var1 = s1[1] / BL - mean1 * mean1
    scale1 = params['g1'] / jnp.sqrt(var1 + eps)
    shift1 = params['b1'] - mean1 * scale1

    o = y[:BL] * scale1[None, :] + shift1[None, :]
    o = o.reshape(b, l, BD).reshape(b, oh, ow, BD)
    return jnp.transpose(o, (0, 3, 1, 2))                       # NCHW


# ----------------------------------------------------------------------------
# pure-JAX reference (same math, no Pallas) for the correctness check
# ----------------------------------------------------------------------------
def reference_forward(x, params, *, A, B, K, P, stride, pad, num_heads, eps=1e-5):
    b = x.shape[0]
    psize, kk, kkA = P * P, K * K, K * K * A
    patches, oh, ow = unfold(x, K, stride, pad)
    l = patches.shape[-1]
    BL = b * l
    pose = patches.reshape(b, A, psize, kk, l)
    pose = jnp.transpose(pose, (0, 4, 3, 1, 2)).reshape(BL, kkA, P, P)
    v = jnp.einsum('nipq,ijqr->nijpr', pose, params['W']).reshape(BL, kkA, B, psize)

    D = psize
    ds = D // num_heads
    Kf = jnp.einsum('nibd,de->nibe', v, params['Wk']) + params['bk']
    Vf = jnp.einsum('nibd,de->nibe', v, params['Wv']) + params['bv']
    sigma = jax.nn.softplus(params['S'])
    logp = jax.nn.log_softmax(params['p'])
    M = params['M']
    outs = []
    for h in range(num_heads):
        sl = slice(h * ds, (h + 1) * ds)
        Kh, Vh = Kf[..., sl], Vf[..., sl]
        mu_h, sg_h = M[:, sl], sigma[:, sl]
        diff = Kh - mu_h[None, None]
        ll = (-0.5 * math.log(2 * math.pi) - jnp.log(sg_h)[None, None]
              - 0.5 * diff ** 2 / (sg_h ** 2)[None, None]).sum(-1)      # (BL, kkA, B)
        ll = ll + logp[None, None, :]
        Aw = jax.nn.softmax(ll / math.sqrt(D), axis=1)
        Oh = mu_h[None] + jnp.sum(Aw[..., None] * Vh, axis=1)           # (BL, B, ds)
        outs.append(Oh)
    O = jnp.concatenate(outs, axis=-1)                                  # (BL, B, D)

    x1 = O.reshape(BL, B * D)
    mean = x1.mean(0, keepdims=True); var = ((x1 - mean) ** 2).mean(0, keepdims=True)
    x1 = (x1 - mean) / jnp.sqrt(var + eps) * params['g0'] + params['b0']
    xr = x1.reshape(BL * B, D)
    xr = xr + jnp.maximum(xr @ params['Wo'] + params['bo'], 0.0)
    x1 = xr.reshape(BL, B * D)
    mean = x1.mean(0, keepdims=True); var = ((x1 - mean) ** 2).mean(0, keepdims=True)
    x1 = (x1 - mean) / jnp.sqrt(var + eps) * params['g1'] + params['b1']
    o = x1.reshape(b, l, B * psize).reshape(b, oh, ow, B * psize)
    return jnp.transpose(o, (0, 3, 1, 2))


# ----------------------------------------------------------------------------
if __name__ == "__main__":
    # small config: A=4, B=8, K=3, P=4, stride=2, pad=0, num_heads=2
    A_, B_, K_, P_, stride, pad, num_heads = 4, 8, 3, 4, 2, 0, 2
    b, h, w = 2, 8, 8
    psize = P_ * P_
    kkA = K_ * K_ * A_

    key = jax.random.PRNGKey(0)
    ks = jax.random.split(key, 11)
    params = dict(
        W=0.2 * jax.random.normal(ks[0], (kkA, B_, P_, P_), jnp.float32),
        M=0.5 * jax.random.normal(ks[1], (B_, psize), jnp.float32),
        S=0.5 * jax.random.normal(ks[2], (B_, psize), jnp.float32),
        p=0.5 * jax.random.normal(ks[3], (B_,), jnp.float32),
        Wk=0.25 * jax.random.normal(ks[4], (psize, psize), jnp.float32),
        bk=0.1 * jax.random.normal(ks[5], (psize,), jnp.float32),
        Wv=0.25 * jax.random.normal(ks[6], (psize, psize), jnp.float32),
        bv=0.1 * jax.random.normal(ks[7], (psize,), jnp.float32),
        Wo=0.25 * jax.random.normal(ks[8], (psize, psize), jnp.float32),
        bo=0.1 * jax.random.normal(ks[9], (psize,), jnp.float32),
        g0=jnp.ones((B_ * psize,), jnp.float32),
        b0=jnp.zeros((B_ * psize,), jnp.float32),
        g1=jnp.ones((B_ * psize,), jnp.float32),
        b1=jnp.zeros((B_ * psize,), jnp.float32),
    )

    x = jax.random.normal(ks[10], (b, A_ * psize, h, w), jnp.float32)

    # block_rows=8 so the demo exercises the multi-tile (padded + masked-stats) path
    out = conv_caps_forward(x, params, A=A_, B=B_, K=K_, P=P_,
                            stride=stride, pad=pad, num_heads=num_heads,
                            block_rows=8)
    out = jax.block_until_ready(out)

    ref = reference_forward(x, params, A=A_, B=B_, K=K_, P=P_,
                            stride=stride, pad=pad, num_heads=num_heads)
    ref = jax.block_until_ready(ref)

    assert out.shape == (b, B_ * psize, 3, 3), out.shape
    err = float(jnp.max(jnp.abs(out - ref)))
    assert jnp.allclose(out, ref, rtol=1e-2, atol=1e-2), err

    print("KERNEL_OK")
</pallas_src>

<mosaic_0001>
module attributes {stable_mosaic.version = 11 : i64} {
  func.func @_pose_route_kernel(%arg0: i32, %arg1: memref<36x8x16xf32, #tpu.memory_space<vmem>>, %arg2: memref<36x16x256xf32, #tpu.memory_space<vmem>>, %arg3: memref<1x256xf32, #tpu.memory_space<vmem>>, %arg4: memref<1x128xf32, #tpu.memory_space<vmem>>, %arg5: memref<1x128xf32, #tpu.memory_space<vmem>>, %arg6: memref<128x128xf32, #tpu.memory_space<vmem>>, %arg7: memref<8x128xf32, #tpu.memory_space<vmem>>, %arg8: memref<1x2x128xf32, #tpu.memory_space<vmem>>, %arg9: memref<36x8x128xf32, #tpu.memory_space<vmem>>, %arg10: memref<36x8x128xf32, #tpu.memory_space<vmem>>) attributes {dimension_semantics = [#tpu.dimension_semantics<parallel>], iteration_bounds = array<i64: 3>, scalar_prefetch = 0 : i64, scratch_operands = 2 : i64, tpu.core_type = #tpu.core_type<tc>, window_params = [{transform_indices = @transform_0, window_bounds = array<i64: 36, 8, 16>}, {pipeline_mode = #tpu.pipeline_mode<synchronous>, transform_indices = @transform_1, window_bounds = array<i64: 36, 16, 256>}, {pipeline_mode = #tpu.pipeline_mode<synchronous>, transform_indices = @transform_2, window_bounds = array<i64: 1, 256>}, {pipeline_mode = #tpu.pipeline_mode<synchronous>, transform_indices = @transform_3, window_bounds = array<i64: 1, 128>}, {pipeline_mode = #tpu.pipeline_mode<synchronous>, transform_indices = @transform_4, window_bounds = array<i64: 1, 128>}, {pipeline_mode = #tpu.pipeline_mode<synchronous>, transform_indices = @transform_5, window_bounds = array<i64: 128, 128>}, {transform_indices = @transform_6, window_bounds = array<i64: 8, 128>}, {transform_indices = @transform_7, window_bounds = array<i64: 1, 2, 128>}]} {
    %c0 = arith.constant 0 : index
    %c0_0 = arith.constant 0 : index
    %0 = vector.load %arg3[%c0, %c0_0] : memref<1x256xf32, #tpu.memory_space<vmem>>, vector<1x256xf32>
    %c0_1 = arith.constant 0 : index
    %c0_2 = arith.constant 0 : index
    %1 = vector.load %arg5[%c0_1, %c0_2] : memref<1x128xf32, #tpu.memory_space<vmem>>, vector<1x128xf32>
    %c0_3 = arith.constant 0 : index
    %c0_4 = arith.constant 0 : index
    %2 = vector.load %arg6[%c0_3, %c0_4] : memref<128x128xf32, #tpu.memory_space<vmem>>, vector<128x128xf32>
    %c0_5 = arith.constant 0 : index
    %c0_6 = arith.constant 0 : index
    %c0_7 = arith.constant 0 : index
    %3 = vector.load %arg1[%c0_5, %c0_6, %c0_7] : memref<36x8x16xf32, #tpu.memory_space<vmem>>, vector<1x8x16xf32>
    %4 = vector.shape_cast %3 : vector<1x8x16xf32> to vector<8x16xf32>
    %c0_8 = arith.constant 0 : index
    %c0_9 = arith.constant 0 : index
    %c0_10 = arith.constant 0 : index
    %5 = vector.load %arg2[%c0_8, %c0_9, %c0_10] : memref<36x16x256xf32, #tpu.memory_space<vmem>>, vector<1x16x256xf32>
    %6 = vector.shape_cast %5 : vector<1x16x256xf32> to vector<16x256xf32>
    %cst = arith.constant dense<0.000000e+00> : vector<8x256xf32>
    %7 = tpu.matmul %4, %6, %cst {dimension_numbers = #tpu.dot_dimension_numbers<[1], [0], [0], [1], [0, 0, 1, 1], [], []>} : vector<8x16xf32>, vector<16x256xf32>, vector<8x256xf32> -> vector<8x256xf32>
    %8 = vector.broadcast %0 : vector<1x256xf32> to vector<8x256xf32>
    %9 = arith.addf %7, %8 : vector<8x256xf32>
    %10 = vector.extract_strided_slice %9 {offsets = [0, 0], sizes = [8, 128], strides = [1, 1]} : vector<8x256xf32> to vector<8x128xf32>
    %11 = vector.extract_strided_slice %9 {offsets = [0, 128], sizes = [8, 128], strides = [1, 1]} : vector<8x256xf32> to vector<8x128xf32>
    %c0_11 = arith.constant 0 : index
    %c0_12 = arith.constant 0 : index
    %c0_13 = arith.constant 0 : index
    %12 = vector.load %arg9[%c0_11, %c0_12, %c0_13] : memref<36x8x128xf32, #tpu.memory_space<vmem>>, vector<1x8x128xf32>
    %13 = vector.shape_cast %12 : vector<1x8x128xf32> to vector<8x128xf32>
    %14 = vector.shape_cast %11 : vector<8x128xf32> to vector<1x8x128xf32>
    tpu.vector_store %arg9[%c0_11, %c0_12, %c0_13], %14 {strides = array<i32>} : memref<36x8x128xf32, #tpu.memory_space<vmem>>, vector<1x8x128xf32>,
    %15 = arith.mulf %10, %10 : vector<8x128xf32>
    %cst_14 = arith.constant dense<0.000000e+00> : vector<8x128xf32>
    %16 = tpu.matmul %15, %2, %cst_14 {dimension_numbers = #tpu.dot_dimension_numbers<[1], [0], [0], [1], [0, 0, 1, 1], [], []>} : vector<8x128xf32>, vector<128x128xf32>, vector<8x128xf32> -> vector<8x128xf32>
    %17 = vector.broadcast %1 : vector<1x128xf32> to vector<8x128xf32>
    %18 = arith.subf %17, %16 : vector<8x128xf32>
    %c0_15 = arith.constant 0 : index
    %c0_16 = arith.constant 0 : index
    %c0_17 = arith.constant 0 : index
    %19 = vector.load %arg10[%c0_15, %c0_16, %c0_17] : memref<36x8x128xf32, #tpu.memory_space<vmem>>, vector<1x8x128xf32>
    %20 = vector.shape_cast %19 : vector<1x8x128xf32> to vector<8x128xf32>
    %21 = vector.shape_cast %18 : vector<8x128xf32> to vector<1x8x128xf32>
    tpu.vector_store %arg10[%c0_15, %c0_16, %c0_17], %21 {strides = array<i32>} : memref<36x8x128xf32, #tpu.memory_space<vmem>>, vector<1x8x128xf32>,
    %c1 = arith.constant 1 : index
    %c0_18 = arith.constant 0 : index
    %c0_19 = arith.constant 0 : index
    %22 = vector.load %arg1[%c1, %c0_18, %c0_19] : memref<36x8x16xf32, #tpu.memory_space<vmem>>, vector<1x8x16xf32>
    %23 = vector.shape_cast %22 : vector<1x8x16xf32> to vector<8x16xf32>
    %c1_20 = arith.constant 1 : index
    %c0_21 = arith.constant 0 : index
    %c0_22 = arith.constant 0 : index
    %24 = vector.load %arg2[%c1_20, %c0_21, %c0_22] : memref<36x16x256xf32, #tpu.memory_space<vmem>>, vector<1x16x256xf32>
    %25 = vector.shape_cast %24 : vector<1x16x256xf32> to vector<16x256xf32>
    %cst_23 = arith.constant dense<0.000000e+00> : vector<8x256xf32>
    %26 = tpu.matmul %23, %25, %cst_23 {dimension_numbers = #tpu.dot_dimension_numbers<[1], [0], [0], [1], [0, 0, 1, 1], [], []>} : vector<8x16xf32>, vector<16x256xf32>, vector<8x256xf32> -> vector<8x256xf32>
    %27 = vector.broadcast %0 : vector<1x256xf32> to vector<8x256xf32>
    %28 = arith.addf %26, %27 : vector<8x256xf32>
    %29 = vector.extract_strided_slice %28 {offsets = [0, 0], sizes = [8, 128], strides = [1, 1]} : vector<8x256xf32> to vector<8x128xf32>
    %30 = vector.extract_strided_slice %28 {offsets = [0, 128], sizes = [8, 128], strides = [1, 1]} : vector<8x256xf32> to vector<8x128xf32>
    %c1_24 = arith.constant 1 : index
    %c0_25 = arith.constant 0 : index
    %c0_26 = arith.constant 0 : index
    %31 = vector.load %arg9[%c1_24, %c0_25, %c0_26] : memref<36x8x128xf32, #tpu.memory_space<vmem>>, vector<1x8x128xf32>
    %32 = vector.shape_cast %31 : vector<1x8x128xf32> to vector<8x128xf32>
    %33 = vector.shape_cast %30 : vector<8x128xf32> to vector<1x8x128xf32>
    tpu.vector_store %arg9[%c1_24, %c0_25, %c0_26], %33 {strides = array<i32>} : memref<36x8x128xf32, #tpu.memory_space<vmem>>, vector<1x8x128xf32>,
    %34 = arith.mulf %29, %29 : vector<8x128xf32>
    %cst_27 = arith.constant dense<0.000000e+00> : vector<8x128xf32>
    %35 = tpu.matmul %34, %2, %cst_27 {dimension_numbers = #tpu.dot_dimension_numbers<[1], [0], [0], [1], [0, 0, 1, 1], [], []>} : vector<8x128xf32>, vector<128x128xf32>, vector<8x128xf32> -> vector<8x128xf32>
    %36 = vector.broadcast %1 : vector<1x128xf32> to vector<8x128xf32>
    %37 = arith.subf %36, %35 : vector<8x128xf32>
    %c1_28 = arith.constant 1 : index
    %c0_29 = arith.constant 0 : index
    %c0_30 = arith.constant 0 : index
    %38 = vector.load %arg10[%c1_28, %c0_29, %c0_30] : memref<36x8x128xf32, #tpu.memory_space<vmem>>, vector<1x8x128xf32>
    %39 = vector.shape_cast %38 : vector<1x8x128xf32> to vector<8x128xf32>
    %40 = vector.shape_cast %37 : vector<8x128xf32> to vector<1x8x128xf32>
    tpu.vector_store %arg10[%c1_28, %c0_29, %c0_30], %40 {strides = array<i32>} : memref<36x8x128xf32, #tpu.memory_space<vmem>>, vector<1x8x128xf32>,
    %c2 = arith.constant 2 : index
    %c0_31 = arith.constant 0 : index
    %c0_32 = arith.constant 0 : index
    %41 = vector.load %arg1[%c2, %c0_31, %c0_32] : memref<36x8x16xf32, #tpu.memory_space<vmem>>, vector<1x8x16xf32>
    %42 = vector.shape_cast %41 : vector<1x8x16xf32> to vector<8x16xf32>
    %c2_33 = arith.constant 2 : index
    %c0_34 = arith.constant 0 : index
    %c0_35 = arith.constant 0 : index
    %43 = vector.load %arg2[%c2_33, %c0_34, %c0_35] : memref<36x16x256xf32, #tpu.memory_space<vmem>>, vector<1x16x256xf32>
    %44 = vector.shape_cast %43 : vector<1x16x256xf32> to vector<16x256xf32>
    %cst_36 = arith.constant dense<0.000000e+00> : vector<8x256xf32>
    %45 = tpu.matmul %42, %44, %cst_36 {dimension_numbers = #tpu.dot_dimension_numbers<[1], [0], [0], [1], [0, 0, 1, 1], [], []>} : vector<8x16xf32>, vector<16x256xf32>, vector<8x256xf32> -> vector<8x256xf32>
    %46 = vector.broadcast %0 : vector<1x256xf32> to vector<8x256xf32>
    %47 = arith.addf %45, %46 : vector<8x256xf32>
    %48 = vector.extract_strided_slice %47 {offsets = [0, 0], sizes = [8, 128], strides = [1, 1]} : vector<8x256xf32> to vector<8x128xf32>
    %49 = vector.extract_strided_slice %47 {offsets = [0, 128], sizes = [8, 128], strides = [1, 1]} : vector<8x256xf32> to vector<8x128xf32>
    %c2_37 = arith.constant 2 : index
    %c0_38 = arith.constant 0 : index
    %c0_39 = arith.constant 0 : index
    %50 = vector.load %arg9[%c2_37, %c0_38, %c0_39] : memref<36x8x128xf32, #tpu.memory_space<vmem>>, vector<1x8x128xf32>
    %51 = vector.shape_cast %50 : vector<1x8x128xf32> to vector<8x128xf32>
    %52 = vector.shape_cast %49 : vector<8x128xf32> to vector<1x8x128xf32>
    tpu.vector_store %arg9[%c2_37, %c0_38, %c0_39], %52 {strides = array<i32>} : memref<36x8x128xf32, #tpu.memory_space<vmem>>, vector<1x8x128xf32>,
    %53 = arith.mulf %48, %48 : vector<8x128xf32>
    %cst_40 = arith.constant dense<0.000000e+00> : vector<8x128xf32>
    %54 = tpu.matmul %53, %2, %cst_40 {dimension_numbers = #tpu.dot_dimension_numbers<[1], [0], [0], [1], [0, 0, 1, 1], [], []>} : vector<8x128xf32>, vector<128x128xf32>, vector<8x128xf32> -> vector<8x128xf32>
    %55 = vector.broadcast %1 : vector<1x128xf32> to vector<8x128xf32>
    %56 = arith.subf %55, %54 : vector<8x128xf32>
    %c2_41 = arith.constant 2 : index
    %c0_42 = arith.constant 0 : index
    %c0_43 = arith.constant 0 : index
    %57 = vector.load %arg10[%c2_41, %c0_42, %c0_43] : memref<36x8x128xf32, #tpu.memory_space<vmem>>, vector<1x8x128xf32>
    %58 = vector.shape_cast %57 : vector<1x8x128xf32> to vector<8x128xf32>
    %59 = vector.shape_cast %56 : vector<8x128xf32> to vector<1x8x128xf32>
    tpu.vector_store %arg10[%c2_41, %c0_42, %c0_43], %59 {strides = array<i32>} : memref<36x8x128xf32, #tpu.memory_space<vmem>>, vector<1x8x128xf32>,
    %c3 = arith.constant 3 : index
    %c0_44 = arith.constant 0 : index
    %c0_45 = arith.constant 0 : index
    %60 = vector.load %arg1[%c3, %c0_44, %c0_45] : memref<36x8x16xf32, #tpu.memory_space<vmem>>, vector<1x8x16xf32>
    %61 = vector.shape_cast %60 : vector<1x8x16xf32> to vector<8x16xf32>
    %c3_46 = arith.constant 3 : index
    %c0_47 = arith.constant 0 : index
    %c0_48 = arith.constant 0 : index
    %62 = vector.load %arg2[%c3_46, %c0_47, %c0_48] : memref<36x16x256xf32, #tpu.memory_space<vmem>>, vector<1x16x256xf32>
    %63 = vector.shape_cast %62 : vector<1x16x256xf32> to vector<16x256xf32>
    %cst_49 = arith.constant dense<0.000000e+00> : vector<8x256xf32>
    %64 = tpu.matmul %61, %63, %cst_49 {dimension_numbers = #tpu.dot_dimension_numbers<[1], [0], [0], [1], [0, 0, 1, 1], [], []>} : vector<8x16xf32>, vector<16x256xf32>, vector<8x256xf32> -> vector<8x256xf32>
    %65 = vector.broadcast %0 : vector<1x256xf32> to vector<8x256xf32>
    %66 = arith.addf %64, %65 : vector<8x256xf32>
    %67 = vector.extract_strided_slice %66 {offsets = [0, 0], sizes = [8, 128], strides = [1, 1]} : vector<8x256xf32> to vector<8x128xf32>
    %68 = vector.extract_strided_slice %66 {offsets = [0, 128], sizes = [8, 128], strides = [1, 1]} : vector<8x256xf32> to vector<8x128xf32>
    %c3_50 = arith.constant 3 : index
    %c0_51 = arith.constant 0 : index
    %c0_52 = arith.constant 0 : index
    %69 = vector.load %arg9[%c3_50, %c0_51, %c0_52] : memref<36x8x128xf32, #tpu.memory_space<vmem>>, vector<1x8x128xf32>
    %70 = vector.shape_cast %69 : vector<1x8x128xf32> to vector<8x128xf32>
    %71 = vector.shape_cast %68 : vector<8x128xf32> to vector<1x8x128xf32>
    tpu.vector_store %arg9[%c3_50, %c0_51, %c0_52], %71 {strides = array<i32>} : memref<36x8x128xf32, #tpu.memory_space<vmem>>, vector<1x8x128xf32>,
    %72 = arith.mulf %67, %67 : vector<8x128xf32>
    %cst_53 = arith.constant dense<0.000000e+00> : vector<8x128xf32>
    %73 = tpu.matmul %72, %2, %cst_53 {dimension_numbers = #tpu.dot_dimension_numbers<[1], [0], [0], [1], [0, 0, 1, 1], [], []>} : vector<8x128xf32>, vector<128x128xf32>, vector<8x128xf32> -> vector<8x128xf32>
    %74 = vector.broadcast %1 : vector<1x128xf32> to vector<8x128xf32>
    %75 = arith.subf %74, %73 : vector<8x128xf32>
    %c3_54 = arith.constant 3 : index
    %c0_55 = arith.constant 0 : index
    %c0_56 = arith.constant 0 : index
    %76 = vector.load %arg10[%c3_54, %c0_55, %c0_56] : memref<36x8x128xf32, #tpu.memory_space<vmem>>, vector<1x8x128xf32>
    %77 = vector.shape_cast %76 : vector<1x8x128xf32> to vector<8x128xf32>
    %78 = vector.shape_cast %75 : vector<8x128xf32> to vector<1x8x128xf32>
    tpu.vector_store %arg10[%c3_54, %c0_55, %c0_56], %78 {strides = array<i32>} : memref<36x8x128xf32, #tpu.memory_space<vmem>>, vector<1x8x128xf32>,
    %c4 = arith.constant 4 : index
    %c0_57 = arith.constant 0 : index
    %c0_58 = arith.constant 0 : index
    %79 = vector.load %arg1[%c4, %c0_57, %c0_58] : memref<36x8x16xf32, #tpu.memory_space<vmem>>, vector<1x8x16xf32>
    %80 = vector.shape_cast %79 : vector<1x8x16xf32> to vector<8x16xf32>
    %c4_59 = arith.constant 4 : index
    %c0_60 = arith.constant 0 : index
    %c0_61 = arith.constant 0 : index
    %81 = vector.load %arg2[%c4_59, %c0_60, %c0_61] : memref<36x16x256xf32, #tpu.memory_space<vmem>>, vector<1x16x256xf32>
    %82 = vector.shape_cast %81 : vector<1x16x256xf32> to vector<16x256xf32>
    %cst_62 = arith.constant dense<0.000000e+00> : vector<8x256xf32>
    %83 = tpu.matmul %80, %82, %cst_62 {dimension_numbers = #tpu.dot_dimension_numbers<[1], [0], [0], [1], [0, 0, 1, 1], [], []>} : vector<8x16xf32>, vector<16x256xf32>, vector<8x256xf32> -> vector<8x256xf32>
    %84 = vector.broadcast %0 : vector<1x256xf32> to vector<8x256xf32>
    %85 = arith.addf %83, %84 : vector<8x256xf32>
    %86 = vector.extract_strided_slice %85 {offsets = [0, 0], sizes = [8, 128], strides = [1, 1]} : vector<8x256xf32> to vector<8x128xf32>
    %87 = vector.extract_strided_slice %85 {offsets = [0, 128], sizes = [8, 128], strides = [1, 1]} : vector<8x256xf32> to vector<8x128xf32>
    %c4_63 = arith.constant 4 : index
    %c0_64 = arith.constant 0 : index
    %c0_65 = arith.constant 0 : index
    %88 = vector.load %arg9[%c4_63, %c0_64, %c0_65] : memref<36x8x128xf32, #tpu.memory_space<vmem>>, vector<1x8x128xf32>
    %89 = vector.shape_cast %88 : vector<1x8x128xf32> to vector<8x128xf32>
    %90 = vector.shape_cast %87 : vector<8x128xf32> to vector<1x8x128xf32>
    tpu.vector_store %arg9[%c4_63, %c0_64, %c0_65], %90 {strides = array<i32>} : memref<36x8x128xf32, #tpu.memory_space<vmem>>, vector<1x8x128xf32>,
    %91 = arith.mulf %86, %86 : vector<8x128xf32>
    %cst_66 = arith.constant dense<0.000000e+00> : vector<8x128xf32>
    %92 = tpu.matmul %91, %2, %cst_66 {dimension_numbers = #tpu.dot_dimension_numbers<[1], [0], [0], [1], [0, 0, 1, 1], [], []>} : vector<8x128xf32>, vector<128x128xf32>, vector<8x128xf32> -> vector<8x128xf32>
    %93 = vector.broadcast %1 : vector<1x128xf32> to vector<8x128xf32>
    %94 = arith.subf %93, %92 : vector<8x128xf32>
    %c4_67 = arith.constant 4 : index
    %c0_68 = arith.constant 0 : index
    %c0_69 = arith.constant 0 : index
    %95 = vector.load %arg10[%c4_67, %c0_68, %c0_69] : memref<36x8x128xf32, #tpu.memory_space<vmem>>, vector<1x8x128xf32>
    %96 = vector.shape_cast %95 : vector<1x8x128xf32> to vector<8x128xf32>
    %97 = vector.shape_cast %94 : vector<8x128xf32> to vector<1x8x128xf32>
    tpu.vector_store %arg10[%c4_67, %c0_68, %c0_69], %97 {strides = array<i32>} : memref<36x8x128xf32, #tpu.memory_space<vmem>>, vector<1x8x128xf32>,
    %c5 = arith.constant 5 : index
    %c0_70 = arith.constant 0 : index
    %c0_71 = arith.constant 0 : index
    %98 = vector.load %arg1[%c5, %c0_70, %c0_71] : memref<36x8x16xf32, #tpu.memory_space<vmem>>, vector<1x8x16xf32>
    %99 = vector.shape_cast %98 : vector<1x8x16xf32> to vector<8x16xf32>
    %c5_72 = arith.constant 5 : index
    %c0_73 = arith.constant 0 : index
    %c0_74 = arith.constant 0 : index
    %100 = vector.load %arg2[%c5_72, %c0_73, %c0_74] : memref<36x16x256xf32, #tpu.memory_space<vmem>>, vector<1x16x256xf32>
    %101 = vector.shape_cast %100 : vector<1x16x256xf32> to vector<16x256xf32>
    %cst_75 = arith.constant dense<0.000000e+00> : vector<8x256xf32>
    %102 = tpu.matmul %99, %101, %cst_75 {dimension_numbers = #tpu.dot_dimension_numbers<[1], [0], [0], [1], [0, 0, 1, 1], [], []>} : vector<8x16xf32>, vector<16x256xf32>, vector<8x256xf32> -> vector<8x256xf32>
    %103 = vector.broadcast %0 : vector<1x256xf32> to vector<8x256xf32>
    %104 = arith.addf %102, %103 : vector<8x256xf32>
    %105 = vector.extract_strided_slice %104 {offsets = [0, 0], sizes = [8, 128], strides = [1, 1]} : vector<8x256xf32> to vector<8x128xf32>
    %106 = vector.extract_strided_slice %104 {offsets = [0, 128], sizes = [8, 128], strides = [1, 1]} : vector<8x256xf32> to vector<8x128xf32>
    %c5_76 = arith.constant 5 : index
    %c0_77 = arith.constant 0 : index
    %c0_78 = arith.constant 0 : index
    %107 = vector.load %arg9[%c5_76, %c0_77, %c0_78] : memref<36x8x128xf32, #tpu.memory_space<vmem>>, vector<1x8x128xf32>
    %108 = vector.shape_cast %107 : vector<1x8x128xf32> to vector<8x128xf32>
    %109 = vector.shape_cast %106 : vector<8x128xf32> to vector<1x8x128xf32>
    tpu.vector_store %arg9[%c5_76, %c0_77, %c0_78], %109 {strides = array<i32>} : memref<36x8x128xf32, #tpu.memory_space<vmem>>, vector<1x8x128xf32>,
    %110 = arith.mulf %105, %105 : vector<8x128xf32>
    %cst_79 = arith.constant dense<0.000000e+00> : vector<8x128xf32>
    %111 = tpu.matmul %110, %2, %cst_79 {dimension_numbers = #tpu.dot_dimension_numbers<[1], [0], [0], [1], [0, 0, 1, 1], [], []>} : vector<8x128xf32>, vector<128x128xf32>, vector<8x128xf32> -> vector<8x128xf32>
    %112 = vector.broadcast %1 : vector<1x128xf32> to vector<8x128xf32>
    %113 = arith.subf %112, %111 : vector<8x128xf32>
    %c5_80 = arith.constant 5 : index
    %c0_81 = arith.constant 0 : index
    %c0_82 = arith.constant 0 : index
    %114 = vector.load %arg10[%c5_80, %c0_81, %c0_82] : memref<36x8x128xf32, #tpu.memory_space<vmem>>, vector<1x8x128xf32>
    %115 = vector.shape_cast %114 : vector<1x8x128xf32> to vector<8x128xf32>
    %116 = vector.shape_cast %113 : vector<8x128xf32> to vector<1x8x128xf32>
    tpu.vector_store %arg10[%c5_80, %c0_81, %c0_82], %116 {strides = array<i32>} : memref<36x8x128xf32, #tpu.memory_space<vmem>>, vector<1x8x128xf32>,
    %c6 = arith.constant 6 : index
    %c0_83 = arith.constant 0 : index
    %c0_84 = arith.constant 0 : index
    %117 = vector.load %arg1[%c6, %c0_83, %c0_84] : memref<36x8x16xf32, #tpu.memory_space<vmem>>, vector<1x8x16xf32>
    %118 = vector.shape_cast %117 : vector<1x8x16xf32> to vector<8x16xf32>
    %c6_85 = arith.constant 6 : index
    %c0_86 = arith.constant 0 : index
    %c0_87 = arith.constant 0 : index
    %119 = vector.load %arg2[%c6_85, %c0_86, %c0_87] : memref<36x16x256xf32, #tpu.memory_space<vmem>>, vector<1x16x256xf32>
    %120 = vector.shape_cast %119 : vector<1x16x256xf32> to vector<16x256xf32>
    %cst_88 = arith.constant dense<0.000000e+00> : vector<8x256xf32>
    %121 = tpu.matmul %118, %120, %cst_88 {dimension_numbers = #tpu.dot_dimension_numbers<[1], [0], [0], [1], [0, 0, 1, 1], [], []>} : vector<8x16xf32>, vector<16x256xf32>, vector<8x256xf32> -> vector<8x256xf32>
    %122 = vector.broadcast %0 : vector<1x256xf32> to vector<8x256xf32>
    %123 = arith.addf %121, %122 : vector<8x256xf32>
    %124 = vector.extract_strided_slice %123 {offsets = [0, 0], sizes = [8, 128], strides = [1, 1]} : vector<8x256xf32> to vector<8x128xf32>
    %125 = vector.extract_strided_slice %123 {offsets = [0, 128], sizes = [8, 128], strides = [1, 1]} : vector<8x256xf32> to vector<8x128xf32>
    %c6_89 = arith.constant 6 : index
    %c0_90 = arith.constant 0 : index
    %c0_91 = arith.constant 0 : index
    %126 = vector.load %arg9[%c6_89, %c0_90, %c0_91] : memref<36x8x128xf32, #tpu.memory_space<vmem>>, vector<1x8x128xf32>
    %127 = vector.shape_cast %126 : vector<1x8x128xf32> to vector<8x128xf32>
    %128 = vector.shape_cast %125 : vector<8x128xf32> to vector<1x8x128xf32>
    tpu.vector_store %arg9[%c6_89, %c0_90, %c0_91], %128 {strides = array<i32>} : memref<36x8x128xf32, #tpu.memory_space<vmem>>, vector<1x8x128xf32>,
    %129 = arith.mulf %124, %124 : vector<8x128xf32>
    %cst_92 = arith.constant dense<0.000000e+00> : vector<8x128xf32>
    %130 = tpu.matmul %129, %2, %cst_92 {dimension_numbers = #tpu.dot_dimension_numbers<[1], [0], [0], [1], [0, 0, 1, 1], [], []>} : vector<8x128xf32>, vector<128x128xf32>, vector<8x128xf32> -> vector<8x128xf32>
    %131 = vector.broadcast %1 : vector<1x128xf32> to vector<8x128xf32>
    %132 = arith.subf %131, %130 : vector<8x128xf32>
    %c6_93 = arith.constant 6 : index
    %c0_94 = arith.constant 0 : index
    %c0_95 = arith.constant 0 : index
    %133 = vector.load %arg10[%c6_93, %c0_94, %c0_95] : memref<36x8x128xf32, #tpu.memory_space<vmem>>, vector<1x8x128xf32>
    %134 = vector.shape_cast %133 : vector<1x8x128xf32> to vector<8x128xf32>
    %135 = vector.shape_cast %132 : vector<8x128xf32> to vector<1x8x128xf32>
    tpu.vector_store %arg10[%c6_93, %c0_94, %c0_95], %135 {strides = array<i32>} : memref<36x8x128xf32, #tpu.memory_space<vmem>>, vector<1x8x128xf32>,
    %c7 = arith.constant 7 : index
    %c0_96 = arith.constant 0 : index
    %c0_97 = arith.constant 0 : index
    %136 = vector.load %arg1[%c7, %c0_96, %c0_97] : memref<36x8x16xf32, #tpu.memory_space<vmem>>, vector<1x8x16xf32>
    %137 = vector.shape_cast %136 : vector<1x8x16xf32> to vector<8x16xf32>
    %c7_98 = arith.constant 7 : index
    %c0_99 = arith.constant 0 : index
    %c0_100 = arith.constant 0 : index
    %138 = vector.load %arg2[%c7_98, %c0_99, %c0_100] : memref<36x16x256xf32, #tpu.memory_space<vmem>>, vector<1x16x256xf32>
    %139 = vector.shape_cast %138 : vector<1x16x256xf32> to vector<16x256xf32>
    %cst_101 = arith.constant dense<0.000000e+00> : vector<8x256xf32>
    %140 = tpu.matmul %137, %139, %cst_101 {dimension_numbers = #tpu.dot_dimension_numbers<[1], [0], [0], [1], [0, 0, 1, 1], [], []>} : vector<8x16xf32>, vector<16x256xf32>, vector<8x256xf32> -> vector<8x256xf32>
    %141 = vector.broadcast %0 : vector<1x256xf32> to vector<8x256xf32>
    %142 = arith.addf %140, %141 : vector<8x256xf32>
    %143 = vector.extract_strided_slice %142 {offsets = [0, 0], sizes = [8, 128], strides = [1, 1]} : vector<8x256xf32> to vector<8x128xf32>
    %144 = vector.extract_strided_slice %142 {offsets = [0, 128], sizes = [8, 128], strides = [1, 1]} : vector<8x256xf32> to vector<8x128xf32>
    %c7_102 = arith.constant 7 : index
    %c0_103 = arith.constant 0 : index
    %c0_104 = arith.constant 0 : index
    %145 = vector.load %arg9[%c7_102, %c0_103, %c0_104] : memref<36x8x128xf32, #tpu.memory_space<vmem>>, vector<1x8x128xf32>
    %146 = vector.shape_cast %145 : vector<1x8x128xf32> to vector<8x128xf32>
    %147 = vector.shape_cast %144 : vector<8x128xf32> to vector<1x8x128xf32>
    tpu.vector_store %arg9[%c7_102, %c0_103, %c0_104], %147 {strides = array<i32>} : memref<36x8x128xf32, #tpu.memory_space<vmem>>, vector<1x8x128xf32>,
    %148 = arith.mulf %143, %143 : vector<8x128xf32>
    %cst_105 = arith.constant dense<0.000000e+00> : vector<8x128xf32>
    %149 = tpu.matmul %148, %2, %cst_105 {dimension_numbers = #tpu.dot_dimension_numbers<[1], [0], [0], [1], [0, 0, 1, 1], [], []>} : vector<8x128xf32>, vector<128x128xf32>, vector<8x128xf32> -> vector<8x128xf32>
    %150 = vector.broadcast %1 : vector<1x128xf32> to vector<8x128xf32>
    %151 = arith.subf %150, %149 : vector<8x128xf32>
    %c7_106 = arith.constant 7 : index
    %c0_107 = arith.constant 0 : index
    %c0_108 = arith.constant 0 : index
    %152 = vector.load %arg10[%c7_106, %c0_107, %c0_108] : memref<36x8x128xf32, #tpu.memory_space<vmem>>, vector<1x8x128xf32>
    %153 = vector.shape_cast %152 : vector<1x8x128xf32> to vector<8x128xf32>
    %154 = vector.shape_cast %151 : vector<8x128xf32> to vector<1x8x128xf32>
    tpu.vector_store %arg10[%c7_106, %c0_107, %c0_108], %154 {strides = array<i32>} : memref<36x8x128xf32, #tpu.memory_space<vmem>>, vector<1x8x128xf32>,
    %c8 = arith.constant 8 : index
    %c0_109 = arith.constant 0 : index
    %c0_110 = arith.constant 0 : index
    %155 = vector.load %arg1[%c8, %c0_109, %c0_110] : memref<36x8x16xf32, #tpu.memory_space<vmem>>, vector<1x8x16xf32>
    %156 = vector.shape_cast %155 : vector<1x8x16xf32> to vector<8x16xf32>
    %c8_111 = arith.constant 8 : index
    %c0_112 = arith.constant 0 : index
    %c0_113 = arith.constant 0 : index
    %157 = vector.load %arg2[%c8_111, %c0_112, %c0_113] : memref<36x16x256xf32, #tpu.memory_space<vmem>>, vector<1x16x256xf32>
    %158 = vector.shape_cast %157 : vector<1x16x256xf32> to vector<16x256xf32>
    %cst_114 = arith.constant dense<0.000000e+00> : vector<8x256xf32>
    %159 = tpu.matmul %156, %158, %cst_114 {dimension_numbers = #tpu.dot_dimension_numbers<[1], [0], [0], [1], [0, 0, 1, 1], [], []>} : vector<8x16xf32>, vector<16x256xf32>, vector<8x256xf32> -> vector<8x256xf32>
    %160 = vector.broadcast %0 : vector<1x256xf32> to vector<8x256xf32>
    %161 = arith.addf %159, %160 : vector<8x256xf32>
    %162 = vector.extract_strided_slice %161 {offsets = [0, 0], sizes = [8, 128], strides = [1, 1]} : vector<8x256xf32> to vector<8x128xf32>
    %163 = vector.extract_strided_slice %161 {offsets = [0, 128], sizes = [8, 128], strides = [1, 1]} : vector<8x256xf32> to vector<8x128xf32>
    %c8_115 = arith.constant 8 : index
    %c0_116 = arith.constant 0 : index
    %c0_117 = arith.constant 0 : index
    %164 = vector.load %arg9[%c8_115, %c0_116, %c0_117] : memref<36x8x128xf32, #tpu.memory_space<vmem>>, vector<1x8x128xf32>
    %165 = vector.shape_cast %164 : vector<1x8x128xf32> to vector<8x128xf32>
    %166 = vector.shape_cast %163 : vector<8x128xf32> to vector<1x8x128xf32>
    tpu.vector_store %arg9[%c8_115, %c0_116, %c0_117], %166 {strides = array<i32>} : memref<36x8x128xf32, #tpu.memory_space<vmem>>, vector<1x8x128xf32>,
    %167 = arith.mulf %162, %162 : vector<8x128xf32>
    %cst_118 = arith.constant dense<0.000000e+00> : vector<8x128xf32>
    %168 = tpu.matmul %167, %2, %cst_118 {dimension_numbers = #tpu.dot_dimension_numbers<[1], [0], [0], [1], [0, 0, 1, 1], [], []>} : vector<8x128xf32>, vector<128x128xf32>, vector<8x128xf32> -> vector<8x128xf32>
    %169 = vector.broadcast %1 : vector<1x128xf32> to vector<8x128xf32>
    %170 = arith.subf %169, %168 : vector<8x128xf32>
    %c8_119 = arith.constant 8 : index
    %c0_120 = arith.constant 0 : index
    %c0_121 = arith.constant 0 : index
    %171 = vector.load %arg10[%c8_119, %c0_120, %c0_121] : memref<36x8x128xf32, #tpu.memory_space<vmem>>, vector<1x8x128xf32>
    %172 = vector.shape_cast %171 : vector<1x8x128xf32> to vector<8x128xf32>
    %173 = vector.shape_cast %170 : vector<8x128xf32> to vector<1x8x128xf32>
    tpu.vector_store %arg10[%c8_119, %c0_120, %c0_121], %173 {strides = array<i32>} : memref<36x8x128xf32, #tpu.memory_space<vmem>>, vector<1x8x128xf32>,
    %c9 = arith.constant 9 : index
    %c0_122 = arith.constant 0 : index
    %c0_123 = arith.constant 0 : index
    %174 = vector.load %arg1[%c9, %c0_122, %c0_123] : memref<36x8x16xf32, #tpu.memory_space<vmem>>, vector<1x8x16xf32>
    %175 = vector.shape_cast %174 : vector<1x8x16xf32> to vector<8x16xf32>
    %c9_124 = arith.constant 9 : index
    %c0_125 = arith.constant 0 : index
    %c0_126 = arith.constant 0 : index
    %176 = vector.load %arg2[%c9_124, %c0_125, %c0_126] : memref<36x16x256xf32, #tpu.memory_space<vmem>>, vector<1x16x256xf32>
    %177 = vector.shape_cast %176 : vector<1x16x256xf32> to vector<16x256xf32>
    %cst_127 = arith.constant dense<0.000000e+00> : vector<8x256xf32>
    %178 = tpu.matmul %175, %177, %cst_127 {dimension_numbers = #tpu.dot_dimension_numbers<[1], [0], [0], [1], [0, 0, 1, 1], [], []>} : vector<8x16xf32>, vector<16x256xf32>, vector<8x256xf32> -> vector<8x256xf32>
    %179 = vector.broadcast %0 : vector<1x256xf32> to vector<8x256xf32>
    %180 = arith.addf %178, %179 : vector<8x256xf32>
    %181 = vector.extract_strided_slice %180 {offsets = [0, 0], sizes = [8, 128], strides = [1, 1]} : vector<8x256xf32> to vector<8x128xf32>
    %182 = vector.extract_strided_slice %180 {offsets = [0, 128], sizes = [8, 128], strides = [1, 1]} : vector<8x256xf32> to vector<8x128xf32>
    %c9_128 = arith.constant 9 : index
    %c0_129 = arith.constant 0 : index
    %c0_130 = arith.constant 0 : index
    %183 = vector.load %arg9[%c9_128, %c0_129, %c0_130] : memref<36x8x128xf32, #tpu.memory_space<vmem>>, vector<1x8x128xf32>
    %184 = vector.shape_cast %183 : vector<1x8x128xf32> to vector<8x128xf32>
    %185 = vector.shape_cast %182 : vector<8x128xf32> to vector<1x8x128xf32>
    tpu.vector_store %arg9[%c9_128, %c0_129, %c0_130], %185 {strides = array<i32>} : memref<36x8x128xf32, #tpu.memory_space<vmem>>, vector<1x8x128xf32>,
    %186 = arith.mulf %181, %181 : vector<8x128xf32>
    %cst_131 = arith.constant dense<0.000000e+00> : vector<8x128xf32>
    %187 = tpu.matmul %186, %2, %cst_131 {dimension_numbers = #tpu.dot_dimension_numbers<[1], [0], [0], [1], [0, 0, 1, 1], [], []>} : vector<8x128xf32>, vector<128x128xf32>, vector<8x128xf32> -> vector<8x128xf32>
    %188 = vector.broadcast %1 : vector<1x128xf32> to vector<8x128xf32>
    %189 = arith.subf %188, %187 : vector<8x128xf32>
    %c9_132 = arith.constant 9 : index
    %c0_133 = arith.constant 0 : index
    %c0_134 = arith.constant 0 : index
    %190 = vector.load %arg10[%c9_132, %c0_133, %c0_134] : memref<36x8x128xf32, #tpu.memory_space<vmem>>, vector<1x8x128xf32>
    %191 = vector.shape_cast %190 : vector<1x8x128xf32> to vector<8x128xf32>
    %192 = vector.shape_cast %189 : vector<8x128xf32> to vector<1x8x128xf32>
    tpu.vector_store %arg10[%c9_132, %c0_133, %c0_134], %192 {strides = array<i32>} : memref<36x8x128xf32, #tpu.memory_space<vmem>>, vector<1x8x128xf32>,
    %c10 = arith.constant 10 : index
    %c0_135 = arith.constant 0 : index
    %c0_136 = arith.constant 0 : index
    %193 = vector.load %arg1[%c10, %c0_135, %c0_136] : memref<36x8x16xf32, #tpu.memory_space<vmem>>, vector<1x8x16xf32>
    %194 = vector.shape_cast %193 : vector<1x8x16xf32> to vector<8x16xf32>
    %c10_137 = arith.constant 10 : index
    %c0_138 = arith.constant 0 : index
    %c0_139 = arith.constant 0 : index
    %195 = vector.load %arg2[%c10_137, %c0_138, %c0_139] : memref<36x16x256xf32, #tpu.memory_space<vmem>>, vector<1x16x256xf32>
    %196 = vector.shape_cast %195 : vector<1x16x256xf32> to vector<16x256xf32>
    %cst_140 = arith.constant dense<0.000000e+00> : vector<8x256xf32>
    %197 = tpu.matmul %194, %196, %cst_140 {dimension_numbers = #tpu.dot_dimension_numbers<[1], [0], [0], [1], [0, 0, 1, 1], [], []>} : vector<8x16xf32>, vector<16x256xf32>, vector<8x256xf32> -> vector<8x256xf32>
    %198 = vector.broadcast %0 : vector<1x256xf32> to vector<8x256xf32>
    %199 = arith.addf %197, %198 : vector<8x256xf32>
    %200 = vector.extract_strided_slice %199 {offsets = [0, 0], sizes = [8, 128], strides = [1, 1]} : vector<8x256xf32> to vector<8x128xf32>
    %201 = vector.extract_strided_slice %199 {offsets = [0, 128], sizes = [8, 128], strides = [1, 1]} : vector<8x256xf32> to vector<8x128xf32>
    %c10_141 = arith.constant 10 : index
    %c0_142 = arith.constant 0 : index
    %c0_143 = arith.constant 0 : index
    %202 = vector.load %arg9[%c10_141, %c0_142, %c0_143] : memref<36x8x128xf32, #tpu.memory_space<vmem>>, vector<1x8x128xf32>
    %203 = vector.shape_cast %202 : vector<1x8x128xf32> to vector<8x128xf32>
    %204 = vector.shape_cast %201 : vector<8x128xf32> to vector<1x8x128xf32>
    tpu.vector_store %arg9[%c10_141, %c0_142, %c0_143], %204 {strides = array<i32>} : memref<36x8x128xf32, #tpu.memory_space<vmem>>, vector<1x8x128xf32>,
    %205 = arith.mulf %200, %200 : vector<8x128xf32>
    %cst_144 = arith.constant dense<0.000000e+00> : vector<8x128xf32>
    %206 = tpu.matmul %205, %2, %cst_144 {dimension_numbers = #tpu.dot_dimension_numbers<[1], [0], [0], [1], [0, 0, 1, 1], [], []>} : vector<8x128xf32>, vector<128x128xf32>, vector<8x128xf32> -> vector<8x128xf32>
    %207 = vector.broadcast %1 : vector<1x128xf32> to vector<8x128xf32>
    %208 = arith.subf %207, %206 : vector<8x128xf32>
    %c10_145 = arith.constant 10 : index
    %c0_146 = arith.constant 0 : index
    %c0_147 = arith.constant 0 : index
    %209 = vector.load %arg10[%c10_145, %c0_146, %c0_147] : memref<36x8x128xf32, #tpu.memory_space<vmem>>, vector<1x8x128xf32>
    %210 = vector.shape_cast %209 : vector<1x8x128xf32> to vector<8x128xf32>
    %211 = vector.shape_cast %208 : vector<8x128xf32> to vector<1x8x128xf32>
    tpu.vector_store %arg10[%c10_145, %c0_146, %c0_147], %211 {strides = array<i32>} : memref<36x8x128xf32, #tpu.memory_space<vmem>>, vector<1x8x128xf32>,
    %c11 = arith.constant 11 : index
    %c0_148 = arith.constant 0 : index
    %c0_149 = arith.constant 0 : index
    %212 = vector.load %arg1[%c11, %c0_148, %c0_149] : memref<36x8x16xf32, #tpu.memory_space<vmem>>, vector<1x8x16xf32>
    %213 = vector.shape_cast %212 : vector<1x8x16xf32> to vector<8x16xf32>
    %c11_150 = arith.constant 11 : index
    %c0_151 = arith.constant 0 : index
    %c0_152 = arith.constant 0 : index
    %214 = vector.load %arg2[%c11_150, %c0_151, %c0_152] : memref<36x16x256xf32, #tpu.memory_space<vmem>>, vector<1x16x256xf32>
    %215 = vector.shape_cast %214 : vector<1x16x256xf32> to vector<16x256xf32>
    %cst_153 = arith.constant dense<0.000000e+00> : vector<8x256xf32>
    %216 = tpu.matmul %213, %215, %cst_153 {dimension_numbers = #tpu.dot_dimension_numbers<[1], [0], [0], [1], [0, 0, 1, 1], [], []>} : vector<8x16xf32>, vector<16x256xf32>, vector<8x256xf32> -> vector<8x256xf32>
    %217 = vector.broadcast %0 : vector<1x256xf32> to vector<8x256xf32>
    %218 = arith.addf %216, %217 : vector<8x256xf32>
    %219 = vector.extract_strided_slice %218 {offsets = [0, 0], sizes = [8, 128], strides = [1, 1]} : vector<8x256xf32> to vector<8x128xf32>
    %220 = vector.extract_strided_slice %218 {offsets = [0, 128], sizes = [8, 128], strides = [1, 1]} : vector<8x256xf32> to vector<8x128xf32>
    %c11_154 = arith.constant 11 : index
    %c0_155 = arith.constant 0 : index
    %c0_156 = arith.constant 0 : index
    %221 = vector.load %arg9[%c11_154, %c0_155, %c0_156] : memref<36x8x128xf32, #tpu.memory_space<vmem>>, vector<1x8x128xf32>
    %222 = vector.shape_cast %221 : vector<1x8x128xf32> to vector<8x128xf32>
    %223 = vector.shape_cast %220 : vector<8x128xf32> to vector<1x8x128xf32>
    tpu.vector_store %arg9[%c11_154, %c0_155, %c0_156], %223 {strides = array<i32>} : memref<36x8x128xf32, #tpu.memory_space<vmem>>, vector<1x8x128xf32>,
    %224 = arith.mulf %219, %219 : vector<8x128xf32>
    %cst_157 = arith.constant dense<0.000000e+00> : vector<8x128xf32>
    %225 = tpu.matmul %224, %2, %cst_157 {dimension_numbers = #tpu.dot_dimension_numbers<[1], [0], [0], [1], [0, 0, 1, 1], [], []>} : vector<8x128xf32>, vector<128x128xf32>, vector<8x128xf32> -> vector<8x128xf32>
    %226 = vector.broadcast %1 : vector<1x128xf32> to vector<8x128xf32>
    %227 = arith.subf %226, %225 : vector<8x128xf32>
    %c11_158 = arith.constant 11 : index
    %c0_159 = arith.constant 0 : index
    %c0_160 = arith.constant 0 : index
    %228 = vector.load %arg10[%c11_158, %c0_159, %c0_160] : memref<36x8x128xf32, #tpu.memory_space<vmem>>, vector<1x8x128xf32>
    %229 = vector.shape_cast %228 : vector<1x8x128xf32> to vector<8x128xf32>
    %230 = vector.shape_cast %227 : vector<8x128xf32> to vector<1x8x128xf32>
    tpu.vector_store %arg10[%c11_158, %c0_159, %c0_160], %230 {strides = array<i32>} : memref<36x8x128xf32, #tpu.memory_space<vmem>>, vector<1x8x128xf32>,
    %c12 = arith.constant 12 : index
    %c0_161 = arith.constant 0 : index
    %c0_162 = arith.constant 0 : index
    %231 = vector.load %arg1[%c12, %c0_161, %c0_162] : memref<36x8x16xf32, #tpu.memory_space<vmem>>, vector<1x8x16xf32>
    %232 = vector.shape_cast %231 : vector<1x8x16xf32> to vector<8x16xf32>
    %c12_163 = arith.constant 12 : index
    %c0_164 = arith.constant 0 : index
    %c0_165 = arith.constant 0 : index
    %233 = vector.load %arg2[%c12_163, %c0_164, %c0_165] : memref<36x16x256xf32, #tpu.memory_space<vmem>>, vector<1x16x256xf32>
    %234 = vector.shape_cast %233 : vector<1x16x256xf32> to vector<16x256xf32>
    %cst_166 = arith.constant dense<0.000000e+00> : vector<8x256xf32>
    %235 = tpu.matmul %232, %234, %cst_166 {dimension_numbers = #tpu.dot_dimension_numbers<[1], [0], [0], [1], [0, 0, 1, 1], [], []>} : vector<8x16xf32>, vector<16x256xf32>, vector<8x256xf32> -> vector<8x256xf32>
    %236 = vector.broadcast %0 : vector<1x256xf32> to vector<8x256xf32>
    %237 = arith.addf %235, %236 : vector<8x256xf32>
    %238 = vector.extract_strided_slice %237 {offsets = [0, 0], sizes = [8, 128], strides = [1, 1]} : vector<8x256xf32> to vector<8x128xf32>
    %239 = vector.extract_strided_slice %237 {offsets = [0, 128], sizes = [8, 128], strides = [1, 1]} : vector<8x256xf32> to vector<8x128xf32>
    %c12_167 = arith.constant 12 : index
    %c0_168 = arith.constant 0 : index
    %c0_169 = arith.constant 0 : index
    %240 = vector.load %arg9[%c12_167, %c0_168, %c0_169] : memref<36x8x128xf32, #tpu.memory_space<vmem>>, vector<1x8x128xf32>
    %241 = vector.shape_cast %240 : vector<1x8x128xf32> to vector<8x128xf32>
    %242 = vector.shape_cast %239 : vector<8x128xf32> to vector<1x8x128xf32>
    tpu.vector_store %arg9[%c12_167, %c0_168, %c0_169], %242 {strides = array<i32>} : memref<36x8x128xf32, #tpu.memory_space<vmem>>, vector<1x8x128xf32>,
    %243 = arith.mulf %238, %238 : vector<8x128xf32>
    %cst_170 = arith.constant dense<0.000000e+00> : vector<8x128xf32>
    %244 = tpu.matmul %243, %2, %cst_170 {dimension_numbers = #tpu.dot_dimension_numbers<[1], [0], [0], [1], [0, 0, 1, 1], [], []>} : vector<8x128xf32>, vector<128x128xf32>, vector<8x128xf32> -> vector<8x128xf32>
    %245 = vector.broadcast %1 : vector<1x128xf32> to vector<8x128xf32>
    %246 = arith.subf %245, %244 : vector<8x128xf32>
    %c12_171 = arith.constant 12 : index
    %c0_172 = arith.constant 0 : index
    %c0_173 = arith.constant 0 : index
    %247 = vector.load %arg10[%c12_171, %c0_172, %c0_173] : memref<36x8x128xf32, #tpu.memory_space<vmem>>, vector<1x8x128xf32>
    %248 = vector.shape_cast %247 : vector<1x8x128xf32> to vector<8x128xf32>
    %249 = vector.shape_cast %246 : vector<8x128xf32> to vector<1x8x128xf32>
    tpu.vector_store %arg10[%c12_171, %c0_172, %c0_173], %249 {strides = array<i32>} : memref<36x8x128xf32, #tpu.memory_space<vmem>>, vector<1x8x128xf32>,
    %c13 = arith.constant 13 : index
    %c0_174 = arith.constant 0 : index
    %c0_175 = arith.constant 0 : index
    %250 = vector.load %arg1[%c13, %c0_174, %c0_175] : memref<36x8x16xf32, #tpu.memory_space<vmem>>, vector<1x8x16xf32>
    %251 = vector.shape_cast %250 : vector<1x8x16xf32> to vector<8x16xf32>
    %c13_176 = arith.constant 13 : index
    %c0_177 = arith.constant 0 : index
    %c0_178 = arith.constant 0 : index
    %252 = vector.load %arg2[%c13_176, %c0_177, %c0_178] : memref<36x16x256xf32, #tpu.memory_space<vmem>>, vector<1x16x256xf32>
    %253 = vector.shape_cast %252 : vector<1x16x256xf32> to vector<16x256xf32>
    %cst_179 = arith.constant dense<0.000000e+00> : vector<8x256xf32>
    %254 = tpu.matmul %251, %253, %cst_179 {dimension_numbers = #tpu.dot_dimension_numbers<[1], [0], [0], [1], [0, 0, 1, 1], [], []>} : vector<8x16xf32>, vector<16x256xf32>, vector<8x256xf32> -> vector<8x256xf32>
    %255 = vector.broadcast %0 : vector<1x256xf32> to vector<8x256xf32>
    %256 = arith.addf %254, %255 : vector<8x256xf32>
    %257 = vector.extract_strided_slice %256 {offsets = [0, 0], sizes = [8, 128], strides = [1, 1]} : vector<8x256xf32> to vector<8x128xf32>
    %258 = vector.extract_strided_slice %256 {offsets = [0, 128], sizes = [8, 128], strides = [1, 1]} : vector<8x256xf32> to vector<8x128xf32>
    %c13_180 = arith.constant 13 : index
    %c0_181 = arith.constant 0 : index
    %c0_182 = arith.constant 0 : index
    %259 = vector.load %arg9[%c13_180, %c0_181, %c0_182] : memref<36x8x128xf32, #tpu.memory_space<vmem>>, vector<1x8x128xf32>
    %260 = vector.shape_cast %259 : vector<1x8x128xf32> to vector<8x128xf32>
    %261 = vector.shape_cast %258 : vector<8x128xf32> to vector<1x8x128xf32>
    tpu.vector_store %arg9[%c13_180, %c0_181, %c0_182], %261 {strides = array<i32>} : memref<36x8x128xf32, #tpu.memory_space<vmem>>, vector<1x8x128xf32>,
    %262 = arith.mulf %257, %257 : vector<8x128xf32>
    %cst_183 = arith.constant dense<0.000000e+00> : vector<8x128xf32>
    %263 = tpu.matmul %262, %2, %cst_183 {dimension_numbers = #tpu.dot_dimension_numbers<[1], [0], [0], [1], [0, 0, 1, 1], [], []>} : vector<8x128xf32>, vector<128x128xf32>, vector<8x128xf32> -> vector<8x128xf32>
    %264 = vector.broadcast %1 : vector<1x128xf32> to vector<8x128xf32>
    %265 = arith.subf %264, %263 : vector<8x128xf32>
    %c13_184 = arith.constant 13 : index
    %c0_185 = arith.constant 0 : index
    %c0_186 = arith.constant 0 : index
    %266 = vector.load %arg10[%c13_184, %c0_185, %c0_186] : memref<36x8x128xf32, #tpu.memory_space<vmem>>, vector<1x8x128xf32>
    %267 = vector.shape_cast %266 : vector<1x8x128xf32> to vector<8x128xf32>
    %268 = vector.shape_cast %265 : vector<8x128xf32> to vector<1x8x128xf32>
    tpu.vector_store %arg10[%c13_184, %c0_185, %c0_186], %268 {strides = array<i32>} : memref<36x8x128xf32, #tpu.memory_space<vmem>>, vector<1x8x128xf32>,
    %c14 = arith.constant 14 : index
    %c0_187 = arith.constant 0 : index
    %c0_188 = arith.constant 0 : index
    %269 = vector.load %arg1[%c14, %c0_187, %c0_188] : memref<36x8x16xf32, #tpu.memory_space<vmem>>, vector<1x8x16xf32>
    %270 = vector.shape_cast %269 : vector<1x8x16xf32> to vector<8x16xf32>
    %c14_189 = arith.constant 14 : index
    %c0_190 = arith.constant 0 : index
    %c0_191 = arith.constant 0 : index
    %271 = vector.load %arg2[%c14_189, %c0_190, %c0_191] : memref<36x16x256xf32, #tpu.memory_space<vmem>>, vector<1x16x256xf32>
    %272 = vector.shape_cast %271 : vector<1x16x256xf32> to vector<16x256xf32>
    %cst_192 = arith.constant dense<0.000000e+00> : vector<8x256xf32>
    %273 = tpu.matmul %270, %272, %cst_192 {dimension_numbers = #tpu.dot_dimension_numbers<[1], [0], [0], [1], [0, 0, 1, 1], [], []>} : vector<8x16xf32>, vector<16x256xf32>, vector<8x256xf32> -> vector<8x256xf32>
    %274 = vector.broadcast %0 : vector<1x256xf32> to vector<8x256xf32>
    %275 = arith.addf %273, %274 : vector<8x256xf32>
    %276 = vector.extract_strided_slice %275 {offsets = [0, 0], sizes = [8, 128], strides = [1, 1]} : vector<8x256xf32> to vector<8x128xf32>
    %277 = vector.extract_strided_slice %275 {offsets = [0, 128], sizes = [8, 128], strides = [1, 1]} : vector<8x256xf32> to vector<8x128xf32>
    %c14_193 = arith.constant 14 : index
    %c0_194 = arith.constant 0 : index
    %c0_195 = arith.constant 0 : index
    %278 = vector.load %arg9[%c14_193, %c0_194, %c0_195] : memref<36x8x128xf32, #tpu.memory_space<vmem>>, vector<1x8x128xf32>
    %279 = vector.shape_cast %278 : vector<1x8x128xf32> to vector<8x128xf32>
    %280 = vector.shape_cast %277 : vector<8x128xf32> to vector<1x8x128xf32>
    tpu.vector_store %arg9[%c14_193, %c0_194, %c0_195], %280 {strides = array<i32>} : memref<36x8x128xf32, #tpu.memory_space<vmem>>, vector<1x8x128xf32>,
    %281 = arith.mulf %276, %276 : vector<8x128xf32>
    %cst_196 = arith.constant dense<0.000000e+00> : vector<8x128xf32>
    %282 = tpu.matmul %281, %2, %cst_196 {dimension_numbers = #tpu.dot_dimension_numbers<[1], [0], [0], [1], [0, 0, 1, 1], [], []>} : vector<8x128xf32>, vector<128x128xf32>, vector<8x128xf32> -> vector<8x128xf32>
    %283 = vector.broadcast %1 : vector<1x128xf32> to vector<8x128xf32>
    %284 = arith.subf %283, %282 : vector<8x128xf32>
    %c14_197 = arith.constant 14 : index
    %c0_198 = arith.constant 0 : index
    %c0_199 = arith.constant 0 : index
    %285 = vector.load %arg10[%c14_197, %c0_198, %c0_199] : memref<36x8x128xf32, #tpu.memory_space<vmem>>, vector<1x8x128xf32>
    %286 = vector.shape_cast %285 : vector<1x8x128xf32> to vector<8x128xf32>
    %287 = vector.shape_cast %284 : vector<8x128xf32> to vector<1x8x128xf32>
    tpu.vector_store %arg10[%c14_197, %c0_198, %c0_199], %287 {strides = array<i32>} : memref<36x8x128xf32, #tpu.memory_space<vmem>>, vector<1x8x128xf32>,
    %c15 = arith.constant 15 : index
    %c0_200 = arith.constant 0 : index
    %c0_201 = arith.constant 0 : index
    %288 = vector.load %arg1[%c15, %c0_200, %c0_201] : memref<36x8x16xf32, #tpu.memory_space<vmem>>, vector<1x8x16xf32>
    %289 = vector.shape_cast %288 : vector<1x8x16xf32> to vector<8x16xf32>
    %c15_202 = arith.constant 15 : index
    %c0_203 = arith.constant 0 : index
    %c0_204 = arith.constant 0 : index
    %290 = vector.load %arg2[%c15_202, %c0_203, %c0_204] : memref<36x16x256xf32, #tpu.memory_space<vmem>>, vector<1x16x256xf32>
    %291 = vector.shape_cast %290 : vector<1x16x256xf32> to vector<16x256xf32>
    %cst_205 = arith.constant dense<0.000000e+00> : vector<8x256xf32>
    %292 = tpu.matmul %289, %291, %cst_205 {dimension_numbers = #tpu.dot_dimension_numbers<[1], [0], [0], [1], [0, 0, 1, 1], [], []>} : vector<8x16xf32>, vector<16x256xf32>, vector<8x256xf32> -> vector<8x256xf32>
    %293 = vector.broadcast %0 : vector<1x256xf32> to vector<8x256xf32>
    %294 = arith.addf %292, %293 : vector<8x256xf32>
    %295 = vector.extract_strided_slice %294 {offsets = [0, 0], sizes = [8, 128], strides = [1, 1]} : vector<8x256xf32> to vector<8x128xf32>
    %296 = vector.extract_strided_slice %294 {offsets = [0, 128], sizes = [8, 128], strides = [1, 1]} : vector<8x256xf32> to vector<8x128xf32>
    %c15_206 = arith.constant 15 : index
    %c0_207 = arith.constant 0 : index
    %c0_208 = arith.constant 0 : index
    %297 = vector.load %arg9[%c15_206, %c0_207, %c0_208] : memref<36x8x128xf32, #tpu.memory_space<vmem>>, vector<1x8x128xf32>
    %298 = vector.shape_cast %297 : vector<1x8x128xf32> to vector<8x128xf32>
    %299 = vector.shape_cast %296 : vector<8x128xf32> to vector<1x8x128xf32>
    tpu.vector_store %arg9[%c15_206, %c0_207, %c0_208], %299 {strides = array<i32>} : memref<36x8x128xf32, #tpu.memory_space<vmem>>, vector<1x8x128xf32>,
    %300 = arith.mulf %295, %295 : vector<8x128xf32>
    %cst_209 = arith.constant dense<0.000000e+00> : vector<8x128xf32>
    %301 = tpu.matmul %300, %2, %cst_209 {dimension_numbers = #tpu.dot_dimension_numbers<[1], [0], [0], [1], [0, 0, 1, 1], [], []>} : vector<8x128xf32>, vector<128x128xf32>, vector<8x128xf32> -> vector<8x128xf32>
    %302 = vector.broadcast %1 : vector<1x128xf32> to vector<8x128xf32>
    %303 = arith.subf %302, %301 : vector<8x128xf32>
    %c15_210 = arith.constant 15 : index
    %c0_211 = arith.constant 0 : index
    %c0_212 = arith.constant 0 : index
    %304 = vector.load %arg10[%c15_210, %c0_211, %c0_212] : memref<36x8x128xf32, #tpu.memory_space<vmem>>, vector<1x8x128xf32>
    %305 = vector.shape_cast %304 : vector<1x8x128xf32> to vector<8x128xf32>
    %306 = vector.shape_cast %303 : vector<8x128xf32> to vector<1x8x128xf32>
    tpu.vector_store %arg10[%c15_210, %c0_211, %c0_212], %306 {strides = array<i32>} : memref<36x8x128xf32, #tpu.memory_space<vmem>>, vector<1x8x128xf32>,
    %c16 = arith.constant 16 : index
    %c0_213 = arith.constant 0 : index
    %c0_214 = arith.constant 0 : index
    %307 = vector.load %arg1[%c16, %c0_213, %c0_214] : memref<36x8x16xf32, #tpu.memory_space<vmem>>, vector<1x8x16xf32>
    %308 = vector.shape_cast %307 : vector<1x8x16xf32> to vector<8x16xf32>
    %c16_215 = arith.constant 16 : index
    %c0_216 = arith.constant 0 : index
    %c0_217 = arith.constant 0 : index
    %309 = vector.load %arg2[%c16_215, %c0_216, %c0_217] : memref<36x16x256xf32, #tpu.memory_space<vmem>>, vector<1x16x256xf32>
    %310 = vector.shape_cast %309 : vector<1x16x256xf32> to vector<16x256xf32>
    %cst_218 = arith.constant dense<0.000000e+00> : vector<8x256xf32>
    %311 = tpu.matmul %308, %310, %cst_218 {dimension_numbers = #tpu.dot_dimension_numbers<[1], [0], [0], [1], [0, 0, 1, 1], [], []>} : vector<8x16xf32>, vector<16x256xf32>, vector<8x256xf32> -> vector<8x256xf32>
    %312 = vector.broadcast %0 : vector<1x256xf32> to vector<8x256xf32>
    %313 = arith.addf %311, %312 : vector<8x256xf32>
    %314 = vector.extract_strided_slice %313 {offsets = [0, 0], sizes = [8, 128], strides = [1, 1]} : vector<8x256xf32> to vector<8x128xf32>
    %315 = vector.extract_strided_slice %313 {offsets = [0, 128], sizes = [8, 128], strides = [1, 1]} : vector<8x256xf32> to vector<8x128xf32>
    %c16_219 = arith.constant 16 : index
    %c0_220 = arith.constant 0 : index
    %c0_221 = arith.constant 0 : index
    %316 = vector.load %arg9[%c16_219, %c0_220, %c0_221] : memref<36x8x128xf32, #tpu.memory_space<vmem>>, vector<1x8x128xf32>
    %317 = vector.shape_cast %316 : vector<1x8x128xf32> to vector<8x128xf32>
    %318 = vector.shape_cast %315 : vector<8x128xf32> to vector<1x8x128xf32>
    tpu.vector_store %arg9[%c16_219, %c0_220, %c0_221], %318 {strides = array<i32>} : memref<36x8x128xf32, #tpu.memory_space<vmem>>, vector<1x8x128xf32>,
    %319 = arith.mulf %314, %314 : vector<8x128xf32>
    %cst_222 = arith.constant dense<0.000000e+00> : vector<8x128xf32>
    %320 = tpu.matmul %319, %2, %cst_222 {dimension_numbers = #tpu.dot_dimension_numbers<[1], [0], [0], [1], [0, 0, 1, 1], [], []>} : vector<8x128xf32>, vector<128x128xf32>, vector<8x128xf32> -> vector<8x128xf32>
    %321 = vector.broadcast %1 : vector<1x128xf32> to vector<8x128xf32>
    %322 = arith.subf %321, %320 : vector<8x128xf32>
    %c16_223 = arith.constant 16 : index
    %c0_224 = arith.constant 0 : index
    %c0_225 = arith.constant 0 : index
    %323 = vector.load %arg10[%c16_223, %c0_224, %c0_225] : memref<36x8x128xf32, #tpu.memory_space<vmem>>, vector<1x8x128xf32>
    %324 = vector.shape_cast %323 : vector<1x8x128xf32> to vector<8x128xf32>
    %325 = vector.shape_cast %322 : vector<8x128xf32> to vector<1x8x128xf32>
    tpu.vector_store %arg10[%c16_223, %c0_224, %c0_225], %325 {strides = array<i32>} : memref<36x8x128xf32, #tpu.memory_space<vmem>>, vector<1x8x128xf32>,
    %c17 = arith.constant 17 : index
    %c0_226 = arith.constant 0 : index
    %c0_227 = arith.constant 0 : index
    %326 = vector.load %arg1[%c17, %c0_226, %c0_227] : memref<36x8x16xf32, #tpu.memory_space<vmem>>, vector<1x8x16xf32>
    %327 = vector.shape_cast %326 : vector<1x8x16xf32> to vector<8x16xf32>
    %c17_228 = arith.constant 17 : index
    %c0_229 = arith.constant 0 : index
    %c0_230 = arith.constant 0 : index
    %328 = vector.load %arg2[%c17_228, %c0_229, %c0_230] : memref<36x16x256xf32, #tpu.memory_space<vmem>>, vector<1x16x256xf32>
    %329 = vector.shape_cast %328 : vector<1x16x256xf32> to vector<16x256xf32>
    %cst_231 = arith.constant dense<0.000000e+00> : vector<8x256xf32>
    %330 = tpu.matmul %327, %329, %cst_231 {dimension_numbers = #tpu.dot_dimension_numbers<[1], [0], [0], [1], [0, 0, 1, 1], [], []>} : vector<8x16xf32>, vector<16x256xf32>, vector<8x256xf32> -> vector<8x256xf32>
    %331 = vector.broadcast %0 : vector<1x256xf32> to vector<8x256xf32>
    %332 = arith.addf %330, %331 : vector<8x256xf32>
    %333 = vector.extract_strided_slice %332 {offsets = [0, 0], sizes = [8, 128], strides = [1, 1]} : vector<8x256xf32> to vector<8x128xf32>
    %334 = vector.extract_strided_slice %332 {offsets = [0, 128], sizes = [8, 128], strides = [1, 1]} : vector<8x256xf32> to vector<8x128xf32>
    %c17_232 = arith.constant 17 : index
    %c0_233 = arith.constant 0 : index
    %c0_234 = arith.constant 0 : index
    %335 = vector.load %arg9[%c17_232, %c0_233, %c0_234] : memref<36x8x128xf32, #tpu.memory_space<vmem>>, vector<1x8x128xf32>
    %336 = vector.shape_cast %335 : vector<1x8x128xf32> to vector<8x128xf32>
    %337 = vector.shape_cast %334 : vector<8x128xf32> to vector<1x8x128xf32>
    tpu.vector_store %arg9[%c17_232, %c0_233, %c0_234], %337 {strides = array<i32>} : memref<36x8x128xf32, #tpu.memory_space<vmem>>, vector<1x8x128xf32>,
    %338 = arith.mulf %333, %333 : vector<8x128xf32>
    %cst_235 = arith.constant dense<0.000000e+00> : vector<8x128xf32>
    %339 = tpu.matmul %338, %2, %cst_235 {dimension_numbers = #tpu.dot_dimension_numbers<[1], [0], [0], [1], [0, 0, 1, 1], [], []>} : vector<8x128xf32>, vector<128x128xf32>, vector<8x128xf32> -> vector<8x128xf32>
    %340 = vector.broadcast %1 : vector<1x128xf32> to vector<8x128xf32>
    %341 = arith.subf %340, %339 : vector<8x128xf32>
    %c17_236 = arith.constant 17 : index
    %c0_237 = arith.constant 0 : index
    %c0_238 = arith.constant 0 : index
    %342 = vector.load %arg10[%c17_236, %c0_237, %c0_238] : memref<36x8x128xf32, #tpu.memory_space<vmem>>, vector<1x8x128xf32>
    %343 = vector.shape_cast %342 : vector<1x8x128xf32> to vector<8x128xf32>
    %344 = vector.shape_cast %341 : vector<8x128xf32> to vector<1x8x128xf32>
    tpu.vector_store %arg10[%c17_236, %c0_237, %c0_238], %344 {strides = array<i32>} : memref<36x8x128xf32, #tpu.memory_space<vmem>>, vector<1x8x128xf32>,
    %c18 = arith.constant 18 : index
    %c0_239 = arith.constant 0 : index
    %c0_240 = arith.constant 0 : index
    %345 = vector.load %arg1[%c18, %c0_239, %c0_240] : memref<36x8x16xf32, #tpu.memory_space<vmem>>, vector<1x8x16xf32>
    %346 = vector.shape_cast %345 : vector<1x8x16xf32> to vector<8x16xf32>
    %c18_241 = arith.constant 18 : index
    %c0_242 = arith.constant 0 : index
    %c0_243 = arith.constant 0 : index
    %347 = vector.load %arg2[%c18_241, %c0_242, %c0_243] : memref<36x16x256xf32, #tpu.memory_space<vmem>>, vector<1x16x256xf32>
    %348 = vector.shape_cast %347 : vector<1x16x256xf32> to vector<16x256xf32>
    %cst_244 = arith.constant dense<0.000000e+00> : vector<8x256xf32>
    %349 = tpu.matmul %346, %348, %cst_244 {dimension_numbers = #tpu.dot_dimension_numbers<[1], [0], [0], [1], [0, 0, 1, 1], [], []>} : vector<8x16xf32>, vector<16x256xf32>, vector<8x256xf32> -> vector<8x256xf32>
    %350 = vector.broadcast %0 : vector<1x256xf32> to vector<8x256xf32>
    %351 = arith.addf %349, %350 : vector<8x256xf32>
    %352 = vector.extract_strided_slice %351 {offsets = [0, 0], sizes = [8, 128], strides = [1, 1]} : vector<8x256xf32> to vector<8x128xf32>
    %353 = vector.extract_strided_slice %351 {offsets = [0, 128], sizes = [8, 128], strides = [1, 1]} : vector<8x256xf32> to vector<8x128xf32>
    %c18_245 = arith.constant 18 : index
    %c0_246 = arith.constant 0 : index
    %c0_247 = arith.constant 0 : index
    %354 = vector.load %arg9[%c18_245, %c0_246, %c0_247] : memref<36x8x128xf32, #tpu.memory_space<vmem>>, vector<1x8x128xf32>
    %355 = vector.shape_cast %354 : vector<1x8x128xf32> to vector<8x128xf32>
    %356 = vector.shape_cast %353 : vector<8x128xf32> to vector<1x8x128xf32>
    tpu.vector_store %arg9[%c18_245, %c0_246, %c0_247], %356 {strides = array<i32>} : memref<36x8x128xf32, #tpu.memory_space<vmem>>, vector<1x8x128xf32>,
    %357 = arith.mulf %352, %352 : vector<8x128xf32>
    %cst_248 = arith.constant dense<0.000000e+00> : vector<8x128xf32>
    %358 = tpu.matmul %357, %2, %cst_248 {dimension_numbers = #tpu.dot_dimension_numbers<[1], [0], [0], [1], [0, 0, 1, 1], [], []>} : vector<8x128xf32>, vector<128x128xf32>, vector<8x128xf32> -> vector<8x128xf32>
    %359 = vector.broadcast %1 : vector<1x128xf32> to vector<8x128xf32>
    %360 = arith.subf %359, %358 : vector<8x128xf32>
    %c18_249 = arith.constant 18 : index
    %c0_250 = arith.constant 0 : index
    %c0_251 = arith.constant 0 : index
    %361 = vector.load %arg10[%c18_249, %c0_250, %c0_251] : memref<36x8x128xf32, #tpu.memory_space<vmem>>, vector<1x8x128xf32>
    %362 = vector.shape_cast %361 : vector<1x8x128xf32> to vector<8x128xf32>
    %363 = vector.shape_cast %360 : vector<8x128xf32> to vector<1x8x128xf32>
    tpu.vector_store %arg10[%c18_249, %c0_250, %c0_251], %363 {strides = array<i32>} : memref<36x8x128xf32, #tpu.memory_space<vmem>>, vector<1x8x128xf32>,
    %c19 = arith.constant 19 : index
    %c0_252 = arith.constant 0 : index
    %c0_253 = arith.constant 0 : index
    %364 = vector.load %arg1[%c19, %c0_252, %c0_253] : memref<36x8x16xf32, #tpu.memory_space<vmem>>, vector<1x8x16xf32>
    %365 = vector.shape_cast %364 : vector<1x8x16xf32> to vector<8x16xf32>
    %c19_254 = arith.constant 19 : index
    %c0_255 = arith.constant 0 : index
    %c0_256 = arith.constant 0 : index
    %366 = vector.load %arg2[%c19_254, %c0_255, %c0_256] : memref<36x16x256xf32, #tpu.memory_space<vmem>>, vector<1x16x256xf32>
    %367 = vector.shape_cast %366 : vector<1x16x256xf32> to vector<16x256xf32>
    %cst_257 = arith.constant dense<0.000000e+00> : vector<8x256xf32>
    %368 = tpu.matmul %365, %367, %cst_257 {dimension_numbers = #tpu.dot_dimension_numbers<[1], [0], [0], [1], [0, 0, 1, 1], [], []>} : vector<8x16xf32>, vector<16x256xf32>, vector<8x256xf32> -> vector<8x256xf32>
    %369 = vector.broadcast %0 : vector<1x256xf32> to vector<8x256xf32>
    %370 = arith.addf %368, %369 : vector<8x256xf32>
    %371 = vector.extract_strided_slice %370 {offsets = [0, 0], sizes = [8, 128], strides = [1, 1]} : vector<8x256xf32> to vector<8x128xf32>
    %372 = vector.extract_strided_slice %370 {offsets = [0, 128], sizes = [8, 128], strides = [1, 1]} : vector<8x256xf32> to vector<8x128xf32>
    %c19_258 = arith.constant 19 : index
    %c0_259 = arith.constant 0 : index
    %c0_260 = arith.constant 0 : index
    %373 = vector.load %arg9[%c19_258, %c0_259, %c0_260] : memref<36x8x128xf32, #tpu.memory_space<vmem>>, vector<1x8x128xf32>
    %374 = vector.shape_cast %373 : vector<1x8x128xf32> to vector<8x128xf32>
    %375 = vector.shape_cast %372 : vector<8x128xf32> to vector<1x8x128xf32>
    tpu.vector_store %arg9[%c19_258, %c0_259, %c0_260], %375 {strides = array<i32>} : memref<36x8x128xf32, #tpu.memory_space<vmem>>, vector<1x8x128xf32>,
    %376 = arith.mulf %371, %371 : vector<8x128xf32>
    %cst_261 = arith.constant dense<0.000000e+00> : vector<8x128xf32>
    %377 = tpu.matmul %376, %2, %cst_261 {dimension_numbers = #tpu.dot_dimension_numbers<[1], [0], [0], [1], [0, 0, 1, 1], [], []>} : vector<8x128xf32>, vector<128x128xf32>, vector<8x128xf32> -> vector<8x128xf32>
    %378 = vector.broadcast %1 : vector<1x128xf32> to vector<8x128xf32>
    %379 = arith.subf %378, %377 : vector<8x128xf32>
    %c19_262 = arith.constant 19 : index
    %c0_263 = arith.constant 0 : index
    %c0_264 = arith.constant 0 : index
    %380 = vector.load %arg10[%c19_262, %c0_263, %c0_264] : memref<36x8x128xf32, #tpu.memory_space<vmem>>, vector<1x8x128xf32>
    %381 = vector.shape_cast %380 : vector<1x8x128xf32> to vector<8x128xf32>
    %382 = vector.shape_cast %379 : vector<8x128xf32> to vector<1x8x128xf32>
    tpu.vector_store %arg10[%c19_262, %c0_263, %c0_264], %382 {strides = array<i32>} : memref<36x8x128xf32, #tpu.memory_space<vmem>>, vector<1x8x128xf32>,
    %c20 = arith.constant 20 : index
    %c0_265 = arith.constant 0 : index
    %c0_266 = arith.constant 0 : index
    %383 = vector.load %arg1[%c20, %c0_265, %c0_266] : memref<36x8x16xf32, #tpu.memory_space<vmem>>, vector<1x8x16xf32>
    %384 = vector.shape_cast %383 : vector<1x8x16xf32> to vector<8x16xf32>
    %c20_267 = arith.constant 20 : index
    %c0_268 = arith.constant 0 : index
    %c0_269 = arith.constant 0 : index
    %385 = vector.load %arg2[%c20_267, %c0_268, %c0_269] : memref<36x16x256xf32, #tpu.memory_space<vmem>>, vector<1x16x256xf32>
    %386 = vector.shape_cast %385 : vector<1x16x256xf32> to vector<16x256xf32>
    %cst_270 = arith.constant dense<0.000000e+00> : vector<8x256xf32>
    %387 = tpu.matmul %384, %386, %cst_270 {dimension_numbers = #tpu.dot_dimension_numbers<[1], [0], [0], [1], [0, 0, 1, 1], [], []>} : vector<8x16xf32>, vector<16x256xf32>, vector<8x256xf32> -> vector<8x256xf32>
    %388 = vector.broadcast %0 : vector<1x256xf32> to vector<8x256xf32>
    %389 = arith.addf %387, %388 : vector<8x256xf32>
    %390 = vector.extract_strided_slice %389 {offsets = [0, 0], sizes = [8, 128], strides = [1, 1]} : vector<8x256xf32> to vector<8x128xf32>
    %391 = vector.extract_strided_slice %389 {offsets = [0, 128], sizes = [8, 128], strides = [1, 1]} : vector<8x256xf32> to vector<8x128xf32>
    %c20_271 = arith.constant 20 : index
    %c0_272 = arith.constant 0 : index
    %c0_273 = arith.constant 0 : index
    %392 = vector.load %arg9[%c20_271, %c0_272, %c0_273] : memref<36x8x128xf32, #tpu.memory_space<vmem>>, vector<1x8x128xf32>
    %393 = vector.shape_cast %392 : vector<1x8x128xf32> to vector<8x128xf32>
    %394 = vector.shape_cast %391 : vector<8x128xf32> to vector<1x8x128xf32>
    tpu.vector_store %arg9[%c20_271, %c0_272, %c0_273], %394 {strides = array<i32>} : memref<36x8x128xf32, #tpu.memory_space<vmem>>, vector<1x8x128xf32>,
    %395 = arith.mulf %390, %390 : vector<8x128xf32>
    %cst_274 = arith.constant dense<0.000000e+00> : vector<8x128xf32>
    %396 = tpu.matmul %395, %2, %cst_274 {dimension_numbers = #tpu.dot_dimension_numbers<[1], [0], [0], [1], [0, 0, 1, 1], [], []>} : vector<8x128xf32>, vector<128x128xf32>, vector<8x128xf32> -> vector<8x128xf32>
    %397 = vector.broadcast %1 : vector<1x128xf32> to vector<8x128xf32>
    %398 = arith.subf %397, %396 : vector<8x128xf32>
    %c20_275 = arith.constant 20 : index
    %c0_276 = arith.constant 0 : index
    %c0_277 = arith.constant 0 : index
    %399 = vector.load %arg10[%c20_275, %c0_276, %c0_277] : memref<36x8x128xf32, #tpu.memory_space<vmem>>, vector<1x8x128xf32>
    %400 = vector.shape_cast %399 : vector<1x8x128xf32> to vector<8x128xf32>
    %401 = vector.shape_cast %398 : vector<8x128xf32> to vector<1x8x128xf32>
    tpu.vector_store %arg10[%c20_275, %c0_276, %c0_277], %401 {strides = array<i32>} : memref<36x8x128xf32, #tpu.memory_space<vmem>>, vector<1x8x128xf32>,
    %c21 = arith.constant 21 : index
    %c0_278 = arith.constant 0 : index
    %c0_279 = arith.constant 0 : index
    %402 = vector.load %arg1[%c21, %c0_278, %c0_279] : memref<36x8x16xf32, #tpu.memory_space<vmem>>, vector<1x8x16xf32>
    %403 = vector.shape_cast %402 : vector<1x8x16xf32> to vector<8x16xf32>
    %c21_280 = arith.constant 21 : index
    %c0_281 = arith.constant 0 : index
    %c0_282 = arith.constant 0 : index
    %404 = vector.load %arg2[%c21_280, %c0_281, %c0_282] : memref<36x16x256xf32, #tpu.memory_space<vmem>>, vector<1x16x256xf32>
    %405 = vector.shape_cast %404 : vector<1x16x256xf32> to vector<16x256xf32>
    %cst_283 = arith.constant dense<0.000000e+00> : vector<8x256xf32>
    %406 = tpu.matmul %403, %405, %cst_283 {dimension_numbers = #tpu.dot_dimension_numbers<[1], [0], [0], [1], [0, 0, 1, 1], [], []>} : vector<8x16xf32>, vector<16x256xf32>, vector<8x256xf32> -> vector<8x256xf32>
    %407 = vector.broadcast %0 : vector<1x256xf32> to vector<8x256xf32>
    %408 = arith.addf %406, %407 : vector<8x256xf32>
    %409 = vector.extract_strided_slice %408 {offsets = [0, 0], sizes = [8, 128], strides = [1, 1]} : vector<8x256xf32> to vector<8x128xf32>
    %410 = vector.extract_strided_slice %408 {offsets = [0, 128], sizes = [8, 128], strides = [1, 1]} : vector<8x256xf32> to vector<8x128xf32>
    %c21_284 = arith.constant 21 : index
    %c0_285 = arith.constant 0 : index
    %c0_286 = arith.constant 0 : index
    %411 = vector.load %arg9[%c21_284, %c0_285, %c0_286] : memref<36x8x128xf32, #tpu.memory_space<vmem>>, vector<1x8x128xf32>
    %412 = vector.shape_cast %411 : vector<1x8x128xf32> to vector<8x128xf32>
    %413 = vector.shape_cast %410 : vector<8x128xf32> to vector<1x8x128xf32>
    tpu.vector_store %arg9[%c21_284, %c0_285, %c0_286], %413 {strides = array<i32>} : memref<36x8x128xf32, #tpu.memory_space<vmem>>, vector<1x8x128xf32>,
    %414 = arith.mulf %409, %409 : vector<8x128xf32>
    %cst_287 = arith.constant dense<0.000000e+00> : vector<8x128xf32>
    %415 = tpu.matmul %414, %2, %cst_287 {dimension_numbers = #tpu.dot_dimension_numbers<[1], [0], [0], [1], [0, 0, 1, 1], [], []>} : vector<8x128xf32>, vector<128x128xf32>, vector<8x128xf32> -> vector<8x128xf32>
    %416 = vector.broadcast %1 : vector<1x128xf32> to vector<8x128xf32>
    %417 = arith.subf %416, %415 : vector<8x128xf32>
    %c21_288 = arith.constant 21 : index
    %c0_289 = arith.constant 0 : index
    %c0_290 = arith.constant 0 : index
    %418 = vector.load %arg10[%c21_288, %c0_289, %c0_290] : memref<36x8x128xf32, #tpu.memory_space<vmem>>, vector<1x8x128xf32>
    %419 = vector.shape_cast %418 : vector<1x8x128xf32> to vector<8x128xf32>
    %420 = vector.shape_cast %417 : vector<8x128xf32> to vector<1x8x128xf32>
    tpu.vector_store %arg10[%c21_288, %c0_289, %c0_290], %420 {strides = array<i32>} : memref<36x8x128xf32, #tpu.memory_space<vmem>>, vector<1x8x128xf32>,
    %c22 = arith.constant 22 : index
    %c0_291 = arith.constant 0 : index
    %c0_292 = arith.constant 0 : index
    %421 = vector.load %arg1[%c22, %c0_291, %c0_292] : memref<36x8x16xf32, #tpu.memory_space<vmem>>, vector<1x8x16xf32>
    %422 = vector.shape_cast %421 : vector<1x8x16xf32> to vector<8x16xf32>
    %c22_293 = arith.constant 22 : index
    %c0_294 = arith.constant 0 : index
    %c0_295 = arith.constant 0 : index
    %423 = vector.load %arg2[%c22_293, %c0_294, %c0_295] : memref<36x16x256xf32, #tpu.memory_space<vmem>>, vector<1x16x256xf32>
    %424 = vector.shape_cast %423 : vector<1x16x256xf32> to vector<16x256xf32>
    %cst_296 = arith.constant dense<0.000000e+00> : vector<8x256xf32>
    %425 = tpu.matmul %422, %424, %cst_296 {dimension_numbers = #tpu.dot_dimension_numbers<[1], [0], [0], [1], [0, 0, 1, 1], [], []>} : vector<8x16xf32>, vector<16x256xf32>, vector<8x256xf32> -> vector<8x256xf32>
    %426 = vector.broadcast %0 : vector<1x256xf32> to vector<8x256xf32>
    %427 = arith.addf %425, %426 : vector<8x256xf32>
    %428 = vector.extract_strided_slice %427 {offsets = [0, 0], sizes = [8, 128], strides = [1, 1]} : vector<8x256xf32> to vector<8x128xf32>
    %429 = vector.extract_strided_slice %427 {offsets = [0, 128], sizes = [8, 128], strides = [1, 1]} : vector<8x256xf32> to vector<8x128xf32>
    %c22_297 = arith.constant 22 : index
    %c0_298 = arith.constant 0 : index
    %c0_299 = arith.constant 0 : index
    %430 = vector.load %arg9[%c22_297, %c0_298, %c0_299] : memref<36x8x128xf32, #tpu.memory_space<vmem>>, vector<1x8x128xf32>
    %431 = vector.shape_cast %430 : vector<1x8x128xf32> to vector<8x128xf32>
    %432 = vector.shape_cast %429 : vector<8x128xf32> to vector<1x8x128xf32>
    tpu.vector_store %arg9[%c22_297, %c0_298, %c0_299], %432 {strides = array<i32>} : memref<36x8x128xf32, #tpu.memory_space<vmem>>, vector<1x8x128xf32>,
    %433 = arith.mulf %428, %428 : vector<8x128xf32>
    %cst_300 = arith.constant dense<0.000000e+00> : vector<8x128xf32>
    %434 = tpu.matmul %433, %2, %cst_300 {dimension_numbers = #tpu.dot_dimension_numbers<[1], [0], [0], [1], [0, 0, 1, 1], [], []>} : vector<8x128xf32>, vector<128x128xf32>, vector<8x128xf32> -> vector<8x128xf32>
    %435 = vector.broadcast %1 : vector<1x128xf32> to vector<8x128xf32>
    %436 = arith.subf %435, %434 : vector<8x128xf32>
    %c22_301 = arith.constant 22 : index
    %c0_302 = arith.constant 0 : index
    %c0_303 = arith.constant 0 : index
    %437 = vector.load %arg10[%c22_301, %c0_302, %c0_303] : memref<36x8x128xf32, #tpu.memory_space<vmem>>, vector<1x8x128xf32>
    %438 = vector.shape_cast %437 : vector<1x8x128xf32> to vector<8x128xf32>
    %439 = vector.shape_cast %436 : vector<8x128xf32> to vector<1x8x128xf32>
    tpu.vector_store %arg10[%c22_301, %c0_302, %c0_303], %439 {strides = array<i32>} : memref<36x8x128xf32, #tpu.memory_space<vmem>>, vector<1x8x128xf32>,
    %c23 = arith.constant 23 : index
    %c0_304 = arith.constant 0 : index
    %c0_305 = arith.constant 0 : index
    %440 = vector.load %arg1[%c23, %c0_304, %c0_305] : memref<36x8x16xf32, #tpu.memory_space<vmem>>, vector<1x8x16xf32>
    %441 = vector.shape_cast %440 : vector<1x8x16xf32> to vector<8x16xf32>
    %c23_306 = arith.constant 23 : index
    %c0_307 = arith.constant 0 : index
    %c0_308 = arith.constant 0 : index
    %442 = vector.load %arg2[%c23_306, %c0_307, %c0_308] : memref<36x16x256xf32, #tpu.memory_space<vmem>>, vector<1x16x256xf32>
    %443 = vector.shape_cast %442 : vector<1x16x256xf32> to vector<16x256xf32>
    %cst_309 = arith.constant dense<0.000000e+00> : vector<8x256xf32>
    %444 = tpu.matmul %441, %443, %cst_309 {dimension_numbers = #tpu.dot_dimension_numbers<[1], [0], [0], [1], [0, 0, 1, 1], [], []>} : vector<8x16xf32>, vector<16x256xf32>, vector<8x256xf32> -> vector<8x256xf32>
    %445 = vector.broadcast %0 : vector<1x256xf32> to vector<8x256xf32>
    %446 = arith.addf %444, %445 : vector<8x256xf32>
    %447 = vector.extract_strided_slice %446 {offsets = [0, 0], sizes = [8, 128], strides = [1, 1]} : vector<8x256xf32> to vector<8x128xf32>
    %448 = vector.extract_strided_slice %446 {offsets = [0, 128], sizes = [8, 128], strides = [1, 1]} : vector<8x256xf32> to vector<8x128xf32>
    %c23_310 = arith.constant 23 : index
    %c0_311 = arith.constant 0 : index
    %c0_312 = arith.constant 0 : index
    %449 = vector.load %arg9[%c23_310, %c0_311, %c0_312] : memref<36x8x128xf32, #tpu.memory_space<vmem>>, vector<1x8x128xf32>
    %450 = vector.shape_cast %449 : vector<1x8x128xf32> to vector<8x128xf32>
    %451 = vector.shape_cast %448 : vector<8x128xf32> to vector<1x8x128xf32>
    tpu.vector_store %arg9[%c23_310, %c0_311, %c0_312], %451 {strides = array<i32>} : memref<36x8x128xf32, #tpu.memory_space<vmem>>, vector<1x8x128xf32>,
    %452 = arith.mulf %447, %447 : vector<8x128xf32>
    %cst_313 = arith.constant dense<0.000000e+00> : vector<8x128xf32>
    %453 = tpu.matmul %452, %2, %cst_313 {dimension_numbers = #tpu.dot_dimension_numbers<[1], [0], [0], [1], [0, 0, 1, 1], [], []>} : vector<8x128xf32>, vector<128x128xf32>, vector<8x128xf32> -> vector<8x128xf32>
    %454 = vector.broadcast %1 : vector<1x128xf32> to vector<8x128xf32>
    %455 = arith.subf %454, %453 : vector<8x128xf32>
    %c23_314 = arith.constant 23 : index
    %c0_315 = arith.constant 0 : index
    %c0_316 = arith.constant 0 : index
    %456 = vector.load %arg10[%c23_314, %c0_315, %c0_316] : memref<36x8x128xf32, #tpu.memory_space<vmem>>, vector<1x8x128xf32>
    %457 = vector.shape_cast %456 : vector<1x8x128xf32> to vector<8x128xf32>
    %458 = vector.shape_cast %455 : vector<8x128xf32> to vector<1x8x128xf32>
    tpu.vector_store %arg10[%c23_314, %c0_315, %c0_316], %458 {strides = array<i32>} : memref<36x8x128xf32, #tpu.memory_space<vmem>>, vector<1x8x128xf32>,
    %c24 = arith.constant 24 : index
    %c0_317 = arith.constant 0 : index
    %c0_318 = arith.constant 0 : index
    %459 = vector.load %arg1[%c24, %c0_317, %c0_318] : memref<36x8x16xf32, #tpu.memory_space<vmem>>, vector<1x8x16xf32>
    %460 = vector.shape_cast %459 : vector<1x8x16xf32> to vector<8x16xf32>
    %c24_319 = arith.constant 24 : index
    %c0_320 = arith.constant 0 : index
    %c0_321 = arith.constant 0 : index
    %461 = vector.load %arg2[%c24_319, %c0_320, %c0_321] : memref<36x16x256xf32, #tpu.memory_space<vmem>>, vector<1x16x256xf32>
    %462 = vector.shape_cast %461 : vector<1x16x256xf32> to vector<16x256xf32>
    %cst_322 = arith.constant dense<0.000000e+00> : vector<8x256xf32>
    %463 = tpu.matmul %460, %462, %cst_322 {dimension_numbers = #tpu.dot_dimension_numbers<[1], [0], [0], [1], [0, 0, 1, 1], [], []>} : vector<8x16xf32>, vector<16x256xf32>, vector<8x256xf32> -> vector<8x256xf32>
    %464 = vector.broadcast %0 : vector<1x256xf32> to vector<8x256xf32>
    %465 = arith.addf %463, %464 : vector<8x256xf32>
    %466 = vector.extract_strided_slice %465 {offsets = [0, 0], sizes = [8, 128], strides = [1, 1]} : vector<8x256xf32> to vector<8x128xf32>
    %467 = vector.extract_strided_slice %465 {offsets = [0, 128], sizes = [8, 128], strides = [1, 1]} : vector<8x256xf32> to vector<8x128xf32>
    %c24_323 = arith.constant 24 : index
    %c0_324 = arith.constant 0 : index
    %c0_325 = arith.constant 0 : index
    %468 = vector.load %arg9[%c24_323, %c0_324, %c0_325] : memref<36x8x128xf32, #tpu.memory_space<vmem>>, vector<1x8x128xf32>
    %469 = vector.shape_cast %468 : vector<1x8x128xf32> to vector<8x128xf32>
    %470 = vector.shape_cast %467 : vector<8x128xf32> to vector<1x8x128xf32>
    tpu.vector_store %arg9[%c24_323, %c0_324, %c0_325], %470 {strides = array<i32>} : memref<36x8x128xf32, #tpu.memory_space<vmem>>, vector<1x8x128xf32>,
    %471 = arith.mulf %466, %466 : vector<8x128xf32>
    %cst_326 = arith.constant dense<0.000000e+00> : vector<8x128xf32>
    %472 = tpu.matmul %471, %2, %cst_326 {dimension_numbers = #tpu.dot_dimension_numbers<[1], [0], [0], [1], [0, 0, 1, 1], [], []>} : vector<8x128xf32>, vector<128x128xf32>, vector<8x128xf32> -> vector<8x128xf32>
    %473 = vector.broadcast %1 : vector<1x128xf32> to vector<8x128xf32>
    %474 = arith.subf %473, %472 : vector<8x128xf32>
    %c24_327 = arith.constant 24 : index
    %c0_328 = arith.constant 0 : index
    %c0_329 = arith.constant 0 : index
    %475 = vector.load %arg10[%c24_327, %c0_328, %c0_329] : memref<36x8x128xf32, #tpu.memory_space<vmem>>, vector<1x8x128xf32>
    %476 = vector.shape_cast %475 : vector<1x8x128xf32> to vector<8x128xf32>
    %477 = vector.shape_cast %474 : vector<8x128xf32> to vector<1x8x128xf32>
    tpu.vector_store %arg10[%c24_327, %c0_328, %c0_329], %477 {strides = array<i32>} : memref<36x8x128xf32, #tpu.memory_space<vmem>>, vector<1x8x128xf32>,
    %c25 = arith.constant 25 : index
    %c0_330 = arith.constant 0 : index
    %c0_331 = arith.constant 0 : index
    %478 = vector.load %arg1[%c25, %c0_330, %c0_331] : memref<36x8x16xf32, #tpu.memory_space<vmem>>, vector<1x8x16xf32>
    %479 = vector.shape_cast %478 : vector<1x8x16xf32> to vector<8x16xf32>
    %c25_332 = arith.constant 25 : index
    %c0_333 = arith.constant 0 : index
    %c0_334 = arith.constant 0 : index
    %480 = vector.load %arg2[%c25_332, %c0_333, %c0_334] : memref<36x16x256xf32, #tpu.memory_space<vmem>>, vector<1x16x256xf32>
    %481 = vector.shape_cast %480 : vector<1x16x256xf32> to vector<16x256xf32>
    %cst_335 = arith.constant dense<0.000000e+00> : vector<8x256xf32>
    %482 = tpu.matmul %479, %481, %cst_335 {dimension_numbers = #tpu.dot_dimension_numbers<[1], [0], [0], [1], [0, 0, 1, 1], [], []>} : vector<8x16xf32>, vector<16x256xf32>, vector<8x256xf32> -> vector<8x256xf32>
    %483 = vector.broadcast %0 : vector<1x256xf32> to vector<8x256xf32>
    %484 = arith.addf %482, %483 : vector<8x256xf32>
    %485 = vector.extract_strided_slice %484 {offsets = [0, 0], sizes = [8, 128], strides = [1, 1]} : vector<8x256xf32> to vector<8x128xf32>
    %486 = vector.extract_strided_slice %484 {offsets = [0, 128], sizes = [8, 128], strides = [1, 1]} : vector<8x256xf32> to vector<8x128xf32>
    %c25_336 = arith.constant 25 : index
    %c0_337 = arith.constant 0 : index
    %c0_338 = arith.constant 0 : index
    %487 = vector.load %arg9[%c25_336, %c0_337, %c0_338] : memref<36x8x128xf32, #tpu.memory_space<vmem>>, vector<1x8x128xf32>
    %488 = vector.shape_cast %487 : vector<1x8x128xf32> to vector<8x128xf32>
    %489 = vector.shape_cast %486 : vector<8x128xf32> to vector<1x8x128xf32>
    tpu.vector_store %arg9[%c25_336, %c0_337, %c0_338], %489 {strides = array<i32>} : memref<36x8x128xf32, #tpu.memory_space<vmem>>, vector<1x8x128xf32>,
    %490 = arith.mulf %485, %485 : vector<8x128xf32>
    %cst_339 = arith.constant dense<0.000000e+00> : vector<8x128xf32>
    %491 = tpu.matmul %490, %2, %cst_339 {dimension_numbers = #tpu.dot_dimension_numbers<[1], [0], [0], [1], [0, 0, 1, 1], [], []>} : vector<8x128xf32>, vector<128x128xf32>, vector<8x128xf32> -> vector<8x128xf32>
    %492 = vector.broadcast %1 : vector<1x128xf32> to vector<8x128xf32>
    %493 = arith.subf %492, %491 : vector<8x128xf32>
    %c25_340 = arith.constant 25 : index
    %c0_341 = arith.constant 0 : index
    %c0_342 = arith.constant 0 : index
    %494 = vector.load %arg10[%c25_340, %c0_341, %c0_342] : memref<36x8x128xf32, #tpu.memory_space<vmem>>, vector<1x8x128xf32>
    %495 = vector.shape_cast %494 : vector<1x8x128xf32> to vector<8x128xf32>
    %496 = vector.shape_cast %493 : vector<8x128xf32> to vector<1x8x128xf32>
    tpu.vector_store %arg10[%c25_340, %c0_341, %c0_342], %496 {strides = array<i32>} : memref<36x8x128xf32, #tpu.memory_space<vmem>>, vector<1x8x128xf32>,
    %c26 = arith.constant 26 : index
    %c0_343 = arith.constant 0 : index
    %c0_344 = arith.constant 0 : index
    %497 = vector.load %arg1[%c26, %c0_343, %c0_344] : memref<36x8x16xf32, #tpu.memory_space<vmem>>, vector<1x8x16xf32>
    %498 = vector.shape_cast %497 : vector<1x8x16xf32> to vector<8x16xf32>
    %c26_345 = arith.constant 26 : index
    %c0_346 = arith.constant 0 : index
    %c0_347 = arith.constant 0 : index
    %499 = vector.load %arg2[%c26_345, %c0_346, %c0_347] : memref<36x16x256xf32, #tpu.memory_space<vmem>>, vector<1x16x256xf32>
    %500 = vector.shape_cast %499 : vector<1x16x256xf32> to vector<16x256xf32>
    %cst_348 = arith.constant dense<0.000000e+00> : vector<8x256xf32>
    %501 = tpu.matmul %498, %500, %cst_348 {dimension_numbers = #tpu.dot_dimension_numbers<[1], [0], [0], [1], [0, 0, 1, 1], [], []>} : vector<8x16xf32>, vector<16x256xf32>, vector<8x256xf32> -> vector<8x256xf32>
    %502 = vector.broadcast %0 : vector<1x256xf32> to vector<8x256xf32>
    %503 = arith.addf %501, %502 : vector<8x256xf32>
    %504 = vector.extract_strided_slice %503 {offsets = [0, 0], sizes = [8, 128], strides = [1, 1]} : vector<8x256xf32> to vector<8x128xf32>
    %505 = vector.extract_strided_slice %503 {offsets = [0, 128], sizes = [8, 128], strides = [1, 1]} : vector<8x256xf32> to vector<8x128xf32>
    %c26_349 = arith.constant 26 : index
    %c0_350 = arith.constant 0 : index
    %c0_351 = arith.constant 0 : index
    %506 = vector.load %arg9[%c26_349, %c0_350, %c0_351] : memref<36x8x128xf32, #tpu.memory_space<vmem>>, vector<1x8x128xf32>
    %507 = vector.shape_cast %506 : vector<1x8x128xf32> to vector<8x128xf32>
    %508 = vector.shape_cast %505 : vector<8x128xf32> to vector<1x8x128xf32>
    tpu.vector_store %arg9[%c26_349, %c0_350, %c0_351], %508 {strides = array<i32>} : memref<36x8x128xf32, #tpu.memory_space<vmem>>, vector<1x8x128xf32>,
    %509 = arith.mulf %504, %504 : vector<8x128xf32>
    %cst_352 = arith.constant dense<0.000000e+00> : vector<8x128xf32>
    %510 = tpu.matmul %509, %2, %cst_352 {dimension_numbers = #tpu.dot_dimension_numbers<[1], [0], [0], [1], [0, 0, 1, 1], [], []>} : vector<8x128xf32>, vector<128x128xf32>, vector<8x128xf32> -> vector<8x128xf32>
    %511 = vector.broadcast %1 : vector<1x128xf32> to vector<8x128xf32>
    %512 = arith.subf %511, %510 : vector<8x128xf32>
    %c26_353 = arith.constant 26 : index
    %c0_354 = arith.constant 0 : index
    %c0_355 = arith.constant 0 : index
    %513 = vector.load %arg10[%c26_353, %c0_354, %c0_355] : memref<36x8x128xf32, #tpu.memory_space<vmem>>, vector<1x8x128xf32>
    %514 = vector.shape_cast %513 : vector<1x8x128xf32> to vector<8x128xf32>
    %515 = vector.shape_cast %512 : vector<8x128xf32> to vector<1x8x128xf32>
    tpu.vector_store %arg10[%c26_353, %c0_354, %c0_355], %515 {strides = array<i32>} : memref<36x8x128xf32, #tpu.memory_space<vmem>>, vector<1x8x128xf32>,
    %c27 = arith.constant 27 : index
    %c0_356 = arith.constant 0 : index
    %c0_357 = arith.constant 0 : index
    %516 = vector.load %arg1[%c27, %c0_356, %c0_357] : memref<36x8x16xf32, #tpu.memory_space<vmem>>, vector<1x8x16xf32>
    %517 = vector.shape_cast %516 : vector<1x8x16xf32> to vector<8x16xf32>
    %c27_358 = arith.constant 27 : index
    %c0_359 = arith.constant 0 : index
    %c0_360 = arith.constant 0 : index
    %518 = vector.load %arg2[%c27_358, %c0_359, %c0_360] : memref<36x16x256xf32, #tpu.memory_space<vmem>>, vector<1x16x256xf32>
    %519 = vector.shape_cast %518 : vector<1x16x256xf32> to vector<16x256xf32>
    %cst_361 = arith.constant dense<0.000000e+00> : vector<8x256xf32>
    %520 = tpu.matmul %517, %519, %cst_361 {dimension_numbers = #tpu.dot_dimension_numbers<[1], [0], [0], [1], [0, 0, 1, 1], [], []>} : vector<8x16xf32>, vector<16x256xf32>, vector<8x256xf32> -> vector<8x256xf32>
    %521 = vector.broadcast %0 : vector<1x256xf32> to vector<8x256xf32>
    %522 = arith.addf %520, %521 : vector<8x256xf32>
    %523 = vector.extract_strided_slice %522 {offsets = [0, 0], sizes = [8, 128], strides = [1, 1]} : vector<8x256xf32> to vector<8x128xf32>
    %524 = vector.extract_strided_slice %522 {offsets = [0, 128], sizes = [8, 128], strides = [1, 1]} : vector<8x256xf32> to vector<8x128xf32>
    %c27_362 = arith.constant 27 : index
    %c0_363 = arith.constant 0 : index
    %c0_364 = arith.constant 0 : index
    %525 = vector.load %arg9[%c27_362, %c0_363, %c0_364] : memref<36x8x128xf32, #tpu.memory_space<vmem>>, vector<1x8x128xf32>
    %526 = vector.shape_cast %525 : vector<1x8x128xf32> to vector<8x128xf32>
    %527 = vector.shape_cast %524 : vector<8x128xf32> to vector<1x8x128xf32>
    tpu.vector_store %arg9[%c27_362, %c0_363, %c0_364], %527 {strides = array<i32>} : memref<36x8x128xf32, #tpu.memory_space<vmem>>, vector<1x8x128xf32>,
    %528 = arith.mulf %523, %523 : vector<8x128xf32>
    %cst_365 = arith.constant dense<0.000000e+00> : vector<8x128xf32>
    %529 = tpu.matmul %528, %2, %cst_365 {dimension_numbers = #tpu.dot_dimension_numbers<[1], [0], [0], [1], [0, 0, 1, 1], [], []>} : vector<8x128xf32>, vector<128x128xf32>, vector<8x128xf32> -> vector<8x128xf32>
    %530 = vector.broadcast %1 : vector<1x128xf32> to vector<8x128xf32>
    %531 = arith.subf %530, %529 : vector<8x128xf32>
    %c27_366 = arith.constant 27 : index
    %c0_367 = arith.constant 0 : index
    %c0_368 = arith.constant 0 : index
    %532 = vector.load %arg10[%c27_366, %c0_367, %c0_368] : memref<36x8x128xf32, #tpu.memory_space<vmem>>, vector<1x8x128xf32>
    %533 = vector.shape_cast %532 : vector<1x8x128xf32> to vector<8x128xf32>
    %534 = vector.shape_cast %531 : vector<8x128xf32> to vector<1x8x128xf32>
    tpu.vector_store %arg10[%c27_366, %c0_367, %c0_368], %534 {strides = array<i32>} : memref<36x8x128xf32, #tpu.memory_space<vmem>>, vector<1x8x128xf32>,
    %c28 = arith.constant 28 : index
    %c0_369 = arith.constant 0 : index
    %c0_370 = arith.constant 0 : index
    %535 = vector.load %arg1[%c28, %c0_369, %c0_370] : memref<36x8x16xf32, #tpu.memory_space<vmem>>, vector<1x8x16xf32>
    %536 = vector.shape_cast %535 : vector<1x8x16xf32> to vector<8x16xf32>
    %c28_371 = arith.constant 28 : index
    %c0_372 = arith.constant 0 : index
    %c0_373 = arith.constant 0 : index
    %537 = vector.load %arg2[%c28_371, %c0_372, %c0_373] : memref<36x16x256xf32, #tpu.memory_space<vmem>>, vector<1x16x256xf32>
    %538 = vector.shape_cast %537 : vector<1x16x256xf32> to vector<16x256xf32>
    %cst_374 = arith.constant dense<0.000000e+00> : vector<8x256xf32>
    %539 = tpu.matmul %536, %538, %cst_374 {dimension_numbers = #tpu.dot_dimension_numbers<[1], [0], [0], [1], [0, 0, 1, 1], [], []>} : vector<8x16xf32>, vector<16x256xf32>, vector<8x256xf32> -> vector<8x256xf32>
    %540 = vector.broadcast %0 : vector<1x256xf32> to vector<8x256xf32>
    %541 = arith.addf %539, %540 : vector<8x256xf32>
    %542 = vector.extract_strided_slice %541 {offsets = [0, 0], sizes = [8, 128], strides = [1, 1]} : vector<8x256xf32> to vector<8x128xf32>
    %543 = vector.extract_strided_slice %541 {offsets = [0, 128], sizes = [8, 128], strides = [1, 1]} : vector<8x256xf32> to vector<8x128xf32>
    %c28_375 = arith.constant 28 : index
    %c0_376 = arith.constant 0 : index
    %c0_377 = arith.constant 0 : index
    %544 = vector.load %arg9[%c28_375, %c0_376, %c0_377] : memref<36x8x128xf32, #tpu.memory_space<vmem>>, vector<1x8x128xf32>
    %545 = vector.shape_cast %544 : vector<1x8x128xf32> to vector<8x128xf32>
    %546 = vector.shape_cast %543 : vector<8x128xf32> to vector<1x8x128xf32>
    tpu.vector_store %arg9[%c28_375, %c0_376, %c0_377], %546 {strides = array<i32>} : memref<36x8x128xf32, #tpu.memory_space<vmem>>, vector<1x8x128xf32>,
    %547 = arith.mulf %542, %542 : vector<8x128xf32>
    %cst_378 = arith.constant dense<0.000000e+00> : vector<8x128xf32>
    %548 = tpu.matmul %547, %2, %cst_378 {dimension_numbers = #tpu.dot_dimension_numbers<[1], [0], [0], [1], [0, 0, 1, 1], [], []>} : vector<8x128xf32>, vector<128x128xf32>, vector<8x128xf32> -> vector<8x128xf32>
    %549 = vector.broadcast %1 : vector<1x128xf32> to vector<8x128xf32>
    %550 = arith.subf %549, %548 : vector<8x128xf32>
    %c28_379 = arith.constant 28 : index
    %c0_380 = arith.constant 0 : index
    %c0_381 = arith.constant 0 : index
    %551 = vector.load %arg10[%c28_379, %c0_380, %c0_381] : memref<36x8x128xf32, #tpu.memory_space<vmem>>, vector<1x8x128xf32>
    %552 = vector.shape_cast %551 : vector<1x8x128xf32> to vector<8x128xf32>
    %553 = vector.shape_cast %550 : vector<8x128xf32> to vector<1x8x128xf32>
    tpu.vector_store %arg10[%c28_379, %c0_380, %c0_381], %553 {strides = array<i32>} : memref<36x8x128xf32, #tpu.memory_space<vmem>>, vector<1x8x128xf32>,
    %c29 = arith.constant 29 : index
    %c0_382 = arith.constant 0 : index
    %c0_383 = arith.constant 0 : index
    %554 = vector.load %arg1[%c29, %c0_382, %c0_383] : memref<36x8x16xf32, #tpu.memory_space<vmem>>, vector<1x8x16xf32>
    %555 = vector.shape_cast %554 : vector<1x8x16xf32> to vector<8x16xf32>
    %c29_384 = arith.constant 29 : index
    %c0_385 = arith.constant 0 : index
    %c0_386 = arith.constant 0 : index
    %556 = vector.load %arg2[%c29_384, %c0_385, %c0_386] : memref<36x16x256xf32, #tpu.memory_space<vmem>>, vector<1x16x256xf32>
    %557 = vector.shape_cast %556 : vector<1x16x256xf32> to vector<16x256xf32>
    %cst_387 = arith.constant dense<0.000000e+00> : vector<8x256xf32>
    %558 = tpu.matmul %555, %557, %cst_387 {dimension_numbers = #tpu.dot_dimension_numbers<[1], [0], [0], [1], [0, 0, 1, 1], [], []>} : vector<8x16xf32>, vector<16x256xf32>, vector<8x256xf32> -> vector<8x256xf32>
    %559 = vector.broadcast %0 : vector<1x256xf32> to vector<8x256xf32>
    %560 = arith.addf %558, %559 : vector<8x256xf32>
    %561 = vector.extract_strided_slice %560 {offsets = [0, 0], sizes = [8, 128], strides = [1, 1]} : vector<8x256xf32> to vector<8x128xf32>
    %562 = vector.extract_strided_slice %560 {offsets = [0, 128], sizes = [8, 128], strides = [1, 1]} : vector<8x256xf32> to vector<8x128xf32>
    %c29_388 = arith.constant 29 : index
    %c0_389 = arith.constant 0 : index
    %c0_390 = arith.constant 0 : index
    %563 = vector.load %arg9[%c29_388, %c0_389, %c0_390] : memref<36x8x128xf32, #tpu.memory_space<vmem>>, vector<1x8x128xf32>
    %564 = vector.shape_cast %563 : vector<1x8x128xf32> to vector<8x128xf32>
    %565 = vector.shape_cast %562 : vector<8x128xf32> to vector<1x8x128xf32>
    tpu.vector_store %arg9[%c29_388, %c0_389, %c0_390], %565 {strides = array<i32>} : memref<36x8x128xf32, #tpu.memory_space<vmem>>, vector<1x8x128xf32>,
    %566 = arith.mulf %561, %561 : vector<8x128xf32>
    %cst_391 = arith.constant dense<0.000000e+00> : vector<8x128xf32>
    %567 = tpu.matmul %566, %2, %cst_391 {dimension_numbers = #tpu.dot_dimension_numbers<[1], [0], [0], [1], [0, 0, 1, 1], [], []>} : vector<8x128xf32>, vector<128x128xf32>, vector<8x128xf32> -> vector<8x128xf32>
    %568 = vector.broadcast %1 : vector<1x128xf32> to vector<8x128xf32>
    %569 = arith.subf %568, %567 : vector<8x128xf32>
    %c29_392 = arith.constant 29 : index
    %c0_393 = arith.constant 0 : index
    %c0_394 = arith.constant 0 : index
    %570 = vector.load %arg10[%c29_392, %c0_393, %c0_394] : memref<36x8x128xf32, #tpu.memory_space<vmem>>, vector<1x8x128xf32>
    %571 = vector.shape_cast %570 : vector<1x8x128xf32> to vector<8x128xf32>
    %572 = vector.shape_cast %569 : vector<8x128xf32> to vector<1x8x128xf32>
    tpu.vector_store %arg10[%c29_392, %c0_393, %c0_394], %572 {strides = array<i32>} : memref<36x8x128xf32, #tpu.memory_space<vmem>>, vector<1x8x128xf32>,
    %c30 = arith.constant 30 : index
    %c0_395 = arith.constant 0 : index
    %c0_396 = arith.constant 0 : index
    %573 = vector.load %arg1[%c30, %c0_395, %c0_396] : memref<36x8x16xf32, #tpu.memory_space<vmem>>, vector<1x8x16xf32>
    %574 = vector.shape_cast %573 : vector<1x8x16xf32> to vector<8x16xf32>
    %c30_397 = arith.constant 30 : index
    %c0_398 = arith.constant 0 : index
    %c0_399 = arith.constant 0 : index
    %575 = vector.load %arg2[%c30_397, %c0_398, %c0_399] : memref<36x16x256xf32, #tpu.memory_space<vmem>>, vector<1x16x256xf32>
    %576 = vector.shape_cast %575 : vector<1x16x256xf32> to vector<16x256xf32>
    %cst_400 = arith.constant dense<0.000000e+00> : vector<8x256xf32>
    %577 = tpu.matmul %574, %576, %cst_400 {dimension_numbers = #tpu.dot_dimension_numbers<[1], [0], [0], [1], [0, 0, 1, 1], [], []>} : vector<8x16xf32>, vector<16x256xf32>, vector<8x256xf32> -> vector<8x256xf32>
    %578 = vector.broadcast %0 : vector<1x256xf32> to vector<8x256xf32>
    %579 = arith.addf %577, %578 : vector<8x256xf32>
    %580 = vector.extract_strided_slice %579 {offsets = [0, 0], sizes = [8, 128], strides = [1, 1]} : vector<8x256xf32> to vector<8x128xf32>
    %581 = vector.extract_strided_slice %579 {offsets = [0, 128], sizes = [8, 128], strides = [1, 1]} : vector<8x256xf32> to vector<8x128xf32>
    %c30_401 = arith.constant 30 : index
    %c0_402 = arith.constant 0 : index
    %c0_403 = arith.constant 0 : index
    %582 = vector.load %arg9[%c30_401, %c0_402, %c0_403] : memref<36x8x128xf32, #tpu.memory_space<vmem>>, vector<1x8x128xf32>
    %583 = vector.shape_cast %582 : vector<1x8x128xf32> to vector<8x128xf32>
    %584 = vector.shape_cast %581 : vector<8x128xf32> to vector<1x8x128xf32>
    tpu.vector_store %arg9[%c30_401, %c0_402, %c0_403], %584 {strides = array<i32>} : memref<36x8x128xf32, #tpu.memory_space<vmem>>, vector<1x8x128xf32>,
    %585 = arith.mulf %580, %580 : vector<8x128xf32>
    %cst_404 = arith.constant dense<0.000000e+00> : vector<8x128xf32>
    %586 = tpu.matmul %585, %2, %cst_404 {dimension_numbers = #tpu.dot_dimension_numbers<[1], [0], [0], [1], [0, 0, 1, 1], [], []>} : vector<8x128xf32>, vector<128x128xf32>, vector<8x128xf32> -> vector<8x128xf32>
    %587 = vector.broadcast %1 : vector<1x128xf32> to vector<8x128xf32>
    %588 = arith.subf %587, %586 : vector<8x128xf32>
    %c30_405 = arith.constant 30 : index
    %c0_406 = arith.constant 0 : index
    %c0_407 = arith.constant 0 : index
    %589 = vector.load %arg10[%c30_405, %c0_406, %c0_407] : memref<36x8x128xf32, #tpu.memory_space<vmem>>, vector<1x8x128xf32>
    %590 = vector.shape_cast %589 : vector<1x8x128xf32> to vector<8x128xf32>
    %591 = vector.shape_cast %588 : vector<8x128xf32> to vector<1x8x128xf32>
    tpu.vector_store %arg10[%c30_405, %c0_406, %c0_407], %591 {strides = array<i32>} : memref<36x8x128xf32, #tpu.memory_space<vmem>>, vector<1x8x128xf32>,
    %c31 = arith.constant 31 : index
    %c0_408 = arith.constant 0 : index
    %c0_409 = arith.constant 0 : index
    %592 = vector.load %arg1[%c31, %c0_408, %c0_409] : memref<36x8x16xf32, #tpu.memory_space<vmem>>, vector<1x8x16xf32>
    %593 = vector.shape_cast %592 : vector<1x8x16xf32> to vector<8x16xf32>
    %c31_410 = arith.constant 31 : index
    %c0_411 = arith.constant 0 : index
    %c0_412 = arith.constant 0 : index
    %594 = vector.load %arg2[%c31_410, %c0_411, %c0_412] : memref<36x16x256xf32, #tpu.memory_space<vmem>>, vector<1x16x256xf32>
    %595 = vector.shape_cast %594 : vector<1x16x256xf32> to vector<16x256xf32>
    %cst_413 = arith.constant dense<0.000000e+00> : vector<8x256xf32>
    %596 = tpu.matmul %593, %595, %cst_413 {dimension_numbers = #tpu.dot_dimension_numbers<[1], [0], [0], [1], [0, 0, 1, 1], [], []>} : vector<8x16xf32>, vector<16x256xf32>, vector<8x256xf32> -> vector<8x256xf32>
    %597 = vector.broadcast %0 : vector<1x256xf32> to vector<8x256xf32>
    %598 = arith.addf %596, %597 : vector<8x256xf32>
    %599 = vector.extract_strided_slice %598 {offsets = [0, 0], sizes = [8, 128], strides = [1, 1]} : vector<8x256xf32> to vector<8x128xf32>
    %600 = vector.extract_strided_slice %598 {offsets = [0, 128], sizes = [8, 128], strides = [1, 1]} : vector<8x256xf32> to vector<8x128xf32>
    %c31_414 = arith.constant 31 : index
    %c0_415 = arith.constant 0 : index
    %c0_416 = arith.constant 0 : index
    %601 = vector.load %arg9[%c31_414, %c0_415, %c0_416] : memref<36x8x128xf32, #tpu.memory_space<vmem>>, vector<1x8x128xf32>
    %602 = vector.shape_cast %601 : vector<1x8x128xf32> to vector<8x128xf32>
    %603 = vector.shape_cast %600 : vector<8x128xf32> to vector<1x8x128xf32>
    tpu.vector_store %arg9[%c31_414, %c0_415, %c0_416], %603 {strides = array<i32>} : memref<36x8x128xf32, #tpu.memory_space<vmem>>, vector<1x8x128xf32>,
    %604 = arith.mulf %599, %599 : vector<8x128xf32>
    %cst_417 = arith.constant dense<0.000000e+00> : vector<8x128xf32>
    %605 = tpu.matmul %604, %2, %cst_417 {dimension_numbers = #tpu.dot_dimension_numbers<[1], [0], [0], [1], [0, 0, 1, 1], [], []>} : vector<8x128xf32>, vector<128x128xf32>, vector<8x128xf32> -> vector<8x128xf32>
    %606 = vector.broadcast %1 : vector<1x128xf32> to vector<8x128xf32>
    %607 = arith.subf %606, %605 : vector<8x128xf32>
    %c31_418 = arith.constant 31 : index
    %c0_419 = arith.constant 0 : index
    %c0_420 = arith.constant 0 : index
    %608 = vector.load %arg10[%c31_418, %c0_419, %c0_420] : memref<36x8x128xf32, #tpu.memory_space<vmem>>, vector<1x8x128xf32>
    %609 = vector.shape_cast %608 : vector<1x8x128xf32> to vector<8x128xf32>
    %610 = vector.shape_cast %607 : vector<8x128xf32> to vector<1x8x128xf32>
    tpu.vector_store %arg10[%c31_418, %c0_419, %c0_420], %610 {strides = array<i32>} : memref<36x8x128xf32, #tpu.memory_space<vmem>>, vector<1x8x128xf32>,
    %c32 = arith.constant 32 : index
    %c0_421 = arith.constant 0 : index
    %c0_422 = arith.constant 0 : index
    %611 = vector.load %arg1[%c32, %c0_421, %c0_422] : memref<36x8x16xf32, #tpu.memory_space<vmem>>, vector<1x8x16xf32>
    %612 = vector.shape_cast %611 : vector<1x8x16xf32> to vector<8x16xf32>
    %c32_423 = arith.constant 32 : index
    %c0_424 = arith.constant 0 : index
    %c0_425 = arith.constant 0 : index
    %613 = vector.load %arg2[%c32_423, %c0_424, %c0_425] : memref<36x16x256xf32, #tpu.memory_space<vmem>>, vector<1x16x256xf32>
    %614 = vector.shape_cast %613 : vector<1x16x256xf32> to vector<16x256xf32>
    %cst_426 = arith.constant dense<0.000000e+00> : vector<8x256xf32>
    %615 = tpu.matmul %612, %614, %cst_426 {dimension_numbers = #tpu.dot_dimension_numbers<[1], [0], [0], [1], [0, 0, 1, 1], [], []>} : vector<8x16xf32>, vector<16x256xf32>, vector<8x256xf32> -> vector<8x256xf32>
    %616 = vector.broadcast %0 : vector<1x256xf32> to vector<8x256xf32>
    %617 = arith.addf %615, %616 : vector<8x256xf32>
    %618 = vector.extract_strided_slice %617 {offsets = [0, 0], sizes = [8, 128], strides = [1, 1]} : vector<8x256xf32> to vector<8x128xf32>
    %619 = vector.extract_strided_slice %617 {offsets = [0, 128], sizes = [8, 128], strides = [1, 1]} : vector<8x256xf32> to vector<8x128xf32>
    %c32_427 = arith.constant 32 : index
    %c0_428 = arith.constant 0 : index
    %c0_429 = arith.constant 0 : index
    %620 = vector.load %arg9[%c32_427, %c0_428, %c0_429] : memref<36x8x128xf32, #tpu.memory_space<vmem>>, vector<1x8x128xf32>
    %621 = vector.shape_cast %620 : vector<1x8x128xf32> to vector<8x128xf32>
    %622 = vector.shape_cast %619 : vector<8x128xf32> to vector<1x8x128xf32>
    tpu.vector_store %arg9[%c32_427, %c0_428, %c0_429], %622 {strides = array<i32>} : memref<36x8x128xf32, #tpu.memory_space<vmem>>, vector<1x8x128xf32>,
    %623 = arith.mulf %618, %618 : vector<8x128xf32>
    %cst_430 = arith.constant dense<0.000000e+00> : vector<8x128xf32>
    %624 = tpu.matmul %623, %2, %cst_430 {dimension_numbers = #tpu.dot_dimension_numbers<[1], [0], [0], [1], [0, 0, 1, 1], [], []>} : vector<8x128xf32>, vector<128x128xf32>, vector<8x128xf32> -> vector<8x128xf32>
    %625 = vector.broadcast %1 : vector<1x128xf32> to vector<8x128xf32>
    %626 = arith.subf %625, %624 : vector<8x128xf32>
    %c32_431 = arith.constant 32 : index
    %c0_432 = arith.constant 0 : index
    %c0_433 = arith.constant 0 : index
    %627 = vector.load %arg10[%c32_431, %c0_432, %c0_433] : memref<36x8x128xf32, #tpu.memory_space<vmem>>, vector<1x8x128xf32>
    %628 = vector.shape_cast %627 : vector<1x8x128xf32> to vector<8x128xf32>
    %629 = vector.shape_cast %626 : vector<8x128xf32> to vector<1x8x128xf32>
    tpu.vector_store %arg10[%c32_431, %c0_432, %c0_433], %629 {strides = array<i32>} : memref<36x8x128xf32, #tpu.memory_space<vmem>>, vector<1x8x128xf32>,
    %c33 = arith.constant 33 : index
    %c0_434 = arith.constant 0 : index
    %c0_435 = arith.constant 0 : index
    %630 = vector.load %arg1[%c33, %c0_434, %c0_435] : memref<36x8x16xf32, #tpu.memory_space<vmem>>, vector<1x8x16xf32>
    %631 = vector.shape_cast %630 : vector<1x8x16xf32> to vector<8x16xf32>
    %c33_436 = arith.constant 33 : index
    %c0_437 = arith.constant 0 : index
    %c0_438 = arith.constant 0 : index
    %632 = vector.load %arg2[%c33_436, %c0_437, %c0_438] : memref<36x16x256xf32, #tpu.memory_space<vmem>>, vector<1x16x256xf32>
    %633 = vector.shape_cast %632 : vector<1x16x256xf32> to vector<16x256xf32>
    %cst_439 = arith.constant dense<0.000000e+00> : vector<8x256xf32>
    %634 = tpu.matmul %631, %633, %cst_439 {dimension_numbers = #tpu.dot_dimension_numbers<[1], [0], [0], [1], [0, 0, 1, 1], [], []>} : vector<8x16xf32>, vector<16x256xf32>, vector<8x256xf32> -> vector<8x256xf32>
    %635 = vector.broadcast %0 : vector<1x256xf32> to vector<8x256xf32>
    %636 = arith.addf %634, %635 : vector<8x256xf32>
    %637 = vector.extract_strided_slice %636 {offsets = [0, 0], sizes = [8, 128], strides = [1, 1]} : vector<8x256xf32> to vector<8x128xf32>
    %638 = vector.extract_strided_slice %636 {offsets = [0, 128], sizes = [8, 128], strides = [1, 1]} : vector<8x256xf32> to vector<8x128xf32>
    %c33_440 = arith.constant 33 : index
    %c0_441 = arith.constant 0 : index
    %c0_442 = arith.constant 0 : index
    %639 = vector.load %arg9[%c33_440, %c0_441, %c0_442] : memref<36x8x128xf32, #tpu.memory_space<vmem>>, vector<1x8x128xf32>
    %640 = vector.shape_cast %639 : vector<1x8x128xf32> to vector<8x128xf32>
    %641 = vector.shape_cast %638 : vector<8x128xf32> to vector<1x8x128xf32>
    tpu.vector_store %arg9[%c33_440, %c0_441, %c0_442], %641 {strides = array<i32>} : memref<36x8x128xf32, #tpu.memory_space<vmem>>, vector<1x8x128xf32>,
    %642 = arith.mulf %637, %637 : vector<8x128xf32>
    %cst_443 = arith.constant dense<0.000000e+00> : vector<8x128xf32>
    %643 = tpu.matmul %642, %2, %cst_443 {dimension_numbers = #tpu.dot_dimension_numbers<[1], [0], [0], [1], [0, 0, 1, 1], [], []>} : vector<8x128xf32>, vector<128x128xf32>, vector<8x128xf32> -> vector<8x128xf32>
    %644 = vector.broadcast %1 : vector<1x128xf32> to vector<8x128xf32>
    %645 = arith.subf %644, %643 : vector<8x128xf32>
    %c33_444 = arith.constant 33 : index
    %c0_445 = arith.constant 0 : index
    %c0_446 = arith.constant 0 : index
    %646 = vector.load %arg10[%c33_444, %c0_445, %c0_446] : memref<36x8x128xf32, #tpu.memory_space<vmem>>, vector<1x8x128xf32>
    %647 = vector.shape_cast %646 : vector<1x8x128xf32> to vector<8x128xf32>
    %648 = vector.shape_cast %645 : vector<8x128xf32> to vector<1x8x128xf32>
    tpu.vector_store %arg10[%c33_444, %c0_445, %c0_446], %648 {strides = array<i32>} : memref<36x8x128xf32, #tpu.memory_space<vmem>>, vector<1x8x128xf32>,
    %c34 = arith.constant 34 : index
    %c0_447 = arith.constant 0 : index
    %c0_448 = arith.constant 0 : index
    %649 = vector.load %arg1[%c34, %c0_447, %c0_448] : memref<36x8x16xf32, #tpu.memory_space<vmem>>, vector<1x8x16xf32>
    %650 = vector.shape_cast %649 : vector<1x8x16xf32> to vector<8x16xf32>
    %c34_449 = arith.constant 34 : index
    %c0_450 = arith.constant 0 : index
    %c0_451 = arith.constant 0 : index
    %651 = vector.load %arg2[%c34_449, %c0_450, %c0_451] : memref<36x16x256xf32, #tpu.memory_space<vmem>>, vector<1x16x256xf32>
    %652 = vector.shape_cast %651 : vector<1x16x256xf32> to vector<16x256xf32>
    %cst_452 = arith.constant dense<0.000000e+00> : vector<8x256xf32>
    %653 = tpu.matmul %650, %652, %cst_452 {dimension_numbers = #tpu.dot_dimension_numbers<[1], [0], [0], [1], [0, 0, 1, 1], [], []>} : vector<8x16xf32>, vector<16x256xf32>, vector<8x256xf32> -> vector<8x256xf32>
    %654 = vector.broadcast %0 : vector<1x256xf32> to vector<8x256xf32>
    %655 = arith.addf %653, %654 : vector<8x256xf32>
    %656 = vector.extract_strided_slice %655 {offsets = [0, 0], sizes = [8, 128], strides = [1, 1]} : vector<8x256xf32> to vector<8x128xf32>
    %657 = vector.extract_strided_slice %655 {offsets = [0, 128], sizes = [8, 128], strides = [1, 1]} : vector<8x256xf32> to vector<8x128xf32>
    %c34_453 = arith.constant 34 : index
    %c0_454 = arith.constant 0 : index
    %c0_455 = arith.constant 0 : index
    %658 = vector.load %arg9[%c34_453, %c0_454, %c0_455] : memref<36x8x128xf32, #tpu.memory_space<vmem>>, vector<1x8x128xf32>
    %659 = vector.shape_cast %658 : vector<1x8x128xf32> to vector<8x128xf32>
    %660 = vector.shape_cast %657 : vector<8x128xf32> to vector<1x8x128xf32>
    tpu.vector_store %arg9[%c34_453, %c0_454, %c0_455], %660 {strides = array<i32>} : memref<36x8x128xf32, #tpu.memory_space<vmem>>, vector<1x8x128xf32>,
    %661 = arith.mulf %656, %656 : vector<8x128xf32>
    %cst_456 = arith.constant dense<0.000000e+00> : vector<8x128xf32>
    %662 = tpu.matmul %661, %2, %cst_456 {dimension_numbers = #tpu.dot_dimension_numbers<[1], [0], [0], [1], [0, 0, 1, 1], [], []>} : vector<8x128xf32>, vector<128x128xf32>, vector<8x128xf32> -> vector<8x128xf32>
    %663 = vector.broadcast %1 : vector<1x128xf32> to vector<8x128xf32>
    %664 = arith.subf %663, %662 : vector<8x128xf32>
    %c34_457 = arith.constant 34 : index
    %c0_458 = arith.constant 0 : index
    %c0_459 = arith.constant 0 : index
    %665 = vector.load %arg10[%c34_457, %c0_458, %c0_459] : memref<36x8x128xf32, #tpu.memory_space<vmem>>, vector<1x8x128xf32>
    %666 = vector.shape_cast %665 : vector<1x8x128xf32> to vector<8x128xf32>
    %667 = vector.shape_cast %664 : vector<8x128xf32> to vector<1x8x128xf32>
    tpu.vector_store %arg10[%c34_457, %c0_458, %c0_459], %667 {strides = array<i32>} : memref<36x8x128xf32, #tpu.memory_space<vmem>>, vector<1x8x128xf32>,
    %c35 = arith.constant 35 : index
    %c0_460 = arith.constant 0 : index
    %c0_461 = arith.constant 0 : index
    %668 = vector.load %arg1[%c35, %c0_460, %c0_461] : memref<36x8x16xf32, #tpu.memory_space<vmem>>, vector<1x8x16xf32>
    %669 = vector.shape_cast %668 : vector<1x8x16xf32> to vector<8x16xf32>
    %c35_462 = arith.constant 35 : index
    %c0_463 = arith.constant 0 : index
    %c0_464 = arith.constant 0 : index
    %670 = vector.load %arg2[%c35_462, %c0_463, %c0_464] : memref<36x16x256xf32, #tpu.memory_space<vmem>>, vector<1x16x256xf32>
    %671 = vector.shape_cast %670 : vector<1x16x256xf32> to vector<16x256xf32>
    %cst_465 = arith.constant dense<0.000000e+00> : vector<8x256xf32>
    %672 = tpu.matmul %669, %671, %cst_465 {dimension_numbers = #tpu.dot_dimension_numbers<[1], [0], [0], [1], [0, 0, 1, 1], [], []>} : vector<8x16xf32>, vector<16x256xf32>, vector<8x256xf32> -> vector<8x256xf32>
    %673 = vector.broadcast %0 : vector<1x256xf32> to vector<8x256xf32>
    %674 = arith.addf %672, %673 : vector<8x256xf32>
    %675 = vector.extract_strided_slice %674 {offsets = [0, 0], sizes = [8, 128], strides = [1, 1]} : vector<8x256xf32> to vector<8x128xf32>
    %676 = vector.extract_strided_slice %674 {offsets = [0, 128], sizes = [8, 128], strides = [1, 1]} : vector<8x256xf32> to vector<8x128xf32>
    %c35_466 = arith.constant 35 : index
    %c0_467 = arith.constant 0 : index
    %c0_468 = arith.constant 0 : index
    %677 = vector.load %arg9[%c35_466, %c0_467, %c0_468] : memref<36x8x128xf32, #tpu.memory_space<vmem>>, vector<1x8x128xf32>
    %678 = vector.shape_cast %677 : vector<1x8x128xf32> to vector<8x128xf32>
    %679 = vector.shape_cast %676 : vector<8x128xf32> to vector<1x8x128xf32>
    tpu.vector_store %arg9[%c35_466, %c0_467, %c0_468], %679 {strides = array<i32>} : memref<36x8x128xf32, #tpu.memory_space<vmem>>, vector<1x8x128xf32>,
    %680 = arith.mulf %675, %675 : vector<8x128xf32>
    %cst_469 = arith.constant dense<0.000000e+00> : vector<8x128xf32>
    %681 = tpu.matmul %680, %2, %cst_469 {dimension_numbers = #tpu.dot_dimension_numbers<[1], [0], [0], [1], [0, 0, 1, 1], [], []>} : vector<8x128xf32>, vector<128x128xf32>, vector<8x128xf32> -> vector<8x128xf32>
    %682 = vector.broadcast %1 : vector<1x128xf32> to vector<8x128xf32>
    %683 = arith.subf %682, %681 : vector<8x128xf32>
    %c35_470 = arith.constant 35 : index
    %c0_471 = arith.constant 0 : index
    %c0_472 = arith.constant 0 : index
    %684 = vector.load %arg10[%c35_470, %c0_471, %c0_472] : memref<36x8x128xf32, #tpu.memory_space<vmem>>, vector<1x8x128xf32>
    %685 = vector.shape_cast %684 : vector<1x8x128xf32> to vector<8x128xf32>
    %686 = vector.shape_cast %683 : vector<8x128xf32> to vector<1x8x128xf32>
    tpu.vector_store %arg10[%c35_470, %c0_471, %c0_472], %686 {strides = array<i32>} : memref<36x8x128xf32, #tpu.memory_space<vmem>>, vector<1x8x128xf32>,
    %c0_473 = arith.constant 0 : index
    %c0_474 = arith.constant 0 : index
    %c0_475 = arith.constant 0 : index
    %687 = vector.load %arg10[%c0_473, %c0_474, %c0_475] : memref<36x8x128xf32, #tpu.memory_space<vmem>>, vector<36x8x128xf32>
    %cst_476 = arith.constant dense<0xFF800000> : vector<8x128xf32>
    %688 = vector.multi_reduction <maximumf>, %687, %cst_476 [0] : vector<36x8x128xf32> to vector<8x128xf32>
    %689 = vector.shape_cast %688 : vector<8x128xf32> to vector<1x8x128xf32>
    %690 = vector.broadcast %689 : vector<1x8x128xf32> to vector<36x8x128xf32>
    %691 = arith.subf %687, %690 : vector<36x8x128xf32>
    %692 = math.exp %691 : vector<36x8x128xf32>
    %cst_477 = arith.constant dense<0.000000e+00> : vector<8x128xf32>
    %693 = vector.multi_reduction <add>, %692, %cst_477 [0] : vector<36x8x128xf32> to vector<8x128xf32>
    %694 = vector.shape_cast %693 : vector<8x128xf32> to vector<1x8x128xf32>
    %695 = vector.broadcast %694 : vector<1x8x128xf32> to vector<36x8x128xf32>
    %696 = arith.divf %692, %695 : vector<36x8x128xf32>
    %c0_478 = arith.constant 0 : index
    %c0_479 = arith.constant 0 : index
    %697 = vector.load %arg4[%c0_478, %c0_479] : memref<1x128xf32, #tpu.memory_space<vmem>>, vector<1x128xf32>
    %c0_480 = arith.constant 0 : index
    %c0_481 = arith.constant 0 : index
    %c0_482 = arith.constant 0 : index
    %698 = vector.load %arg9[%c0_480, %c0_481, %c0_482] : memref<36x8x128xf32, #tpu.memory_space<vmem>>, vector<36x8x128xf32>
    %699 = arith.mulf %696, %698 : vector<36x8x128xf32>
    %cst_483 = arith.constant dense<0.000000e+00> : vector<8x128xf32>
    %700 = vector.multi_reduction <add>, %699, %cst_483 [0] : vector<36x8x128xf32> to vector<8x128xf32>
    %701 = vector.broadcast %697 : vector<1x128xf32> to vector<8x128xf32>
    %702 = arith.addf %701, %700 : vector<8x128xf32>
    %c0_484 = arith.constant 0 : index
    %c0_485 = arith.constant 0 : index
    %703 = vector.load %arg7[%c0_484, %c0_485] : memref<8x128xf32, #tpu.memory_space<vmem>>, vector<8x128xf32>
    tpu.vector_store %arg7[%c0_484, %c0_485], %702 {strides = array<i32>} : memref<8x128xf32, #tpu.memory_space<vmem>>, vector<8x128xf32>,
    %704 = tpu.iota {dimensions = array<i32: 0>} : vector<8x1xi32>
    %c8_i32 = arith.constant 8 : i32
    %705 = arith.muli %arg0, %c8_i32 : i32
    %706 = vector.broadcast %705 : i32 to vector<8x1xi32>
    %707 = arith.addi %704, %706 : vector<8x1xi32>
    %c18_i32 = arith.constant 18 : i32
    %708 = vector.broadcast %c18_i32 : i32 to vector<8x1xi32>
    %709 = arith.cmpi slt, %707, %708 : vector<8x1xi32>
    %710 = arith.extui %709 : vector<8x1xi1> to vector<8x1xi32>
    %711 = arith.sitofp %710 : vector<8x1xi32> to vector<8x1xf32>
    %712 = vector.broadcast %711 : vector<8x1xf32> to vector<8x128xf32>
    %713 = arith.mulf %702, %712 : vector<8x128xf32>
    %cst_486 = arith.constant dense<0.000000e+00> : vector<128xf32>
    %714 = vector.multi_reduction <add>, %713, %cst_486 [0] : vector<8x128xf32> to vector<128xf32>
    %715 = vector.shape_cast %714 : vector<128xf32> to vector<1x128xf32>
    %716 = arith.mulf %713, %702 : vector<8x128xf32>
    %cst_487 = arith.constant dense<0.000000e+00> : vector<128xf32>
    %717 = vector.multi_reduction <add>, %716, %cst_487 [0] : vector<8x128xf32> to vector<128xf32>
    %718 = vector.shape_cast %717 : vector<128xf32> to vector<1x128xf32>
    %719 = tpu.concatenate %715, %718 in 0 : vector<1x128xf32>, vector<1x128xf32> -> vector<2x128xf32>
    %c0_488 = arith.constant 0 : index
    %c0_489 = arith.constant 0 : index
    %c0_490 = arith.constant 0 : index
    %720 = vector.load %arg8[%c0_488, %c0_489, %c0_490] : memref<1x2x128xf32, #tpu.memory_space<vmem>>, vector<1x2x128xf32>
    %721 = vector.shape_cast %720 : vector<1x2x128xf32> to vector<2x128xf32>
    %722 = vector.shape_cast %719 : vector<2x128xf32> to vector<1x2x128xf32>
    tpu.vector_store %arg8[%c0_488, %c0_489, %c0_490], %722 {strides = array<i32>} : memref<1x2x128xf32, #tpu.memory_space<vmem>>, vector<1x2x128xf32>,
    return
  }
  func.func @transform_0(%arg0: i32) -> (i32, i32, i32) {
    %c0_i32 = arith.constant 0 : i32
    %c0_i32_0 = arith.constant 0 : i32
    %c0_i32_1 = arith.constant 0 : i32
    return %c0_i32, %arg0, %c0_i32_0 : i32, i32, i32
  }
  func.func @transform_1(%arg0: i32) -> (i32, i32, i32) {
    %c0_i32 = arith.constant 0 : i32
    %c0_i32_0 = arith.constant 0 : i32
    %c0_i32_1 = arith.constant 0 : i32
    %c0_i32_2 = arith.constant 0 : i32
    return %c0_i32, %c0_i32_0, %c0_i32_1 : i32, i32, i32
  }
  func.func @transform_2(%arg0: i32) -> (i32, i32) {
    %c0_i32 = arith.constant 0 : i32
    %c0_i32_0 = arith.constant 0 : i32
    %c0_i32_1 = arith.constant 0 : i32
    return %c0_i32, %c0_i32_0 : i32, i32
  }
  func.func @transform_3(%arg0: i32) -> (i32, i32) {
    %c0_i32 = arith.constant 0 : i32
    %c0_i32_0 = arith.constant 0 : i32
    %c0_i32_1 = arith.constant 0 : i32
    return %c0_i32, %c0_i32_0 : i32, i32
  }
  func.func @transform_4(%arg0: i32) -> (i32, i32) {
    %c0_i32 = arith.constant 0 : i32
    %c0_i32_0 = arith.constant 0 : i32
    %c0_i32_1 = arith.constant 0 : i32
    return %c0_i32, %c0_i32_0 : i32, i32
  }
  func.func @transform_5(%arg0: i32) -> (i32, i32) {
    %c0_i32 = arith.constant 0 : i32
    %c0_i32_0 = arith.constant 0 : i32
    %c0_i32_1 = arith.constant 0 : i32
    return %c0_i32, %c0_i32_0 : i32, i32
  }
  func.func @transform_6(%arg0: i32) -> (i32, i32) {
    %c0_i32 = arith.constant 0 : i32
    %c0_i32_0 = arith.constant 0 : i32
    return %arg0, %c0_i32 : i32, i32
  }
  func.func @transform_7(%arg0: i32) -> (i32, i32, i32) {
    %c0_i32 = arith.constant 0 : i32
    %c0_i32_0 = arith.constant 0 : i32
    %c0_i32_1 = arith.constant 0 : i32
    return %arg0, %c0_i32, %c0_i32_0 : i32, i32, i32
  }
}

</mosaic_0001>

<llo_original>
// kernel: tpu_custom_call.1
$region0: #{tpu_custom_call.1}
  #allocation0 [shape = 'u32[]', space=smem, size = 0x4, offset = 0x4, fixed_abs, tag = 'smem constant byte address 0x4 - core index']
  #allocation1 [shape = 'u32[144,128]{1,0:T(1,128)}', space=vmem, size = 0x12000, scoped, tag = 'internal scratch']
  #allocation2 [shape = 'f32[36,8,128]{2,1,0:T(8,128)}', space=vmem, size = 0x24000, scoped, tag = 'scratch operand']
  #allocation3 [shape = 'f32[36,8,128]{2,1,0:T(8,128)}', space=vmem, size = 0x24000, scoped, tag = 'scratch operand']
  %s0 = inlined_call_operand.hbm [shape: f32[36,24,16], index: 0, kind: input, shape index: {}]
  %s1 = inlined_call_operand.hbm [shape: f32[36,16,256], index: 1, kind: input, shape index: {}]
  %s2 = inlined_call_operand.hbm [shape: f32[1,256], index: 2, kind: input, shape index: {}]
  %s3 = inlined_call_operand.hbm [shape: f32[1,128], index: 3, kind: input, shape index: {}]
  %s4 = inlined_call_operand.hbm [shape: f32[1,128], index: 4, kind: input, shape index: {}]
  %s5 = inlined_call_operand.hbm [shape: f32[128,128], index: 5, kind: input, shape index: {}]
  %s6 = inlined_call_operand.hbm [shape: f32[24,128], index: 6, kind: output, shape index: {0}]
  %s7 = inlined_call_operand.hbm [shape: f32[3,2,128], index: 7, kind: output, shape index: {1}]
  %8 = xla_tuple %s6, %s7
  %s9 = sld [smem:[#allocation0]]
  $region89: #{tpu_custom_call.1} parent=0
    _
  %s11 = ssub.s32 1, %s9
  %s12 = scalar_select 0, %s11, %s9
  $region1: #{tpu_custom_call.1} parent=0
    #allocation4 [shape = 'u8[294912]{0}', space=vmem, size = 0x48000, scoped, tag = 'input window, operand 0']
    #allocation5 [shape = 's32[2]{0}', space=sflag, size = 0x8, scoped, tag = 'scoped memory for tpu_custom_call.1']
    #allocation6 [shape = 's32[2]{0}', space=sflag, size = 0x8, scoped, tag = 'scoped memory for tpu_custom_call.1']
    #allocation7 [shape = 'u8[589824]{0}', space=vmem, size = 0x90000, scoped, tag = 'input window, operand 1, single buffered']
    #allocation8 [shape = 's32[1]{0}', space=sflag, size = 0x4, scoped, tag = 'scoped memory for tpu_custom_call.1']
    #allocation9 [shape = 'u8[1024]{0}', space=vmem, size = 0x400, scoped, tag = 'input window, operand 2, single buffered']
    #allocation10 [shape = 'u8[512]{0}', space=vmem, size = 0x400, scoped, tag = 'input window, operand 3, single buffered']
    #allocation11 [shape = 's32[1]{0}', space=sflag, size = 0x4, scoped, tag = 'scoped memory for tpu_custom_call.1']
    #allocation12 [shape = 'u8[512]{0}', space=vmem, size = 0x400, scoped, tag = 'input window, operand 4, single buffered']
    #allocation13 [shape = 'u8[65536]{0}', space=vmem, size = 0x10000, scoped, tag = 'input window, operand 5, single buffered']
    #allocation14 [shape = 's32[1]{0}', space=sflag, size = 0x4, scoped, tag = 'scoped memory for tpu_custom_call.1']
    #allocation15 [shape = 'u8[8192]{0}', space=vmem, size = 0x2000, scoped, tag = 'output window, operand 0']
    #allocation16 [shape = 'u8[2048]{0}', space=vmem, size = 0x800, scoped, tag = 'output window, operand 1']
    #allocation17 [shape = 's32[2]{0}', space=sflag, size = 0x8, scoped, tag = 'scoped memory for tpu_custom_call.1']
    %13 = vsyncpa [#allocation5], 0
    %s14 = scalar_lea.sflag [#allocation5], 1
    %15 = vsyncpa %s14, 0
    %16 = vsyncpa [#allocation8], 0
    %17 = vsyncpa [#allocation11], 0
    %18 = vsyncpa [#allocation14], 0
    %19 = vsyncpa [#allocation6], 0
    %s20 = scalar_lea.sflag [#allocation6], 1
    %21 = vsyncpa %s20, 0
    %22 = vsyncpa [#allocation17], 0
    %s23 = scalar_lea.sflag [#allocation17], 1
    %24 = vsyncpa %s23, 0
    loop: start=0, step=1, limit=5
    $region2: #{tpu_custom_call.1} parent=1 // loop_pre_header
      _
    $region3: #{tpu_custom_call.1} parent=1 // loop_header
      %s26 = sphi 0, %s30
      %p27 = scmp.ge.s32.totalorder %s26, 5
      %s36 = sphi 0, %s38
      %s39 = sphi 0, %s36
      %s40 = sphi 0, %s39
      %s56 = sphi 0, %s40
      %s60 = sphi 0, %s60
      %s62 = sphi 0, %s60
      %s63 = sphi 0, %s62
      %s77 = sphi 0, %s63
      %s81 = sphi 0, %s81
      %s83 = sphi 0, %s81
      %s84 = sphi 0, %s83
      %s98 = sphi 0, %s84
      %s102 = sphi 0, %s102
      %s104 = sphi 0, %s102
      %s105 = sphi 0, %s104
      %s119 = sphi 0, %s105
      %s123 = sphi 0, %s123
      %s125 = sphi 0, %s123
      %s126 = sphi 0, %s125
      %s140 = sphi 0, %s126
      %s144 = sphi 0, %s144
      %s146 = sphi 0, %s144
      %s147 = sphi 0, %s146
      %s161 = sphi 0, %s147
      %s167 = sphi 0, %s169
      %s170 = sphi 0, %s167
      %s171 = sphi 0, %s170
      %s187 = sphi 0, %s171
      %s193 = sphi 0, %s195
      %s196 = sphi 0, %s193
      %s197 = sphi 0, %s196
      %s213 = sphi 0, %s197
    $region4: #{tpu_custom_call.1} parent=1 // loop_header_branch
      %29 = sbr.rel (%p27) target = $region8
    $region5: #{tpu_custom_call.1} parent=1 // loop_body
      %s31 = ssub.s32 %s26, 1
      %s32 = ssub.s32 %s26, 2
      %s33 = sadd.s32 %s26, 1
      %s34 = ssub.s32 %s26, %s33
      %p35 = scmp.eq.s32.totalorder %s34, 0
      %s37 = sadd.s32 %s36, 1
      %s38 = scalar_select %p35, %s36, %s37
      %p41 = pneg %p35
      %p42 = scmp.eq.s32.totalorder %s26, 2
      %p43 = por %p41, %p42
      %p44 = scmp.ne.s32.totalorder %s36, %s39
      %p45 = scmp.eq.s32.totalorder %s26, 0
      %p46 = por %p44, %p45
      %p47 = scmp.ne.s32.totalorder %s36, %s39
      %p48 = scmp.eq.s32.totalorder %s31, 2
      %p49 = por %p47, %p48
      %p50 = scmp.ne.s32.totalorder %s39, %s40
      %p51 = scmp.eq.s32.totalorder %s31, 0
      %p52 = por %p50, %p51
      %p53 = scmp.ne.s32.totalorder %s39, %s40
      %p54 = scmp.eq.s32.totalorder %s32, 2
      %p55 = por %p53, %p54
      %p57 = scmp.ne.s32.totalorder %s40, %s56
      %p58 = scmp.eq.s32.totalorder %s32, 0
      %p59 = por %p57, %p58
      %s61 = sadd.s32 %s60, 1
      %p64 = scmp.eq.s32.totalorder %s26, 2
      %p65 = scmp.ne.s32.totalorder %s60, %s62
      %p66 = scmp.eq.s32.totalorder %s26, 0
      %p67 = por %p65, %p66
      %p68 = scmp.ne.s32.totalorder %s60, %s62
      %p69 = scmp.eq.s32.totalorder %s31, 2
      %p70 = por %p68, %p69
      %p71 = scmp.ne.s32.totalorder %s62, %s63
      %p72 = scmp.eq.s32.totalorder %s31, 0
      %p73 = por %p71, %p72
      %p74 = scmp.ne.s32.totalorder %s62, %s63
      %p75 = scmp.eq.s32.totalorder %s32, 2
      %p76 = por %p74, %p75
      %p78 = scmp.ne.s32.totalorder %s63, %s77
      %p79 = scmp.eq.s32.totalorder %s32, 0
      %p80 = por %p78, %p79
      %s82 = sadd.s32 %s81, 1
      %p85 = scmp.eq.s32.totalorder %s26, 2
      %p86 = scmp.ne.s32.totalorder %s81, %s83
      %p87 = scmp.eq.s32.totalorder %s26, 0
      %p88 = por %p86, %p87
      %p89 = scmp.ne.s32.totalorder %s81, %s83
      %p90 = scmp.eq.s32.totalorder %s31, 2
      %p91 = por %p89, %p90
      %p92 = scmp.ne.s32.totalorder %s83, %s84
      %p93 = scmp.eq.s32.totalorder %s31, 0
      %p94 = por %p92, %p93
      %p95 = scmp.ne.s32.totalorder %s83, %s84
      %p96 = scmp.eq.s32.totalorder %s32, 2
      %p97 = por %p95, %p96
      %p99 = scmp.ne.s32.totalorder %s84, %s98
      %p100 = scmp.eq.s32.totalorder %s32, 0
      %p101 = por %p99, %p100
      %s103 = sadd.s32 %s102, 1
      %p106 = scmp.eq.s32.totalorder %s26, 2
      %p107 = scmp.ne.s32.totalorder %s102, %s104
      %p108 = scmp.eq.s32.totalorder %s26, 0
      %p109 = por %p107, %p108
      %p110 = scmp.ne.s32.totalorder %s102, %s104
      %p111 = scmp.eq.s32.totalorder %s31, 2
      %p112 = por %p110, %p111
      %p113 = scmp.ne.s32.totalorder %s104, %s105
      %p114 = scmp.eq.s32.totalorder %s31, 0
      %p115 = por %p113, %p114
      %p116 = scmp.ne.s32.totalorder %s104, %s105
      %p117 = scmp.eq.s32.totalorder %s32, 2
      %p118 = por %p116, %p117
      %p120 = scmp.ne.s32.totalorder %s105, %s119
      %p121 = scmp.eq.s32.totalorder %s32, 0
      %p122 = por %p120, %p121
      %s124 = sadd.s32 %s123, 1
      %p127 = scmp.eq.s32.totalorder %s26, 2
      %p128 = scmp.ne.s32.totalorder %s123, %s125
      %p129 = scmp.eq.s32.totalorder %s26, 0
      %p130 = por %p128, %p129
      %p131 = scmp.ne.s32.totalorder %s123, %s125
      %p132 = scmp.eq.s32.totalorder %s31, 2
      %p133 = por %p131, %p132
      %p134 = scmp.ne.s32.totalorder %s125, %s126
      %p135 = scmp.eq.s32.totalorder %s31, 0
      %p136 = por %p134, %p135
      %p137 = scmp.ne.s32.totalorder %s125, %s126
      %p138 = scmp.eq.s32.totalorder %s32, 2
      %p139 = por %p137, %p138
      %p141 = scmp.ne.s32.totalorder %s126, %s140
      %p142 = scmp.eq.s32.totalorder %s32, 0
      %p143 = por %p141, %p142
      %s145 = sadd.s32 %s144, 1
      %p148 = scmp.eq.s32.totalorder %s26, 2
      %p149 = scmp.ne.s32.totalorder %s144, %s146
      %p150 = scmp.eq.s32.totalorder %s26, 0
      %p151 = por %p149, %p150
      %p152 = scmp.ne.s32.totalorder %s144, %s146
      %p153 = scmp.eq.s32.totalorder %s31, 2
      %p154 = por %p152, %p153
      %p155 = scmp.ne.s32.totalorder %s146, %s147
      %p156 = scmp.eq.s32.totalorder %s31, 0
      %p157 = por %p155, %p156
      %p158 = scmp.ne.s32.totalorder %s146, %s147
      %p159 = scmp.eq.s32.totalorder %s32, 2
      %p160 = por %p158, %p159
      %p162 = scmp.ne.s32.totalorder %s147, %s161
      %p163 = scmp.eq.s32.totalorder %s32, 0
      %p164 = por %p162, %p163
      %s165 = ssub.s32 %s26, %s33
      %p166 = scmp.eq.s32.totalorder %s165, 0
      %s168 = sadd.s32 %s167, 1
      %s169 = scalar_select %p166, %s167, %s168
      %p172 = pneg %p166
      %p173 = scmp.eq.s32.totalorder %s26, 2
      %p174 = por %p172, %p173
      %p175 = scmp.ne.s32.totalorder %s167, %s170
      %p176 = scmp.eq.s32.totalorder %s26, 0
      %p177 = por %p175, %p176
      %p178 = scmp.ne.s32.totalorder %s167, %s170
      %p179 = scmp.eq.s32.totalorder %s31, 2
      %p180 = por %p178, %p179
      %p181 = scmp.ne.s32.totalorder %s170, %s171
      %p182 = scmp.eq.s32.totalorder %s31, 0
      %p183 = por %p181, %p182
      %p184 = scmp.ne.s32.totalorder %s170, %s171
      %p185 = scmp.eq.s32.totalorder %s32, 2
      %p186 = por %p184, %p185
      %p188 = scmp.ne.s32.totalorder %s171, %s187
      %p189 = scmp.eq.s32.totalorder %s32, 0
      %p190 = por %p188, %p189
      %s191 = ssub.s32 %s26, %s33
      %p192 = scmp.eq.s32.totalorder %s191, 0
      %s194 = sadd.s32 %s193, 1
      %s195 = scalar_select %p192, %s193, %s194
      %p198 = pneg %p192
      %p199 = scmp.eq.s32.totalorder %s26, 2
      %p200 = por %p198, %p199
      %p201 = scmp.ne.s32.totalorder %s193, %s196
      %p202 = scmp.eq.s32.totalorder %s26, 0
      %p203 = por %p201, %p202
      %p204 = scmp.ne.s32.totalorder %s193, %s196
      %p205 = scmp.eq.s32.totalorder %s31, 2
      %p206 = por %p204, %p205
      %p207 = scmp.ne.s32.totalorder %s196, %s197
      %p208 = scmp.eq.s32.totalorder %s31, 0
      %p209 = por %p207, %p208
      %p210 = scmp.ne.s32.totalorder %s196, %s197
      %p211 = scmp.eq.s32.totalorder %s32, 2
      %p212 = por %p210, %p211
      %p214 = scmp.ne.s32.totalorder %s197, %s213
      %p215 = scmp.eq.s32.totalorder %s32, 0
      %p216 = por %p214, %p215
      %p217 = scmp.le.s32.totalorder 1, %s26
      %p218 = scmp.lt.s32.totalorder %s26, 4
      %p219 = pnand %p217, %p218
      %p220 = pneg %p219
      // Predicated region
      $region9: #{tpu_custom_call.1} parent=5 // pred_check
        _
      $region10: #{tpu_custom_call.1} parent=5 // pred_check_branch
        %222 = sbr.rel (%p219) target = $region12
      $region11: #{tpu_custom_call.1} parent=5 // pred_region
        %s223 = ssub.s32 %s26, 1
        // Predicated region
        $region13: #{tpu_custom_call.1} parent=11 // pred_check
          %p224 = pneg %p73
        $region14: #{tpu_custom_call.1} parent=11 // pred_check_branch
          %226 = sbr.rel (%p224) target = $region16
        $region15: #{tpu_custom_call.1} parent=11 // pred_region
          %s228 = ssub.s32 18432, 18432
          %229 = vsyncadd [#allocation8], %s228
          %s230 = sshll.u32 [#allocation7], 4
          %s231 = int_to_ptr.vmem [resolvable:$true] %s230
          %236 = dma.hbm_to_vmem [thread:$0]  %s1, 18432, %s231, [#allocation8], 256, 256, 16
        $region16: #{tpu_custom_call.1} parent=11 // pred_fallthru
          _
        // Predicated region
        $region17: #{tpu_custom_call.1} parent=11 // pred_check
          %p237 = pneg %p94
        $region18: #{tpu_custom_call.1} parent=11 // pred_check_branch
          %239 = sbr.rel (%p237) target = $region20
        $region19: #{tpu_custom_call.1} parent=11 // pred_region
          %s241 = ssub.s32 32, 32
          %242 = vsyncadd [#allocation8], %s241
          %s244 = sshll.u32 [#allocation9], 4
          %s245 = int_to_ptr.vmem [resolvable:$true] %s244
          %247 = dma.hbm_to_vmem [thread:$0]  %s2, 32, %s245, [#allocation8]
        $region20: #{tpu_custom_call.1} parent=11 // pred_fallthru
          _
        // Predicated region
        $region21: #{tpu_custom_call.1} parent=11 // pred_check
          %p248 = pneg %p115
        $region22: #{tpu_custom_call.1} parent=11 // pred_check_branch
          %250 = sbr.rel (%p248) target = $region24
        $region23: #{tpu_custom_call.1} parent=11 // pred_region
          %s252 = ssub.s32 16, 16
          %253 = vsyncadd [#allocation11], %s252
          %s255 = sshll.u32 [#allocation10], 4
          %s256 = int_to_ptr.vmem [resolvable:$true] %s255
          %258 = dma.hbm_to_vmem [thread:$0]  %s3, 16, %s256, [#allocation11]
        $region24: #{tpu_custom_call.1} parent=11 // pred_fallthru
          _
        // Predicated region
        $region25: #{tpu_custom_call.1} parent=11 // pred_check
          %p259 = pneg %p136
        $region26: #{tpu_custom_call.1} parent=11 // pred_check_branch
          %261 = sbr.rel (%p259) target = $region28
        $region27: #{tpu_custom_call.1} parent=11 // pred_region
          %s263 = ssub.s32 16, 16
          %264 = vsyncadd [#allocation11], %s263
          %s266 = sshll.u32 [#allocation12], 4
          %s267 = int_to_ptr.vmem [resolvable:$true] %s266
          %269 = dma.hbm_to_vmem [thread:$0]  %s4, 16, %s267, [#allocation11]
        $region28: #{tpu_custom_call.1} parent=11 // pred_fallthru
          _
        // Predicated region
        $region29: #{tpu_custom_call.1} parent=11 // pred_check
          %p270 = pneg %p157
        $region30: #{tpu_custom_call.1} parent=11 // pred_check_branch
          %272 = sbr.rel (%p270) target = $region32
        $region31: #{tpu_custom_call.1} parent=11 // pred_region
          %s274 = ssub.s32 2048, 2048
          %275 = vsyncadd [#allocation14], %s274
          %s276 = sshll.u32 [#allocation13], 4
          %s277 = int_to_ptr.vmem [resolvable:$true] %s276
          %282 = dma.hbm_to_vmem [thread:$0]  %s5, 2048, %s277, [#allocation14], 128, 128, 8
        $region32: #{tpu_custom_call.1} parent=11 // pred_fallthru
          _
      $region12: #{tpu_custom_call.1} parent=5 // pred_fallthru
        _
      %p283 = scmp.lt.s32.totalorder %s26, 3
      // Predicated region
      $region33: #{tpu_custom_call.1} parent=5 // pred_check
        %p284 = pneg %p283
      $region34: #{tpu_custom_call.1} parent=5 // pred_check_branch
        %286 = sbr.rel (%p284) target = $region36
      $region35: #{tpu_custom_call.1} parent=5 // pred_region
        // Predicated region
        $region37: #{tpu_custom_call.1} parent=35 // pred_check
          %p287 = pneg %p46
        $region38: #{tpu_custom_call.1} parent=35 // pred_check_branch
          %289 = sbr.rel (%p287) target = $region40
        $region39: #{tpu_custom_call.1} parent=35 // pred_region
          %s290 = sand.u32 %s36, 1
          %s291 = scalar_lea.sflag [#allocation5], %s290
          %s292 = sand.u32 %s36, 1
          %s293 = smul.addr %s292, 288
          %s294 = scalar_lea.vmem [#allocation4], %s293
          %s296 = ssub.s32 4608, 4608
          %297 = vsyncadd %s291, %s296
          %s298 = smul.addr %s26, 128
          %s299 = scalar_lea.hbm %s0, %s298
          %s300 = sshll.u32 %s294, 4
          %s301 = int_to_ptr.vmem [resolvable:$true] %s300
          %306 = dma.hbm_to_vmem [thread:$0]  %s299, 4608, %s301, %s291, 384, 128, 8
        $region40: #{tpu_custom_call.1} parent=35 // pred_fallthru
          _
      $region36: #{tpu_custom_call.1} parent=5 // pred_fallthru
        _
      %p307 = scmp.le.s32.totalorder 1, %s26
      %p308 = scmp.lt.s32.totalorder %s26, 4
      %p309 = pnand %p307, %p308
      %p310 = pneg %p309
      // Predicated region
      $region41: #{tpu_custom_call.1} parent=5 // pred_check
        _
      $region42: #{tpu_custom_call.1} parent=5 // pred_check_branch
        %312 = sbr.rel (%p309) target = $region44
      $region43: #{tpu_custom_call.1} parent=5 // pred_region
        %s313 = ssub.s32 %s26, 1
        %s314 = sand.u32 %s39, 1
        %s315 = scalar_lea.sflag [#allocation5], %s314
        %s316 = sand.u32 %s39, 1
        %s317 = smul.addr %s316, 288
        %s318 = scalar_lea.vmem [#allocation4], %s317
        // Predicated region
        $region45: #{tpu_custom_call.1} parent=43 // pred_check
          %p319 = pneg %p52
        $region46: #{tpu_custom_call.1} parent=43 // pred_check_branch
          %321 = sbr.rel (%p319) target = $region48
        $region47: #{tpu_custom_call.1} parent=43 // pred_region
          %322 = dma.done %s315, 4608
        $region48: #{tpu_custom_call.1} parent=43 // pred_fallthru
          _
        // Predicated region
        $region49: #{tpu_custom_call.1} parent=43 // pred_check
          %p323 = pneg %p73
        $region50: #{tpu_custom_call.1} parent=43 // pred_check_branch
          %325 = sbr.rel (%p323) target = $region52
        $region51: #{tpu_custom_call.1} parent=43 // pred_region
          %326 = dma.done [#allocation8], 18432
        $region52: #{tpu_custom_call.1} parent=43 // pred_fallthru
          _
        // Predicated region
        $region53: #{tpu_custom_call.1} parent=43 // pred_check
          %p327 = pneg %p94
        $region54: #{tpu_custom_call.1} parent=43 // pred_check_branch
          %329 = sbr.rel (%p327) target = $region56
        $region55: #{tpu_custom_call.1} parent=43 // pred_region
          %330 = dma.done [#allocation8], 32
        $region56: #{tpu_custom_call.1} parent=43 // pred_fallthru
          _
        // Predicated region
        $region57: #{tpu_custom_call.1} parent=43 // pred_check
          %p331 = pneg %p115
        $region58: #{tpu_custom_call.1} parent=43 // pred_check_branch
          %333 = sbr.rel (%p331) target = $region60
        $region59: #{tpu_custom_call.1} parent=43 // pred_region
          %334 = dma.done [#allocation11], 16
        $region60: #{tpu_custom_call.1} parent=43 // pred_fallthru
          _
        // Predicated region
        $region61: #{tpu_custom_call.1} parent=43 // pred_check
          %p335 = pneg %p136
        $region62: #{tpu_custom_call.1} parent=43 // pred_check_branch
          %337 = sbr.rel (%p335) target = $region64
        $region63: #{tpu_custom_call.1} parent=43 // pred_region
          %338 = dma.done [#allocation11], 16
        $region64: #{tpu_custom_call.1} parent=43 // pred_fallthru
          _
        // Predicated region
        $region65: #{tpu_custom_call.1} parent=43 // pred_check
          %p339 = pneg %p157
        $region66: #{tpu_custom_call.1} parent=43 // pred_check_branch
          %341 = sbr.rel (%p339) target = $region68
        $region67: #{tpu_custom_call.1} parent=43 // pred_region
          %342 = dma.done [#allocation14], 2048
        $region68: #{tpu_custom_call.1} parent=43 // pred_fallthru
          _
        %s343 = sand.u32 %s39, 1
        %s344 = scalar_lea.sflag [#allocation5], %s343
        %s345 = sand.u32 %s39, 1
        %s346 = smul.addr %s345, 288
        %s347 = scalar_lea.vmem [#allocation4], %s346
        %p348 = pneg %p52
        %p349 = pneg %p49
        %p350 = pneg %p73
        %p351 = pneg %p70
        %p352 = pneg %p94
        %p353 = pneg %p91
        %p354 = pneg %p115
        %p355 = pneg %p112
        %p356 = pneg %p136
        %p357 = pneg %p133
        %p358 = pneg %p157
        %p359 = pneg %p154
        %p360 = pneg %p183
        %p361 = pneg %p180
        %s362 = sand.u32 %s170, 1
        %s363 = scalar_lea.sflag [#allocation6], %s362
        %s364 = sand.u32 %s170, 1
        %s365 = smul.addr %s364, 8
        %s366 = scalar_lea.vmem [#allocation15], %s365
        %p367 = pneg %p209
        %p368 = pneg %p206
        %s369 = sand.u32 %s196, 1
        %s370 = scalar_lea.sflag [#allocation17], %s369
        %s371 = sand.u32 %s196, 1
        %s372 = smul.addr %s371, 2
        %s373 = scalar_lea.vmem [#allocation16], %s372
        %v374 = vld [vmem:[#allocation9] sm:$0x3]
        %v375 = vld [vmem:[#allocation12] sm:$0x1]
        %v376 = vld [vmem:[#allocation13] sm:$0xff]
        %v377 = vld [vmem:[#allocation13 + $0x8] sm:$0xff]
        %v378 = vld [vmem:[#allocation13 + $0x10] sm:$0xff]
        %v379 = vld [vmem:[#allocation13 + $0x18] sm:$0xff]
        %v380 = vld [vmem:[#allocation13 + $0x20] sm:$0xff]
        %v381 = vld [vmem:[#allocation13 + $0x28] sm:$0xff]
        %v382 = vld [vmem:[#allocation13 + $0x30] sm:$0xff]
        %v383 = vld [vmem:[#allocation13 + $0x38] sm:$0xff]
        %v384 = vld [vmem:[#allocation13 + $0x40] sm:$0xff]
        %v385 = vld [vmem:[#allocation13 + $0x48] sm:$0xff]
        %v386 = vld [vmem:[#allocation13 + $0x50] sm:$0xff]
        %v387 = vld [vmem:[#allocation13 + $0x58] sm:$0xff]
        %v388 = vld [vmem:[#allocation13 + $0x60] sm:$0xff]
        %v389 = vld [vmem:[#allocation13 + $0x68] sm:$0xff]
        %v390 = vld [vmem:[#allocation13 + $0x70] sm:$0xff]
        %v391 = vld [vmem:[#allocation13 + $0x78] sm:$0xff]
        %v392 = vld [vmem:[%s318] sm:$0xff]
        %v393 = vld [vmem:[#allocation7] sm:$0xff]
        %v394 = vld [vmem:[#allocation7 + $0x8] sm:$0xff]
        %v395 = vld [vmem:[#allocation7 + $0x10] sm:$0xff]
        %v396 = vld [vmem:[#allocation7 + $0x18] sm:$0xff]
        %v398 = vlaneseq
        %v399 = vshrl.u32 %v398, 7
        %v400 = vsub.s32 0, %v399
        %v401 = vrot.slane %v374, %v400
        %v402 = vlaneseq
        %v403 = vshrl.u32 %v402, 7
        %v404 = vsub.s32 1, %v403
        %v405 = vrot.slane %v374, %v404
        %vm408 = vcmask 130048
        %v410 = vsel %vm408, %v392, 0
        %412 = vmatprep.subr.mxu0 %v394
        %413 = vmatpush1.msra.mxu0 %v393
        %414 = vmatprep.subr.mxu0 %v396
        %415 = vmatpush1.msra.mxu0 %v395
        %416 = vmatprep.subr.mxu0 0.0
        %417 = vmatpush1.msra.mxu0 0.0
        %418 = vmatprep.subr.mxu0 0.0
        %419 = vmatpush1.msra.mxu0 0.0
        %420 = vmatprep.subr.mxu0 0.0
        %421 = vmatpush1.msra.mxu0 0.0
        %422 = vmatprep.subr.mxu0 0.0
        %423 = vmatpush1.msra.mxu0 0.0
        %424 = vmatprep.subr.mxu0 0.0
        %425 = vmatpush1.msra.mxu0 0.0
        %426 = vmatprep.subr.mxu0 0.0
        %427 = vmatpush1.msra.mxu0 0.0
        %428 = vmatprep.subr.mxu0 0.0
        %429 = vmatpush1.msra.mxu0 0.0
        %430 = vmatprep.subr.mxu0 0.0
        %431 = vmatpush1.msra.mxu0 0.0
        %432 = vmatprep.subr.mxu0 0.0
        %433 = vmatpush1.msra.mxu0 0.0
        %434 = vmatprep.subr.mxu0 0.0
        %435 = vmatpush1.msra.mxu0 0.0
        %436 = vmatprep.subr.mxu0 0.0
        %437 = vmatpush1.msra.mxu0 0.0
        %438 = vmatprep.subr.mxu0 0.0
        %439 = vmatpush1.msra.mxu0 0.0
        %440 = vmatprep.subr.mxu0 0.0
        %441 = vmatpush1.msra.mxu0 0.0
        %442 = vmatprep.subr.mxu0 0.0
        %443 = vmatpush1.msra.mxu0 0.0
        %444 = vmatprep.subr.mxu0 0.0
        %445 = vmatpush1.msra.mxu0 0.0
        %446 = vmatprep.subr.mxu0 0.0
        %447 = vmatpush1.msra.mxu0 0.0
        %448 = vmatprep.subr.mxu0 0.0
        %449 = vmatpush1.msra.mxu0 0.0
        %450 = vmatprep.subr.mxu0 0.0
        %451 = vmatpush1.msra.mxu0 0.0
        %452 = vmatprep.subr.mxu0 0.0
        %453 = vmatpush1.msra.mxu0 0.0
        %454 = vmatprep.subr.mxu0 0.0
        %455 = vmatpush1.msra.mxu0 0.0
        %456 = vmatprep.subr.mxu0 0.0
        %457 = vmatpush1.msra.mxu0 0.0
        %458 = vmatprep.subr.mxu0 0.0
        %459 = vmatpush1.msra.mxu0 0.0
        %460 = vmatprep.subr.mxu0 0.0
        %461 = vmatpush1.msra.mxu0 0.0
        %462 = vmatprep.subr.mxu0 0.0
        %463 = vmatpush1.msra.mxu0 0.0
        %464 = vmatprep.subr.mxu0 0.0
        %465 = vmatpush1.msra.mxu0 0.0
        %466 = vmatprep.subr.mxu0 0.0
        %467 = vmatpush1.msra.mxu0 0.0
        %468 = vmatprep.subr.mxu0 0.0
        %469 = vmatpush1.msra.mxu0 0.0
        %470 = vmatprep.subr.mxu0 0.0
        %471 = vmatpush1.msra.mxu0 0.0
        %472 = vmatprep.subr.mxu0 0.0
        %473 = vmatpush1.msra.mxu0 0.0
        %474 = vmatprep.subr.mxu0 0.0
        %475 = vmatpush1.msra.mxu0 0.0
        %476 = vmatprep.mubr.f32.mxu0 0.0
        %477 = vmatmul.mubr.f32.gmra.mrb[0].mxu0 %v410
        %v478 = vpop.f32.mrb[0].mxu0
        %v479 = vadd.f32 %v401, %v478
        %v480 = vpop.f32.mrb[0].mxu0
        %v481 = vadd.f32 %v405, %v480
        %482 = vdwg.mxu0
        %483 = vst [vmem:[#allocation2] sm:$0xff] %v481
        %v484 = vmul.f32 %v479, %v479
        %485 = vmatprep.subr.mxu0 0.0
        %486 = vmatpush1.msra.mxu0 %v376
        %487 = vmatprep.subr.mxu0 0.0
        %488 = vmatpush1.msra.mxu0 %v377
        %489 = vmatprep.subr.mxu0 0.0
        %490 = vmatpush1.msra.mxu0 %v378
        %491 = vmatprep.subr.mxu0 0.0
        %492 = vmatpush1.msra.mxu0 %v379
        %493 = vmatprep.subr.mxu0 0.0
        %494 = vmatpush1.msra.mxu0 %v380
        %495 = vmatprep.subr.mxu0 0.0
        %496 = vmatpush1.msra.mxu0 %v381
        %497 = vmatprep.subr.mxu0 0.0
        %498 = vmatpush1.msra.mxu0 %v382
        %499 = vmatprep.subr.mxu0 0.0
        %500 = vmatpush1.msra.mxu0 %v383
        %501 = vmatprep.subr.mxu0 0.0
        %502 = vmatpush1.msra.mxu0 %v384
        %503 = vmatprep.subr.mxu0 0.0
        %504 = vmatpush1.msra.mxu0 %v385
        %505 = vmatprep.subr.mxu0 0.0
        %506 = vmatpush1.msra.mxu0 %v386
        %507 = vmatprep.subr.mxu0 0.0
        %508 = vmatpush1.msra.mxu0 %v387
        %509 = vmatprep.subr.mxu0 0.0
        %510 = vmatpush1.msra.mxu0 %v388
        %511 = vmatprep.subr.mxu0 0.0
        %512 = vmatpush1.msra.mxu0 %v389
        %513 = vmatprep.subr.mxu0 0.0
        %514 = vmatpush1.msra.mxu0 %v390
        %515 = vmatprep.subr.mxu0 0.0
        %516 = vmatpush1.msra.mxu0 %v391
        %517 = vmatprep.subr.mxu0 0.0
        %518 = vmatpush1.msra.mxu0 0.0
        %519 = vmatprep.subr.mxu0 0.0
        %520 = vmatpush1.msra.mxu0 0.0
        %521 = vmatprep.subr.mxu0 0.0
        %522 = vmatpush1.msra.mxu0 0.0
        %523 = vmatprep.subr.mxu0 0.0
        %524 = vmatpush1.msra.mxu0 0.0
        %525 = vmatprep.subr.mxu0 0.0
        %526 = vmatpush1.msra.mxu0 0.0
        %527 = vmatprep.subr.mxu0 0.0
        %528 = vmatpush1.msra.mxu0 0.0
        %529 = vmatprep.subr.mxu0 0.0
        %530 = vmatpush1.msra.mxu0 0.0
        %531 = vmatprep.subr.mxu0 0.0
        %532 = vmatpush1.msra.mxu0 0.0
        %533 = vmatprep.subr.mxu0 0.0
        %534 = vmatpush1.msra.mxu0 0.0
        %535 = vmatprep.subr.mxu0 0.0
        %536 = vmatpush1.msra.mxu0 0.0
        %537 = vmatprep.subr.mxu0 0.0
        %538 = vmatpush1.msra.mxu0 0.0
        %539 = vmatprep.subr.mxu0 0.0
        %540 = vmatpush1.msra.mxu0 0.0
        %541 = vmatprep.subr.mxu0 0.0
        %542 = vmatpush1.msra.mxu0 0.0
        %543 = vmatprep.subr.mxu0 0.0
        %544 = vmatpush1.msra.mxu0 0.0
        %545 = vmatprep.subr.mxu0 0.0
        %546 = vmatpush1.msra.mxu0 0.0
        %547 = vmatprep.subr.mxu0 0.0
        %548 = vmatpush1.msra.mxu0 0.0
        %549 = vmatprep.mubr.f32.mxu0 0.0
        %550 = vmatmul.mubr.f32.gmra.mrb[0].mxu0 %v484
        %v551 = vpop.f32.mrb[0].mxu0
        %v552 = vadd.f32 0.0, %v551
        %v553 = vpop.f32.mrb[0].mxu0
        %554 = vdwg.mxu0
        %v556 = vlaneseq
        %v557 = vshrl.u32 %v556, 7
        %v558 = vsub.s32 0, %v557
        %v559 = vrot.slane %v375, %v558
        %v561 = vsub.f32 %v559, %v552
        %562 = vst [vmem:[#allocation3] sm:$0xff] %v561
        %s563 = scalar_lea.vmem %s318, 8 [#allocation4]
        %v564 = vld [vmem:[%s563] sm:$0xff]
        %s565 = scalar_lea.vmem [#allocation7], 32
        %v566 = vld [vmem:[%s565] sm:$0xff]
        %v567 = vld [vmem:[%s565 + $0x8] sm:$0xff]
        %v568 = vld [vmem:[%s565 + $0x10] sm:$0xff]
        %v569 = vld [vmem:[%s565 + $0x18] sm:$0xff]
        %v571 = vsel %vm408, %v564, 0
        %573 = vmatprep.subr.mxu0 %v567
        %574 = vmatpush1.msra.mxu0 %v566
        %575 = vmatprep.subr.mxu0 %v569
        %576 = vmatpush1.msra.mxu0 %v568
        %577 = vmatprep.subr.mxu0 0.0
        %578 = vmatpush1.msra.mxu0 0.0
        %579 = vmatprep.subr.mxu0 0.0
        %580 = vmatpush1.msra.mxu0 0.0
        %581 = vmatprep.subr.mxu0 0.0
        %582 = vmatpush1.msra.mxu0 0.0
        %583 = vmatprep.subr.mxu0 0.0
        %584 = vmatpush1.msra.mxu0 0.0
        %585 = vmatprep.subr.mxu0 0.0
        %586 = vmatpush1.msra.mxu0 0.0
        %587 = vmatprep.subr.mxu0 0.0
        %588 = vmatpush1.msra.mxu0 0.0
        %589 = vmatprep.subr.mxu0 0.0
        %590 = vmatpush1.msra.mxu0 0.0
        %591 = vmatprep.subr.mxu0 0.0
        %592 = vmatpush1.msra.mxu0 0.0
        %593 = vmatprep.subr.mxu0 0.0
        %594 = vmatpush1.msra.mxu0 0.0
        %595 = vmatprep.subr.mxu0 0.0
        %596 = vmatpush1.msra.mxu0 0.0
        %597 = vmatprep.subr.mxu0 0.0
        %598 = vmatpush1.msra.mxu0 0.0
        %599 = vmatprep.subr.mxu0 0.0
        %600 = vmatpush1.msra.mxu0 0.0
        %601 = vmatprep.subr.mxu0 0.0
        %602 = vmatpush1.msra.mxu0 0.0
        %603 = vmatprep.subr.mxu0 0.0
        %604 = vmatpush1.msra.mxu0 0.0
        %605 = vmatprep.subr.mxu0 0.0
        %606 = vmatpush1.msra.mxu0 0.0
        %607 = vmatprep.subr.mxu0 0.0
        %608 = vmatpush1.msra.mxu0 0.0
        %609 = vmatprep.subr.mxu0 0.0
        %610 = vmatpush1.msra.mxu0 0.0
        %611 = vmatprep.subr.mxu0 0.0
        %612 = vmatpush1.msra.mxu0 0.0
        %613 = vmatprep.subr.mxu0 0.0
        %614 = vmatpush1.msra.mxu0 0.0
        %615 = vmatprep.subr.mxu0 0.0
        %616 = vmatpush1.msra.mxu0 0.0
        %617 = vmatprep.subr.mxu0 0.0
        %618 = vmatpush1.msra.mxu0 0.0
        %619 = vmatprep.subr.mxu0 0.0
        %620 = vmatpush1.msra.mxu0 0.0
        %621 = vmatprep.subr.mxu0 0.0
        %622 = vmatpush1.msra.mxu0 0.0
        %623 = vmatprep.subr.mxu0 0.0
        %624 = vmatpush1.msra.mxu0 0.0
        %625 = vmatprep.subr.mxu0 0.0
        %626 = vmatpush1.msra.mxu0 0.0
        %627 = vmatprep.subr.mxu0 0.0
        %628 = vmatpush1.msra.mxu0 0.0
        %629 = vmatprep.subr.mxu0 0.0
        %630 = vmatpush1.msra.mxu0 0.0
        %631 = vmatprep.subr.mxu0 0.0
        %632 = vmatpush1.msra.mxu0 0.0
        %633 = vmatprep.subr.mxu0 0.0
        %634 = vmatpush1.msra.mxu0 0.0
        %635 = vmatprep.subr.mxu0 0.0
        %636 = vmatpush1.msra.mxu0 0.0
        %637 = vmatprep.mubr.f32.mxu0 0.0
        %638 = vmatmul.mubr.f32.gmra.mrb[0].mxu0 %v571
        %v639 = vpop.f32.mrb[0].mxu0
        %v640 = vadd.f32 %v401, %v639
        %v641 = vpop.f32.mrb[0].mxu0
        %v642 = vadd.f32 %v405, %v641
        %643 = vdwg.mxu0
        %s644 = scalar_lea.vmem [#allocation2], 8
        %645 = vst [vmem:[%s644] sm:$0xff] %v642
        %v646 = vmul.f32 %v640, %v640
        %647 = vmatprep.subr.mxu0 0.0
        %648 = vmatpush1.msra.mxu0 %v376
        %649 = vmatprep.subr.mxu0 0.0
        %650 = vmatpush1.msra.mxu0 %v377
        %651 = vmatprep.subr.mxu0 0.0
        %652 = vmatpush1.msra.mxu0 %v378
        %653 = vmatprep.subr.mxu0 0.0
        %654 = vmatpush1.msra.mxu0 %v379
        %655 = vmatprep.subr.mxu0 0.0
        %656 = vmatpush1.msra.mxu0 %v380
        %657 = vmatprep.subr.mxu0 0.0
        %658 = vmatpush1.msra.mxu0 %v381
        %659 = vmatprep.subr.mxu0 0.0
        %660 = vmatpush1.msra.mxu0 %v382
        %661 = vmatprep.subr.mxu0 0.0
        %662 = vmatpush1.msra.mxu0 %v383
        %663 = vmatprep.subr.mxu0 0.0
        %664 = vmatpush1.msra.mxu0 %v384
        %665 = vmatprep.subr.mxu0 0.0
        %666 = vmatpush1.msra.mxu0 %v385
        %667 = vmatprep.subr.mxu0 0.0
        %668 = vmatpush1.msra.mxu0 %v386
        %669 = vmatprep.subr.mxu0 0.0
        %670 = vmatpush1.msra.mxu0 %v387
        %671 = vmatprep.subr.mxu0 0.0
        %672 = vmatpush1.msra.mxu0 %v388
        %673 = vmatprep.subr.mxu0 0.0
        %674 = vmatpush1.msra.mxu0 %v389
        %675 = vmatprep.subr.mxu0 0.0
        %676 = vmatpush1.msra.mxu0 %v390
        %677 = vmatprep.subr.mxu0 0.0
        %678 = vmatpush1.msra.mxu0 %v391
        %679 = vmatprep.subr.mxu0 0.0
        %680 = vmatpush1.msra.mxu0 0.0
        %681 = vmatprep.subr.mxu0 0.0
        %682 = vmatpush1.msra.mxu0 0.0
        %683 = vmatprep.subr.mxu0 0.0
        %684 = vmatpush1.msra.mxu0 0.0
        %685 = vmatprep.subr.mxu0 0.0
        %686 = vmatpush1.msra.mxu0 0.0
        %687 = vmatprep.subr.mxu0 0.0
        %688 = vmatpush1.msra.mxu0 0.0
        %689 = vmatprep.subr.mxu0 0.0
        %690 = vmatpush1.msra.mxu0 0.0
        %691 = vmatprep.subr.mxu0 0.0
        %692 = vmatpush1.msra.mxu0 0.0
        %693 = vmatprep.subr.mxu0 0.0
        %694 = vmatpush1.msra.mxu0 0.0
        %695 = vmatprep.subr.mxu0 0.0
        %696 = vmatpush1.msra.mxu0 0.0
        %697 = vmatprep.subr.mxu0 0.0
        %698 = vmatpush1.msra.mxu0 0.0
        %699 = vmatprep.subr.mxu0 0.0
        %700 = vmatpush1.msra.mxu0 0.0
        %701 = vmatprep.subr.mxu0 0.0
        %702 = vmatpush1.msra.mxu0 0.0
        %703 = vmatprep.subr.mxu0 0.0
        %704 = vmatpush1.msra.mxu0 0.0
        %705 = vmatprep.subr.mxu0 0.0
        %706 = vmatpush1.msra.mxu0 0.0
        %707 = vmatprep.subr.mxu0 0.0
        %708 = vmatpush1.msra.mxu0 0.0
        %709 = vmatprep.subr.mxu0 0.0
        %710 = vmatpush1.msra.mxu0 0.0
        %711 = vmatprep.mubr.f32.mxu0 0.0
        %712 = vmatmul.mubr.f32.gmra.mrb[0].mxu0 %v646
        %v713 = vpop.f32.mrb[0].mxu0
        %v714 = vadd.f32 0.0, %v713
        %v715 = vpop.f32.mrb[0].mxu0
        %716 = vdwg.mxu0
        %v717 = vsub.f32 %v559, %v714
        %s718 = scalar_lea.vmem [#allocation3], 8
        %719 = vst [vmem:[%s718] sm:$0xff] %v717
        %s720 = scalar_lea.vmem %s318, 16 [#allocation4]
        %v721 = vld [vmem:[%s720] sm:$0xff]
        %s722 = scalar_lea.vmem [#allocation7], 64
        %v723 = vld [vmem:[%s722] sm:$0xff]
        %v724 = vld [vmem:[%s722 + $0x8] sm:$0xff]
        %v725 = vld [vmem:[%s722 + $0x10] sm:$0xff]
        %v726 = vld [vmem:[%s722 + $0x18] sm:$0xff]
        %v728 = vsel %vm408, %v721, 0
        %730 = vmatprep.subr.mxu0 %v724
        %731 = vmatpush1.msra.mxu0 %v723
        %732 = vmatprep.subr.mxu0 %v726
        %733 = vmatpush1.msra.mxu0 %v725
        %734 = vmatprep.subr.mxu0 0.0
        %735 = vmatpush1.msra.mxu0 0.0
        %736 = vmatprep.subr.mxu0 0.0
        %737 = vmatpush1.msra.mxu0 0.0
        %738 = vmatprep.subr.mxu0 0.0
        %739 = vmatpush1.msra.mxu0 0.0
        %740 = vmatprep.subr.mxu0 0.0
        %741 = vmatpush1.msra.mxu0 0.0
        %742 = vmatprep.subr.mxu0 0.0
        %743 = vmatpush1.msra.mxu0 0.0
        %744 = vmatprep.subr.mxu0 0.0
        %745 = vmatpush1.msra.mxu0 0.0
        %746 = vmatprep.subr.mxu0 0.0
        %747 = vmatpush1.msra.mxu0 0.0
        %748 = vmatprep.subr.mxu0 0.0
        %749 = vmatpush1.msra.mxu0 0.0
        %750 = vmatprep.subr.mxu0 0.0
        %751 = vmatpush1.msra.mxu0 0.0
        %752 = vmatprep.subr.mxu0 0.0
        %753 = vmatpush1.msra.mxu0 0.0
        %754 = vmatprep.subr.mxu0 0.0
        %755 = vmatpush1.msra.mxu0 0.0
        %756 = vmatprep.subr.mxu0 0.0
        %757 = vmatpush1.msra.mxu0 0.0
        %758 = vmatprep.subr.mxu0 0.0
        %759 = vmatpush1.msra.mxu0 0.0
        %760 = vmatprep.subr.mxu0 0.0
        %761 = vmatpush1.msra.mxu0 0.0
        %762 = vmatprep.subr.mxu0 0.0
        %763 = vmatpush1.msra.mxu0 0.0
        %764 = vmatprep.subr.mxu0 0.0
        %765 = vmatpush1.msra.mxu0 0.0
        %766 = vmatprep.subr.mxu0 0.0
        %767 = vmatpush1.msra.mxu0 0.0
        %768 = vmatprep.subr.mxu0 0.0
        %769 = vmatpush1.msra.mxu0 0.0
        %770 = vmatprep.subr.mxu0 0.0
        %771 = vmatpush1.msra.mxu0 0.0
        %772 = vmatprep.subr.mxu0 0.0
        %773 = vmatpush1.msra.mxu0 0.0
        %774 = vmatprep.subr.mxu0 0.0
        %775 = vmatpush1.msra.mxu0 0.0
        %776 = vmatprep.subr.mxu0 0.0
        %777 = vmatpush1.msra.mxu0 0.0
        %778 = vmatprep.subr.mxu0 0.0
        %779 = vmatpush1.msra.mxu0 0.0
        %780 = vmatprep.subr.mxu0 0.0
        %781 = vmatpush1.msra.mxu0 0.0
        %782 = vmatprep.subr.mxu0 0.0
        %783 = vmatpush1.msra.mxu0 0.0
        %784 = vmatprep.subr.mxu0 0.0
        %785 = vmatpush1.msra.mxu0 0.0
        %786 = vmatprep.subr.mxu0 0.0
        %787 = vmatpush1.msra.mxu0 0.0
        %788 = vmatprep.subr.mxu0 0.0
        %789 = vmatpush1.msra.mxu0 0.0
        %790 = vmatprep.subr.mxu0 0.0
        %791 = vmatpush1.msra.mxu0 0.0
        %792 = vmatprep.subr.mxu0 0.0
        %793 = vmatpush1.msra.mxu0 0.0
        %794 = vmatprep.mubr.f32.mxu0 0.0
        %795 = vmatmul.mubr.f32.gmra.mrb[0].mxu0 %v728
        %v796 = vpop.f32.mrb[0].mxu0
        %v797 = vadd.f32 %v401, %v796
        %v798 = vpop.f32.mrb[0].mxu0
        %v799 = vadd.f32 %v405, %v798
        %800 = vdwg.mxu0
        %s801 = scalar_lea.vmem [#allocation2], 16
        %802 = vst [vmem:[%s801] sm:$0xff] %v799
        %v803 = vmul.f32 %v797, %v797
        %804 = vmatprep.subr.mxu0 0.0
        %805 = vmatpush1.msra.mxu0 %v376
        %806 = vmatprep.subr.mxu0 0.0
        %807 = vmatpush1.msra.mxu0 %v377
        %808 = vmatprep.subr.mxu0 0.0
        %809 = vmatpush1.msra.mxu0 %v378
        %810 = vmatprep.subr.mxu0 0.0
        %811 = vmatpush1.msra.mxu0 %v379
        %812 = vmatprep.subr.mxu0 0.0
        %813 = vmatpush1.msra.mxu0 %v380
        %814 = vmatprep.subr.mxu0 0.0
        %815 = vmatpush1.msra.mxu0 %v381
        %816 = vmatprep.subr.mxu0 0.0
        %817 = vmatpush1.msra.mxu0 %v382
        %818 = vmatprep.subr.mxu0 0.0
        %819 = vmatpush1.msra.mxu0 %v383
        %820 = vmatprep.subr.mxu0 0.0
        %821 = vmatpush1.msra.mxu0 %v384
        %822 = vmatprep.subr.mxu0 0.0
        %823 = vmatpush1.msra.mxu0 %v385
        %824 = vmatprep.subr.mxu0 0.0
        %825 = vmatpush1.msra.mxu0 %v386
        %826 = vmatprep.subr.mxu0 0.0
        %827 = vmatpush1.msra.mxu0 %v387
        %828 = vmatprep.subr.mxu0 0.0
        %829 = vmatpush1.msra.mxu0 %v388
        %830 = vmatprep.subr.mxu0 0.0
        %831 = vmatpush1.msra.mxu0 %v389
        %832 = vmatprep.subr.mxu0 0.0
        %833 = vmatpush1.msra.mxu0 %v390
        %834 = vmatprep.subr.mxu0 0.0
        %835 = vmatpush1.msra.mxu0 %v391
        %836 = vmatprep.subr.mxu0 0.0
        %837 = vmatpush1.msra.mxu0 0.0
        %838 = vmatprep.subr.mxu0 0.0
        %839 = vmatpush1.msra.mxu0 0.0
        %840 = vmatprep.subr.mxu0 0.0
        %841 = vmatpush1.msra.mxu0 0.0
        %842 = vmatprep.subr.mxu0 0.0
        %843 = vmatpush1.msra.mxu0 0.0
        %844 = vmatprep.subr.mxu0 0.0
        %845 = vmatpush1.msra.mxu0 0.0
        %846 = vmatprep.subr.mxu0 0.0
        %847 = vmatpush1.msra.mxu0 0.0
        %848 = vmatprep.subr.mxu0 0.0
        %849 = vmatpush1.msra.mxu0 0.0
        %850 = vmatprep.subr.mxu0 0.0
        %851 = vmatpush1.msra.mxu0 0.0
        %852 = vmatprep.subr.mxu0 0.0
        %853 = vmatpush1.msra.mxu0 0.0
        %854 = vmatprep.subr.mxu0 0.0
        %855 = vmatpush1.msra.mxu0 0.0
        %856 = vmatprep.subr.mxu0 0.0
        %857 = vmatpush1.msra.mxu0 0.0
        %858 = vmatprep.subr.mxu0 0.0
        %859 = vmatpush1.msra.mxu0 0.0
        %860 = vmatprep.subr.mxu0 0.0
        %861 = vmatpush1.msra.mxu0 0.0
        %862 = vmatprep.subr.mxu0 0.0
        %863 = vmatpush1.msra.mxu0 0.0
        %864 = vmatprep.subr.mxu0 0.0
        %865 = vmatpush1.msra.mxu0 0.0
        %866 = vmatprep.subr.mxu0 0.0
        %867 = vmatpush1.msra.mxu0 0.0
        %868 = vmatprep.mubr.f32.mxu0 0.0
        %869 = vmatmul.mubr.f32.gmra.mrb[0].mxu0 %v803
        %v870 = vpop.f32.mrb[0].mxu0
        %v871 = vadd.f32 0.0, %v870
        %v872 = vpop.f32.mrb[0].mxu0
        %873 = vdwg.mxu0
        %v874 = vsub.f32 %v559, %v871
        %s875 = scalar_lea.vmem [#allocation3], 16
        %876 = vst [vmem:[%s875] sm:$0xff] %v874
        %s877 = scalar_lea.vmem %s318, 24 [#allocation4]
        %v878 = vld [vmem:[%s877] sm:$0xff]
        %s879 = scalar_lea.vmem [#allocation7], 96
        %v880 = vld [vmem:[%s879] sm:$0xff]
        %v881 = vld [vmem:[%s879 + $0x8] sm:$0xff]
        %v882 = vld [vmem:[%s879 + $0x10] sm:$0xff]
        %v883 = vld [vmem:[%s879 + $0x18] sm:$0xff]
        %v885 = vsel %vm408, %v878, 0
        %887 = vmatprep.subr.mxu0 %v881
        %888 = vmatpush1.msra.mxu0 %v880
        %889 = vmatprep.subr.mxu0 %v883
        %890 = vmatpush1.msra.mxu0 %v882
        %891 = vmatprep.subr.mxu0 0.0
        %892 = vmatpush1.msra.mxu0 0.0
        %893 = vmatprep.subr.mxu0 0.0
        %894 = vmatpush1.msra.mxu0 0.0
        %895 = vmatprep.subr.mxu0 0.0
        %896 = vmatpush1.msra.mxu0 0.0
        %897 = vmatprep.subr.mxu0 0.0
        %898 = vmatpush1.msra.mxu0 0.0
        %899 = vmatprep.subr.mxu0 0.0
        %900 = vmatpush1.msra.mxu0 0.0
        %901 = vmatprep.subr.mxu0 0.0
        %902 = vmatpush1.msra.mxu0 0.0
        %903 = vmatprep.subr.mxu0 0.0
        %904 = vmatpush1.msra.mxu0 0.0
        %905 = vmatprep.subr.mxu0 0.0
        %906 = vmatpush1.msra.mxu0 0.0
        %907 = vmatprep.subr.mxu0 0.0
        %908 = vmatpush1.msra.mxu0 0.0
        %909 = vmatprep.subr.mxu0 0.0
        %910 = vmatpush1.msra.mxu0 0.0
        %911 = vmatprep.subr.mxu0 0.0
        %912 = vmatpush1.msra.mxu0 0.0
        %913 = vmatprep.subr.mxu0 0.0
        %914 = vmatpush1.msra.mxu0 0.0
        %915 = vmatprep.subr.mxu0 0.0
        %916 = vmatpush1.msra.mxu0 0.0
        %917 = vmatprep.subr.mxu0 0.0
        %918 = vmatpush1.msra.mxu0 0.0
        %919 = vmatprep.subr.mxu0 0.0
        %920 = vmatpush1.msra.mxu0 0.0
        %921 = vmatprep.subr.mxu0 0.0
        %922 = vmatpush1.msra.mxu0 0.0
        %923 = vmatprep.subr.mxu0 0.0
        %924 = vmatpush1.msra.mxu0 0.0
        %925 = vmatprep.subr.mxu0 0.0
        %926 = vmatpush1.msra.mxu0 0.0
        %927 = vmatprep.subr.mxu0 0.0
        %928 = vmatpush1.msra.mxu0 0.0
        %929 = vmatprep.subr.mxu0 0.0
        %930 = vmatpush1.msra.mxu0 0.0
        %931 = vmatprep.subr.mxu0 0.0
        %932 = vmatpush1.msra.mxu0 0.0
        %933 = vmatprep.subr.mxu0 0.0
        %934 = vmatpush1.msra.mxu0 0.0
        %935 = vmatprep.subr.mxu0 0.0
        %936 = vmatpush1.msra.mxu0 0.0
        %937 = vmatprep.subr.mxu0 0.0
        %938 = vmatpush1.msra.mxu0 0.0
        %939 = vmatprep.subr.mxu0 0.0
        %940 = vmatpush1.msra.mxu0 0.0
        %941 = vmatprep.subr.mxu0 0.0
        %942 = vmatpush1.msra.mxu0 0.0
        %943 = vmatprep.subr.mxu0 0.0
        %944 = vmatpush1.msra.mxu0 0.0
        %945 = vmatprep.subr.mxu0 0.0
        %946 = vmatpush1.msra.mxu0 0.0
        %947 = vmatprep.subr.mxu0 0.0
        %948 = vmatpush1.msra.mxu0 0.0
        %949 = vmatprep.subr.mxu0 0.0
        %950 = vmatpush1.msra.mxu0 0.0
        %951 = vmatprep.mubr.f32.mxu0 0.0
        %952 = vmatmul.mubr.f32.gmra.mrb[0].mxu0 %v885
        %v953 = vpop.f32.mrb[0].mxu0
        %v954 = vadd.f32 %v401, %v953
        %v955 = vpop.f32.mrb[0].mxu0
        %v956 = vadd.f32 %v405, %v955
        %957 = vdwg.mxu0
        %s958 = scalar_lea.vmem [#allocation2], 24
        %959 = vst [vmem:[%s958] sm:$0xff] %v956
        %v960 = vmul.f32 %v954, %v954
        %961 = vmatprep.subr.mxu0 0.0
        %962 = vmatpush1.msra.mxu0 %v376
        %963 = vmatprep.subr.mxu0 0.0
        %964 = vmatpush1.msra.mxu0 %v377
        %965 = vmatprep.subr.mxu0 0.0
        %966 = vmatpush1.msra.mxu0 %v378
        %967 = vmatprep.subr.mxu0 0.0
        %968 = vmatpush1.msra.mxu0 %v379
        %969 = vmatprep.subr.mxu0 0.0
        %970 = vmatpush1.msra.mxu0 %v380
        %971 = vmatprep.subr.mxu0 0.0
        %972 = vmatpush1.msra.mxu0 %v381
        %973 = vmatprep.subr.mxu0 0.0
        %974 = vmatpush1.msra.mxu0 %v382
        %975 = vmatprep.subr.mxu0 0.0
        %976 = vmatpush1.msra.mxu0 %v383
        %977 = vmatprep.subr.mxu0 0.0
        %978 = vmatpush1.msra.mxu0 %v384
        %979 = vmatprep.subr.mxu0 0.0
        %980 = vmatpush1.msra.mxu0 %v385
        %981 = vmatprep.subr.mxu0 0.0
        %982 = vmatpush1.msra.mxu0 %v386
        %983 = vmatprep.subr.mxu0 0.0
        %984 = vmatpush1.msra.mxu0 %v387
        %985 = vmatprep.subr.mxu0 0.0
        %986 = vmatpush1.msra.mxu0 %v388
        %987 = vmatprep.subr.mxu0 0.0
        %988 = vmatpush1.msra.mxu0 %v389
        %989 = vmatprep.subr.mxu0 0.0
        %990 = vmatpush1.msra.mxu0 %v390
        %991 = vmatprep.subr.mxu0 0.0
        %992 = vmatpush1.msra.mxu0 %v391
        %993 = vmatprep.subr.mxu0 0.0
        %994 = vmatpush1.msra.mxu0 0.0
        %995 = vmatprep.subr.mxu0 0.0
        %996 = vmatpush1.msra.mxu0 0.0
        %997 = vmatprep.subr.mxu0 0.0
        %998 = vmatpush1.msra.mxu0 0.0
        %999 = vmatprep.subr.mxu0 0.0
        %1000 = vmatpush1.msra.mxu0 0.0
        %1001 = vmatprep.subr.mxu0 0.0
        %1002 = vmatpush1.msra.mxu0 0.0
        %1003 = vmatprep.subr.mxu0 0.0
        %1004 = vmatpush1.msra.mxu0 0.0
        %1005 = vmatprep.subr.mxu0 0.0
        %1006 = vmatpush1.msra.mxu0 0.0
        %1007 = vmatprep.subr.mxu0 0.0
        %1008 = vmatpush1.msra.mxu0 0.0
        %1009 = vmatprep.subr.mxu0 0.0
        %1010 = vmatpush1.msra.mxu0 0.0
        %1011 = vmatprep.subr.mxu0 0.0
        %1012 = vmatpush1.msra.mxu0 0.0
        %1013 = vmatprep.subr.mxu0 0.0
        %1014 = vmatpush1.msra.mxu0 0.0
        %1015 = vmatprep.subr.mxu0 0.0
        %1016 = vmatpush1.msra.mxu0 0.0
        %1017 = vmatprep.subr.mxu0 0.0
        %1018 = vmatpush1.msra.mxu0 0.0
        %1019 = vmatprep.subr.mxu0 0.0
        %1020 = vmatpush1.msra.mxu0 0.0
        %1021 = vmatprep.subr.mxu0 0.0
        %1022 = vmatpush1.msra.mxu0 0.0
        %1023 = vmatprep.subr.mxu0 0.0
        %1024 = vmatpush1.msra.mxu0 0.0
        %1025 = vmatprep.mubr.f32.mxu0 0.0
        %1026 = vmatmul.mubr.f32.gmra.mrb[0].mxu0 %v960
        %v1027 = vpop.f32.mrb[0].mxu0
        %v1028 = vadd.f32 0.0, %v1027
        %v1029 = vpop.f32.mrb[0].mxu0
        %1030 = vdwg.mxu0
        %v1031 = vsub.f32 %v559, %v1028
        %s1032 = scalar_lea.vmem [#allocation3], 24
        %1033 = vst [vmem:[%s1032] sm:$0xff] %v1031
        %s1034 = scalar_lea.vmem %s318, 32 [#allocation4]
        %v1035 = vld [vmem:[%s1034] sm:$0xff]
        %s1036 = scalar_lea.vmem [#allocation7], 128
        %v1037 = vld [vmem:[%s1036] sm:$0xff]
        %v1038 = vld [vmem:[%s1036 + $0x8] sm:$0xff]
        %v1039 = vld [vmem:[%s1036 + $0x10] sm:$0xff]
        %v1040 = vld [vmem:[%s1036 + $0x18] sm:$0xff]
        %v1042 = vsel %vm408, %v1035, 0
        %1044 = vmatprep.subr.mxu0 %v1038
        %1045 = vmatpush1.msra.mxu0 %v1037
        %1046 = vmatprep.subr.mxu0 %v1040
        %1047 = vmatpush1.msra.mxu0 %v1039
        %1048 = vmatprep.subr.mxu0 0.0
        %1049 = vmatpush1.msra.mxu0 0.0
        %1050 = vmatprep.subr.mxu0 0.0
        %1051 = vmatpush1.msra.mxu0 0.0
        %1052 = vmatprep.subr.mxu0 0.0
        %1053 = vmatpush1.msra.mxu0 0.0
        %1054 = vmatprep.subr.mxu0 0.0
        %1055 = vmatpush1.msra.mxu0 0.0
        %1056 = vmatprep.subr.mxu0 0.0
        %1057 = vmatpush1.msra.mxu0 0.0
        %1058 = vmatprep.subr.mxu0 0.0
        %1059 = vmatpush1.msra.mxu0 0.0
        %1060 = vmatprep.subr.mxu0 0.0
        %1061 = vmatpush1.msra.mxu0 0.0
        %1062 = vmatprep.subr.mxu0 0.0
        %1063 = vmatpush1.msra.mxu0 0.0
        %1064 = vmatprep.subr.mxu0 0.0
        %1065 = vmatpush1.msra.mxu0 0.0
        %1066 = vmatprep.subr.mxu0 0.0
        %1067 = vmatpush1.msra.mxu0 0.0
        %1068 = vmatprep.subr.mxu0 0.0
        %1069 = vmatpush1.msra.mxu0 0.0
        %1070 = vmatprep.subr.mxu0 0.0
        %1071 = vmatpush1.msra.mxu0 0.0
        %1072 = vmatprep.subr.mxu0 0.0
        %1073 = vmatpush1.msra.mxu0 0.0
        %1074 = vmatprep.subr.mxu0 0.0
        %1075 = vmatpush1.msra.mxu0 0.0
        %1076 = vmatprep.subr.mxu0 0.0
        %1077 = vmatpush1.msra.mxu0 0.0
        %1078 = vmatprep.subr.mxu0 0.0
        %1079 = vmatpush1.msra.mxu0 0.0
        %1080 = vmatprep.subr.mxu0 0.0
        %1081 = vmatpush1.msra.mxu0 0.0
        %1082 = vmatprep.subr.mxu0 0.0
        %1083 = vmatpush1.msra.mxu0 0.0
        %1084 = vmatprep.subr.mxu0 0.0
        %1085 = vmatpush1.msra.mxu0 0.0
        %1086 = vmatprep.subr.mxu0 0.0
        %1087 = vmatpush1.msra.mxu0 0.0
        %1088 = vmatprep.subr.mxu0 0.0
        %1089 = vmatpush1.msra.mxu0 0.0
        %1090 = vmatprep.subr.mxu0 0.0
        %1091 = vmatpush1.msra.mxu0 0.0
        %1092 = vmatprep.subr.mxu0 0.0
        %1093 = vmatpush1.msra.mxu0 0.0
        %1094 = vmatprep.subr.mxu0 0.0
        %1095 = vmatpush1.msra.mxu0 0.0
        %1096 = vmatprep.subr.mxu0 0.0
        %1097 = vmatpush1.msra.mxu0 0.0
        %1098 = vmatprep.subr.mxu0 0.0
        %1099 = vmatpush1.msra.mxu0 0.0
        %1100 = vmatprep.subr.mxu0 0.0
        %1101 = vmatpush1.msra.mxu0 0.0
        %1102 = vmatprep.subr.mxu0 0.0
        %1103 = vmatpush1.msra.mxu0 0.0
        %1104 = vmatprep.subr.mxu0 0.0
        %1105 = vmatpush1.msra.mxu0 0.0
        %1106 = vmatprep.subr.mxu0 0.0
        %1107 = vmatpush1.msra.mxu0 0.0
        %1108 = vmatprep.mubr.f32.mxu0 0.0
        %1109 = vmatmul.mubr.f32.gmra.mrb[0].mxu0 %v1042
        %v1110 = vpop.f32.mrb[0].mxu0
        %v1111 = vadd.f32 %v401, %v1110
        %v1112 = vpop.f32.mrb[0].mxu0
        %v1113 = vadd.f32 %v405, %v1112
        %1114 = vdwg.mxu0
        %s1115 = scalar_lea.vmem [#allocation2], 32
        %1116 = vst [vmem:[%s1115] sm:$0xff] %v1113
        %v1117 = vmul.f32 %v1111, %v1111
        %1118 = vmatprep.subr.mxu0 0.0
        %1119 = vmatpush1.msra.mxu0 %v376
        %1120 = vmatprep.subr.mxu0 0.0
        %1121 = vmatpush1.msra.mxu0 %v377
        %1122 = vmatprep.subr.mxu0 0.0
        %1123 = vmatpush1.msra.mxu0 %v378
        %1124 = vmatprep.subr.mxu0 0.0
        %1125 = vmatpush1.msra.mxu0 %v379
        %1126 = vmatprep.subr.mxu0 0.0
        %1127 = vmatpush1.msra.mxu0 %v380
        %1128 = vmatprep.subr.mxu0 0.0
        %1129 = vmatpush1.msra.mxu0 %v381
        %1130 = vmatprep.subr.mxu0 0.0
        %1131 = vmatpush1.msra.mxu0 %v382
        %1132 = vmatprep.subr.mxu0 0.0
        %1133 = vmatpush1.msra.mxu0 %v383
        %1134 = vmatprep.subr.mxu0 0.0
        %1135 = vmatpush1.msra.mxu0 %v384
        %1136 = vmatprep.subr.mxu0 0.0
        %1137 = vmatpush1.msra.mxu0 %v385
        %1138 = vmatprep.subr.mxu0 0.0
        %1139 = vmatpush1.msra.mxu0 %v386
        %1140 = vmatprep.subr.mxu0 0.0
        %1141 = vmatpush1.msra.mxu0 %v387
        %1142 = vmatprep.subr.mxu0 0.0
        %1143 = vmatpush1.msra.mxu0 %v388
        %1144 = vmatprep.subr.mxu0 0.0
        %1145 = vmatpush1.msra.mxu0 %v389
        %1146 = vmatprep.subr.mxu0 0.0
        %1147 = vmatpush1.msra.mxu0 %v390
        %1148 = vmatprep.subr.mxu0 0.0
        %1149 = vmatpush1.msra.mxu0 %v391
        %1150 = vmatprep.subr.mxu0 0.0
        %1151 = vmatpush1.msra.mxu0 0.0
        %1152 = vmatprep.subr.mxu0 0.0
        %1153 = vmatpush1.msra.mxu0 0.0
        %1154 = vmatprep.subr.mxu0 0.0
        %1155 = vmatpush1.msra.mxu0 0.0
        %1156 = vmatprep.subr.mxu0 0.0
        %1157 = vmatpush1.msra.mxu0 0.0
        %1158 = vmatprep.subr.mxu0 0.0
        %1159 = vmatpush1.msra.mxu0 0.0
        %1160 = vmatprep.subr.mxu0 0.0
        %1161 = vmatpush1.msra.mxu0 0.0
        %1162 = vmatprep.subr.mxu0 0.0
        %1163 = vmatpush1.msra.mxu0 0.0
        %1164 = vmatprep.subr.mxu0 0.0
        %1165 = vmatpush1.msra.mxu0 0.0
        %1166 = vmatprep.subr.mxu0 0.0
        %1167 = vmatpush1.msra.mxu0 0.0
        %1168 = vmatprep.subr.mxu0 0.0
        %1169 = vmatpush1.msra.mxu0 0.0
        %1170 = vmatprep.subr.mxu0 0.0
        %1171 = vmatpush1.msra.mxu0 0.0
        %1172 = vmatprep.subr.mxu0 0.0
        %1173 = vmatpush1.msra.mxu0 0.0
        %1174 = vmatprep.subr.mxu0 0.0
        %1175 = vmatpush1.msra.mxu0 0.0
        %1176 = vmatprep.subr.mxu0 0.0
        %1177 = vmatpush1.msra.mxu0 0.0
        %1178 = vmatprep.subr.mxu0 0.0
        %1179 = vmatpush1.msra.mxu0 0.0
        %1180 = vmatprep.subr.mxu0 0.0
        %1181 = vmatpush1.msra.mxu0 0.0
        %1182 = vmatprep.mubr.f32.mxu0 0.0
        %1183 = vmatmul.mubr.f32.gmra.mrb[0].mxu0 %v1117
        %v1184 = vpop.f32.mrb[0].mxu0
        %v1185 = vadd.f32 0.0, %v1184
        %v1186 = vpop.f32.mrb[0].mxu0
        %1187 = vdwg.mxu0
        %v1188 = vsub.f32 %v559, %v1185
        %s1189 = scalar_lea.vmem [#allocation3], 32
        %1190 = vst [vmem:[%s1189] sm:$0xff] %v1188
        %s1191 = scalar_lea.vmem %s318, 40 [#allocation4]
        %v1192 = vld [vmem:[%s1191] sm:$0xff]
        %s1193 = scalar_lea.vmem [#allocation7], 160
        %v1194 = vld [vmem:[%s1193] sm:$0xff]
        %v1195 = vld [vmem:[%s1193 + $0x8] sm:$0xff]
        %v1196 = vld [vmem:[%s1193 + $0x10] sm:$0xff]
        %v1197 = vld [vmem:[%s1193 + $0x18] sm:$0xff]
        %v1199 = vsel %vm408, %v1192, 0
        %1201 = vmatprep.subr.mxu0 %v1195
        %1202 = vmatpush1.msra.mxu0 %v1194
        %1203 = vmatprep.subr.mxu0 %v1197
        %1204 = vmatpush1.msra.mxu0 %v1196
        %1205 = vmatprep.subr.mxu0 0.0
        %1206 = vmatpush1.msra.mxu0 0.0
        %1207 = vmatprep.subr.mxu0 0.0
        %1208 = vmatpush1.msra.mxu0 0.0
        %1209 = vmatprep.subr.mxu0 0.0
        %1210 = vmatpush1.msra.mxu0 0.0
        %1211 = vmatprep.subr.mxu0 0.0
        %1212 = vmatpush1.msra.mxu0 0.0
        %1213 = vmatprep.subr.mxu0 0.0
        %1214 = vmatpush1.msra.mxu0 0.0
        %1215 = vmatprep.subr.mxu0 0.0
        %1216 = vmatpush1.msra.mxu0 0.0
        %1217 = vmatprep.subr.mxu0 0.0
        %1218 = vmatpush1.msra.mxu0 0.0
        %1219 = vmatprep.subr.mxu0 0.0
        %1220 = vmatpush1.msra.mxu0 0.0
        %1221 = vmatprep.subr.mxu0 0.0
        %1222 = vmatpush1.msra.mxu0 0.0
        %1223 = vmatprep.subr.mxu0 0.0
        %1224 = vmatpush1.msra.mxu0 0.0
        %1225 = vmatprep.subr.mxu0 0.0
        %1226 = vmatpush1.msra.mxu0 0.0
        %1227 = vmatprep.subr.mxu0 0.0
        %1228 = vmatpush1.msra.mxu0 0.0
        %1229 = vmatprep.subr.mxu0 0.0
        %1230 = vmatpush1.msra.mxu0 0.0
        %1231 = vmatprep.subr.mxu0 0.0
        %1232 = vmatpush1.msra.mxu0 0.0
        %1233 = vmatprep.subr.mxu0 0.0
        %1234 = vmatpush1.msra.mxu0 0.0
        %1235 = vmatprep.subr.mxu0 0.0
        %1236 = vmatpush1.msra.mxu0 0.0
        %1237 = vmatprep.subr.mxu0 0.0
        %1238 = vmatpush1.msra.mxu0 0.0
        %1239 = vmatprep.subr.mxu0 0.0
        %1240 = vmatpush1.msra.mxu0 0.0
        %1241 = vmatprep.subr.mxu0 0.0
        %1242 = vmatpush1.msra.mxu0 0.0
        %1243 = vmatprep.subr.mxu0 0.0
        %1244 = vmatpush1.msra.mxu0 0.0
        %1245 = vmatprep.subr.mxu0 0.0
        %1246 = vmatpush1.msra.mxu0 0.0
        %1247 = vmatprep.subr.mxu0 0.0
        %1248 = vmatpush1.msra.mxu0 0.0
        %1249 = vmatprep.subr.mxu0 0.0
        %1250 = vmatpush1.msra.mxu0 0.0
        %1251 = vmatprep.subr.mxu0 0.0
        %1252 = vmatpush1.msra.mxu0 0.0
        %1253 = vmatprep.subr.mxu0 0.0
        %1254 = vmatpush1.msra.mxu0 0.0
        %1255 = vmatprep.subr.mxu0 0.0
        %1256 = vmatpush1.msra.mxu0 0.0
        %1257 = vmatprep.subr.mxu0 0.0
        %1258 = vmatpush1.msra.mxu0 0.0
        %1259 = vmatprep.subr.mxu0 0.0
        %1260 = vmatpush1.msra.mxu0 0.0
        %1261 = vmatprep.subr.mxu0 0.0
        %1262 = vmatpush1.msra.mxu0 0.0
        %1263 = vmatprep.subr.mxu0 0.0
        %1264 = vmatpush1.msra.mxu0 0.0
        %1265 = vmatprep.mubr.f32.mxu0 0.0
        %1266 = vmatmul.mubr.f32.gmra.mrb[0].mxu0 %v1199
        %v1267 = vpop.f32.mrb[0].mxu0
        %v1268 = vadd.f32 %v401, %v1267
        %v1269 = vpop.f32.mrb[0].mxu0
        %v1270 = vadd.f32 %v405, %v1269
        %1271 = vdwg.mxu0
        %s1272 = scalar_lea.vmem [#allocation2], 40
        %1273 = vst [vmem:[%s1272] sm:$0xff] %v1270
        %v1274 = vmul.f32 %v1268, %v1268
        %1275 = vmatprep.subr.mxu0 0.0
        %1276 = vmatpush1.msra.mxu0 %v376
        %1277 = vmatprep.subr.mxu0 0.0
        %1278 = vmatpush1.msra.mxu0 %v377
        %1279 = vmatprep.subr.mxu0 0.0
        %1280 = vmatpush1.msra.mxu0 %v378
        %1281 = vmatprep.subr.mxu0 0.0
        %1282 = vmatpush1.msra.mxu0 %v379
        %1283 = vmatprep.subr.mxu0 0.0
        %1284 = vmatpush1.msra.mxu0 %v380
        %1285 = vmatprep.subr.mxu0 0.0
        %1286 = vmatpush1.msra.mxu0 %v381
        %1287 = vmatprep.subr.mxu0 0.0
        %1288 = vmatpush1.msra.mxu0 %v382
        %1289 = vmatprep.subr.mxu0 0.0
        %1290 = vmatpush1.msra.mxu0 %v383
        %1291 = vmatprep.subr.mxu0 0.0
        %1292 = vmatpush1.msra.mxu0 %v384
        %1293 = vmatprep.subr.mxu0 0.0
        %1294 = vmatpush1.msra.mxu0 %v385
        %1295 = vmatprep.subr.mxu0 0.0
        %1296 = vmatpush1.msra.mxu0 %v386
        %1297 = vmatprep.subr.mxu0 0.0
        %1298 = vmatpush1.msra.mxu0 %v387
        %1299 = vmatprep.subr.mxu0 0.0
        %1300 = vmatpush1.msra.mxu0 %v388
        %1301 = vmatprep.subr.mxu0 0.0
        %1302 = vmatpush1.msra.mxu0 %v389
        %1303 = vmatprep.subr.mxu0 0.0
        %1304 = vmatpush1.msra.mxu0 %v390
        %1305 = vmatprep.subr.mxu0 0.0
        %1306 = vmatpush1.msra.mxu0 %v391
        %1307 = vmatprep.subr.mxu0 0.0
        %1308 = vmatpush1.msra.mxu0 0.0
        %1309 = vmatprep.subr.mxu0 0.0
        %1310 = vmatpush1.msra.mxu0 0.0
        %1311 = vmatprep.subr.mxu0 0.0
        %1312 = vmatpush1.msra.mxu0 0.0
        %1313 = vmatprep.subr.mxu0 0.0
        %1314 = vmatpush1.msra.mxu0 0.0
        %1315 = vmatprep.subr.mxu0 0.0
        %1316 = vmatpush1.msra.mxu0 0.0
        %1317 = vmatprep.subr.mxu0 0.0
        %1318 = vmatpush1.msra.mxu0 0.0
        %1319 = vmatprep.subr.mxu0 0.0
        %1320 = vmatpush1.msra.mxu0 0.0
        %1321 = vmatprep.subr.mxu0 0.0
        %1322 = vmatpush1.msra.mxu0 0.0
        %1323 = vmatprep.subr.mxu0 0.0
        %1324 = vmatpush1.msra.mxu0 0.0
        %1325 = vmatprep.subr.mxu0 0.0
        %1326 = vmatpush1.msra.mxu0 0.0
        %1327 = vmatprep.subr.mxu0 0.0
        %1328 = vmatpush1.msra.mxu0 0.0
        %1329 = vmatprep.subr.mxu0 0.0
        %1330 = vmatpush1.msra.mxu0 0.0
        %1331 = vmatprep.subr.mxu0 0.0
        %1332 = vmatpush1.msra.mxu0 0.0
        %1333 = vmatprep.subr.mxu0 0.0
        %1334 = vmatpush1.msra.mxu0 0.0
        %1335 = vmatprep.subr.mxu0 0.0
        %1336 = vmatpush1.msra.mxu0 0.0
        %1337 = vmatprep.subr.mxu0 0.0
        %1338 = vmatpush1.msra.mxu0 0.0
        %1339 = vmatprep.mubr.f32.mxu0 0.0
        %1340 = vmatmul.mubr.f32.gmra.mrb[0].mxu0 %v1274
        %v1341 = vpop.f32.mrb[0].mxu0
        %v1342 = vadd.f32 0.0, %v1341
        %v1343 = vpop.f32.mrb[0].mxu0
        %1344 = vdwg.mxu0
        %v1345 = vsub.f32 %v559, %v1342
        %s1346 = scalar_lea.vmem [#allocation3], 40
        %1347 = vst [vmem:[%s1346] sm:$0xff] %v1345
        %s1348 = scalar_lea.vmem %s318, 48 [#allocation4]
        %v1349 = vld [vmem:[%s1348] sm:$0xff]
        %s1350 = scalar_lea.vmem [#allocation7], 192
        %v1351 = vld [vmem:[%s1350] sm:$0xff]
        %v1352 = vld [vmem:[%s1350 + $0x8] sm:$0xff]
        %v1353 = vld [vmem:[%s1350 + $0x10] sm:$0xff]
        %v1354 = vld [vmem:[%s1350 + $0x18] sm:$0xff]
        %v1356 = vsel %vm408, %v1349, 0
        %1358 = vmatprep.subr.mxu0 %v1352
        %1359 = vmatpush1.msra.mxu0 %v1351
        %1360 = vmatprep.subr.mxu0 %v1354
        %1361 = vmatpush1.msra.mxu0 %v1353
        %1362 = vmatprep.subr.mxu0 0.0
        %1363 = vmatpush1.msra.mxu0 0.0
        %1364 = vmatprep.subr.mxu0 0.0
        %1365 = vmatpush1.msra.mxu0 0.0
        %1366 = vmatprep.subr.mxu0 0.0
        %1367 = vmatpush1.msra.mxu0 0.0
        %1368 = vmatprep.subr.mxu0 0.0
        %1369 = vmatpush1.msra.mxu0 0.0
        %1370 = vmatprep.subr.mxu0 0.0
        %1371 = vmatpush1.msra.mxu0 0.0
        %1372 = vmatprep.subr.mxu0 0.0
        %1373 = vmatpush1.msra.mxu0 0.0
        %1374 = vmatprep.subr.mxu0 0.0
        %1375 = vmatpush1.msra.mxu0 0.0
        %1376 = vmatprep.subr.mxu0 0.0
        %1377 = vmatpush1.msra.mxu0 0.0
        %1378 = vmatprep.subr.mxu0 0.0
        %1379 = vmatpush1.msra.mxu0 0.0
        %1380 = vmatprep.subr.mxu0 0.0
        %1381 = vmatpush1.msra.mxu0 0.0
        %1382 = vmatprep.subr.mxu0 0.0
        %1383 = vmatpush1.msra.mxu0 0.0
        %1384 = vmatprep.subr.mxu0 0.0
        %1385 = vmatpush1.msra.mxu0 0.0
        %1386 = vmatprep.subr.mxu0 0.0
        %1387 = vmatpush1.msra.mxu0 0.0
        %1388 = vmatprep.subr.mxu0 0.0
        %1389 = vmatpush1.msra.mxu0 0.0
        %1390 = vmatprep.subr.mxu0 0.0
        %1391 = vmatpush1.msra.mxu0 0.0
        %1392 = vmatprep.subr.mxu0 0.0
        %1393 = vmatpush1.msra.mxu0 0.0
        %1394 = vmatprep.subr.mxu0 0.0
        %1395 = vmatpush1.msra.mxu0 0.0
        %1396 = vmatprep.subr.mxu0 0.0
        %1397 = vmatpush1.msra.mxu0 0.0
        %1398 = vmatprep.subr.mxu0 0.0
        %1399 = vmatpush1.msra.mxu0 0.0
        %1400 = vmatprep.subr.mxu0 0.0
        %1401 = vmatpush1.msra.mxu0 0.0
        %1402 = vmatprep.subr.mxu0 0.0
        %1403 = vmatpush1.msra.mxu0 0.0
        %1404 = vmatprep.subr.mxu0 0.0
        %1405 = vmatpush1.msra.mxu0 0.0
        %1406 = vmatprep.subr.mxu0 0.0
        %1407 = vmatpush1.msra.mxu0 0.0
        %1408 = vmatprep.subr.mxu0 0.0
        %1409 = vmatpush1.msra.mxu0 0.0
        %1410 = vmatprep.subr.mxu0 0.0
        %1411 = vmatpush1.msra.mxu0 0.0
        %1412 = vmatprep.subr.mxu0 0.0
        %1413 = vmatpush1.msra.mxu0 0.0
        %1414 = vmatprep.subr.mxu0 0.0
        %1415 = vmatpush1.msra.mxu0 0.0
        %1416 = vmatprep.subr.mxu0 0.0
        %1417 = vmatpush1.msra.mxu0 0.0
        %1418 = vmatprep.subr.mxu0 0.0
        %1419 = vmatpush1.msra.mxu0 0.0
        %1420 = vmatprep.subr.mxu0 0.0
        %1421 = vmatpush1.msra.mxu0 0.0
        %1422 = vmatprep.mubr.f32.mxu0 0.0
        %1423 = vmatmul.mubr.f32.gmra.mrb[0].mxu0 %v1356
        %v1424 = vpop.f32.mrb[0].mxu0
        %v1425 = vadd.f32 %v401, %v1424
        %v1426 = vpop.f32.mrb[0].mxu0
        %v1427 = vadd.f32 %v405, %v1426
        %1428 = vdwg.mxu0
        %s1429 = scalar_lea.vmem [#allocation2], 48
        %1430 = vst [vmem:[%s1429] sm:$0xff] %v1427
        %v1431 = vmul.f32 %v1425, %v1425
        %1432 = vmatprep.subr.mxu0 0.0
        %1433 = vmatpush1.msra.mxu0 %v376
        %1434 = vmatprep.subr.mxu0 0.0
        %1435 = vmatpush1.msra.mxu0 %v377
        %1436 = vmatprep.subr.mxu0 0.0
        %1437 = vmatpush1.msra.mxu0 %v378
        %1438 = vmatprep.subr.mxu0 0.0
        %1439 = vmatpush1.msra.mxu0 %v379
        %1440 = vmatprep.subr.mxu0 0.0
        %1441 = vmatpush1.msra.mxu0 %v380
        %1442 = vmatprep.subr.mxu0 0.0
        %1443 = vmatpush1.msra.mxu0 %v381
        %1444 = vmatprep.subr.mxu0 0.0
        %1445 = vmatpush1.msra.mxu0 %v382
        %1446 = vmatprep.subr.mxu0 0.0
        %1447 = vmatpush1.msra.mxu0 %v383
        %1448 = vmatprep.subr.mxu0 0.0
        %1449 = vmatpush1.msra.mxu0 %v384
        %1450 = vmatprep.subr.mxu0 0.0
        %1451 = vmatpush1.msra.mxu0 %v385
        %1452 = vmatprep.subr.mxu0 0.0
        %1453 = vmatpush1.msra.mxu0 %v386
        %1454 = vmatprep.subr.mxu0 0.0
        %1455 = vmatpush1.msra.mxu0 %v387
        %1456 = vmatprep.subr.mxu0 0.0
        %1457 = vmatpush1.msra.mxu0 %v388
        %1458 = vmatprep.subr.mxu0 0.0
        %1459 = vmatpush1.msra.mxu0 %v389
        %1460 = vmatprep.subr.mxu0 0.0
        %1461 = vmatpush1.msra.mxu0 %v390
        %1462 = vmatprep.subr.mxu0 0.0
        %1463 = vmatpush1.msra.mxu0 %v391
        %1464 = vmatprep.subr.mxu0 0.0
        %1465 = vmatpush1.msra.mxu0 0.0
        %1466 = vmatprep.subr.mxu0 0.0
        %1467 = vmatpush1.msra.mxu0 0.0
        %1468 = vmatprep.subr.mxu0 0.0
        %1469 = vmatpush1.msra.mxu0 0.0
        %1470 = vmatprep.subr.mxu0 0.0
        %1471 = vmatpush1.msra.mxu0 0.0
        %1472 = vmatprep.subr.mxu0 0.0
        %1473 = vmatpush1.msra.mxu0 0.0
        %1474 = vmatprep.subr.mxu0 0.0
        %1475 = vmatpush1.msra.mxu0 0.0
        %1476 = vmatprep.subr.mxu0 0.0
        %1477 = vmatpush1.msra.mxu0 0.0
        %1478 = vmatprep.subr.mxu0 0.0
        %1479 = vmatpush1.msra.mxu0 0.0
        %1480 = vmatprep.subr.mxu0 0.0
        %1481 = vmatpush1.msra.mxu0 0.0
        %1482 = vmatprep.subr.mxu0 0.0
        %1483 = vmatpush1.msra.mxu0 0.0
        %1484 = vmatprep.subr.mxu0 0.0
        %1485 = vmatpush1.msra.mxu0 0.0
        %1486 = vmatprep.subr.mxu0 0.0
        %1487 = vmatpush1.msra.mxu0 0.0
        %1488 = vmatprep.subr.mxu0 0.0
        %1489 = vmatpush1.msra.mxu0 0.0
        %1490 = vmatprep.subr.mxu0 0.0
        %1491 = vmatpush1.msra.mxu0 0.0
        %1492 = vmatprep.subr.mxu0 0.0
        %1493 = vmatpush1.msra.mxu0 0.0
        %1494 = vmatprep.subr.mxu0 0.0
        %1495 = vmatpush1.msra.mxu0 0.0
        %1496 = vmatprep.mubr.f32.mxu0 0.0
        %1497 = vmatmul.mubr.f32.gmra.mrb[0].mxu0 %v1431
        %v1498 = vpop.f32.mrb[0].mxu0
        %v1499 = vadd.f32 0.0, %v1498
        %v1500 = vpop.f32.mrb[0].mxu0
        %1501 = vdwg.mxu0
        %v1502 = vsub.f32 %v559, %v1499
        %s1503 = scalar_lea.vmem [#allocation3], 48
        %1504 = vst [vmem:[%s1503] sm:$0xff] %v1502
        %s1505 = scalar_lea.vmem %s318, 56 [#allocation4]
        %v1506 = vld [vmem:[%s1505] sm:$0xff]
        %s1507 = scalar_lea.vmem [#allocation7], 224
        %v1508 = vld [vmem:[%s1507] sm:$0xff]
        %v1509 = vld [vmem:[%s1507 + $0x8] sm:$0xff]
        %v1510 = vld [vmem:[%s1507 + $0x10] sm:$0xff]
        %v1511 = vld [vmem:[%s1507 + $0x18] sm:$0xff]
        %v1513 = vsel %vm408, %v1506, 0
        %1515 = vmatprep.subr.mxu0 %v1509
        %1516 = vmatpush1.msra.mxu0 %v1508
        %1517 = vmatprep.subr.mxu0 %v1511
        %1518 = vmatpush1.msra.mxu0 %v1510
        %1519 = vmatprep.subr.mxu0 0.0
        %1520 = vmatpush1.msra.mxu0 0.0
        %1521 = vmatprep.subr.mxu0 0.0
        %1522 = vmatpush1.msra.mxu0 0.0
        %1523 = vmatprep.subr.mxu0 0.0
        %1524 = vmatpush1.msra.mxu0 0.0
        %1525 = vmatprep.subr.mxu0 0.0
        %1526 = vmatpush1.msra.mxu0 0.0
        %1527 = vmatprep.subr.mxu0 0.0
        %1528 = vmatpush1.msra.mxu0 0.0
        %1529 = vmatprep.subr.mxu0 0.0
        %1530 = vmatpush1.msra.mxu0 0.0
        %1531 = vmatprep.subr.mxu0 0.0
        %1532 = vmatpush1.msra.mxu0 0.0
        %1533 = vmatprep.subr.mxu0 0.0
        %1534 = vmatpush1.msra.mxu0 0.0
        %1535 = vmatprep.subr.mxu0 0.0
        %1536 = vmatpush1.msra.mxu0 0.0
        %1537 = vmatprep.subr.mxu0 0.0
        %1538 = vmatpush1.msra.mxu0 0.0
        %1539 = vmatprep.subr.mxu0 0.0
        %1540 = vmatpush1.msra.mxu0 0.0
        %1541 = vmatprep.subr.mxu0 0.0
        %1542 = vmatpush1.msra.mxu0 0.0
        %1543 = vmatprep.subr.mxu0 0.0
        %1544 = vmatpush1.msra.mxu0 0.0
        %1545 = vmatprep.subr.mxu0 0.0
        %1546 = vmatpush1.msra.mxu0 0.0
        %1547 = vmatprep.subr.mxu0 0.0
        %1548 = vmatpush1.msra.mxu0 0.0
        %1549 = vmatprep.subr.mxu0 0.0
        %1550 = vmatpush1.msra.mxu0 0.0
        %1551 = vmatprep.subr.mxu0 0.0
        %1552 = vmatpush1.msra.mxu0 0.0
        %1553 = vmatprep.subr.mxu0 0.0
        %1554 = vmatpush1.msra.mxu0 0.0
        %1555 = vmatprep.subr.mxu0 0.0
        %1556 = vmatpush1.msra.mxu0 0.0
        %1557 = vmatprep.subr.mxu0 0.0
        %1558 = vmatpush1.msra.mxu0 0.0
        %1559 = vmatprep.subr.mxu0 0.0
        %1560 = vmatpush1.msra.mxu0 0.0
        %1561 = vmatprep.subr.mxu0 0.0
        %1562 = vmatpush1.msra.mxu0 0.0
        %1563 = vmatprep.subr.mxu0 0.0
        %1564 = vmatpush1.msra.mxu0 0.0
        %1565 = vmatprep.subr.mxu0 0.0
        %1566 = vmatpush1.msra.mxu0 0.0
        %1567 = vmatprep.subr.mxu0 0.0
        %1568 = vmatpush1.msra.mxu0 0.0
        %1569 = vmatprep.subr.mxu0 0.0
        %1570 = vmatpush1.msra.mxu0 0.0
        %1571 = vmatprep.subr.mxu0 0.0
        %1572 = vmatpush1.msra.mxu0 0.0
        %1573 = vmatprep.subr.mxu0 0.0
        %1574 = vmatpush1.msra.mxu0 0.0
        %1575 = vmatprep.subr.mxu0 0.0
        %1576 = vmatpush1.msra.mxu0 0.0
        %1577 = vmatprep.subr.mxu0 0.0
        %1578 = vmatpush1.msra.mxu0 0.0
        %1579 = vmatprep.mubr.f32.mxu0 0.0
        %1580 = vmatmul.mubr.f32.gmra.mrb[0].mxu0 %v1513
        %v1581 = vpop.f32.mrb[0].mxu0
        %v1582 = vadd.f32 %v401, %v1581
        %v1583 = vpop.f32.mrb[0].mxu0
        %v1584 = vadd.f32 %v405, %v1583
        %1585 = vdwg.mxu0
        %s1586 = scalar_lea.vmem [#allocation2], 56
        %1587 = vst [vmem:[%s1586] sm:$0xff] %v1584
        %v1588 = vmul.f32 %v1582, %v1582
        %1589 = vmatprep.subr.mxu0 0.0
        %1590 = vmatpush1.msra.mxu0 %v376
        %1591 = vmatprep.subr.mxu0 0.0
        %1592 = vmatpush1.msra.mxu0 %v377
        %1593 = vmatprep.subr.mxu0 0.0
        %1594 = vmatpush1.msra.mxu0 %v378
        %1595 = vmatprep.subr.mxu0 0.0
        %1596 = vmatpush1.msra.mxu0 %v379
        %1597 = vmatprep.subr.mxu0 0.0
        %1598 = vmatpush1.msra.mxu0 %v380
        %1599 = vmatprep.subr.mxu0 0.0
        %1600 = vmatpush1.msra.mxu0 %v381
        %1601 = vmatprep.subr.mxu0 0.0
        %1602 = vmatpush1.msra.mxu0 %v382
        %1603 = vmatprep.subr.mxu0 0.0
        %1604 = vmatpush1.msra.mxu0 %v383
        %1605 = vmatprep.subr.mxu0 0.0
        %1606 = vmatpush1.msra.mxu0 %v384
        %1607 = vmatprep.subr.mxu0 0.0
        %1608 = vmatpush1.msra.mxu0 %v385
        %1609 = vmatprep.subr.mxu0 0.0
        %1610 = vmatpush1.msra.mxu0 %v386
        %1611 = vmatprep.subr.mxu0 0.0
        %1612 = vmatpush1.msra.mxu0 %v387
        %1613 = vmatprep.subr.mxu0 0.0
        %1614 = vmatpush1.msra.mxu0 %v388
        %1615 = vmatprep.subr.mxu0 0.0
        %1616 = vmatpush1.msra.mxu0 %v389
        %1617 = vmatprep.subr.mxu0 0.0
        %1618 = vmatpush1.msra.mxu0 %v390
        %1619 = vmatprep.subr.mxu0 0.0
        %1620 = vmatpush1.msra.mxu0 %v391
        %1621 = vmatprep.subr.mxu0 0.0
        %1622 = vmatpush1.msra.mxu0 0.0
        %1623 = vmatprep.subr.mxu0 0.0
        %1624 = vmatpush1.msra.mxu0 0.0
        %1625 = vmatprep.subr.mxu0 0.0
        %1626 = vmatpush1.msra.mxu0 0.0
        %1627 = vmatprep.subr.mxu0 0.0
        %1628 = vmatpush1.msra.mxu0 0.0
        %1629 = vmatprep.subr.mxu0 0.0
        %1630 = vmatpush1.msra.mxu0 0.0
        %1631 = vmatprep.subr.mxu0 0.0
        %1632 = vmatpush1.msra.mxu0 0.0
        %1633 = vmatprep.subr.mxu0 0.0
        %1634 = vmatpush1.msra.mxu0 0.0
        %1635 = vmatprep.subr.mxu0 0.0
        %1636 = vmatpush1.msra.mxu0 0.0
        %1637 = vmatprep.subr.mxu0 0.0
        %1638 = vmatpush1.msra.mxu0 0.0
        %1639 = vmatprep.subr.mxu0 0.0
        %1640 = vmatpush1.msra.mxu0 0.0
        %1641 = vmatprep.subr.mxu0 0.0
        %1642 = vmatpush1.msra.mxu0 0.0
        %1643 = vmatprep.subr.mxu0 0.0
        %1644 = vmatpush1.msra.mxu0 0.0
        %1645 = vmatprep.subr.mxu0 0.0
        %1646 = vmatpush1.msra.mxu0 0.0
        %1647 = vmatprep.subr.mxu0 0.0
        %1648 = vmatpush1.msra.mxu0 0.0
        %1649 = vmatprep.subr.mxu0 0.0
        %1650 = vmatpush1.msra.mxu0 0.0
        %1651 = vmatprep.subr.mxu0 0.0
        %1652 = vmatpush1.msra.mxu0 0.0
        %1653 = vmatprep.mubr.f32.mxu0 0.0
        %1654 = vmatmul.mubr.f32.gmra.mrb[0].mxu0 %v1588
        %v1655 = vpop.f32.mrb[0].mxu0
        %v1656 = vadd.f32 0.0, %v1655
        %v1657 = vpop.f32.mrb[0].mxu0
        %1658 = vdwg.mxu0
        %v1659 = vsub.f32 %v559, %v1656
        %s1660 = scalar_lea.vmem [#allocation3], 56
        %1661 = vst [vmem:[%s1660] sm:$0xff] %v1659
        %s1662 = scalar_lea.vmem %s318, 64 [#allocation4]
        %v1663 = vld [vmem:[%s1662] sm:$0xff]
        %s1664 = scalar_lea.vmem [#allocation7], 256
        %v1665 = vld [vmem:[%s1664] sm:$0xff]
        %v1666 = vld [vmem:[%s1664 + $0x8] sm:$0xff]
        %v1667 = vld [vmem:[%s1664 + $0x10] sm:$0xff]
        %v1668 = vld [vmem:[%s1664 + $0x18] sm:$0xff]
        %v1670 = vsel %vm408, %v1663, 0
        %1672 = vmatprep.subr.mxu0 %v1666
        %1673 = vmatpush1.msra.mxu0 %v1665
        %1674 = vmatprep.subr.mxu0 %v1668
        %1675 = vmatpush1.msra.mxu0 %v1667
        %1676 = vmatprep.subr.mxu0 0.0
        %1677 = vmatpush1.msra.mxu0 0.0
        %1678 = vmatprep.subr.mxu0 0.0
        %1679 = vmatpush1.msra.mxu0 0.0
        %1680 = vmatprep.subr.mxu0 0.0
        %1681 = vmatpush1.msra.mxu0 0.0
        %1682 = vmatprep.subr.mxu0 0.0
        %1683 = vmatpush1.msra.mxu0 0.0
        %1684 = vmatprep.subr.mxu0 0.0
        %1685 = vmatpush1.msra.mxu0 0.0
        %1686 = vmatprep.subr.mxu0 0.0
        %1687 = vmatpush1.msra.mxu0 0.0
        %1688 = vmatprep.subr.mxu0 0.0
        %1689 = vmatpush1.msra.mxu0 0.0
        %1690 = vmatprep.subr.mxu0 0.0
        %1691 = vmatpush1.msra.mxu0 0.0
        %1692 = vmatprep.subr.mxu0 0.0
        %1693 = vmatpush1.msra.mxu0 0.0
        %1694 = vmatprep.subr.mxu0 0.0
        %1695 = vmatpush1.msra.mxu0 0.0
        %1696 = vmatprep.subr.mxu0 0.0
        %1697 = vmatpush1.msra.mxu0 0.0
        %1698 = vmatprep.subr.mxu0 0.0
        %1699 = vmatpush1.msra.mxu0 0.0
        %1700 = vmatprep.subr.mxu0 0.0
        %1701 = vmatpush1.msra.mxu0 0.0
        %1702 = vmatprep.subr.mxu0 0.0
        %1703 = vmatpush1.msra.mxu0 0.0
        %1704 = vmatprep.subr.mxu0 0.0
        %1705 = vmatpush1.msra.mxu0 0.0
        %1706 = vmatprep.subr.mxu0 0.0
        %1707 = vmatpush1.msra.mxu0 0.0
        %1708 = vmatprep.subr.mxu0 0.0
        %1709 = vmatpush1.msra.mxu0 0.0
        %1710 = vmatprep.subr.mxu0 0.0
        %1711 = vmatpush1.msra.mxu0 0.0
        %1712 = vmatprep.subr.mxu0 0.0
        %1713 = vmatpush1.msra.mxu0 0.0
        %1714 = vmatprep.subr.mxu0 0.0
        %1715 = vmatpush1.msra.mxu0 0.0
        %1716 = vmatprep.subr.mxu0 0.0
        %1717 = vmatpush1.msra.mxu0 0.0
        %1718 = vmatprep.subr.mxu0 0.0
        %1719 = vmatpush1.msra.mxu0 0.0
        %1720 = vmatprep.subr.mxu0 0.0
        %1721 = vmatpush1.msra.mxu0 0.0
        %1722 = vmatprep.subr.mxu0 0.0
        %1723 = vmatpush1.msra.mxu0 0.0
        %1724 = vmatprep.subr.mxu0 0.0
        %1725 = vmatpush1.msra.mxu0 0.0
        %1726 = vmatprep.subr.mxu0 0.0
        %1727 = vmatpush1.msra.mxu0 0.0
        %1728 = vmatprep.subr.mxu0 0.0
        %1729 = vmatpush1.msra.mxu0 0.0
        %1730 = vmatprep.subr.mxu0 0.0
        %1731 = vmatpush1.msra.mxu0 0.0
        %1732 = vmatprep.subr.mxu0 0.0
        %1733 = vmatpush1.msra.mxu0 0.0
        %1734 = vmatprep.subr.mxu0 0.0
        %1735 = vmatpush1.msra.mxu0 0.0
        %1736 = vmatprep.mubr.f32.mxu0 0.0
        %1737 = vmatmul.mubr.f32.gmra.mrb[0].mxu0 %v1670
        %v1738 = vpop.f32.mrb[0].mxu0
        %v1739 = vadd.f32 %v401, %v1738
        %v1740 = vpop.f32.mrb[0].mxu0
        %v1741 = vadd.f32 %v405, %v1740
        %1742 = vdwg.mxu0
        %s1743 = scalar_lea.vmem [#allocation2], 64
        %1744 = vst [vmem:[%s1743] sm:$0xff] %v1741
        %v1745 = vmul.f32 %v1739, %v1739
        %1746 = vmatprep.subr.mxu0 0.0
        %1747 = vmatpush1.msra.mxu0 %v376
        %1748 = vmatprep.subr.mxu0 0.0
        %1749 = vmatpush1.msra.mxu0 %v377
        %1750 = vmatprep.subr.mxu0 0.0
        %1751 = vmatpush1.msra.mxu0 %v378
        %1752 = vmatprep.subr.mxu0 0.0
        %1753 = vmatpush1.msra.mxu0 %v379
        %1754 = vmatprep.subr.mxu0 0.0
        %1755 = vmatpush1.msra.mxu0 %v380
        %1756 = vmatprep.subr.mxu0 0.0
        %1757 = vmatpush1.msra.mxu0 %v381
        %1758 = vmatprep.subr.mxu0 0.0
        %1759 = vmatpush1.msra.mxu0 %v382
        %1760 = vmatprep.subr.mxu0 0.0
        %1761 = vmatpush1.msra.mxu0 %v383
        %1762 = vmatprep.subr.mxu0 0.0
        %1763 = vmatpush1.msra.mxu0 %v384
        %1764 = vmatprep.subr.mxu0 0.0
        %1765 = vmatpush1.msra.mxu0 %v385
        %1766 = vmatprep.subr.mxu0 0.0
        %1767 = vmatpush1.msra.mxu0 %v386
        %1768 = vmatprep.subr.mxu0 0.0
        %1769 = vmatpush1.msra.mxu0 %v387
        %1770 = vmatprep.subr.mxu0 0.0
        %1771 = vmatpush1.msra.mxu0 %v388
        %1772 = vmatprep.subr.mxu0 0.0
        %1773 = vmatpush1.msra.mxu0 %v389
        %1774 = vmatprep.subr.mxu0 0.0
        %1775 = vmatpush1.msra.mxu0 %v390
        %1776 = vmatprep.subr.mxu0 0.0
        %1777 = vmatpush1.msra.mxu0 %v391
        %1778 = vmatprep.subr.mxu0 0.0
        %1779 = vmatpush1.msra.mxu0 0.0
        %1780 = vmatprep.subr.mxu0 0.0
        %1781 = vmatpush1.msra.mxu0 0.0
        %1782 = vmatprep.subr.mxu0 0.0
        %1783 = vmatpush1.msra.mxu0 0.0
        %1784 = vmatprep.subr.mxu0 0.0
        %1785 = vmatpush1.msra.mxu0 0.0
        %1786 = vmatprep.subr.mxu0 0.0
        %1787 = vmatpush1.msra.mxu0 0.0
        %1788 = vmatprep.subr.mxu0 0.0
        %1789 = vmatpush1.msra.mxu0 0.0
        %1790 = vmatprep.subr.mxu0 0.0
        %1791 = vmatpush1.msra.mxu0 0.0
        %1792 = vmatprep.subr.mxu0 0.0
        %1793 = vmatpush1.msra.mxu0 0.0
        %1794 = vmatprep.subr.mxu0 0.0
        %1795 = vmatpush1.msra.mxu0 0.0
        %1796 = vmatprep.subr.mxu0 0.0
        %1797 = vmatpush1.msra.mxu0 0.0
        %1798 = vmatprep.subr.mxu0 0.0
        %1799 = vmatpush1.msra.mxu0 0.0
        %1800 = vmatprep.subr.mxu0 0.0
        %1801 = vmatpush1.msra.mxu0 0.0
        %1802 = vmatprep.subr.mxu0 0.0
        %1803 = vmatpush1.msra.mxu0 0.0
        %1804 = vmatprep.subr.mxu0 0.0
        %1805 = vmatpush1.msra.mxu0 0.0
        %1806 = vmatprep.subr.mxu0 0.0
        %1807 = vmatpush1.msra.mxu0 0.0
        %1808 = vmatprep.subr.mxu0 0.0
        %1809 = vmatpush1.msra.mxu0 0.0
        %1810 = vmatprep.mubr.f32.mxu0 0.0
        %1811 = vmatmul.mubr.f32.gmra.mrb[0].mxu0 %v1745
        %v1812 = vpop.f32.mrb[0].mxu0
        %v1813 = vadd.f32 0.0, %v1812
        %v1814 = vpop.f32.mrb[0].mxu0
        %1815 = vdwg.mxu0
        %v1816 = vsub.f32 %v559, %v1813
        %s1817 = scalar_lea.vmem [#allocation3], 64
        %1818 = vst [vmem:[%s1817] sm:$0xff] %v1816
        %s1819 = scalar_lea.vmem %s318, 72 [#allocation4]
        %v1820 = vld [vmem:[%s1819] sm:$0xff]
        %s1821 = scalar_lea.vmem [#allocation7], 288
        %v1822 = vld [vmem:[%s1821] sm:$0xff]
        %v1823 = vld [vmem:[%s1821 + $0x8] sm:$0xff]
        %v1824 = vld [vmem:[%s1821 + $0x10] sm:$0xff]
        %v1825 = vld [vmem:[%s1821 + $0x18] sm:$0xff]
        %v1827 = vsel %vm408, %v1820, 0
        %1829 = vmatprep.subr.mxu0 %v1823
        %1830 = vmatpush1.msra.mxu0 %v1822
        %1831 = vmatprep.subr.mxu0 %v1825
        %1832 = vmatpush1.msra.mxu0 %v1824
        %1833 = vmatprep.subr.mxu0 0.0
        %1834 = vmatpush1.msra.mxu0 0.0
        %1835 = vmatprep.subr.mxu0 0.0
        %1836 = vmatpush1.msra.mxu0 0.0
        %1837 = vmatprep.subr.mxu0 0.0
        %1838 = vmatpush1.msra.mxu0 0.0
        %1839 = vmatprep.subr.mxu0 0.0
        %1840 = vmatpush1.msra.mxu0 0.0
        %1841 = vmatprep.subr.mxu0 0.0
        %1842 = vmatpush1.msra.mxu0 0.0
        %1843 = vmatprep.subr.mxu0 0.0
        %1844 = vmatpush1.msra.mxu0 0.0
        %1845 = vmatprep.subr.mxu0 0.0
        %1846 = vmatpush1.msra.mxu0 0.0
        %1847 = vmatprep.subr.mxu0 0.0
        %1848 = vmatpush1.msra.mxu0 0.0
        %1849 = vmatprep.subr.mxu0 0.0
        %1850 = vmatpush1.msra.mxu0 0.0
        %1851 = vmatprep.subr.mxu0 0.0
        %1852 = vmatpush1.msra.mxu0 0.0
        %1853 = vmatprep.subr.mxu0 0.0
        %1854 = vmatpush1.msra.mxu0 0.0
        %1855 = vmatprep.subr.mxu0 0.0
        %1856 = vmatpush1.msra.mxu0 0.0
        %1857 = vmatprep.subr.mxu0 0.0
        %1858 = vmatpush1.msra.mxu0 0.0
        %1859 = vmatprep.subr.mxu0 0.0
        %1860 = vmatpush1.msra.mxu0 0.0
        %1861 = vmatprep.subr.mxu0 0.0
        %1862 = vmatpush1.msra.mxu0 0.0
        %1863 = vmatprep.subr.mxu0 0.0
        %1864 = vmatpush1.msra.mxu0 0.0
        %1865 = vmatprep.subr.mxu0 0.0
        %1866 = vmatpush1.msra.mxu0 0.0
        %1867 = vmatprep.subr.mxu0 0.0
        %1868 = vmatpush1.msra.mxu0 0.0
        %1869 = vmatprep.subr.mxu0 0.0
        %1870 = vmatpush1.msra.mxu0 0.0
        %1871 = vmatprep.subr.mxu0 0.0
        %1872 = vmatpush1.msra.mxu0 0.0
        %1873 = vmatprep.subr.mxu0 0.0
        %1874 = vmatpush1.msra.mxu0 0.0
        %1875 = vmatprep.subr.mxu0 0.0
        %1876 = vmatpush1.msra.mxu0 0.0
        %1877 = vmatprep.subr.mxu0 0.0
        %1878 = vmatpush1.msra.mxu0 0.0
        %1879 = vmatprep.subr.mxu0 0.0
        %1880 = vmatpush1.msra.mxu0 0.0
        %1881 = vmatprep.subr.mxu0 0.0
        %1882 = vmatpush1.msra.mxu0 0.0
        %1883 = vmatprep.subr.mxu0 0.0
        %1884 = vmatpush1.msra.mxu0 0.0
        %1885 = vmatprep.subr.mxu0 0.0
        %1886 = vmatpush1.msra.mxu0 0.0
        %1887 = vmatprep.subr.mxu0 0.0
        %1888 = vmatpush1.msra.mxu0 0.0
        %1889 = vmatprep.subr.mxu0 0.0
        %1890 = vmatpush1.msra.mxu0 0.0
        %1891 = vmatprep.subr.mxu0 0.0
        %1892 = vmatpush1.msra.mxu0 0.0
        %1893 = vmatprep.mubr.f32.mxu0 0.0
        %1894 = vmatmul.mubr.f32.gmra.mrb[0].mxu0 %v1827
        %v1895 = vpop.f32.mrb[0].mxu0
        %v1896 = vadd.f32 %v401, %v1895
        %v1897 = vpop.f32.mrb[0].mxu0
        %v1898 = vadd.f32 %v405, %v1897
        %1899 = vdwg.mxu0
        %s1900 = scalar_lea.vmem [#allocation2], 72
        %1901 = vst [vmem:[%s1900] sm:$0xff] %v1898
        %v1902 = vmul.f32 %v1896, %v1896
        %1903 = vmatprep.subr.mxu0 0.0
        %1904 = vmatpush1.msra.mxu0 %v376
        %1905 = vmatprep.subr.mxu0 0.0
        %1906 = vmatpush1.msra.mxu0 %v377
        %1907 = vmatprep.subr.mxu0 0.0
        %1908 = vmatpush1.msra.mxu0 %v378
        %1909 = vmatprep.subr.mxu0 0.0
        %1910 = vmatpush1.msra.mxu0 %v379
        %1911 = vmatprep.subr.mxu0 0.0
        %1912 = vmatpush1.msra.mxu0 %v380
        %1913 = vmatprep.subr.mxu0 0.0
        %1914 = vmatpush1.msra.mxu0 %v381
        %1915 = vmatprep.subr.mxu0 0.0
        %1916 = vmatpush1.msra.mxu0 %v382
        %1917 = vmatprep.subr.mxu0 0.0
        %1918 = vmatpush1.msra.mxu0 %v383
        %1919 = vmatprep.subr.mxu0 0.0
        %1920 = vmatpush1.msra.mxu0 %v384
        %1921 = vmatprep.subr.mxu0 0.0
        %1922 = vmatpush1.msra.mxu0 %v385
        %1923 = vmatprep.subr.mxu0 0.0
        %1924 = vmatpush1.msra.mxu0 %v386
        %1925 = vmatprep.subr.mxu0 0.0
        %1926 = vmatpush1.msra.mxu0 %v387
        %1927 = vmatprep.subr.mxu0 0.0
        %1928 = vmatpush1.msra.mxu0 %v388
        %1929 = vmatprep.subr.mxu0 0.0
        %1930 = vmatpush1.msra.mxu0 %v389
        %1931 = vmatprep.subr.mxu0 0.0
        %1932 = vmatpush1.msra.mxu0 %v390
        %1933 = vmatprep.subr.mxu0 0.0
        %1934 = vmatpush1.msra.mxu0 %v391
        %1935 = vmatprep.subr.mxu0 0.0
        %1936 = vmatpush1.msra.mxu0 0.0
        %1937 = vmatprep.subr.mxu0 0.0
        %1938 = vmatpush1.msra.mxu0 0.0
        %1939 = vmatprep.subr.mxu0 0.0
        %1940 = vmatpush1.msra.mxu0 0.0
        %1941 = vmatprep.subr.mxu0 0.0
        %1942 = vmatpush1.msra.mxu0 0.0
        %1943 = vmatprep.subr.mxu0 0.0
        %1944 = vmatpush1.msra.mxu0 0.0
        %1945 = vmatprep.subr.mxu0 0.0
        %1946 = vmatpush1.msra.mxu0 0.0
        %1947 = vmatprep.subr.mxu0 0.0
        %1948 = vmatpush1.msra.mxu0 0.0
        %1949 = vmatprep.subr.mxu0 0.0
        %1950 = vmatpush1.msra.mxu0 0.0
        %1951 = vmatprep.subr.mxu0 0.0
        %1952 = vmatpush1.msra.mxu0 0.0
        %1953 = vmatprep.subr.mxu0 0.0
        %1954 = vmatpush1.msra.mxu0 0.0
        %1955 = vmatprep.subr.mxu0 0.0
        %1956 = vmatpush1.msra.mxu0 0.0
        %1957 = vmatprep.subr.mxu0 0.0
        %1958 = vmatpush1.msra.mxu0 0.0
        %1959 = vmatprep.subr.mxu0 0.0
        %1960 = vmatpush1.msra.mxu0 0.0
        %1961 = vmatprep.subr.mxu0 0.0
        %1962 = vmatpush1.msra.mxu0 0.0
        %1963 = vmatprep.subr.mxu0 0.0
        %1964 = vmatpush1.msra.mxu0 0.0
        %1965 = vmatprep.subr.mxu0 0.0
        %1966 = vmatpush1.msra.mxu0 0.0
        %1967 = vmatprep.mubr.f32.mxu0 0.0
        %1968 = vmatmul.mubr.f32.gmra.mrb[0].mxu0 %v1902
        %v1969 = vpop.f32.mrb[0].mxu0
        %v1970 = vadd.f32 0.0, %v1969
        %v1971 = vpop.f32.mrb[0].mxu0
        %1972 = vdwg.mxu0
        %v1973 = vsub.f32 %v559, %v1970
        %s1974 = scalar_lea.vmem [#allocation3], 72
        %1975 = vst [vmem:[%s1974] sm:$0xff] %v1973
        %s1976 = scalar_lea.vmem %s318, 80 [#allocation4]
        %v1977 = vld [vmem:[%s1976] sm:$0xff]
        %s1978 = scalar_lea.vmem [#allocation7], 320
        %v1979 = vld [vmem:[%s1978] sm:$0xff]
        %v1980 = vld [vmem:[%s1978 + $0x8] sm:$0xff]
        %v1981 = vld [vmem:[%s1978 + $0x10] sm:$0xff]
        %v1982 = vld [vmem:[%s1978 + $0x18] sm:$0xff]
        %v1984 = vsel %vm408, %v1977, 0
        %1986 = vmatprep.subr.mxu0 %v1980
        %1987 = vmatpush1.msra.mxu0 %v1979
        %1988 = vmatprep.subr.mxu0 %v1982
        %1989 = vmatpush1.msra.mxu0 %v1981
        %1990 = vmatprep.subr.mxu0 0.0
        %1991 = vmatpush1.msra.mxu0 0.0
        %1992 = vmatprep.subr.mxu0 0.0
        %1993 = vmatpush1.msra.mxu0 0.0
        %1994 = vmatprep.subr.mxu0 0.0
        %1995 = vmatpush1.msra.mxu0 0.0
        %1996 = vmatprep.subr.mxu0 0.0
        %1997 = vmatpush1.msra.mxu0 0.0
        %1998 = vmatprep.subr.mxu0 0.0
        %1999 = vmatpush1.msra.mxu0 0.0
        %2000 = vmatprep.subr.mxu0 0.0
        %2001 = vmatpush1.msra.mxu0 0.0
        %2002 = vmatprep.subr.mxu0 0.0
        %2003 = vmatpush1.msra.mxu0 0.0
        %2004 = vmatprep.subr.mxu0 0.0
        %2005 = vmatpush1.msra.mxu0 0.0
        %2006 = vmatprep.subr.mxu0 0.0
        %2007 = vmatpush1.msra.mxu0 0.0
        %2008 = vmatprep.subr.mxu0 0.0
        %2009 = vmatpush1.msra.mxu0 0.0
        %2010 = vmatprep.subr.mxu0 0.0
        %2011 = vmatpush1.msra.mxu0 0.0
        %2012 = vmatprep.subr.mxu0 0.0
        %2013 = vmatpush1.msra.mxu0 0.0
        %2014 = vmatprep.subr.mxu0 0.0
        %2015 = vmatpush1.msra.mxu0 0.0
        %2016 = vmatprep.subr.mxu0 0.0
        %2017 = vmatpush1.msra.mxu0 0.0
        %2018 = vmatprep.subr.mxu0 0.0
        %2019 = vmatpush1.msra.mxu0 0.0
        %2020 = vmatprep.subr.mxu0 0.0
        %2021 = vmatpush1.msra.mxu0 0.0
        %2022 = vmatprep.subr.mxu0 0.0
        %2023 = vmatpush1.msra.mxu0 0.0
        %2024 = vmatprep.subr.mxu0 0.0
        %2025 = vmatpush1.msra.mxu0 0.0
        %2026 = vmatprep.subr.mxu0 0.0
        %2027 = vmatpush1.msra.mxu0 0.0
        %2028 = vmatprep.subr.mxu0 0.0
        %2029 = vmatpush1.msra.mxu0 0.0
        %2030 = vmatprep.subr.mxu0 0.0
        %2031 = vmatpush1.msra.mxu0 0.0
        %2032 = vmatprep.subr.mxu0 0.0
        %2033 = vmatpush1.msra.mxu0 0.0
        %2034 = vmatprep.subr.mxu0 0.0
        %2035 = vmatpush1.msra.mxu0 0.0
        %2036 = vmatprep.subr.mxu0 0.0
        %2037 = vmatpush1.msra.mxu0 0.0
        %2038 = vmatprep.subr.mxu0 0.0
        %2039 = vmatpush1.msra.mxu0 0.0
        %2040 = vmatprep.subr.mxu0 0.0
        %2041 = vmatpush1.msra.mxu0 0.0
        %2042 = vmatprep.subr.mxu0 0.0
        %2043 = vmatpush1.msra.mxu0 0.0
        %2044 = vmatprep.subr.mxu0 0.0
        %2045 = vmatpush1.msra.mxu0 0.0
        %2046 = vmatprep.subr.mxu0 0.0
        %2047 = vmatpush1.msra.mxu0 0.0
        %2048 = vmatprep.subr.mxu0 0.0
        %2049 = vmatpush1.msra.mxu0 0.0
        %2050 = vmatprep.mubr.f32.mxu0 0.0
        %2051 = vmatmul.mubr.f32.gmra.mrb[0].mxu0 %v1984
        %v2052 = vpop.f32.mrb[0].mxu0
        %v2053 = vadd.f32 %v401, %v2052
        %v2054 = vpop.f32.mrb[0].mxu0
        %v2055 = vadd.f32 %v405, %v2054
        %2056 = vdwg.mxu0
        %s2057 = scalar_lea.vmem [#allocation2], 80
        %2058 = vst [vmem:[%s2057] sm:$0xff] %v2055
        %v2059 = vmul.f32 %v2053, %v2053
        %2060 = vmatprep.subr.mxu0 0.0
        %2061 = vmatpush1.msra.mxu0 %v376
        %2062 = vmatprep.subr.mxu0 0.0
        %2063 = vmatpush1.msra.mxu0 %v377
        %2064 = vmatprep.subr.mxu0 0.0
        %2065 = vmatpush1.msra.mxu0 %v378
        %2066 = vmatprep.subr.mxu0 0.0
        %2067 = vmatpush1.msra.mxu0 %v379
        %2068 = vmatprep.subr.mxu0 0.0
        %2069 = vmatpush1.msra.mxu0 %v380
        %2070 = vmatprep.subr.mxu0 0.0
        %2071 = vmatpush1.msra.mxu0 %v381
        %2072 = vmatprep.subr.mxu0 0.0
        %2073 = vmatpush1.msra.mxu0 %v382
        %2074 = vmatprep.subr.mxu0 0.0
        %2075 = vmatpush1.msra.mxu0 %v383
        %2076 = vmatprep.subr.mxu0 0.0
        %2077 = vmatpush1.msra.mxu0 %v384
        %2078 = vmatprep.subr.mxu0 0.0
        %2079 = vmatpush1.msra.mxu0 %v385
        %2080 = vmatprep.subr.mxu0 0.0
        %2081 = vmatpush1.msra.mxu0 %v386
        %2082 = vmatprep.subr.mxu0 0.0
        %2083 = vmatpush1.msra.mxu0 %v387
        %2084 = vmatprep.subr.mxu0 0.0
        %2085 = vmatpush1.msra.mxu0 %v388
        %2086 = vmatprep.subr.mxu0 0.0
        %2087 = vmatpush1.msra.mxu0 %v389
        %2088 = vmatprep.subr.mxu0 0.0
        %2089 = vmatpush1.msra.mxu0 %v390
        %2090 = vmatprep.subr.mxu0 0.0
        %2091 = vmatpush1.msra.mxu0 %v391
        %2092 = vmatprep.subr.mxu0 0.0
        %2093 = vmatpush1.msra.mxu0 0.0
        %2094 = vmatprep.subr.mxu0 0.0
        %2095 = vmatpush1.msra.mxu0 0.0
        %2096 = vmatprep.subr.mxu0 0.0
        %2097 = vmatpush1.msra.mxu0 0.0
        %2098 = vmatprep.subr.mxu0 0.0
        %2099 = vmatpush1.msra.mxu0 0.0
        %2100 = vmatprep.subr.mxu0 0.0
        %2101 = vmatpush1.msra.mxu0 0.0
        %2102 = vmatprep.subr.mxu0 0.0
        %2103 = vmatpush1.msra.mxu0 0.0
        %2104 = vmatprep.subr.mxu0 0.0
        %2105 = vmatpush1.msra.mxu0 0.0
        %2106 = vmatprep.subr.mxu0 0.0
        %2107 = vmatpush1.msra.mxu0 0.0
        %2108 = vmatprep.subr.mxu0 0.0
        %2109 = vmatpush1.msra.mxu0 0.0
        %2110 = vmatprep.subr.mxu0 0.0
        %2111 = vmatpush1.msra.mxu0 0.0
        %2112 = vmatprep.subr.mxu0 0.0
        %2113 = vmatpush1.msra.mxu0 0.0
        %2114 = vmatprep.subr.mxu0 0.0
        %2115 = vmatpush1.msra.mxu0 0.0
        %2116 = vmatprep.subr.mxu0 0.0
        %2117 = vmatpush1.msra.mxu0 0.0
        %2118 = vmatprep.subr.mxu0 0.0
        %2119 = vmatpush1.msra.mxu0 0.0
        %2120 = vmatprep.subr.mxu0 0.0
        %2121 = vmatpush1.msra.mxu0 0.0
        %2122 = vmatprep.subr.mxu0 0.0
        %2123 = vmatpush1.msra.mxu0 0.0
        %2124 = vmatprep.mubr.f32.mxu0 0.0
        %2125 = vmatmul.mubr.f32.gmra.mrb[0].mxu0 %v2059
        %v2126 = vpop.f32.mrb[0].mxu0
        %v2127 = vadd.f32 0.0, %v2126
        %v2128 = vpop.f32.mrb[0].mxu0
        %2129 = vdwg.mxu0
        %v2130 = vsub.f32 %v559, %v2127
        %s2131 = scalar_lea.vmem [#allocation3], 80
        %2132 = vst [vmem:[%s2131] sm:$0xff] %v2130
        %s2133 = scalar_lea.vmem %s318, 88 [#allocation4]
        %v2134 = vld [vmem:[%s2133] sm:$0xff]
        %s2135 = scalar_lea.vmem [#allocation7], 352
        %v2136 = vld [vmem:[%s2135] sm:$0xff]
        %v2137 = vld [vmem:[%s2135 + $0x8] sm:$0xff]
        %v2138 = vld [vmem:[%s2135 + $0x10] sm:$0xff]
        %v2139 = vld [vmem:[%s2135 + $0x18] sm:$0xff]
        %v2141 = vsel %vm408, %v2134, 0
        %2143 = vmatprep.subr.mxu0 %v2137
        %2144 = vmatpush1.msra.mxu0 %v2136
        %2145 = vmatprep.subr.mxu0 %v2139
        %2146 = vmatpush1.msra.mxu0 %v2138
        %2147 = vmatprep.subr.mxu0 0.0
        %2148 = vmatpush1.msra.mxu0 0.0
        %2149 = vmatprep.subr.mxu0 0.0
        %2150 = vmatpush1.msra.mxu0 0.0
        %2151 = vmatprep.subr.mxu0 0.0
        %2152 = vmatpush1.msra.mxu0 0.0
        %2153 = vmatprep.subr.mxu0 0.0
        %2154 = vmatpush1.msra.mxu0 0.0
        %2155 = vmatprep.subr.mxu0 0.0
        %2156 = vmatpush1.msra.mxu0 0.0
        %2157 = vmatprep.subr.mxu0 0.0
        %2158 = vmatpush1.msra.mxu0 0.0
        %2159 = vmatprep.subr.mxu0 0.0
        %2160 = vmatpush1.msra.mxu0 0.0
        %2161 = vmatprep.subr.mxu0 0.0
        %2162 = vmatpush1.msra.mxu0 0.0
        %2163 = vmatprep.subr.mxu0 0.0
        %2164 = vmatpush1.msra.mxu0 0.0
        %2165 = vmatprep.subr.mxu0 0.0
        %2166 = vmatpush1.msra.mxu0 0.0
        %2167 = vmatprep.subr.mxu0 0.0
        %2168 = vmatpush1.msra.mxu0 0.0
        %2169 = vmatprep.subr.mxu0 0.0
        %2170 = vmatpush1.msra.mxu0 0.0
        %2171 = vmatprep.subr.mxu0 0.0
        %2172 = vmatpush1.msra.mxu0 0.0
        %2173 = vmatprep.subr.mxu0 0.0
        %2174 = vmatpush1.msra.mxu0 0.0
        %2175 = vmatprep.subr.mxu0 0.0
        %2176 = vmatpush1.msra.mxu0 0.0
        %2177 = vmatprep.subr.mxu0 0.0
        %2178 = vmatpush1.msra.mxu0 0.0
        %2179 = vmatprep.subr.mxu0 0.0
        %2180 = vmatpush1.msra.mxu0 0.0
        %2181 = vmatprep.subr.mxu0 0.0
        %2182 = vmatpush1.msra.mxu0 0.0
        %2183 = vmatprep.subr.mxu0 0.0
        %2184 = vmatpush1.msra.mxu0 0.0
        %2185 = vmatprep.subr.mxu0 0.0
        %2186 = vmatpush1.msra.mxu0 0.0
        %2187 = vmatprep.subr.mxu0 0.0
        %2188 = vmatpush1.msra.mxu0 0.0
        %2189 = vmatprep.subr.mxu0 0.0
        %2190 = vmatpush1.msra.mxu0 0.0
        %2191 = vmatprep.subr.mxu0 0.0
        %2192 = vmatpush1.msra.mxu0 0.0
        %2193 = vmatprep.subr.mxu0 0.0
        %2194 = vmatpush1.msra.mxu0 0.0
        %2195 = vmatprep.subr.mxu0 0.0
        %2196 = vmatpush1.msra.mxu0 0.0
        %2197 = vmatprep.subr.mxu0 0.0
        %2198 = vmatpush1.msra.mxu0 0.0
        %2199 = vmatprep.subr.mxu0 0.0
        %2200 = vmatpush1.msra.mxu0 0.0
        %2201 = vmatprep.subr.mxu0 0.0
        %2202 = vmatpush1.msra.mxu0 0.0
        %2203 = vmatprep.subr.mxu0 0.0
        %2204 = vmatpush1.msra.mxu0 0.0
        %2205 = vmatprep.subr.mxu0 0.0
        %2206 = vmatpush1.msra.mxu0 0.0
        %2207 = vmatprep.mubr.f32.mxu0 0.0
        %2208 = vmatmul.mubr.f32.gmra.mrb[0].mxu0 %v2141
        %v2209 = vpop.f32.mrb[0].mxu0
        %v2210 = vadd.f32 %v401, %v2209
        %v2211 = vpop.f32.mrb[0].mxu0
        %v2212 = vadd.f32 %v405, %v2211
        %2213 = vdwg.mxu0
        %s2214 = scalar_lea.vmem [#allocation2], 88
        %2215 = vst [vmem:[%s2214] sm:$0xff] %v2212
        %v2216 = vmul.f32 %v2210, %v2210
        %2217 = vmatprep.subr.mxu0 0.0
        %2218 = vmatpush1.msra.mxu0 %v376
        %2219 = vmatprep.subr.mxu0 0.0
        %2220 = vmatpush1.msra.mxu0 %v377
        %2221 = vmatprep.subr.mxu0 0.0
        %2222 = vmatpush1.msra.mxu0 %v378
        %2223 = vmatprep.subr.mxu0 0.0
        %2224 = vmatpush1.msra.mxu0 %v379
        %2225 = vmatprep.subr.mxu0 0.0
        %2226 = vmatpush1.msra.mxu0 %v380
        %2227 = vmatprep.subr.mxu0 0.0
        %2228 = vmatpush1.msra.mxu0 %v381
        %2229 = vmatprep.subr.mxu0 0.0
        %2230 = vmatpush1.msra.mxu0 %v382
        %2231 = vmatprep.subr.mxu0 0.0
        %2232 = vmatpush1.msra.mxu0 %v383
        %2233 = vmatprep.subr.mxu0 0.0
        %2234 = vmatpush1.msra.mxu0 %v384
        %2235 = vmatprep.subr.mxu0 0.0
        %2236 = vmatpush1.msra.mxu0 %v385
        %2237 = vmatprep.subr.mxu0 0.0
        %2238 = vmatpush1.msra.mxu0 %v386
        %2239 = vmatprep.subr.mxu0 0.0
        %2240 = vmatpush1.msra.mxu0 %v387
        %2241 = vmatprep.subr.mxu0 0.0
        %2242 = vmatpush1.msra.mxu0 %v388
        %2243 = vmatprep.subr.mxu0 0.0
        %2244 = vmatpush1.msra.mxu0 %v389
        %2245 = vmatprep.subr.mxu0 0.0
        %2246 = vmatpush1.msra.mxu0 %v390
        %2247 = vmatprep.subr.mxu0 0.0
        %2248 = vmatpush1.msra.mxu0 %v391
        %2249 = vmatprep.subr.mxu0 0.0
        %2250 = vmatpush1.msra.mxu0 0.0
        %2251 = vmatprep.subr.mxu0 0.0
        %2252 = vmatpush1.msra.mxu0 0.0
        %2253 = vmatprep.subr.mxu0 0.0
        %2254 = vmatpush1.msra.mxu0 0.0
        %2255 = vmatprep.subr.mxu0 0.0
        %2256 = vmatpush1.msra.mxu0 0.0
        %2257 = vmatprep.subr.mxu0 0.0
        %2258 = vmatpush1.msra.mxu0 0.0
        %2259 = vmatprep.subr.mxu0 0.0
        %2260 = vmatpush1.msra.mxu0 0.0
        %2261 = vmatprep.subr.mxu0 0.0
        %2262 = vmatpush1.msra.mxu0 0.0
        %2263 = vmatprep.subr.mxu0 0.0
        %2264 = vmatpush1.msra.mxu0 0.0
        %2265 = vmatprep.subr.mxu0 0.0
        %2266 = vmatpush1.msra.mxu0 0.0
        %2267 = vmatprep.subr.mxu0 0.0
        %2268 = vmatpush1.msra.mxu0 0.0
        %2269 = vmatprep.subr.mxu0 0.0
        %2270 = vmatpush1.msra.mxu0 0.0
        %2271 = vmatprep.subr.mxu0 0.0
        %2272 = vmatpush1.msra.mxu0 0.0
        %2273 = vmatprep.subr.mxu0 0.0
        %2274 = vmatpush1.msra.mxu0 0.0
        %2275 = vmatprep.subr.mxu0 0.0
        %2276 = vmatpush1.msra.mxu0 0.0
        %2277 = vmatprep.subr.mxu0 0.0
        %2278 = vmatpush1.msra.mxu0 0.0
        %2279 = vmatprep.subr.mxu0 0.0
        %2280 = vmatpush1.msra.mxu0 0.0
        %2281 = vmatprep.mubr.f32.mxu0 0.0
        %2282 = vmatmul.mubr.f32.gmra.mrb[0].mxu0 %v2216
        %v2283 = vpop.f32.mrb[0].mxu0
        %v2284 = vadd.f32 0.0, %v2283
        %v2285 = vpop.f32.mrb[0].mxu0
        %2286 = vdwg.mxu0
        %v2287 = vsub.f32 %v559, %v2284
        %s2288 = scalar_lea.vmem [#allocation3], 88
        %2289 = vst [vmem:[%s2288] sm:$0xff] %v2287
        %s2290 = scalar_lea.vmem %s318, 96 [#allocation4]
        %v2291 = vld [vmem:[%s2290] sm:$0xff]
        %s2292 = scalar_lea.vmem [#allocation7], 384
        %v2293 = vld [vmem:[%s2292] sm:$0xff]
        %v2294 = vld [vmem:[%s2292 + $0x8] sm:$0xff]
        %v2295 = vld [vmem:[%s2292 + $0x10] sm:$0xff]
        %v2296 = vld [vmem:[%s2292 + $0x18] sm:$0xff]
        %v2298 = vsel %vm408, %v2291, 0
        %2300 = vmatprep.subr.mxu0 %v2294
        %2301 = vmatpush1.msra.mxu0 %v2293
        %2302 = vmatprep.subr.mxu0 %v2296
        %2303 = vmatpush1.msra.mxu0 %v2295
        %2304 = vmatprep.subr.mxu0 0.0
        %2305 = vmatpush1.msra.mxu0 0.0
        %2306 = vmatprep.subr.mxu0 0.0
        %2307 = vmatpush1.msra.mxu0 0.0
        %2308 = vmatprep.subr.mxu0 0.0
        %2309 = vmatpush1.msra.mxu0 0.0
        %2310 = vmatprep.subr.mxu0 0.0
        %2311 = vmatpush1.msra.mxu0 0.0
        %2312 = vmatprep.subr.mxu0 0.0
        %2313 = vmatpush1.msra.mxu0 0.0
        %2314 = vmatprep.subr.mxu0 0.0
        %2315 = vmatpush1.msra.mxu0 0.0
        %2316 = vmatprep.subr.mxu0 0.0
        %2317 = vmatpush1.msra.mxu0 0.0
        %2318 = vmatprep.subr.mxu0 0.0
        %2319 = vmatpush1.msra.mxu0 0.0
        %2320 = vmatprep.subr.mxu0 0.0
        %2321 = vmatpush1.msra.mxu0 0.0
        %2322 = vmatprep.subr.mxu0 0.0
        %2323 = vmatpush1.msra.mxu0 0.0
        %2324 = vmatprep.subr.mxu0 0.0
        %2325 = vmatpush1.msra.mxu0 0.0
        %2326 = vmatprep.subr.mxu0 0.0
        %2327 = vmatpush1.msra.mxu0 0.0
        %2328 = vmatprep.subr.mxu0 0.0
        %2329 = vmatpush1.msra.mxu0 0.0
        %2330 = vmatprep.subr.mxu0 0.0
        %2331 = vmatpush1.msra.mxu0 0.0
        %2332 = vmatprep.subr.mxu0 0.0
        %2333 = vmatpush1.msra.mxu0 0.0
        %2334 = vmatprep.subr.mxu0 0.0
        %2335 = vmatpush1.msra.mxu0 0.0
        %2336 = vmatprep.subr.mxu0 0.0
        %2337 = vmatpush1.msra.mxu0 0.0
        %2338 = vmatprep.subr.mxu0 0.0
        %2339 = vmatpush1.msra.mxu0 0.0
        %2340 = vmatprep.subr.mxu0 0.0
        %2341 = vmatpush1.msra.mxu0 0.0
        %2342 = vmatprep.subr.mxu0 0.0
        %2343 = vmatpush1.msra.mxu0 0.0
        %2344 = vmatprep.subr.mxu0 0.0
        %2345 = vmatpush1.msra.mxu0 0.0
        %2346 = vmatprep.subr.mxu0 0.0
        %2347 = vmatpush1.msra.mxu0 0.0
        %2348 = vmatprep.subr.mxu0 0.0
        %2349 = vmatpush1.msra.mxu0 0.0
        %2350 = vmatprep.subr.mxu0 0.0
        %2351 = vmatpush1.msra.mxu0 0.0
        %2352 = vmatprep.subr.mxu0 0.0
        %2353 = vmatpush1.msra.mxu0 0.0
        %2354 = vmatprep.subr.mxu0 0.0
        %2355 = vmatpush1.msra.mxu0 0.0
        %2356 = vmatprep.subr.mxu0 0.0
        %2357 = vmatpush1.msra.mxu0 0.0
        %2358 = vmatprep.subr.mxu0 0.0
        %2359 = vmatpush1.msra.mxu0 0.0
        %2360 = vmatprep.subr.mxu0 0.0
        %2361 = vmatpush1.msra.mxu0 0.0
        %2362 = vmatprep.subr.mxu0 0.0
        %2363 = vmatpush1.msra.mxu0 0.0
        %2364 = vmatprep.mubr.f32.mxu0 0.0
        %2365 = vmatmul.mubr.f32.gmra.mrb[0].mxu0 %v2298
        %v2366 = vpop.f32.mrb[0].mxu0
        %v2367 = vadd.f32 %v401, %v2366
        %v2368 = vpop.f32.mrb[0].mxu0
        %v2369 = vadd.f32 %v405, %v2368
        %2370 = vdwg.mxu0
        %s2371 = scalar_lea.vmem [#allocation2], 96
        %2372 = vst [vmem:[%s2371] sm:$0xff] %v2369
        %v2373 = vmul.f32 %v2367, %v2367
        %2374 = vmatprep.subr.mxu0 0.0
        %2375 = vmatpush1.msra.mxu0 %v376
        %2376 = vmatprep.subr.mxu0 0.0
        %2377 = vmatpush1.msra.mxu0 %v377
        %2378 = vmatprep.subr.mxu0 0.0
        %2379 = vmatpush1.msra.mxu0 %v378
        %2380 = vmatprep.subr.mxu0 0.0
        %2381 = vmatpush1.msra.mxu0 %v379
        %2382 = vmatprep.subr.mxu0 0.0
        %2383 = vmatpush1.msra.mxu0 %v380
        %2384 = vmatprep.subr.mxu0 0.0
        %2385 = vmatpush1.msra.mxu0 %v381
        %2386 = vmatprep.subr.mxu0 0.0
        %2387 = vmatpush1.msra.mxu0 %v382
        %2388 = vmatprep.subr.mxu0 0.0
        %2389 = vmatpush1.msra.mxu0 %v383
        %2390 = vmatprep.subr.mxu0 0.0
        %2391 = vmatpush1.msra.mxu0 %v384
        %2392 = vmatprep.subr.mxu0 0.0
        %2393 = vmatpush1.msra.mxu0 %v385
        %2394 = vmatprep.subr.mxu0 0.0
        %2395 = vmatpush1.msra.mxu0 %v386
        %2396 = vmatprep.subr.mxu0 0.0
        %2397 = vmatpush1.msra.mxu0 %v387
        %2398 = vmatprep.subr.mxu0 0.0
        %2399 = vmatpush1.msra.mxu0 %v388
        %2400 = vmatprep.subr.mxu0 0.0
        %2401 = vmatpush1.msra.mxu0 %v389
        %2402 = vmatprep.subr.mxu0 0.0
        %2403 = vmatpush1.msra.mxu0 %v390
        %2404 = vmatprep.subr.mxu0 0.0
        %2405 = vmatpush1.msra.mxu0 %v391
        %2406 = vmatprep.subr.mxu0 0.0
        %2407 = vmatpush1.msra.mxu0 0.0
        %2408 = vmatprep.subr.mxu0 0.0
        %2409 = vmatpush1.msra.mxu0 0.0
        %2410 = vmatprep.subr.mxu0 0.0
        %2411 = vmatpush1.msra.mxu0 0.0
        %2412 = vmatprep.subr.mxu0 0.0
        %2413 = vmatpush1.msra.mxu0 0.0
        %2414 = vmatprep.subr.mxu0 0.0
        %2415 = vmatpush1.msra.mxu0 0.0
        %2416 = vmatprep.subr.mxu0 0.0
        %2417 = vmatpush1.msra.mxu0 0.0
        %2418 = vmatprep.subr.mxu0 0.0
        %2419 = vmatpush1.msra.mxu0 0.0
        %2420 = vmatprep.subr.mxu0 0.0
        %2421 = vmatpush1.msra.mxu0 0.0
        %2422 = vmatprep.subr.mxu0 0.0
        %2423 = vmatpush1.msra.mxu0 0.0
        %2424 = vmatprep.subr.mxu0 0.0
        %2425 = vmatpush1.msra.mxu0 0.0
        %2426 = vmatprep.subr.mxu0 0.0
        %2427 = vmatpush1.msra.mxu0 0.0
        %2428 = vmatprep.subr.mxu0 0.0
        %2429 = vmatpush1.msra.mxu0 0.0
        %2430 = vmatprep.subr.mxu0 0.0
        %2431 = vmatpush1.msra.mxu0 0.0
        %2432 = vmatprep.subr.mxu0 0.0
        %2433 = vmatpush1.msra.mxu0 0.0
        %2434 = vmatprep.subr.mxu0 0.0
        %2435 = vmatpush1.msra.mxu0 0.0
        %2436 = vmatprep.subr.mxu0 0.0
        %2437 = vmatpush1.msra.mxu0 0.0
        %2438 = vmatprep.mubr.f32.mxu0 0.0
        %2439 = vmatmul.mubr.f32.gmra.mrb[0].mxu0 %v2373
        %v2440 = vpop.f32.mrb[0].mxu0
        %v2441 = vadd.f32 0.0, %v2440
        %v2442 = vpop.f32.mrb[0].mxu0
        %2443 = vdwg.mxu0
        %v2444 = vsub.f32 %v559, %v2441
        %s2445 = scalar_lea.vmem [#allocation3], 96
        %2446 = vst [vmem:[%s2445] sm:$0xff] %v2444
        %s2447 = scalar_lea.vmem %s318, 104 [#allocation4]
        %v2448 = vld [vmem:[%s2447] sm:$0xff]
        %s2449 = scalar_lea.vmem [#allocation7], 416
        %v2450 = vld [vmem:[%s2449] sm:$0xff]
        %v2451 = vld [vmem:[%s2449 + $0x8] sm:$0xff]
        %v2452 = vld [vmem:[%s2449 + $0x10] sm:$0xff]
        %v2453 = vld [vmem:[%s2449 + $0x18] sm:$0xff]
        %v2455 = vsel %vm408, %v2448, 0
        %2457 = vmatprep.subr.mxu0 %v2451
        %2458 = vmatpush1.msra.mxu0 %v2450
        %2459 = vmatprep.subr.mxu0 %v2453
        %2460 = vmatpush1.msra.mxu0 %v2452
        %2461 = vmatprep.subr.mxu0 0.0
        %2462 = vmatpush1.msra.mxu0 0.0
        %2463 = vmatprep.subr.mxu0 0.0
        %2464 = vmatpush1.msra.mxu0 0.0
        %2465 = vmatprep.subr.mxu0 0.0
        %2466 = vmatpush1.msra.mxu0 0.0
        %2467 = vmatprep.subr.mxu0 0.0
        %2468 = vmatpush1.msra.mxu0 0.0
        %2469 = vmatprep.subr.mxu0 0.0
        %2470 = vmatpush1.msra.mxu0 0.0
        %2471 = vmatprep.subr.mxu0 0.0
        %2472 = vmatpush1.msra.mxu0 0.0
        %2473 = vmatprep.subr.mxu0 0.0
        %2474 = vmatpush1.msra.mxu0 0.0
        %2475 = vmatprep.subr.mxu0 0.0
        %2476 = vmatpush1.msra.mxu0 0.0
        %2477 = vmatprep.subr.mxu0 0.0
        %2478 = vmatpush1.msra.mxu0 0.0
        %2479 = vmatprep.subr.mxu0 0.0
        %2480 = vmatpush1.msra.mxu0 0.0
        %2481 = vmatprep.subr.mxu0 0.0
        %2482 = vmatpush1.msra.mxu0 0.0
        %2483 = vmatprep.subr.mxu0 0.0
        %2484 = vmatpush1.msra.mxu0 0.0
        %2485 = vmatprep.subr.mxu0 0.0
        %2486 = vmatpush1.msra.mxu0 0.0
        %2487 = vmatprep.subr.mxu0 0.0
        %2488 = vmatpush1.msra.mxu0 0.0
        %2489 = vmatprep.subr.mxu0 0.0
        %2490 = vmatpush1.msra.mxu0 0.0
        %2491 = vmatprep.subr.mxu0 0.0
        %2492 = vmatpush1.msra.mxu0 0.0
        %2493 = vmatprep.subr.mxu0 0.0
        %2494 = vmatpush1.msra.mxu0 0.0
        %2495 = vmatprep.subr.mxu0 0.0
        %2496 = vmatpush1.msra.mxu0 0.0
        %2497 = vmatprep.subr.mxu0 0.0
        %2498 = vmatpush1.msra.mxu0 0.0
        %2499 = vmatprep.subr.mxu0 0.0
        %2500 = vmatpush1.msra.mxu0 0.0
        %2501 = vmatprep.subr.mxu0 0.0
        %2502 = vmatpush1.msra.mxu0 0.0
        %2503 = vmatprep.subr.mxu0 0.0
        %2504 = vmatpush1.msra.mxu0 0.0
        %2505 = vmatprep.subr.mxu0 0.0
        %2506 = vmatpush1.msra.mxu0 0.0
        %2507 = vmatprep.subr.mxu0 0.0
        %2508 = vmatpush1.msra.mxu0 0.0
        %2509 = vmatprep.subr.mxu0 0.0
        %2510 = vmatpush1.msra.mxu0 0.0
        %2511 = vmatprep.subr.mxu0 0.0
        %2512 = vmatpush1.msra.mxu0 0.0
        %2513 = vmatprep.subr.mxu0 0.0
        %2514 = vmatpush1.msra.mxu0 0.0
        %2515 = vmatprep.subr.mxu0 0.0
        %2516 = vmatpush1.msra.mxu0 0.0
        %2517 = vmatprep.subr.mxu0 0.0
        %2518 = vmatpush1.msra.mxu0 0.0
        %2519 = vmatprep.subr.mxu0 0.0
        %2520 = vmatpush1.msra.mxu0 0.0
        %2521 = vmatprep.mubr.f32.mxu0 0.0
        %2522 = vmatmul.mubr.f32.gmra.mrb[0].mxu0 %v2455
        %v2523 = vpop.f32.mrb[0].mxu0
        %v2524 = vadd.f32 %v401, %v2523
        %v2525 = vpop.f32.mrb[0].mxu0
        %v2526 = vadd.f32 %v405, %v2525
        %2527 = vdwg.mxu0
        %s2528 = scalar_lea.vmem [#allocation2], 104
        %2529 = vst [vmem:[%s2528] sm:$0xff] %v2526
        %v2530 = vmul.f32 %v2524, %v2524
        %2531 = vmatprep.subr.mxu0 0.0
        %2532 = vmatpush1.msra.mxu0 %v376
        %2533 = vmatprep.subr.mxu0 0.0
        %2534 = vmatpush1.msra.mxu0 %v377
        %2535 = vmatprep.subr.mxu0 0.0
        %2536 = vmatpush1.msra.mxu0 %v378
        %2537 = vmatprep.subr.mxu0 0.0
        %2538 = vmatpush1.msra.mxu0 %v379
        %2539 = vmatprep.subr.mxu0 0.0
        %2540 = vmatpush1.msra.mxu0 %v380
        %2541 = vmatprep.subr.mxu0 0.0
        %2542 = vmatpush1.msra.mxu0 %v381
        %2543 = vmatprep.subr.mxu0 0.0
        %2544 = vmatpush1.msra.mxu0 %v382
        %2545 = vmatprep.subr.mxu0 0.0
        %2546 = vmatpush1.msra.mxu0 %v383
        %2547 = vmatprep.subr.mxu0 0.0
        %2548 = vmatpush1.msra.mxu0 %v384
        %2549 = vmatprep.subr.mxu0 0.0
        %2550 = vmatpush1.msra.mxu0 %v385
        %2551 = vmatprep.subr.mxu0 0.0
        %2552 = vmatpush1.msra.mxu0 %v386
        %2553 = vmatprep.subr.mxu0 0.0
        %2554 = vmatpush1.msra.mxu0 %v387
        %2555 = vmatprep.subr.mxu0 0.0
        %2556 = vmatpush1.msra.mxu0 %v388
        %2557 = vmatprep.subr.mxu0 0.0
        %2558 = vmatpush1.msra.mxu0 %v389
        %2559 = vmatprep.subr.mxu0 0.0
        %2560 = vmatpush1.msra.mxu0 %v390
        %2561 = vmatprep.subr.mxu0 0.0
        %2562 = vmatpush1.msra.mxu0 %v391
        %2563 = vmatprep.subr.mxu0 0.0
        %2564 = vmatpush1.msra.mxu0 0.0
        %2565 = vmatprep.subr.mxu0 0.0
        %2566 = vmatpush1.msra.mxu0 0.0
        %2567 = vmatprep.subr.mxu0 0.0
        %2568 = vmatpush1.msra.mxu0 0.0
        %2569 = vmatprep.subr.mxu0 0.0
        %2570 = vmatpush1.msra.mxu0 0.0
        %2571 = vmatprep.subr.mxu0 0.0
        %2572 = vmatpush1.msra.mxu0 0.0
        %2573 = vmatprep.subr.mxu0 0.0
        %2574 = vmatpush1.msra.mxu0 0.0
        %2575 = vmatprep.subr.mxu0 0.0
        %2576 = vmatpush1.msra.mxu0 0.0
        %2577 = vmatprep.subr.mxu0 0.0
        %2578 = vmatpush1.msra.mxu0 0.0
        %2579 = vmatprep.subr.mxu0 0.0
        %2580 = vmatpush1.msra.mxu0 0.0
        %2581 = vmatprep.subr.mxu0 0.0
        %2582 = vmatpush1.msra.mxu0 0.0
        %2583 = vmatprep.subr.mxu0 0.0
        %2584 = vmatpush1.msra.mxu0 0.0
        %2585 = vmatprep.subr.mxu0 0.0
        %2586 = vmatpush1.msra.mxu0 0.0
        %2587 = vmatprep.subr.mxu0 0.0
        %2588 = vmatpush1.msra.mxu0 0.0
        %2589 = vmatprep.subr.mxu0 0.0
        %2590 = vmatpush1.msra.mxu0 0.0
        %2591 = vmatprep.subr.mxu0 0.0
        %2592 = vmatpush1.msra.mxu0 0.0
        %2593 = vmatprep.subr.mxu0 0.0
        %2594 = vmatpush1.msra.mxu0 0.0
        %2595 = vmatprep.mubr.f32.mxu0 0.0
        %2596 = vmatmul.mubr.f32.gmra.mrb[0].mxu0 %v2530
        %v2597 = vpop.f32.mrb[0].mxu0
        %v2598 = vadd.f32 0.0, %v2597
        %v2599 = vpop.f32.mrb[0].mxu0
        %2600 = vdwg.mxu0
        %v2601 = vsub.f32 %v559, %v2598
        %s2602 = scalar_lea.vmem [#allocation3], 104
        %2603 = vst [vmem:[%s2602] sm:$0xff] %v2601
        %s2604 = scalar_lea.vmem %s318, 112 [#allocation4]
        %v2605 = vld [vmem:[%s2604] sm:$0xff]
        %s2606 = scalar_lea.vmem [#allocation7], 448
        %v2607 = vld [vmem:[%s2606] sm:$0xff]
        %v2608 = vld [vmem:[%s2606 + $0x8] sm:$0xff]
        %v2609 = vld [vmem:[%s2606 + $0x10] sm:$0xff]
        %v2610 = vld [vmem:[%s2606 + $0x18] sm:$0xff]
        %v2612 = vsel %vm408, %v2605, 0
        %2614 = vmatprep.subr.mxu0 %v2608
        %2615 = vmatpush1.msra.mxu0 %v2607
        %2616 = vmatprep.subr.mxu0 %v2610
        %2617 = vmatpush1.msra.mxu0 %v2609
        %2618 = vmatprep.subr.mxu0 0.0
        %2619 = vmatpush1.msra.mxu0 0.0
        %2620 = vmatprep.subr.mxu0 0.0
        %2621 = vmatpush1.msra.mxu0 0.0
        %2622 = vmatprep.subr.mxu0 0.0
        %2623 = vmatpush1.msra.mxu0 0.0
        %2624 = vmatprep.subr.mxu0 0.0
        %2625 = vmatpush1.msra.mxu0 0.0
        %2626 = vmatprep.subr.mxu0 0.0
        %2627 = vmatpush1.msra.mxu0 0.0
        %2628 = vmatprep.subr.mxu0 0.0
        %2629 = vmatpush1.msra.mxu0 0.0
        %2630 = vmatprep.subr.mxu0 0.0
        %2631 = vmatpush1.msra.mxu0 0.0
        %2632 = vmatprep.subr.mxu0 0.0
        %2633 = vmatpush1.msra.mxu0 0.0
        %2634 = vmatprep.subr.mxu0 0.0
        %2635 = vmatpush1.msra.mxu0 0.0
        %2636 = vmatprep.subr.mxu0 0.0
        %2637 = vmatpush1.msra.mxu0 0.0
        %2638 = vmatprep.subr.mxu0 0.0
        %2639 = vmatpush1.msra.mxu0 0.0
        %2640 = vmatprep.subr.mxu0 0.0
        %2641 = vmatpush1.msra.mxu0 0.0
        %2642 = vmatprep.subr.mxu0 0.0
        %2643 = vmatpush1.msra.mxu0 0.0
        %2644 = vmatprep.subr.mxu0 0.0
        %2645 = vmatpush1.msra.mxu0 0.0
        %2646 = vmatprep.subr.mxu0 0.0
        %2647 = vmatpush1.msra.mxu0 0.0
        %2648 = vmatprep.subr.mxu0 0.0
        %2649 = vmatpush1.msra.mxu0 0.0
        %2650 = vmatprep.subr.mxu0 0.0
        %2651 = vmatpush1.msra.mxu0 0.0
        %2652 = vmatprep.subr.mxu0 0.0
        %2653 = vmatpush1.msra.mxu0 0.0
        %2654 = vmatprep.subr.mxu0 0.0
        %2655 = vmatpush1.msra.mxu0 0.0
        %2656 = vmatprep.subr.mxu0 0.0
        %2657 = vmatpush1.msra.mxu0 0.0
        %2658 = vmatprep.subr.mxu0 0.0
        %2659 = vmatpush1.msra.mxu0 0.0
        %2660 = vmatprep.subr.mxu0 0.0
        %2661 = vmatpush1.msra.mxu0 0.0
        %2662 = vmatprep.subr.mxu0 0.0
        %2663 = vmatpush1.msra.mxu0 0.0
        %2664 = vmatprep.subr.mxu0 0.0
        %2665 = vmatpush1.msra.mxu0 0.0
        %2666 = vmatprep.subr.mxu0 0.0
        %2667 = vmatpush1.msra.mxu0 0.0
        %2668 = vmatprep.subr.mxu0 0.0
        %2669 = vmatpush1.msra.mxu0 0.0
        %2670 = vmatprep.subr.mxu0 0.0
        %2671 = vmatpush1.msra.mxu0 0.0
        %2672 = vmatprep.subr.mxu0 0.0
        %2673 = vmatpush1.msra.mxu0 0.0
        %2674 = vmatprep.subr.mxu0 0.0
        %2675 = vmatpush1.msra.mxu0 0.0
        %2676 = vmatprep.subr.mxu0 0.0
        %2677 = vmatpush1.msra.mxu0 0.0
        %2678 = vmatprep.mubr.f32.mxu0 0.0
        %2679 = vmatmul.mubr.f32.gmra.mrb[0].mxu0 %v2612
        %v2680 = vpop.f32.mrb[0].mxu0
        %v2681 = vadd.f32 %v401, %v2680
        %v2682 = vpop.f32.mrb[0].mxu0
        %v2683 = vadd.f32 %v405, %v2682
        %2684 = vdwg.mxu0
        %s2685 = scalar_lea.vmem [#allocation2], 112
        %2686 = vst [vmem:[%s2685] sm:$0xff] %v2683
        %v2687 = vmul.f32 %v2681, %v2681
        %2688 = vmatprep.subr.mxu0 0.0
        %2689 = vmatpush1.msra.mxu0 %v376
        %2690 = vmatprep.subr.mxu0 0.0
        %2691 = vmatpush1.msra.mxu0 %v377
        %2692 = vmatprep.subr.mxu0 0.0
        %2693 = vmatpush1.msra.mxu0 %v378
        %2694 = vmatprep.subr.mxu0 0.0
        %2695 = vmatpush1.msra.mxu0 %v379
        %2696 = vmatprep.subr.mxu0 0.0
        %2697 = vmatpush1.msra.mxu0 %v380
        %2698 = vmatprep.subr.mxu0 0.0
        %2699 = vmatpush1.msra.mxu0 %v381
        %2700 = vmatprep.subr.mxu0 0.0
        %2701 = vmatpush1.msra.mxu0 %v382
        %2702 = vmatprep.subr.mxu0 0.0
        %2703 = vmatpush1.msra.mxu0 %v383
        %2704 = vmatprep.subr.mxu0 0.0
        %2705 = vmatpush1.msra.mxu0 %v384
        %2706 = vmatprep.subr.mxu0 0.0
        %2707 = vmatpush1.msra.mxu0 %v385
        %2708 = vmatprep.subr.mxu0 0.0
        %2709 = vmatpush1.msra.mxu0 %v386
        %2710 = vmatprep.subr.mxu0 0.0
        %2711 = vmatpush1.msra.mxu0 %v387
        %2712 = vmatprep.subr.mxu0 0.0
        %2713 = vmatpush1.msra.mxu0 %v388
        %2714 = vmatprep.subr.mxu0 0.0
        %2715 = vmatpush1.msra.mxu0 %v389
        %2716 = vmatprep.subr.mxu0 0.0
        %2717 = vmatpush1.msra.mxu0 %v390
        %2718 = vmatprep.subr.mxu0 0.0
        %2719 = vmatpush1.msra.mxu0 %v391
        %2720 = vmatprep.subr.mxu0 0.0
        %2721 = vmatpush1.msra.mxu0 0.0
        %2722 = vmatprep.subr.mxu0 0.0
        %2723 = vmatpush1.msra.mxu0 0.0
        %2724 = vmatprep.subr.mxu0 0.0
        %2725 = vmatpush1.msra.mxu0 0.0
        %2726 = vmatprep.subr.mxu0 0.0
        %2727 = vmatpush1.msra.mxu0 0.0
        %2728 = vmatprep.subr.mxu0 0.0
        %2729 = vmatpush1.msra.mxu0 0.0
        %2730 = vmatprep.subr.mxu0 0.0
        %2731 = vmatpush1.msra.mxu0 0.0
        %2732 = vmatprep.subr.mxu0 0.0
        %2733 = vmatpush1.msra.mxu0 0.0
        %2734 = vmatprep.subr.mxu0 0.0
        %2735 = vmatpush1.msra.mxu0 0.0
        %2736 = vmatprep.subr.mxu0 0.0
        %2737 = vmatpush1.msra.mxu0 0.0
        %2738 = vmatprep.subr.mxu0 0.0
        %2739 = vmatpush1.msra.mxu0 0.0
        %2740 = vmatprep.subr.mxu0 0.0
        %2741 = vmatpush1.msra.mxu0 0.0
        %2742 = vmatprep.subr.mxu0 0.0
        %2743 = vmatpush1.msra.mxu0 0.0
        %2744 = vmatprep.subr.mxu0 0.0
        %2745 = vmatpush1.msra.mxu0 0.0
        %2746 = vmatprep.subr.mxu0 0.0
        %2747 = vmatpush1.msra.mxu0 0.0
        %2748 = vmatprep.subr.mxu0 0.0
        %2749 = vmatpush1.msra.mxu0 0.0
        %2750 = vmatprep.subr.mxu0 0.0
        %2751 = vmatpush1.msra.mxu0 0.0
        %2752 = vmatprep.mubr.f32.mxu0 0.0
        %2753 = vmatmul.mubr.f32.gmra.mrb[0].mxu0 %v2687
        %v2754 = vpop.f32.mrb[0].mxu0
        %v2755 = vadd.f32 0.0, %v2754
        %v2756 = vpop.f32.mrb[0].mxu0
        %2757 = vdwg.mxu0
        %v2758 = vsub.f32 %v559, %v2755
        %s2759 = scalar_lea.vmem [#allocation3], 112
        %2760 = vst [vmem:[%s2759] sm:$0xff] %v2758
        %s2761 = scalar_lea.vmem %s318, 120 [#allocation4]
        %v2762 = vld [vmem:[%s2761] sm:$0xff]
        %s2763 = scalar_lea.vmem [#allocation7], 480
        %v2764 = vld [vmem:[%s2763] sm:$0xff]
        %v2765 = vld [vmem:[%s2763 + $0x8] sm:$0xff]
        %v2766 = vld [vmem:[%s2763 + $0x10] sm:$0xff]
        %v2767 = vld [vmem:[%s2763 + $0x18] sm:$0xff]
        %v2769 = vsel %vm408, %v2762, 0
        %2771 = vmatprep.subr.mxu0 %v2765
        %2772 = vmatpush1.msra.mxu0 %v2764
        %2773 = vmatprep.subr.mxu0 %v2767
        %2774 = vmatpush1.msra.mxu0 %v2766
        %2775 = vmatprep.subr.mxu0 0.0
        %2776 = vmatpush1.msra.mxu0 0.0
        %2777 = vmatprep.subr.mxu0 0.0
        %2778 = vmatpush1.msra.mxu0 0.0
        %2779 = vmatprep.subr.mxu0 0.0
        %2780 = vmatpush1.msra.mxu0 0.0
        %2781 = vmatprep.subr.mxu0 0.0
        %2782 = vmatpush1.msra.mxu0 0.0
        %2783 = vmatprep.subr.mxu0 0.0
        %2784 = vmatpush1.msra.mxu0 0.0
        %2785 = vmatprep.subr.mxu0 0.0
        %2786 = vmatpush1.msra.mxu0 0.0
        %2787 = vmatprep.subr.mxu0 0.0
        %2788 = vmatpush1.msra.mxu0 0.0
        %2789 = vmatprep.subr.mxu0 0.0
        %2790 = vmatpush1.msra.mxu0 0.0
        %2791 = vmatprep.subr.mxu0 0.0
        %2792 = vmatpush1.msra.mxu0 0.0
        %2793 = vmatprep.subr.mxu0 0.0
        %2794 = vmatpush1.msra.mxu0 0.0
        %2795 = vmatprep.subr.mxu0 0.0
        %2796 = vmatpush1.msra.mxu0 0.0
        %2797 = vmatprep.subr.mxu0 0.0
        %2798 = vmatpush1.msra.mxu0 0.0
        %2799 = vmatprep.subr.mxu0 0.0
        %2800 = vmatpush1.msra.mxu0 0.0
        %2801 = vmatprep.subr.mxu0 0.0
        %2802 = vmatpush1.msra.mxu0 0.0
        %2803 = vmatprep.subr.mxu0 0.0
        %2804 = vmatpush1.msra.mxu0 0.0
        %2805 = vmatprep.subr.mxu0 0.0
        %2806 = vmatpush1.msra.mxu0 0.0
        %2807 = vmatprep.subr.mxu0 0.0
        %2808 = vmatpush1.msra.mxu0 0.0
        %2809 = vmatprep.subr.mxu0 0.0
        %2810 = vmatpush1.msra.mxu0 0.0
        %2811 = vmatprep.subr.mxu0 0.0
        %2812 = vmatpush1.msra.mxu0 0.0
        %2813 = vmatprep.subr.mxu0 0.0
        %2814 = vmatpush1.msra.mxu0 0.0
        %2815 = vmatprep.subr.mxu0 0.0
        %2816 = vmatpush1.msra.mxu0 0.0
        %2817 = vmatprep.subr.mxu0 0.0
        %2818 = vmatpush1.msra.mxu0 0.0
        %2819 = vmatprep.subr.mxu0 0.0
        %2820 = vmatpush1.msra.mxu0 0.0
        %2821 = vmatprep.subr.mxu0 0.0
        %2822 = vmatpush1.msra.mxu0 0.0
        %2823 = vmatprep.subr.mxu0 0.0
        %2824 = vmatpush1.msra.mxu0 0.0
        %2825 = vmatprep.subr.mxu0 0.0
        %2826 = vmatpush1.msra.mxu0 0.0
        %2827 = vmatprep.subr.mxu0 0.0
        %2828 = vmatpush1.msra.mxu0 0.0
        %2829 = vmatprep.subr.mxu0 0.0
        %2830 = vmatpush1.msra.mxu0 0.0
        %2831 = vmatprep.subr.mxu0 0.0
        %2832 = vmatpush1.msra.mxu0 0.0
        %2833 = vmatprep.subr.mxu0 0.0
        %2834 = vmatpush1.msra.mxu0 0.0
        %2835 = vmatprep.mubr.f32.mxu0 0.0
        %2836 = vmatmul.mubr.f32.gmra.mrb[0].mxu0 %v2769
        %v2837 = vpop.f32.mrb[0].mxu0
        %v2838 = vadd.f32 %v401, %v2837
        %v2839 = vpop.f32.mrb[0].mxu0
        %v2840 = vadd.f32 %v405, %v2839
        %2841 = vdwg.mxu0
        %s2842 = scalar_lea.vmem [#allocation2], 120
        %2843 = vst [vmem:[%s2842] sm:$0xff] %v2840
        %v2844 = vmul.f32 %v2838, %v2838
        %2845 = vmatprep.subr.mxu0 0.0
        %2846 = vmatpush1.msra.mxu0 %v376
        %2847 = vmatprep.subr.mxu0 0.0
        %2848 = vmatpush1.msra.mxu0 %v377
        %2849 = vmatprep.subr.mxu0 0.0
        %2850 = vmatpush1.msra.mxu0 %v378
        %2851 = vmatprep.subr.mxu0 0.0
        %2852 = vmatpush1.msra.mxu0 %v379
        %2853 = vmatprep.subr.mxu0 0.0
        %2854 = vmatpush1.msra.mxu0 %v380
        %2855 = vmatprep.subr.mxu0 0.0
        %2856 = vmatpush1.msra.mxu0 %v381
        %2857 = vmatprep.subr.mxu0 0.0
        %2858 = vmatpush1.msra.mxu0 %v382
        %2859 = vmatprep.subr.mxu0 0.0
        %2860 = vmatpush1.msra.mxu0 %v383
        %2861 = vmatprep.subr.mxu0 0.0
        %2862 = vmatpush1.msra.mxu0 %v384
        %2863 = vmatprep.subr.mxu0 0.0
        %2864 = vmatpush1.msra.mxu0 %v385
        %2865 = vmatprep.subr.mxu0 0.0
        %2866 = vmatpush1.msra.mxu0 %v386
        %2867 = vmatprep.subr.mxu0 0.0
        %2868 = vmatpush1.msra.mxu0 %v387
        %2869 = vmatprep.subr.mxu0 0.0
        %2870 = vmatpush1.msra.mxu0 %v388
        %2871 = vmatprep.subr.mxu0 0.0
        %2872 = vmatpush1.msra.mxu0 %v389
        %2873 = vmatprep.subr.mxu0 0.0
        %2874 = vmatpush1.msra.mxu0 %v390
        %2875 = vmatprep.subr.mxu0 0.0
        %2876 = vmatpush1.msra.mxu0 %v391
        %2877 = vmatprep.subr.mxu0 0.0
        %2878 = vmatpush1.msra.mxu0 0.0
        %2879 = vmatprep.subr.mxu0 0.0
        %2880 = vmatpush1.msra.mxu0 0.0
        %2881 = vmatprep.subr.mxu0 0.0
        %2882 = vmatpush1.msra.mxu0 0.0
        %2883 = vmatprep.subr.mxu0 0.0
        %2884 = vmatpush1.msra.mxu0 0.0
        %2885 = vmatprep.subr.mxu0 0.0
        %2886 = vmatpush1.msra.mxu0 0.0
        %2887 = vmatprep.subr.mxu0 0.0
        %2888 = vmatpush1.msra.mxu0 0.0
        %2889 = vmatprep.subr.mxu0 0.0
        %2890 = vmatpush1.msra.mxu0 0.0
        %2891 = vmatprep.subr.mxu0 0.0
        %2892 = vmatpush1.msra.mxu0 0.0
        %2893 = vmatprep.subr.mxu0 0.0
        %2894 = vmatpush1.msra.mxu0 0.0
        %2895 = vmatprep.subr.mxu0 0.0
        %2896 = vmatpush1.msra.mxu0 0.0
        %2897 = vmatprep.subr.mxu0 0.0
        %2898 = vmatpush1.msra.mxu0 0.0
        %2899 = vmatprep.subr.mxu0 0.0
        %2900 = vmatpush1.msra.mxu0 0.0
        %2901 = vmatprep.subr.mxu0 0.0
        %2902 = vmatpush1.msra.mxu0 0.0
        %2903 = vmatprep.subr.mxu0 0.0
        %2904 = vmatpush1.msra.mxu0 0.0
        %2905 = vmatprep.subr.mxu0 0.0
        %2906 = vmatpush1.msra.mxu0 0.0
        %2907 = vmatprep.subr.mxu0 0.0
        %2908 = vmatpush1.msra.mxu0 0.0
        %2909 = vmatprep.mubr.f32.mxu0 0.0
        %2910 = vmatmul.mubr.f32.gmra.mrb[0].mxu0 %v2844
        %v2911 = vpop.f32.mrb[0].mxu0
        %v2912 = vadd.f32 0.0, %v2911
        %v2913 = vpop.f32.mrb[0].mxu0
        %2914 = vdwg.mxu0
        %v2915 = vsub.f32 %v559, %v2912
        %s2916 = scalar_lea.vmem [#allocation3], 120
        %2917 = vst [vmem:[%s2916] sm:$0xff] %v2915
        %s2918 = scalar_lea.vmem %s318, 128 [#allocation4]
        %v2919 = vld [vmem:[%s2918] sm:$0xff]
        %s2920 = scalar_lea.vmem [#allocation7], 512
        %v2921 = vld [vmem:[%s2920] sm:$0xff]
        %v2922 = vld [vmem:[%s2920 + $0x8] sm:$0xff]
        %v2923 = vld [vmem:[%s2920 + $0x10] sm:$0xff]
        %v2924 = vld [vmem:[%s2920 + $0x18] sm:$0xff]
        %v2926 = vsel %vm408, %v2919, 0
        %2928 = vmatprep.subr.mxu0 %v2922
        %2929 = vmatpush1.msra.mxu0 %v2921
        %2930 = vmatprep.subr.mxu0 %v2924
        %2931 = vmatpush1.msra.mxu0 %v2923
        %2932 = vmatprep.subr.mxu0 0.0
        %2933 = vmatpush1.msra.mxu0 0.0
        %2934 = vmatprep.subr.mxu0 0.0
        %2935 = vmatpush1.msra.mxu0 0.0
        %2936 = vmatprep.subr.mxu0 0.0
        %2937 = vmatpush1.msra.mxu0 0.0
        %2938 = vmatprep.subr.mxu0 0.0
        %2939 = vmatpush1.msra.mxu0 0.0
        %2940 = vmatprep.subr.mxu0 0.0
        %2941 = vmatpush1.msra.mxu0 0.0
        %2942 = vmatprep.subr.mxu0 0.0
        %2943 = vmatpush1.msra.mxu0 0.0
        %2944 = vmatprep.subr.mxu0 0.0
        %2945 = vmatpush1.msra.mxu0 0.0
        %2946 = vmatprep.subr.mxu0 0.0
        %2947 = vmatpush1.msra.mxu0 0.0
        %2948 = vmatprep.subr.mxu0 0.0
        %2949 = vmatpush1.msra.mxu0 0.0
        %2950 = vmatprep.subr.mxu0 0.0
        %2951 = vmatpush1.msra.mxu0 0.0
        %2952 = vmatprep.subr.mxu0 0.0
        %2953 = vmatpush1.msra.mxu0 0.0
        %2954 = vmatprep.subr.mxu0 0.0
        %2955 = vmatpush1.msra.mxu0 0.0
        %2956 = vmatprep.subr.mxu0 0.0
        %2957 = vmatpush1.msra.mxu0 0.0
        %2958 = vmatprep.subr.mxu0 0.0
        %2959 = vmatpush1.msra.mxu0 0.0
        %2960 = vmatprep.subr.mxu0 0.0
        %2961 = vmatpush1.msra.mxu0 0.0
        %2962 = vmatprep.subr.mxu0 0.0
        %2963 = vmatpush1.msra.mxu0 0.0
        %2964 = vmatprep.subr.mxu0 0.0
        %2965 = vmatpush1.msra.mxu0 0.0
        %2966 = vmatprep.subr.mxu0 0.0
        %2967 = vmatpush1.msra.mxu0 0.0
        %2968 = vmatprep.subr.mxu0 0.0
        %2969 = vmatpush1.msra.mxu0 0.0
        %2970 = vmatprep.subr.mxu0 0.0
        %2971 = vmatpush1.msra.mxu0 0.0
        %2972 = vmatprep.subr.mxu0 0.0
        %2973 = vmatpush1.msra.mxu0 0.0
        %2974 = vmatprep.subr.mxu0 0.0
        %2975 = vmatpush1.msra.mxu0 0.0
        %2976 = vmatprep.subr.mxu0 0.0
        %2977 = vmatpush1.msra.mxu0 0.0
        %2978 = vmatprep.subr.mxu0 0.0
        %2979 = vmatpush1.msra.mxu0 0.0
        %2980 = vmatprep.subr.mxu0 0.0
        %2981 = vmatpush1.msra.mxu0 0.0
        %2982 = vmatprep.subr.mxu0 0.0
        %2983 = vmatpush1.msra.mxu0 0.0
        %2984 = vmatprep.subr.mxu0 0.0
        %2985 = vmatpush1.msra.mxu0 0.0
        %2986 = vmatprep.subr.mxu0 0.0
        %2987 = vmatpush1.msra.mxu0 0.0
        %2988 = vmatprep.subr.mxu0 0.0
        %2989 = vmatpush1.msra.mxu0 0.0
        %2990 = vmatprep.subr.mxu0 0.0
        %2991 = vmatpush1.msra.mxu0 0.0
        %2992 = vmatprep.mubr.f32.mxu0 0.0
        %2993 = vmatmul.mubr.f32.gmra.mrb[0].mxu0 %v2926
        %v2994 = vpop.f32.mrb[0].mxu0
        %v2995 = vadd.f32 %v401, %v2994
        %v2996 = vpop.f32.mrb[0].mxu0
        %v2997 = vadd.f32 %v405, %v2996
        %2998 = vdwg.mxu0
        %s2999 = scalar_lea.vmem [#allocation2], 128
        %3000 = vst [vmem:[%s2999] sm:$0xff] %v2997
        %v3001 = vmul.f32 %v2995, %v2995
        %3002 = vmatprep.subr.mxu0 0.0
        %3003 = vmatpush1.msra.mxu0 %v376
        %3004 = vmatprep.subr.mxu0 0.0
        %3005 = vmatpush1.msra.mxu0 %v377
        %3006 = vmatprep.subr.mxu0 0.0
        %3007 = vmatpush1.msra.mxu0 %v378
        %3008 = vmatprep.subr.mxu0 0.0
        %3009 = vmatpush1.msra.mxu0 %v379
        %3010 = vmatprep.subr.mxu0 0.0
        %3011 = vmatpush1.msra.mxu0 %v380
        %3012 = vmatprep.subr.mxu0 0.0
        %3013 = vmatpush1.msra.mxu0 %v381
        %3014 = vmatprep.subr.mxu0 0.0
        %3015 = vmatpush1.msra.mxu0 %v382
        %3016 = vmatprep.subr.mxu0 0.0
        %3017 = vmatpush1.msra.mxu0 %v383
        %3018 = vmatprep.subr.mxu0 0.0
        %3019 = vmatpush1.msra.mxu0 %v384
        %3020 = vmatprep.subr.mxu0 0.0
        %3021 = vmatpush1.msra.mxu0 %v385
        %3022 = vmatprep.subr.mxu0 0.0
        %3023 = vmatpush1.msra.mxu0 %v386
        %3024 = vmatprep.subr.mxu0 0.0
        %3025 = vmatpush1.msra.mxu0 %v387
        %3026 = vmatprep.subr.mxu0 0.0
        %3027 = vmatpush1.msra.mxu0 %v388
        %3028 = vmatprep.subr.mxu0 0.0
        %3029 = vmatpush1.msra.mxu0 %v389
        %3030 = vmatprep.subr.mxu0 0.0
        %3031 = vmatpush1.msra.mxu0 %v390
        %3032 = vmatprep.subr.mxu0 0.0
        %3033 = vmatpush1.msra.mxu0 %v391
        %3034 = vmatprep.subr.mxu0 0.0
        %3035 = vmatpush1.msra.mxu0 0.0
        %3036 = vmatprep.subr.mxu0 0.0
        %3037 = vmatpush1.msra.mxu0 0.0
        %3038 = vmatprep.subr.mxu0 0.0
        %3039 = vmatpush1.msra.mxu0 0.0
        %3040 = vmatprep.subr.mxu0 0.0
        %3041 = vmatpush1.msra.mxu0 0.0
        %3042 = vmatprep.subr.mxu0 0.0
        %3043 = vmatpush1.msra.mxu0 0.0
        %3044 = vmatprep.subr.mxu0 0.0
        %3045 = vmatpush1.msra.mxu0 0.0
        %3046 = vmatprep.subr.mxu0 0.0
        %3047 = vmatpush1.msra.mxu0 0.0
        %3048 = vmatprep.subr.mxu0 0.0
        %3049 = vmatpush1.msra.mxu0 0.0
        %3050 = vmatprep.subr.mxu0 0.0
        %3051 = vmatpush1.msra.mxu0 0.0
        %3052 = vmatprep.subr.mxu0 0.0
        %3053 = vmatpush1.msra.mxu0 0.0
        %3054 = vmatprep.subr.mxu0 0.0
        %3055 = vmatpush1.msra.mxu0 0.0
        %3056 = vmatprep.subr.mxu0 0.0
        %3057 = vmatpush1.msra.mxu0 0.0
        %3058 = vmatprep.subr.mxu0 0.0
        %3059 = vmatpush1.msra.mxu0 0.0
        %3060 = vmatprep.subr.mxu0 0.0
        %3061 = vmatpush1.msra.mxu0 0.0
        %3062 = vmatprep.subr.mxu0 0.0
        %3063 = vmatpush1.msra.mxu0 0.0
        %3064 = vmatprep.subr.mxu0 0.0
        %3065 = vmatpush1.msra.mxu0 0.0
        %3066 = vmatprep.mubr.f32.mxu0 0.0
        %3067 = vmatmul.mubr.f32.gmra.mrb[0].mxu0 %v3001
        %v3068 = vpop.f32.mrb[0].mxu0
        %v3069 = vadd.f32 0.0, %v3068
        %v3070 = vpop.f32.mrb[0].mxu0
        %3071 = vdwg.mxu0
        %v3072 = vsub.f32 %v559, %v3069
        %s3073 = scalar_lea.vmem [#allocation3], 128
        %3074 = vst [vmem:[%s3073] sm:$0xff] %v3072
        %s3075 = scalar_lea.vmem %s318, 136 [#allocation4]
        %v3076 = vld [vmem:[%s3075] sm:$0xff]
        %s3077 = scalar_lea.vmem [#allocation7], 544
        %v3078 = vld [vmem:[%s3077] sm:$0xff]
        %v3079 = vld [vmem:[%s3077 + $0x8] sm:$0xff]
        %v3080 = vld [vmem:[%s3077 + $0x10] sm:$0xff]
        %v3081 = vld [vmem:[%s3077 + $0x18] sm:$0xff]
        %v3083 = vsel %vm408, %v3076, 0
        %3085 = vmatprep.subr.mxu0 %v3079
        %3086 = vmatpush1.msra.mxu0 %v3078
        %3087 = vmatprep.subr.mxu0 %v3081
        %3088 = vmatpush1.msra.mxu0 %v3080
        %3089 = vmatprep.subr.mxu0 0.0
        %3090 = vmatpush1.msra.mxu0 0.0
        %3091 = vmatprep.subr.mxu0 0.0
        %3092 = vmatpush1.msra.mxu0 0.0
        %3093 = vmatprep.subr.mxu0 0.0
        %3094 = vmatpush1.msra.mxu0 0.0
        %3095 = vmatprep.subr.mxu0 0.0
        %3096 = vmatpush1.msra.mxu0 0.0
        %3097 = vmatprep.subr.mxu0 0.0
        %3098 = vmatpush1.msra.mxu0 0.0
        %3099 = vmatprep.subr.mxu0 0.0
        %3100 = vmatpush1.msra.mxu0 0.0
        %3101 = vmatprep.subr.mxu0 0.0
        %3102 = vmatpush1.msra.mxu0 0.0
        %3103 = vmatprep.subr.mxu0 0.0
        %3104 = vmatpush1.msra.mxu0 0.0
        %3105 = vmatprep.subr.mxu0 0.0
        %3106 = vmatpush1.msra.mxu0 0.0
        %3107 = vmatprep.subr.mxu0 0.0
        %3108 = vmatpush1.msra.mxu0 0.0
        %3109 = vmatprep.subr.mxu0 0.0
        %3110 = vmatpush1.msra.mxu0 0.0
        %3111 = vmatprep.subr.mxu0 0.0
        %3112 = vmatpush1.msra.mxu0 0.0
        %3113 = vmatprep.subr.mxu0 0.0
        %3114 = vmatpush1.msra.mxu0 0.0
        %3115 = vmatprep.subr.mxu0 0.0
        %3116 = vmatpush1.msra.mxu0 0.0
        %3117 = vmatprep.subr.mxu0 0.0
        %3118 = vmatpush1.msra.mxu0 0.0
        %3119 = vmatprep.subr.mxu0 0.0
        %3120 = vmatpush1.msra.mxu0 0.0
        %3121 = vmatprep.subr.mxu0 0.0
        %3122 = vmatpush1.msra.mxu0 0.0
        %3123 = vmatprep.subr.mxu0 0.0
        %3124 = vmatpush1.msra.mxu0 0.0
        %3125 = vmatprep.subr.mxu0 0.0
        %3126 = vmatpush1.msra.mxu0 0.0
        %3127 = vmatprep.subr.mxu0 0.0
        %3128 = vmatpush1.msra.mxu0 0.0
        %3129 = vmatprep.subr.mxu0 0.0
        %3130 = vmatpush1.msra.mxu0 0.0
        %3131 = vmatprep.subr.mxu0 0.0
        %3132 = vmatpush1.msra.mxu0 0.0
        %3133 = vmatprep.subr.mxu0 0.0
        %3134 = vmatpush1.msra.mxu0 0.0
        %3135 = vmatprep.subr.mxu0 0.0
        %3136 = vmatpush1.msra.mxu0 0.0
        %3137 = vmatprep.subr.mxu0 0.0
        %3138 = vmatpush1.msra.mxu0 0.0
        %3139 = vmatprep.subr.mxu0 0.0
        %3140 = vmatpush1.msra.mxu0 0.0
        %3141 = vmatprep.subr.mxu0 0.0
        %3142 = vmatpush1.msra.mxu0 0.0
        %3143 = vmatprep.subr.mxu0 0.0
        %3144 = vmatpush1.msra.mxu0 0.0
        %3145 = vmatprep.subr.mxu0 0.0
        %3146 = vmatpush1.msra.mxu0 0.0
        %3147 = vmatprep.subr.mxu0 0.0
        %3148 = vmatpush1.msra.mxu0 0.0
        %3149 = vmatprep.mubr.f32.mxu0 0.0
        %3150 = vmatmul.mubr.f32.gmra.mrb[0].mxu0 %v3083
        %v3151 = vpop.f32.mrb[0].mxu0
        %v3152 = vadd.f32 %v401, %v3151
        %v3153 = vpop.f32.mrb[0].mxu0
        %v3154 = vadd.f32 %v405, %v3153
        %3155 = vdwg.mxu0
        %s3156 = scalar_lea.vmem [#allocation2], 136
        %3157 = vst [vmem:[%s3156] sm:$0xff] %v3154
        %v3158 = vmul.f32 %v3152, %v3152
        %3159 = vmatprep.subr.mxu0 0.0
        %3160 = vmatpush1.msra.mxu0 %v376
        %3161 = vmatprep.subr.mxu0 0.0
        %3162 = vmatpush1.msra.mxu0 %v377
        %3163 = vmatprep.subr.mxu0 0.0
        %3164 = vmatpush1.msra.mxu0 %v378
        %3165 = vmatprep.subr.mxu0 0.0
        %3166 = vmatpush1.msra.mxu0 %v379
        %3167 = vmatprep.subr.mxu0 0.0
        %3168 = vmatpush1.msra.mxu0 %v380
        %3169 = vmatprep.subr.mxu0 0.0
        %3170 = vmatpush1.msra.mxu0 %v381
        %3171 = vmatprep.subr.mxu0 0.0
        %3172 = vmatpush1.msra.mxu0 %v382
        %3173 = vmatprep.subr.mxu0 0.0
        %3174 = vmatpush1.msra.mxu0 %v383
        %3175 = vmatprep.subr.mxu0 0.0
        %3176 = vmatpush1.msra.mxu0 %v384
        %3177 = vmatprep.subr.mxu0 0.0
        %3178 = vmatpush1.msra.mxu0 %v385
        %3179 = vmatprep.subr.mxu0 0.0
        %3180 = vmatpush1.msra.mxu0 %v386
        %3181 = vmatprep.subr.mxu0 0.0
        %3182 = vmatpush1.msra.mxu0 %v387
        %3183 = vmatprep.subr.mxu0 0.0
        %3184 = vmatpush1.msra.mxu0 %v388
        %3185 = vmatprep.subr.mxu0 0.0
        %3186 = vmatpush1.msra.mxu0 %v389
        %3187 = vmatprep.subr.mxu0 0.0
        %3188 = vmatpush1.msra.mxu0 %v390
        %3189 = vmatprep.subr.mxu0 0.0
        %3190 = vmatpush1.msra.mxu0 %v391
        %3191 = vmatprep.subr.mxu0 0.0
        %3192 = vmatpush1.msra.mxu0 0.0
        %3193 = vmatprep.subr.mxu0 0.0
        %3194 = vmatpush1.msra.mxu0 0.0
        %3195 = vmatprep.subr.mxu0 0.0
        %3196 = vmatpush1.msra.mxu0 0.0
        %3197 = vmatprep.subr.mxu0 0.0
        %3198 = vmatpush1.msra.mxu0 0.0
        %3199 = vmatprep.subr.mxu0 0.0
        %3200 = vmatpush1.msra.mxu0 0.0
        %3201 = vmatprep.subr.mxu0 0.0
        %3202 = vmatpush1.msra.mxu0 0.0
        %3203 = vmatprep.subr.mxu0 0.0
        %3204 = vmatpush1.msra.mxu0 0.0
        %3205 = vmatprep.subr.mxu0 0.0
        %3206 = vmatpush1.msra.mxu0 0.0
        %3207 = vmatprep.subr.mxu0 0.0
        %3208 = vmatpush1.msra.mxu0 0.0
        %3209 = vmatprep.subr.mxu0 0.0
        %3210 = vmatpush1.msra.mxu0 0.0
        %3211 = vmatprep.subr.mxu0 0.0
        %3212 = vmatpush1.msra.mxu0 0.0
        %3213 = vmatprep.subr.mxu0 0.0
        %3214 = vmatpush1.msra.mxu0 0.0
        %3215 = vmatprep.subr.mxu0 0.0
        %3216 = vmatpush1.msra.mxu0 0.0
        %3217 = vmatprep.subr.mxu0 0.0
        %3218 = vmatpush1.msra.mxu0 0.0
        %3219 = vmatprep.subr.mxu0 0.0
        %3220 = vmatpush1.msra.mxu0 0.0
        %3221 = vmatprep.subr.mxu0 0.0
        %3222 = vmatpush1.msra.mxu0 0.0
        %3223 = vmatprep.mubr.f32.mxu0 0.0
        %3224 = vmatmul.mubr.f32.gmra.mrb[0].mxu0 %v3158
        %v3225 = vpop.f32.mrb[0].mxu0
        %v3226 = vadd.f32 0.0, %v3225
        %v3227 = vpop.f32.mrb[0].mxu0
        %3228 = vdwg.mxu0
        %v3229 = vsub.f32 %v559, %v3226
        %s3230 = scalar_lea.vmem [#allocation3], 136
        %3231 = vst [vmem:[%s3230] sm:$0xff] %v3229
        %s3232 = scalar_lea.vmem %s318, 144 [#allocation4]
        %v3233 = vld [vmem:[%s3232] sm:$0xff]
        %s3234 = scalar_lea.vmem [#allocation7], 576
        %v3235 = vld [vmem:[%s3234] sm:$0xff]
        %v3236 = vld [vmem:[%s3234 + $0x8] sm:$0xff]
        %v3237 = vld [vmem:[%s3234 + $0x10] sm:$0xff]
        %v3238 = vld [vmem:[%s3234 + $0x18] sm:$0xff]
        %v3240 = vsel %vm408, %v3233, 0
        %3242 = vmatprep.subr.mxu0 %v3236
        %3243 = vmatpush1.msra.mxu0 %v3235
        %3244 = vmatprep.subr.mxu0 %v3238
        %3245 = vmatpush1.msra.mxu0 %v3237
        %3246 = vmatprep.subr.mxu0 0.0
        %3247 = vmatpush1.msra.mxu0 0.0
        %3248 = vmatprep.subr.mxu0 0.0
        %3249 = vmatpush1.msra.mxu0 0.0
        %3250 = vmatprep.subr.mxu0 0.0
        %3251 = vmatpush1.msra.mxu0 0.0
        %3252 = vmatprep.subr.mxu0 0.0
        %3253 = vmatpush1.msra.mxu0 0.0
        %3254 = vmatprep.subr.mxu0 0.0
        %3255 = vmatpush1.msra.mxu0 0.0
        %3256 = vmatprep.subr.mxu0 0.0
        %3257 = vmatpush1.msra.mxu0 0.0
        %3258 = vmatprep.subr.mxu0 0.0
        %3259 = vmatpush1.msra.mxu0 0.0
        %3260 = vmatprep.subr.mxu0 0.0
        %3261 = vmatpush1.msra.mxu0 0.0
        %3262 = vmatprep.subr.mxu0 0.0
        %3263 = vmatpush1.msra.mxu0 0.0
        %3264 = vmatprep.subr.mxu0 0.0
        %3265 = vmatpush1.msra.mxu0 0.0
        %3266 = vmatprep.subr.mxu0 0.0
        %3267 = vmatpush1.msra.mxu0 0.0
        %3268 = vmatprep.subr.mxu0 0.0
        %3269 = vmatpush1.msra.mxu0 0.0
        %3270 = vmatprep.subr.mxu0 0.0
        %3271 = vmatpush1.msra.mxu0 0.0
        %3272 = vmatprep.subr.mxu0 0.0
        %3273 = vmatpush1.msra.mxu0 0.0
        %3274 = vmatprep.subr.mxu0 0.0
        %3275 = vmatpush1.msra.mxu0 0.0
        %3276 = vmatprep.subr.mxu0 0.0
        %3277 = vmatpush1.msra.mxu0 0.0
        %3278 = vmatprep.subr.mxu0 0.0
        %3279 = vmatpush1.msra.mxu0 0.0
        %3280 = vmatprep.subr.mxu0 0.0
        %3281 = vmatpush1.msra.mxu0 0.0
        %3282 = vmatprep.subr.mxu0 0.0
        %3283 = vmatpush1.msra.mxu0 0.0
        %3284 = vmatprep.subr.mxu0 0.0
        %3285 = vmatpush1.msra.mxu0 0.0
        %3286 = vmatprep.subr.mxu0 0.0
        %3287 = vmatpush1.msra.mxu0 0.0
        %3288 = vmatprep.subr.mxu0 0.0
        %3289 = vmatpush1.msra.mxu0 0.0
        %3290 = vmatprep.subr.mxu0 0.0
        %3291 = vmatpush1.msra.mxu0 0.0
        %3292 = vmatprep.subr.mxu0 0.0
        %3293 = vmatpush1.msra.mxu0 0.0
        %3294 = vmatprep.subr.mxu0 0.0
        %3295 = vmatpush1.msra.mxu0 0.0
        %3296 = vmatprep.subr.mxu0 0.0
        %3297 = vmatpush1.msra.mxu0 0.0
        %3298 = vmatprep.subr.mxu0 0.0
        %3299 = vmatpush1.msra.mxu0 0.0
        %3300 = vmatprep.subr.mxu0 0.0
        %3301 = vmatpush1.msra.mxu0 0.0
        %3302 = vmatprep.subr.mxu0 0.0
        %3303 = vmatpush1.msra.mxu0 0.0
        %3304 = vmatprep.subr.mxu0 0.0
        %3305 = vmatpush1.msra.mxu0 0.0
        %3306 = vmatprep.mubr.f32.mxu0 0.0
        %3307 = vmatmul.mubr.f32.gmra.mrb[0].mxu0 %v3240
        %v3308 = vpop.f32.mrb[0].mxu0
        %v3309 = vadd.f32 %v401, %v3308
        %v3310 = vpop.f32.mrb[0].mxu0
        %v3311 = vadd.f32 %v405, %v3310
        %3312 = vdwg.mxu0
        %s3313 = scalar_lea.vmem [#allocation2], 144
        %3314 = vst [vmem:[%s3313] sm:$0xff] %v3311
        %v3315 = vmul.f32 %v3309, %v3309
        %3316 = vmatprep.subr.mxu0 0.0
        %3317 = vmatpush1.msra.mxu0 %v376
        %3318 = vmatprep.subr.mxu0 0.0
        %3319 = vmatpush1.msra.mxu0 %v377
        %3320 = vmatprep.subr.mxu0 0.0
        %3321 = vmatpush1.msra.mxu0 %v378
        %3322 = vmatprep.subr.mxu0 0.0
        %3323 = vmatpush1.msra.mxu0 %v379
        %3324 = vmatprep.subr.mxu0 0.0
        %3325 = vmatpush1.msra.mxu0 %v380
        %3326 = vmatprep.subr.mxu0 0.0
        %3327 = vmatpush1.msra.mxu0 %v381
        %3328 = vmatprep.subr.mxu0 0.0
        %3329 = vmatpush1.msra.mxu0 %v382
        %3330 = vmatprep.subr.mxu0 0.0
        %3331 = vmatpush1.msra.mxu0 %v383
        %3332 = vmatprep.subr.mxu0 0.0
        %3333 = vmatpush1.msra.mxu0 %v384
        %3334 = vmatprep.subr.mxu0 0.0
        %3335 = vmatpush1.msra.mxu0 %v385
        %3336 = vmatprep.subr.mxu0 0.0
        %3337 = vmatpush1.msra.mxu0 %v386
        %3338 = vmatprep.subr.mxu0 0.0
        %3339 = vmatpush1.msra.mxu0 %v387
        %3340 = vmatprep.subr.mxu0 0.0
        %3341 = vmatpush1.msra.mxu0 %v388
        %3342 = vmatprep.subr.mxu0 0.0
        %3343 = vmatpush1.msra.mxu0 %v389
        %3344 = vmatprep.subr.mxu0 0.0
        %3345 = vmatpush1.msra.mxu0 %v390
        %3346 = vmatprep.subr.mxu0 0.0
        %3347 = vmatpush1.msra.mxu0 %v391
        %3348 = vmatprep.subr.mxu0 0.0
        %3349 = vmatpush1.msra.mxu0 0.0
        %3350 = vmatprep.subr.mxu0 0.0
        %3351 = vmatpush1.msra.mxu0 0.0
        %3352 = vmatprep.subr.mxu0 0.0
        %3353 = vmatpush1.msra.mxu0 0.0
        %3354 = vmatprep.subr.mxu0 0.0
        %3355 = vmatpush1.msra.mxu0 0.0
        %3356 = vmatprep.subr.mxu0 0.0
        %3357 = vmatpush1.msra.mxu0 0.0
        %3358 = vmatprep.subr.mxu0 0.0
        %3359 = vmatpush1.msra.mxu0 0.0
        %3360 = vmatprep.subr.mxu0 0.0
        %3361 = vmatpush1.msra.mxu0 0.0
        %3362 = vmatprep.subr.mxu0 0.0
        %3363 = vmatpush1.msra.mxu0 0.0
        %3364 = vmatprep.subr.mxu0 0.0
        %3365 = vmatpush1.msra.mxu0 0.0
        %3366 = vmatprep.subr.mxu0 0.0
        %3367 = vmatpush1.msra.mxu0 0.0
        %3368 = vmatprep.subr.mxu0 0.0
        %3369 = vmatpush1.msra.mxu0 0.0
        %3370 = vmatprep.subr.mxu0 0.0
        %3371 = vmatpush1.msra.mxu0 0.0
        %3372 = vmatprep.subr.mxu0 0.0
        %3373 = vmatpush1.msra.mxu0 0.0
        %3374 = vmatprep.subr.mxu0 0.0
        %3375 = vmatpush1.msra.mxu0 0.0
        %3376 = vmatprep.subr.mxu0 0.0
        %3377 = vmatpush1.msra.mxu0 0.0
        %3378 = vmatprep.subr.mxu0 0.0
        %3379 = vmatpush1.msra.mxu0 0.0
        %3380 = vmatprep.mubr.f32.mxu0 0.0
        %3381 = vmatmul.mubr.f32.gmra.mrb[0].mxu0 %v3315
        %v3382 = vpop.f32.mrb[0].mxu0
        %v3383 = vadd.f32 0.0, %v3382
        %v3384 = vpop.f32.mrb[0].mxu0
        %3385 = vdwg.mxu0
        %v3386 = vsub.f32 %v559, %v3383
        %s3387 = scalar_lea.vmem [#allocation3], 144
        %3388 = vst [vmem:[%s3387] sm:$0xff] %v3386
        %s3389 = scalar_lea.vmem %s318, 152 [#allocation4]
        %v3390 = vld [vmem:[%s3389] sm:$0xff]
        %s3391 = scalar_lea.vmem [#allocation7], 608
        %v3392 = vld [vmem:[%s3391] sm:$0xff]
        %v3393 = vld [vmem:[%s3391 + $0x8] sm:$0xff]
        %v3394 = vld [vmem:[%s3391 + $0x10] sm:$0xff]
        %v3395 = vld [vmem:[%s3391 + $0x18] sm:$0xff]
        %v3397 = vsel %vm408, %v3390, 0
        %3399 = vmatprep.subr.mxu0 %v3393
        %3400 = vmatpush1.msra.mxu0 %v3392
        %3401 = vmatprep.subr.mxu0 %v3395
        %3402 = vmatpush1.msra.mxu0 %v3394
        %3403 = vmatprep.subr.mxu0 0.0
        %3404 = vmatpush1.msra.mxu0 0.0
        %3405 = vmatprep.subr.mxu0 0.0
        %3406 = vmatpush1.msra.mxu0 0.0
        %3407 = vmatprep.subr.mxu0 0.0
        %3408 = vmatpush1.msra.mxu0 0.0
        %3409 = vmatprep.subr.mxu0 0.0
        %3410 = vmatpush1.msra.mxu0 0.0
        %3411 = vmatprep.subr.mxu0 0.0
        %3412 = vmatpush1.msra.mxu0 0.0
        %3413 = vmatprep.subr.mxu0 0.0
        %3414 = vmatpush1.msra.mxu0 0.0
        %3415 = vmatprep.subr.mxu0 0.0
        %3416 = vmatpush1.msra.mxu0 0.0
        %3417 = vmatprep.subr.mxu0 0.0
        %3418 = vmatpush1.msra.mxu0 0.0
        %3419 = vmatprep.subr.mxu0 0.0
        %3420 = vmatpush1.msra.mxu0 0.0
        %3421 = vmatprep.subr.mxu0 0.0
        %3422 = vmatpush1.msra.mxu0 0.0
        %3423 = vmatprep.subr.mxu0 0.0
        %3424 = vmatpush1.msra.mxu0 0.0
        %3425 = vmatprep.subr.mxu0 0.0
        %3426 = vmatpush1.msra.mxu0 0.0
        %3427 = vmatprep.subr.mxu0 0.0
        %3428 = vmatpush1.msra.mxu0 0.0
        %3429 = vmatprep.subr.mxu0 0.0
        %3430 = vmatpush1.msra.mxu0 0.0
        %3431 = vmatprep.subr.mxu0 0.0
        %3432 = vmatpush1.msra.mxu0 0.0
        %3433 = vmatprep.subr.mxu0 0.0
        %3434 = vmatpush1.msra.mxu0 0.0
        %3435 = vmatprep.subr.mxu0 0.0
        %3436 = vmatpush1.msra.mxu0 0.0
        %3437 = vmatprep.subr.mxu0 0.0
        %3438 = vmatpush1.msra.mxu0 0.0
        %3439 = vmatprep.subr.mxu0 0.0
        %3440 = vmatpush1.msra.mxu0 0.0
        %3441 = vmatprep.subr.mxu0 0.0
        %3442 = vmatpush1.msra.mxu0 0.0
        %3443 = vmatprep.subr.mxu0 0.0
        %3444 = vmatpush1.msra.mxu0 0.0
        %3445 = vmatprep.subr.mxu0 0.0
        %3446 = vmatpush1.msra.mxu0 0.0
        %3447 = vmatprep.subr.mxu0 0.0
        %3448 = vmatpush1.msra.mxu0 0.0
        %3449 = vmatprep.subr.mxu0 0.0
        %3450 = vmatpush1.msra.mxu0 0.0
        %3451 = vmatprep.subr.mxu0 0.0
        %3452 = vmatpush1.msra.mxu0 0.0
        %3453 = vmatprep.subr.mxu0 0.0
        %3454 = vmatpush1.msra.mxu0 0.0
        %3455 = vmatprep.subr.mxu0 0.0
        %3456 = vmatpush1.msra.mxu0 0.0
        %3457 = vmatprep.subr.mxu0 0.0
        %3458 = vmatpush1.msra.mxu0 0.0
        %3459 = vmatprep.subr.mxu0 0.0
        %3460 = vmatpush1.msra.mxu0 0.0
        %3461 = vmatprep.subr.mxu0 0.0
        %3462 = vmatpush1.msra.mxu0 0.0
        %3463 = vmatprep.mubr.f32.mxu0 0.0
        %3464 = vmatmul.mubr.f32.gmra.mrb[0].mxu0 %v3397
        %v3465 = vpop.f32.mrb[0].mxu0
        %v3466 = vadd.f32 %v401, %v3465
        %v3467 = vpop.f32.mrb[0].mxu0
        %v3468 = vadd.f32 %v405, %v3467
        %3469 = vdwg.mxu0
        %s3470 = scalar_lea.vmem [#allocation2], 152
        %3471 = vst [vmem:[%s3470] sm:$0xff] %v3468
        %v3472 = vmul.f32 %v3466, %v3466
        %3473 = vmatprep.subr.mxu0 0.0
        %3474 = vmatpush1.msra.mxu0 %v376
        %3475 = vmatprep.subr.mxu0 0.0
        %3476 = vmatpush1.msra.mxu0 %v377
        %3477 = vmatprep.subr.mxu0 0.0
        %3478 = vmatpush1.msra.mxu0 %v378
        %3479 = vmatprep.subr.mxu0 0.0
        %3480 = vmatpush1.msra.mxu0 %v379
        %3481 = vmatprep.subr.mxu0 0.0
        %3482 = vmatpush1.msra.mxu0 %v380
        %3483 = vmatprep.subr.mxu0 0.0
        %3484 = vmatpush1.msra.mxu0 %v381
        %3485 = vmatprep.subr.mxu0 0.0
        %3486 = vmatpush1.msra.mxu0 %v382
        %3487 = vmatprep.subr.mxu0 0.0
        %3488 = vmatpush1.msra.mxu0 %v383
        %3489 = vmatprep.subr.mxu0 0.0
        %3490 = vmatpush1.msra.mxu0 %v384
        %3491 = vmatprep.subr.mxu0 0.0
        %3492 = vmatpush1.msra.mxu0 %v385
        %3493 = vmatprep.subr.mxu0 0.0
        %3494 = vmatpush1.msra.mxu0 %v386
        %3495 = vmatprep.subr.mxu0 0.0
        %3496 = vmatpush1.msra.mxu0 %v387
        %3497 = vmatprep.subr.mxu0 0.0
        %3498 = vmatpush1.msra.mxu0 %v388
        %3499 = vmatprep.subr.mxu0 0.0
        %3500 = vmatpush1.msra.mxu0 %v389
        %3501 = vmatprep.subr.mxu0 0.0
        %3502 = vmatpush1.msra.mxu0 %v390
        %3503 = vmatprep.subr.mxu0 0.0
        %3504 = vmatpush1.msra.mxu0 %v391
        %3505 = vmatprep.subr.mxu0 0.0
        %3506 = vmatpush1.msra.mxu0 0.0
        %3507 = vmatprep.subr.mxu0 0.0
        %3508 = vmatpush1.msra.mxu0 0.0
        %3509 = vmatprep.subr.mxu0 0.0
        %3510 = vmatpush1.msra.mxu0 0.0
        %3511 = vmatprep.subr.mxu0 0.0
        %3512 = vmatpush1.msra.mxu0 0.0
        %3513 = vmatprep.subr.mxu0 0.0
        %3514 = vmatpush1.msra.mxu0 0.0
        %3515 = vmatprep.subr.mxu0 0.0
        %3516 = vmatpush1.msra.mxu0 0.0
        %3517 = vmatprep.subr.mxu0 0.0
        %3518 = vmatpush1.msra.mxu0 0.0
        %3519 = vmatprep.subr.mxu0 0.0
        %3520 = vmatpush1.msra.mxu0 0.0
        %3521 = vmatprep.subr.mxu0 0.0
        %3522 = vmatpush1.msra.mxu0 0.0
        %3523 = vmatprep.subr.mxu0 0.0
        %3524 = vmatpush1.msra.mxu0 0.0
        %3525 = vmatprep.subr.mxu0 0.0
        %3526 = vmatpush1.msra.mxu0 0.0
        %3527 = vmatprep.subr.mxu0 0.0
        %3528 = vmatpush1.msra.mxu0 0.0
        %3529 = vmatprep.subr.mxu0 0.0
        %3530 = vmatpush1.msra.mxu0 0.0
        %3531 = vmatprep.subr.mxu0 0.0
        %3532 = vmatpush1.msra.mxu0 0.0
        %3533 = vmatprep.subr.mxu0 0.0
        %3534 = vmatpush1.msra.mxu0 0.0
        %3535 = vmatprep.subr.mxu0 0.0
        %3536 = vmatpush1.msra.mxu0 0.0
        %3537 = vmatprep.mubr.f32.mxu0 0.0
        %3538 = vmatmul.mubr.f32.gmra.mrb[0].mxu0 %v3472
        %v3539 = vpop.f32.mrb[0].mxu0
        %v3540 = vadd.f32 0.0, %v3539
        %v3541 = vpop.f32.mrb[0].mxu0
        %3542 = vdwg.mxu0
        %v3543 = vsub.f32 %v559, %v3540
        %s3544 = scalar_lea.vmem [#allocation3], 152
        %3545 = vst [vmem:[%s3544] sm:$0xff] %v3543
        %s3546 = scalar_lea.vmem %s318, 160 [#allocation4]
        %v3547 = vld [vmem:[%s3546] sm:$0xff]
        %s3548 = scalar_lea.vmem [#allocation7], 640
        %v3549 = vld [vmem:[%s3548] sm:$0xff]
        %v3550 = vld [vmem:[%s3548 + $0x8] sm:$0xff]
        %v3551 = vld [vmem:[%s3548 + $0x10] sm:$0xff]
        %v3552 = vld [vmem:[%s3548 + $0x18] sm:$0xff]
        %v3554 = vsel %vm408, %v3547, 0
        %3556 = vmatprep.subr.mxu0 %v3550
        %3557 = vmatpush1.msra.mxu0 %v3549
        %3558 = vmatprep.subr.mxu0 %v3552
        %3559 = vmatpush1.msra.mxu0 %v3551
        %3560 = vmatprep.subr.mxu0 0.0
        %3561 = vmatpush1.msra.mxu0 0.0
        %3562 = vmatprep.subr.mxu0 0.0
        %3563 = vmatpush1.msra.mxu0 0.0
        %3564 = vmatprep.subr.mxu0 0.0
        %3565 = vmatpush1.msra.mxu0 0.0
        %3566 = vmatprep.subr.mxu0 0.0
        %3567 = vmatpush1.msra.mxu0 0.0
        %3568 = vmatprep.subr.mxu0 0.0
        %3569 = vmatpush1.msra.mxu0 0.0
        %3570 = vmatprep.subr.mxu0 0.0
        %3571 = vmatpush1.msra.mxu0 0.0
        %3572 = vmatprep.subr.mxu0 0.0
        %3573 = vmatpush1.msra.mxu0 0.0
        %3574 = vmatprep.subr.mxu0 0.0
        %3575 = vmatpush1.msra.mxu0 0.0
        %3576 = vmatprep.subr.mxu0 0.0
        %3577 = vmatpush1.msra.mxu0 0.0
        %3578 = vmatprep.subr.mxu0 0.0
        %3579 = vmatpush1.msra.mxu0 0.0
        %3580 = vmatprep.subr.mxu0 0.0
        %3581 = vmatpush1.msra.mxu0 0.0
        %3582 = vmatprep.subr.mxu0 0.0
        %3583 = vmatpush1.msra.mxu0 0.0
        %3584 = vmatprep.subr.mxu0 0.0
        %3585 = vmatpush1.msra.mxu0 0.0
        %3586 = vmatprep.subr.mxu0 0.0
        %3587 = vmatpush1.msra.mxu0 0.0
        %3588 = vmatprep.subr.mxu0 0.0
        %3589 = vmatpush1.msra.mxu0 0.0
        %3590 = vmatprep.subr.mxu0 0.0
        %3591 = vmatpush1.msra.mxu0 0.0
        %3592 = vmatprep.subr.mxu0 0.0
        %3593 = vmatpush1.msra.mxu0 0.0
        %3594 = vmatprep.subr.mxu0 0.0
        %3595 = vmatpush1.msra.mxu0 0.0
        %3596 = vmatprep.subr.mxu0 0.0
        %3597 = vmatpush1.msra.mxu0 0.0
        %3598 = vmatprep.subr.mxu0 0.0
        %3599 = vmatpush1.msra.mxu0 0.0
        %3600 = vmatprep.subr.mxu0 0.0
        %3601 = vmatpush1.msra.mxu0 0.0
        %3602 = vmatprep.subr.mxu0 0.0
        %3603 = vmatpush1.msra.mxu0 0.0
        %3604 = vmatprep.subr.mxu0 0.0
        %3605 = vmatpush1.msra.mxu0 0.0
        %3606 = vmatprep.subr.mxu0 0.0
        %3607 = vmatpush1.msra.mxu0 0.0
        %3608 = vmatprep.subr.mxu0 0.0
        %3609 = vmatpush1.msra.mxu0 0.0
        %3610 = vmatprep.subr.mxu0 0.0
        %3611 = vmatpush1.msra.mxu0 0.0
        %3612 = vmatprep.subr.mxu0 0.0
        %3613 = vmatpush1.msra.mxu0 0.0
        %3614 = vmatprep.subr.mxu0 0.0
        %3615 = vmatpush1.msra.mxu0 0.0
        %3616 = vmatprep.subr.mxu0 0.0
        %3617 = vmatpush1.msra.mxu0 0.0
        %3618 = vmatprep.subr.mxu0 0.0
        %3619 = vmatpush1.msra.mxu0 0.0
        %3620 = vmatprep.mubr.f32.mxu0 0.0
        %3621 = vmatmul.mubr.f32.gmra.mrb[0].mxu0 %v3554
        %v3622 = vpop.f32.mrb[0].mxu0
        %v3623 = vadd.f32 %v401, %v3622
        %v3624 = vpop.f32.mrb[0].mxu0
        %v3625 = vadd.f32 %v405, %v3624
        %3626 = vdwg.mxu0
        %s3627 = scalar_lea.vmem [#allocation2], 160
        %3628 = vst [vmem:[%s3627] sm:$0xff] %v3625
        %v3629 = vmul.f32 %v3623, %v3623
        %3630 = vmatprep.subr.mxu0 0.0
        %3631 = vmatpush1.msra.mxu0 %v376
        %3632 = vmatprep.subr.mxu0 0.0
        %3633 = vmatpush1.msra.mxu0 %v377
        %3634 = vmatprep.subr.mxu0 0.0
        %3635 = vmatpush1.msra.mxu0 %v378
        %3636 = vmatprep.subr.mxu0 0.0
        %3637 = vmatpush1.msra.mxu0 %v379
        %3638 = vmatprep.subr.mxu0 0.0
        %3639 = vmatpush1.msra.mxu0 %v380
        %3640 = vmatprep.subr.mxu0 0.0
        %3641 = vmatpush1.msra.mxu0 %v381
        %3642 = vmatprep.subr.mxu0 0.0
        %3643 = vmatpush1.msra.mxu0 %v382
        %3644 = vmatprep.subr.mxu0 0.0
        %3645 = vmatpush1.msra.mxu0 %v383
        %3646 = vmatprep.subr.mxu0 0.0
        %3647 = vmatpush1.msra.mxu0 %v384
        %3648 = vmatprep.subr.mxu0 0.0
        %3649 = vmatpush1.msra.mxu0 %v385
        %3650 = vmatprep.subr.mxu0 0.0
        %3651 = vmatpush1.msra.mxu0 %v386
        %3652 = vmatprep.subr.mxu0 0.0
        %3653 = vmatpush1.msra.mxu0 %v387
        %3654 = vmatprep.subr.mxu0 0.0
        %3655 = vmatpush1.msra.mxu0 %v388
        %3656 = vmatprep.subr.mxu0 0.0
        %3657 = vmatpush1.msra.mxu0 %v389
        %3658 = vmatprep.subr.mxu0 0.0
        %3659 = vmatpush1.msra.mxu0 %v390
        %3660 = vmatprep.subr.mxu0 0.0
        %3661 = vmatpush1.msra.mxu0 %v391
        %3662 = vmatprep.subr.mxu0 0.0
        %3663 = vmatpush1.msra.mxu0 0.0
        %3664 = vmatprep.subr.mxu0 0.0
        %3665 = vmatpush1.msra.mxu0 0.0
        %3666 = vmatprep.subr.mxu0 0.0
        %3667 = vmatpush1.msra.mxu0 0.0
        %3668 = vmatprep.subr.mxu0 0.0
        %3669 = vmatpush1.msra.mxu0 0.0
        %3670 = vmatprep.subr.mxu0 0.0
        %3671 = vmatpush1.msra.mxu0 0.0
        %3672 = vmatprep.subr.mxu0 0.0
        %3673 = vmatpush1.msra.mxu0 0.0
        %3674 = vmatprep.subr.mxu0 0.0
        %3675 = vmatpush1.msra.mxu0 0.0
        %3676 = vmatprep.subr.mxu0 0.0
        %3677 = vmatpush1.msra.mxu0 0.0
        %3678 = vmatprep.subr.mxu0 0.0
        %3679 = vmatpush1.msra.mxu0 0.0
        %3680 = vmatprep.subr.mxu0 0.0
        %3681 = vmatpush1.msra.mxu0 0.0
        %3682 = vmatprep.subr.mxu0 0.0
        %3683 = vmatpush1.msra.mxu0 0.0
        %3684 = vmatprep.subr.mxu0 0.0
        %3685 = vmatpush1.msra.mxu0 0.0
        %3686 = vmatprep.subr.mxu0 0.0
        %3687 = vmatpush1.msra.mxu0 0.0
        %3688 = vmatprep.subr.mxu0 0.0
        %3689 = vmatpush1.msra.mxu0 0.0
        %3690 = vmatprep.subr.mxu0 0.0
        %3691 = vmatpush1.msra.mxu0 0.0
        %3692 = vmatprep.subr.mxu0 0.0
        %3693 = vmatpush1.msra.mxu0 0.0
        %3694 = vmatprep.mubr.f32.mxu0 0.0
        %3695 = vmatmul.mubr.f32.gmra.mrb[0].mxu0 %v3629
        %v3696 = vpop.f32.mrb[0].mxu0
        %v3697 = vadd.f32 0.0, %v3696
        %v3698 = vpop.f32.mrb[0].mxu0
        %3699 = vdwg.mxu0
        %v3700 = vsub.f32 %v559, %v3697
        %s3701 = scalar_lea.vmem [#allocation3], 160
        %3702 = vst [vmem:[%s3701] sm:$0xff] %v3700
        %s3703 = scalar_lea.vmem %s318, 168 [#allocation4]
        %v3704 = vld [vmem:[%s3703] sm:$0xff]
        %s3705 = scalar_lea.vmem [#allocation7], 672
        %v3706 = vld [vmem:[%s3705] sm:$0xff]
        %v3707 = vld [vmem:[%s3705 + $0x8] sm:$0xff]
        %v3708 = vld [vmem:[%s3705 + $0x10] sm:$0xff]
        %v3709 = vld [vmem:[%s3705 + $0x18] sm:$0xff]
        %v3711 = vsel %vm408, %v3704, 0
        %3713 = vmatprep.subr.mxu0 %v3707
        %3714 = vmatpush1.msra.mxu0 %v3706
        %3715 = vmatprep.subr.mxu0 %v3709
        %3716 = vmatpush1.msra.mxu0 %v3708
        %3717 = vmatprep.subr.mxu0 0.0
        %3718 = vmatpush1.msra.mxu0 0.0
        %3719 = vmatprep.subr.mxu0 0.0
        %3720 = vmatpush1.msra.mxu0 0.0
        %3721 = vmatprep.subr.mxu0 0.0
        %3722 = vmatpush1.msra.mxu0 0.0
        %3723 = vmatprep.subr.mxu0 0.0
        %3724 = vmatpush1.msra.mxu0 0.0
        %3725 = vmatprep.subr.mxu0 0.0
        %3726 = vmatpush1.msra.mxu0 0.0
        %3727 = vmatprep.subr.mxu0 0.0
        %3728 = vmatpush1.msra.mxu0 0.0
        %3729 = vmatprep.subr.mxu0 0.0
        %3730 = vmatpush1.msra.mxu0 0.0
        %3731 = vmatprep.subr.mxu0 0.0
        %3732 = vmatpush1.msra.mxu0 0.0
        %3733 = vmatprep.subr.mxu0 0.0
        %3734 = vmatpush1.msra.mxu0 0.0
        %3735 = vmatprep.subr.mxu0 0.0
        %3736 = vmatpush1.msra.mxu0 0.0
        %3737 = vmatprep.subr.mxu0 0.0
        %3738 = vmatpush1.msra.mxu0 0.0
        %3739 = vmatprep.subr.mxu0 0.0
        %3740 = vmatpush1.msra.mxu0 0.0
        %3741 = vmatprep.subr.mxu0 0.0
        %3742 = vmatpush1.msra.mxu0 0.0
        %3743 = vmatprep.subr.mxu0 0.0
        %3744 = vmatpush1.msra.mxu0 0.0
        %3745 = vmatprep.subr.mxu0 0.0
        %3746 = vmatpush1.msra.mxu0 0.0
        %3747 = vmatprep.subr.mxu0 0.0
        %3748 = vmatpush1.msra.mxu0 0.0
        %3749 = vmatprep.subr.mxu0 0.0
        %3750 = vmatpush1.msra.mxu0 0.0
        %3751 = vmatprep.subr.mxu0 0.0
        %3752 = vmatpush1.msra.mxu0 0.0
        %3753 = vmatprep.subr.mxu0 0.0
        %3754 = vmatpush1.msra.mxu0 0.0
        %3755 = vmatprep.subr.mxu0 0.0
        %3756 = vmatpush1.msra.mxu0 0.0
        %3757 = vmatprep.subr.mxu0 0.0
        %3758 = vmatpush1.msra.mxu0 0.0
        %3759 = vmatprep.subr.mxu0 0.0
        %3760 = vmatpush1.msra.mxu0 0.0
        %3761 = vmatprep.subr.mxu0 0.0
        %3762 = vmatpush1.msra.mxu0 0.0
        %3763 = vmatprep.subr.mxu0 0.0
        %3764 = vmatpush1.msra.mxu0 0.0
        %3765 = vmatprep.subr.mxu0 0.0
        %3766 = vmatpush1.msra.mxu0 0.0
        %3767 = vmatprep.subr.mxu0 0.0
        %3768 = vmatpush1.msra.mxu0 0.0
        %3769 = vmatprep.subr.mxu0 0.0
        %3770 = vmatpush1.msra.mxu0 0.0
        %3771 = vmatprep.subr.mxu0 0.0
        %3772 = vmatpush1.msra.mxu0 0.0
        %3773 = vmatprep.subr.mxu0 0.0
        %3774 = vmatpush1.msra.mxu0 0.0
        %3775 = vmatprep.subr.mxu0 0.0
        %3776 = vmatpush1.msra.mxu0 0.0
        %3777 = vmatprep.mubr.f32.mxu0 0.0
        %3778 = vmatmul.mubr.f32.gmra.mrb[0].mxu0 %v3711
        %v3779 = vpop.f32.mrb[0].mxu0
        %v3780 = vadd.f32 %v401, %v3779
        %v3781 = vpop.f32.mrb[0].mxu0
        %v3782 = vadd.f32 %v405, %v3781
        %3783 = vdwg.mxu0
        %s3784 = scalar_lea.vmem [#allocation2], 168
        %3785 = vst [vmem:[%s3784] sm:$0xff] %v3782
        %v3786 = vmul.f32 %v3780, %v3780
        %3787 = vmatprep.subr.mxu0 0.0
        %3788 = vmatpush1.msra.mxu0 %v376
        %3789 = vmatprep.subr.mxu0 0.0
        %3790 = vmatpush1.msra.mxu0 %v377
        %3791 = vmatprep.subr.mxu0 0.0
        %3792 = vmatpush1.msra.mxu0 %v378
        %3793 = vmatprep.subr.mxu0 0.0
        %3794 = vmatpush1.msra.mxu0 %v379
        %3795 = vmatprep.subr.mxu0 0.0
        %3796 = vmatpush1.msra.mxu0 %v380
        %3797 = vmatprep.subr.mxu0 0.0
        %3798 = vmatpush1.msra.mxu0 %v381
        %3799 = vmatprep.subr.mxu0 0.0
        %3800 = vmatpush1.msra.mxu0 %v382
        %3801 = vmatprep.subr.mxu0 0.0
        %3802 = vmatpush1.msra.mxu0 %v383
        %3803 = vmatprep.subr.mxu0 0.0
        %3804 = vmatpush1.msra.mxu0 %v384
        %3805 = vmatprep.subr.mxu0 0.0
        %3806 = vmatpush1.msra.mxu0 %v385
        %3807 = vmatprep.subr.mxu0 0.0
        %3808 = vmatpush1.msra.mxu0 %v386
        %3809 = vmatprep.subr.mxu0 0.0
        %3810 = vmatpush1.msra.mxu0 %v387
        %3811 = vmatprep.subr.mxu0 0.0
        %3812 = vmatpush1.msra.mxu0 %v388
        %3813 = vmatprep.subr.mxu0 0.0
        %3814 = vmatpush1.msra.mxu0 %v389
        %3815 = vmatprep.subr.mxu0 0.0
        %3816 = vmatpush1.msra.mxu0 %v390
        %3817 = vmatprep.subr.mxu0 0.0
        %3818 = vmatpush1.msra.mxu0 %v391
        %3819 = vmatprep.subr.mxu0 0.0
        %3820 = vmatpush1.msra.mxu0 0.0
        %3821 = vmatprep.subr.mxu0 0.0
        %3822 = vmatpush1.msra.mxu0 0.0
        %3823 = vmatprep.subr.mxu0 0.0
        %3824 = vmatpush1.msra.mxu0 0.0
        %3825 = vmatprep.subr.mxu0 0.0
        %3826 = vmatpush1.msra.mxu0 0.0
        %3827 = vmatprep.subr.mxu0 0.0
        %3828 = vmatpush1.msra.mxu0 0.0
        %3829 = vmatprep.subr.mxu0 0.0
        %3830 = vmatpush1.msra.mxu0 0.0
        %3831 = vmatprep.subr.mxu0 0.0
        %3832 = vmatpush1.msra.mxu0 0.0
        %3833 = vmatprep.subr.mxu0 0.0
        %3834 = vmatpush1.msra.mxu0 0.0
        %3835 = vmatprep.subr.mxu0 0.0
        %3836 = vmatpush1.msra.mxu0 0.0
        %3837 = vmatprep.subr.mxu0 0.0
        %3838 = vmatpush1.msra.mxu0 0.0
        %3839 = vmatprep.subr.mxu0 0.0
        %3840 = vmatpush1.msra.mxu0 0.0
        %3841 = vmatprep.subr.mxu0 0.0
        %3842 = vmatpush1.msra.mxu0 0.0
        %3843 = vmatprep.subr.mxu0 0.0
        %3844 = vmatpush1.msra.mxu0 0.0
        %3845 = vmatprep.subr.mxu0 0.0
        %3846 = vmatpush1.msra.mxu0 0.0
        %3847 = vmatprep.subr.mxu0 0.0
        %3848 = vmatpush1.msra.mxu0 0.0
        %3849 = vmatprep.subr.mxu0 0.0
        %3850 = vmatpush1.msra.mxu0 0.0
        %3851 = vmatprep.mubr.f32.mxu0 0.0
        %3852 = vmatmul.mubr.f32.gmra.mrb[0].mxu0 %v3786
        %v3853 = vpop.f32.mrb[0].mxu0
        %v3854 = vadd.f32 0.0, %v3853
        %v3855 = vpop.f32.mrb[0].mxu0
        %3856 = vdwg.mxu0
        %v3857 = vsub.f32 %v559, %v3854
        %s3858 = scalar_lea.vmem [#allocation3], 168
        %3859 = vst [vmem:[%s3858] sm:$0xff] %v3857
        %s3860 = scalar_lea.vmem %s318, 176 [#allocation4]
        %v3861 = vld [vmem:[%s3860] sm:$0xff]
        %s3862 = scalar_lea.vmem [#allocation7], 704
        %v3863 = vld [vmem:[%s3862] sm:$0xff]
        %v3864 = vld [vmem:[%s3862 + $0x8] sm:$0xff]
        %v3865 = vld [vmem:[%s3862 + $0x10] sm:$0xff]
        %v3866 = vld [vmem:[%s3862 + $0x18] sm:$0xff]
        %v3868 = vsel %vm408, %v3861, 0
        %3870 = vmatprep.subr.mxu0 %v3864
        %3871 = vmatpush1.msra.mxu0 %v3863
        %3872 = vmatprep.subr.mxu0 %v3866
        %3873 = vmatpush1.msra.mxu0 %v3865
        %3874 = vmatprep.subr.mxu0 0.0
        %3875 = vmatpush1.msra.mxu0 0.0
        %3876 = vmatprep.subr.mxu0 0.0
        %3877 = vmatpush1.msra.mxu0 0.0
        %3878 = vmatprep.subr.mxu0 0.0
        %3879 = vmatpush1.msra.mxu0 0.0
        %3880 = vmatprep.subr.mxu0 0.0
        %3881 = vmatpush1.msra.mxu0 0.0
        %3882 = vmatprep.subr.mxu0 0.0
        %3883 = vmatpush1.msra.mxu0 0.0
        %3884 = vmatprep.subr.mxu0 0.0
        %3885 = vmatpush1.msra.mxu0 0.0
        %3886 = vmatprep.subr.mxu0 0.0
        %3887 = vmatpush1.msra.mxu0 0.0
        %3888 = vmatprep.subr.mxu0 0.0
        %3889 = vmatpush1.msra.mxu0 0.0
        %3890 = vmatprep.subr.mxu0 0.0
        %3891 = vmatpush1.msra.mxu0 0.0
        %3892 = vmatprep.subr.mxu0 0.0
        %3893 = vmatpush1.msra.mxu0 0.0
        %3894 = vmatprep.subr.mxu0 0.0
        %3895 = vmatpush1.msra.mxu0 0.0
        %3896 = vmatprep.subr.mxu0 0.0
        %3897 = vmatpush1.msra.mxu0 0.0
        %3898 = vmatprep.subr.mxu0 0.0
        %3899 = vmatpush1.msra.mxu0 0.0
        %3900 = vmatprep.subr.mxu0 0.0
        %3901 = vmatpush1.msra.mxu0 0.0
        %3902 = vmatprep.subr.mxu0 0.0
        %3903 = vmatpush1.msra.mxu0 0.0
        %3904 = vmatprep.subr.mxu0 0.0
        %3905 = vmatpush1.msra.mxu0 0.0
        %3906 = vmatprep.subr.mxu0 0.0
        %3907 = vmatpush1.msra.mxu0 0.0
        %3908 = vmatprep.subr.mxu0 0.0
        %3909 = vmatpush1.msra.mxu0 0.0
        %3910 = vmatprep.subr.mxu0 0.0
        %3911 = vmatpush1.msra.mxu0 0.0
        %3912 = vmatprep.subr.mxu0 0.0
        %3913 = vmatpush1.msra.mxu0 0.0
        %3914 = vmatprep.subr.mxu0 0.0
        %3915 = vmatpush1.msra.mxu0 0.0
        %3916 = vmatprep.subr.mxu0 0.0
        %3917 = vmatpush1.msra.mxu0 0.0
        %3918 = vmatprep.subr.mxu0 0.0
        %3919 = vmatpush1.msra.mxu0 0.0
        %3920 = vmatprep.subr.mxu0 0.0
        %3921 = vmatpush1.msra.mxu0 0.0
        %3922 = vmatprep.subr.mxu0 0.0
        %3923 = vmatpush1.msra.mxu0 0.0
        %3924 = vmatprep.subr.mxu0 0.0
        %3925 = vmatpush1.msra.mxu0 0.0
        %3926 = vmatprep.subr.mxu0 0.0
        %3927 = vmatpush1.msra.mxu0 0.0
        %3928 = vmatprep.subr.mxu0 0.0
        %3929 = vmatpush1.msra.mxu0 0.0
        %3930 = vmatprep.subr.mxu0 0.0
        %3931 = vmatpush1.msra.mxu0 0.0
        %3932 = vmatprep.subr.mxu0 0.0
        %3933 = vmatpush1.msra.mxu0 0.0
        %3934 = vmatprep.mubr.f32.mxu0 0.0
        %3935 = vmatmul.mubr.f32.gmra.mrb[0].mxu0 %v3868
        %v3936 = vpop.f32.mrb[0].mxu0
        %v3937 = vadd.f32 %v401, %v3936
        %v3938 = vpop.f32.mrb[0].mxu0
        %v3939 = vadd.f32 %v405, %v3938
        %3940 = vdwg.mxu0
        %s3941 = scalar_lea.vmem [#allocation2], 176
        %3942 = vst [vmem:[%s3941] sm:$0xff] %v3939
        %v3943 = vmul.f32 %v3937, %v3937
        %3944 = vmatprep.subr.mxu0 0.0
        %3945 = vmatpush1.msra.mxu0 %v376
        %3946 = vmatprep.subr.mxu0 0.0
        %3947 = vmatpush1.msra.mxu0 %v377
        %3948 = vmatprep.subr.mxu0 0.0
        %3949 = vmatpush1.msra.mxu0 %v378
        %3950 = vmatprep.subr.mxu0 0.0
        %3951 = vmatpush1.msra.mxu0 %v379
        %3952 = vmatprep.subr.mxu0 0.0
        %3953 = vmatpush1.msra.mxu0 %v380
        %3954 = vmatprep.subr.mxu0 0.0
        %3955 = vmatpush1.msra.mxu0 %v381
        %3956 = vmatprep.subr.mxu0 0.0
        %3957 = vmatpush1.msra.mxu0 %v382
        %3958 = vmatprep.subr.mxu0 0.0
        %3959 = vmatpush1.msra.mxu0 %v383
        %3960 = vmatprep.subr.mxu0 0.0
        %3961 = vmatpush1.msra.mxu0 %v384
        %3962 = vmatprep.subr.mxu0 0.0
        %3963 = vmatpush1.msra.mxu0 %v385
        %3964 = vmatprep.subr.mxu0 0.0
        %3965 = vmatpush1.msra.mxu0 %v386
        %3966 = vmatprep.subr.mxu0 0.0
        %3967 = vmatpush1.msra.mxu0 %v387
        %3968 = vmatprep.subr.mxu0 0.0
        %3969 = vmatpush1.msra.mxu0 %v388
        %3970 = vmatprep.subr.mxu0 0.0
        %3971 = vmatpush1.msra.mxu0 %v389
        %3972 = vmatprep.subr.mxu0 0.0
        %3973 = vmatpush1.msra.mxu0 %v390
        %3974 = vmatprep.subr.mxu0 0.0
        %3975 = vmatpush1.msra.mxu0 %v391
        %3976 = vmatprep.subr.mxu0 0.0
        %3977 = vmatpush1.msra.mxu0 0.0
        %3978 = vmatprep.subr.mxu0 0.0
        %3979 = vmatpush1.msra.mxu0 0.0
        %3980 = vmatprep.subr.mxu0 0.0
        %3981 = vmatpush1.msra.mxu0 0.0
        %3982 = vmatprep.subr.mxu0 0.0
        %3983 = vmatpush1.msra.mxu0 0.0
        %3984 = vmatprep.subr.mxu0 0.0
        %3985 = vmatpush1.msra.mxu0 0.0
        %3986 = vmatprep.subr.mxu0 0.0
        %3987 = vmatpush1.msra.mxu0 0.0
        %3988 = vmatprep.subr.mxu0 0.0
        %3989 = vmatpush1.msra.mxu0 0.0
        %3990 = vmatprep.subr.mxu0 0.0
        %3991 = vmatpush1.msra.mxu0 0.0
        %3992 = vmatprep.subr.mxu0 0.0
        %3993 = vmatpush1.msra.mxu0 0.0
        %3994 = vmatprep.subr.mxu0 0.0
        %3995 = vmatpush1.msra.mxu0 0.0
        %3996 = vmatprep.subr.mxu0 0.0
        %3997 = vmatpush1.msra.mxu0 0.0
        %3998 = vmatprep.subr.mxu0 0.0
        %3999 = vmatpush1.msra.mxu0 0.0
        %4000 = vmatprep.subr.mxu0 0.0
        %4001 = vmatpush1.msra.mxu0 0.0
        %4002 = vmatprep.subr.mxu0 0.0
        %4003 = vmatpush1.msra.mxu0 0.0
        %4004 = vmatprep.subr.mxu0 0.0
        %4005 = vmatpush1.msra.mxu0 0.0
        %4006 = vmatprep.subr.mxu0 0.0
        %4007 = vmatpush1.msra.mxu0 0.0
        %4008 = vmatprep.mubr.f32.mxu0 0.0
        %4009 = vmatmul.mubr.f32.gmra.mrb[0].mxu0 %v3943
        %v4010 = vpop.f32.mrb[0].mxu0
        %v4011 = vadd.f32 0.0, %v4010
        %v4012 = vpop.f32.mrb[0].mxu0
        %4013 = vdwg.mxu0
        %v4014 = vsub.f32 %v559, %v4011
        %s4015 = scalar_lea.vmem [#allocation3], 176
        %4016 = vst [vmem:[%s4015] sm:$0xff] %v4014
        %s4017 = scalar_lea.vmem %s318, 184 [#allocation4]
        %v4018 = vld [vmem:[%s4017] sm:$0xff]
        %s4019 = scalar_lea.vmem [#allocation7], 736
        %v4020 = vld [vmem:[%s4019] sm:$0xff]
        %v4021 = vld [vmem:[%s4019 + $0x8] sm:$0xff]
        %v4022 = vld [vmem:[%s4019 + $0x10] sm:$0xff]
        %v4023 = vld [vmem:[%s4019 + $0x18] sm:$0xff]
        %v4025 = vsel %vm408, %v4018, 0
        %4027 = vmatprep.subr.mxu0 %v4021
        %4028 = vmatpush1.msra.mxu0 %v4020
        %4029 = vmatprep.subr.mxu0 %v4023
        %4030 = vmatpush1.msra.mxu0 %v4022
        %4031 = vmatprep.subr.mxu0 0.0
        %4032 = vmatpush1.msra.mxu0 0.0
        %4033 = vmatprep.subr.mxu0 0.0
        %4034 = vmatpush1.msra.mxu0 0.0
        %4035 = vmatprep.subr.mxu0 0.0
        %4036 = vmatpush1.msra.mxu0 0.0
        %4037 = vmatprep.subr.mxu0 0.0
        %4038 = vmatpush1.msra.mxu0 0.0
        %4039 = vmatprep.subr.mxu0 0.0
        %4040 = vmatpush1.msra.mxu0 0.0
        %4041 = vmatprep.subr.mxu0 0.0
        %4042 = vmatpush1.msra.mxu0 0.0
        %4043 = vmatprep.subr.mxu0 0.0
        %4044 = vmatpush1.msra.mxu0 0.0
        %4045 = vmatprep.subr.mxu0 0.0
        %4046 = vmatpush1.msra.mxu0 0.0
        %4047 = vmatprep.subr.mxu0 0.0
        %4048 = vmatpush1.msra.mxu0 0.0
        %4049 = vmatprep.subr.mxu0 0.0
        %4050 = vmatpush1.msra.mxu0 0.0
        %4051 = vmatprep.subr.mxu0 0.0
        %4052 = vmatpush1.msra.mxu0 0.0
        %4053 = vmatprep.subr.mxu0 0.0
        %4054 = vmatpush1.msra.mxu0 0.0
        %4055 = vmatprep.subr.mxu0 0.0
        %4056 = vmatpush1.msra.mxu0 0.0
        %4057 = vmatprep.subr.mxu0 0.0
        %4058 = vmatpush1.msra.mxu0 0.0
        %4059 = vmatprep.subr.mxu0 0.0
        %4060 = vmatpush1.msra.mxu0 0.0
        %4061 = vmatprep.subr.mxu0 0.0
        %4062 = vmatpush1.msra.mxu0 0.0
        %4063 = vmatprep.subr.mxu0 0.0
        %4064 = vmatpush1.msra.mxu0 0.0
        %4065 = vmatprep.subr.mxu0 0.0
        %4066 = vmatpush1.msra.mxu0 0.0
        %4067 = vmatprep.subr.mxu0 0.0
        %4068 = vmatpush1.msra.mxu0 0.0
        %4069 = vmatprep.subr.mxu0 0.0
        %4070 = vmatpush1.msra.mxu0 0.0
        %4071 = vmatprep.subr.mxu0 0.0
        %4072 = vmatpush1.msra.mxu0 0.0
        %4073 = vmatprep.subr.mxu0 0.0
        %4074 = vmatpush1.msra.mxu0 0.0
        %4075 = vmatprep.subr.mxu0 0.0
        %4076 = vmatpush1.msra.mxu0 0.0
        %4077 = vmatprep.subr.mxu0 0.0
        %4078 = vmatpush1.msra.mxu0 0.0
        %4079 = vmatprep.subr.mxu0 0.0
        %4080 = vmatpush1.msra.mxu0 0.0
        %4081 = vmatprep.subr.mxu0 0.0
        %4082 = vmatpush1.msra.mxu0 0.0
        %4083 = vmatprep.subr.mxu0 0.0
        %4084 = vmatpush1.msra.mxu0 0.0
        %4085 = vmatprep.subr.mxu0 0.0
        %4086 = vmatpush1.msra.mxu0 0.0
        %4087 = vmatprep.subr.mxu0 0.0
        %4088 = vmatpush1.msra.mxu0 0.0
        %4089 = vmatprep.subr.mxu0 0.0
        %4090 = vmatpush1.msra.mxu0 0.0
        %4091 = vmatprep.mubr.f32.mxu0 0.0
        %4092 = vmatmul.mubr.f32.gmra.mrb[0].mxu0 %v4025
        %v4093 = vpop.f32.mrb[0].mxu0
        %v4094 = vadd.f32 %v401, %v4093
        %v4095 = vpop.f32.mrb[0].mxu0
        %v4096 = vadd.f32 %v405, %v4095
        %4097 = vdwg.mxu0
        %s4098 = scalar_lea.vmem [#allocation2], 184
        %4099 = vst [vmem:[%s4098] sm:$0xff] %v4096
        %v4100 = vmul.f32 %v4094, %v4094
        %4101 = vmatprep.subr.mxu0 0.0
        %4102 = vmatpush1.msra.mxu0 %v376
        %4103 = vmatprep.subr.mxu0 0.0
        %4104 = vmatpush1.msra.mxu0 %v377
        %4105 = vmatprep.subr.mxu0 0.0
        %4106 = vmatpush1.msra.mxu0 %v378
        %4107 = vmatprep.subr.mxu0 0.0
        %4108 = vmatpush1.msra.mxu0 %v379
        %4109 = vmatprep.subr.mxu0 0.0
        %4110 = vmatpush1.msra.mxu0 %v380
        %4111 = vmatprep.subr.mxu0 0.0
        %4112 = vmatpush1.msra.mxu0 %v381
        %4113 = vmatprep.subr.mxu0 0.0
        %4114 = vmatpush1.msra.mxu0 %v382
        %4115 = vmatprep.subr.mxu0 0.0
        %4116 = vmatpush1.msra.mxu0 %v383
        %4117 = vmatprep.subr.mxu0 0.0
        %4118 = vmatpush1.msra.mxu0 %v384
        %4119 = vmatprep.subr.mxu0 0.0
        %4120 = vmatpush1.msra.mxu0 %v385
        %4121 = vmatprep.subr.mxu0 0.0
        %4122 = vmatpush1.msra.mxu0 %v386
        %4123 = vmatprep.subr.mxu0 0.0
        %4124 = vmatpush1.msra.mxu0 %v387
        %4125 = vmatprep.subr.mxu0 0.0
        %4126 = vmatpush1.msra.mxu0 %v388
        %4127 = vmatprep.subr.mxu0 0.0
        %4128 = vmatpush1.msra.mxu0 %v389
        %4129 = vmatprep.subr.mxu0 0.0
        %4130 = vmatpush1.msra.mxu0 %v390
        %4131 = vmatprep.subr.mxu0 0.0
        %4132 = vmatpush1.msra.mxu0 %v391
        %4133 = vmatprep.subr.mxu0 0.0
        %4134 = vmatpush1.msra.mxu0 0.0
        %4135 = vmatprep.subr.mxu0 0.0
        %4136 = vmatpush1.msra.mxu0 0.0
        %4137 = vmatprep.subr.mxu0 0.0
        %4138 = vmatpush1.msra.mxu0 0.0
        %4139 = vmatprep.subr.mxu0 0.0
        %4140 = vmatpush1.msra.mxu0 0.0
        %4141 = vmatprep.subr.mxu0 0.0
        %4142 = vmatpush1.msra.mxu0 0.0
        %4143 = vmatprep.subr.mxu0 0.0
        %4144 = vmatpush1.msra.mxu0 0.0
        %4145 = vmatprep.subr.mxu0 0.0
        %4146 = vmatpush1.msra.mxu0 0.0
        %4147 = vmatprep.subr.mxu0 0.0
        %4148 = vmatpush1.msra.mxu0 0.0
        %4149 = vmatprep.subr.mxu0 0.0
        %4150 = vmatpush1.msra.mxu0 0.0
        %4151 = vmatprep.subr.mxu0 0.0
        %4152 = vmatpush1.msra.mxu0 0.0
        %4153 = vmatprep.subr.mxu0 0.0
        %4154 = vmatpush1.msra.mxu0 0.0
        %4155 = vmatprep.subr.mxu0 0.0
        %4156 = vmatpush1.msra.mxu0 0.0
        %4157 = vmatprep.subr.mxu0 0.0
        %4158 = vmatpush1.msra.mxu0 0.0
        %4159 = vmatprep.subr.mxu0 0.0
        %4160 = vmatpush1.msra.mxu0 0.0
        %4161 = vmatprep.subr.mxu0 0.0
        %4162 = vmatpush1.msra.mxu0 0.0
        %4163 = vmatprep.subr.mxu0 0.0
        %4164 = vmatpush1.msra.mxu0 0.0
        %4165 = vmatprep.mubr.f32.mxu0 0.0
        %4166 = vmatmul.mubr.f32.gmra.mrb[0].mxu0 %v4100
        %v4167 = vpop.f32.mrb[0].mxu0
        %v4168 = vadd.f32 0.0, %v4167
        %v4169 = vpop.f32.mrb[0].mxu0
        %4170 = vdwg.mxu0
        %v4171 = vsub.f32 %v559, %v4168
        %s4172 = scalar_lea.vmem [#allocation3], 184
        %4173 = vst [vmem:[%s4172] sm:$0xff] %v4171
        %s4174 = scalar_lea.vmem %s318, 192 [#allocation4]
        %v4175 = vld [vmem:[%s4174] sm:$0xff]
        %s4176 = scalar_lea.vmem [#allocation7], 768
        %v4177 = vld [vmem:[%s4176] sm:$0xff]
        %v4178 = vld [vmem:[%s4176 + $0x8] sm:$0xff]
        %v4179 = vld [vmem:[%s4176 + $0x10] sm:$0xff]
        %v4180 = vld [vmem:[%s4176 + $0x18] sm:$0xff]
        %v4182 = vsel %vm408, %v4175, 0
        %4184 = vmatprep.subr.mxu0 %v4178
        %4185 = vmatpush1.msra.mxu0 %v4177
        %4186 = vmatprep.subr.mxu0 %v4180
        %4187 = vmatpush1.msra.mxu0 %v4179
        %4188 = vmatprep.subr.mxu0 0.0
        %4189 = vmatpush1.msra.mxu0 0.0
        %4190 = vmatprep.subr.mxu0 0.0
        %4191 = vmatpush1.msra.mxu0 0.0
        %4192 = vmatprep.subr.mxu0 0.0
        %4193 = vmatpush1.msra.mxu0 0.0
        %4194 = vmatprep.subr.mxu0 0.0
        %4195 = vmatpush1.msra.mxu0 0.0
        %4196 = vmatprep.subr.mxu0 0.0
        %4197 = vmatpush1.msra.mxu0 0.0
        %4198 = vmatprep.subr.mxu0 0.0
        %4199 = vmatpush1.msra.mxu0 0.0
        %4200 = vmatprep.subr.mxu0 0.0
        %4201 = vmatpush1.msra.mxu0 0.0
        %4202 = vmatprep.subr.mxu0 0.0
        %4203 = vmatpush1.msra.mxu0 0.0
        %4204 = vmatprep.subr.mxu0 0.0
        %4205 = vmatpush1.msra.mxu0 0.0
        %4206 = vmatprep.subr.mxu0 0.0
        %4207 = vmatpush1.msra.mxu0 0.0
        %4208 = vmatprep.subr.mxu0 0.0
        %4209 = vmatpush1.msra.mxu0 0.0
        %4210 = vmatprep.subr.mxu0 0.0
        %4211 = vmatpush1.msra.mxu0 0.0
        %4212 = vmatprep.subr.mxu0 0.0
        %4213 = vmatpush1.msra.mxu0 0.0
        %4214 = vmatprep.subr.mxu0 0.0
        %4215 = vmatpush1.msra.mxu0 0.0
        %4216 = vmatprep.subr.mxu0 0.0
        %4217 = vmatpush1.msra.mxu0 0.0
        %4218 = vmatprep.subr.mxu0 0.0
        %4219 = vmatpush1.msra.mxu0 0.0
        %4220 = vmatprep.subr.mxu0 0.0
        %4221 = vmatpush1.msra.mxu0 0.0
        %4222 = vmatprep.subr.mxu0 0.0
        %4223 = vmatpush1.msra.mxu0 0.0
        %4224 = vmatprep.subr.mxu0 0.0
        %4225 = vmatpush1.msra.mxu0 0.0
        %4226 = vmatprep.subr.mxu0 0.0
        %4227 = vmatpush1.msra.mxu0 0.0
        %4228 = vmatprep.subr.mxu0 0.0
        %4229 = vmatpush1.msra.mxu0 0.0
        %4230 = vmatprep.subr.mxu0 0.0
        %4231 = vmatpush1.msra.mxu0 0.0
        %4232 = vmatprep.subr.mxu0 0.0
        %4233 = vmatpush1.msra.mxu0 0.0
        %4234 = vmatprep.subr.mxu0 0.0
        %4235 = vmatpush1.msra.mxu0 0.0
        %4236 = vmatprep.subr.mxu0 0.0
        %4237 = vmatpush1.msra.mxu0 0.0
        %4238 = vmatprep.subr.mxu0 0.0
        %4239 = vmatpush1.msra.mxu0 0.0
        %4240 = vmatprep.subr.mxu0 0.0
        %4241 = vmatpush1.msra.mxu0 0.0
        %4242 = vmatprep.subr.mxu0 0.0
        %4243 = vmatpush1.msra.mxu0 0.0
        %4244 = vmatprep.subr.mxu0 0.0
        %4245 = vmatpush1.msra.mxu0 0.0
        %4246 = vmatprep.subr.mxu0 0.0
        %4247 = vmatpush1.msra.mxu0 0.0
        %4248 = vmatprep.mubr.f32.mxu0 0.0
        %4249 = vmatmul.mubr.f32.gmra.mrb[0].mxu0 %v4182
        %v4250 = vpop.f32.mrb[0].mxu0
        %v4251 = vadd.f32 %v401, %v4250
        %v4252 = vpop.f32.mrb[0].mxu0
        %v4253 = vadd.f32 %v405, %v4252
        %4254 = vdwg.mxu0
        %s4255 = scalar_lea.vmem [#allocation2], 192
        %4256 = vst [vmem:[%s4255] sm:$0xff] %v4253
        %v4257 = vmul.f32 %v4251, %v4251
        %4258 = vmatprep.subr.mxu0 0.0
        %4259 = vmatpush1.msra.mxu0 %v376
        %4260 = vmatprep.subr.mxu0 0.0
        %4261 = vmatpush1.msra.mxu0 %v377
        %4262 = vmatprep.subr.mxu0 0.0
        %4263 = vmatpush1.msra.mxu0 %v378
        %4264 = vmatprep.subr.mxu0 0.0
        %4265 = vmatpush1.msra.mxu0 %v379
        %4266 = vmatprep.subr.mxu0 0.0
        %4267 = vmatpush1.msra.mxu0 %v380
        %4268 = vmatprep.subr.mxu0 0.0
        %4269 = vmatpush1.msra.mxu0 %v381
        %4270 = vmatprep.subr.mxu0 0.0
        %4271 = vmatpush1.msra.mxu0 %v382
        %4272 = vmatprep.subr.mxu0 0.0
        %4273 = vmatpush1.msra.mxu0 %v383
        %4274 = vmatprep.subr.mxu0 0.0
        %4275 = vmatpush1.msra.mxu0 %v384
        %4276 = vmatprep.subr.mxu0 0.0
        %4277 = vmatpush1.msra.mxu0 %v385
        %4278 = vmatprep.subr.mxu0 0.0
        %4279 = vmatpush1.msra.mxu0 %v386
        %4280 = vmatprep.subr.mxu0 0.0
        %4281 = vmatpush1.msra.mxu0 %v387
        %4282 = vmatprep.subr.mxu0 0.0
        %4283 = vmatpush1.msra.mxu0 %v388
        %4284 = vmatprep.subr.mxu0 0.0
        %4285 = vmatpush1.msra.mxu0 %v389
        %4286 = vmatprep.subr.mxu0 0.0
        %4287 = vmatpush1.msra.mxu0 %v390
        %4288 = vmatprep.subr.mxu0 0.0
        %4289 = vmatpush1.msra.mxu0 %v391
        %4290 = vmatprep.subr.mxu0 0.0
        %4291 = vmatpush1.msra.mxu0 0.0
        %4292 = vmatprep.subr.mxu0 0.0
        %4293 = vmatpush1.msra.mxu0 0.0
        %4294 = vmatprep.subr.mxu0 0.0
        %4295 = vmatpush1.msra.mxu0 0.0
        %4296 = vmatprep.subr.mxu0 0.0
        %4297 = vmatpush1.msra.mxu0 0.0
        %4298 = vmatprep.subr.mxu0 0.0
        %4299 = vmatpush1.msra.mxu0 0.0
        %4300 = vmatprep.subr.mxu0 0.0
        %4301 = vmatpush1.msra.mxu0 0.0
        %4302 = vmatprep.subr.mxu0 0.0
        %4303 = vmatpush1.msra.mxu0 0.0
        %4304 = vmatprep.subr.mxu0 0.0
        %4305 = vmatpush1.msra.mxu0 0.0
        %4306 = vmatprep.subr.mxu0 0.0
        %4307 = vmatpush1.msra.mxu0 0.0
        %4308 = vmatprep.subr.mxu0 0.0
        %4309 = vmatpush1.msra.mxu0 0.0
        %4310 = vmatprep.subr.mxu0 0.0
        %4311 = vmatpush1.msra.mxu0 0.0
        %4312 = vmatprep.subr.mxu0 0.0
        %4313 = vmatpush1.msra.mxu0 0.0
        %4314 = vmatprep.subr.mxu0 0.0
        %4315 = vmatpush1.msra.mxu0 0.0
        %4316 = vmatprep.subr.mxu0 0.0
        %4317 = vmatpush1.msra.mxu0 0.0
        %4318 = vmatprep.subr.mxu0 0.0
        %4319 = vmatpush1.msra.mxu0 0.0
        %4320 = vmatprep.subr.mxu0 0.0
        %4321 = vmatpush1.msra.mxu0 0.0
        %4322 = vmatprep.mubr.f32.mxu0 0.0
        %4323 = vmatmul.mubr.f32.gmra.mrb[0].mxu0 %v4257
        %v4324 = vpop.f32.mrb[0].mxu0
        %v4325 = vadd.f32 0.0, %v4324
        %v4326 = vpop.f32.mrb[0].mxu0
        %4327 = vdwg.mxu0
        %v4328 = vsub.f32 %v559, %v4325
        %s4329 = scalar_lea.vmem [#allocation3], 192
        %4330 = vst [vmem:[%s4329] sm:$0xff] %v4328
        %s4331 = scalar_lea.vmem %s318, 200 [#allocation4]
        %v4332 = vld [vmem:[%s4331] sm:$0xff]
        %s4333 = scalar_lea.vmem [#allocation7], 800
        %v4334 = vld [vmem:[%s4333] sm:$0xff]
        %v4335 = vld [vmem:[%s4333 + $0x8] sm:$0xff]
        %v4336 = vld [vmem:[%s4333 + $0x10] sm:$0xff]
        %v4337 = vld [vmem:[%s4333 + $0x18] sm:$0xff]
        %v4339 = vsel %vm408, %v4332, 0
        %4341 = vmatprep.subr.mxu0 %v4335
        %4342 = vmatpush1.msra.mxu0 %v4334
        %4343 = vmatprep.subr.mxu0 %v4337
        %4344 = vmatpush1.msra.mxu0 %v4336
        %4345 = vmatprep.subr.mxu0 0.0
        %4346 = vmatpush1.msra.mxu0 0.0
        %4347 = vmatprep.subr.mxu0 0.0
        %4348 = vmatpush1.msra.mxu0 0.0
        %4349 = vmatprep.subr.mxu0 0.0
        %4350 = vmatpush1.msra.mxu0 0.0
        %4351 = vmatprep.subr.mxu0 0.0
        %4352 = vmatpush1.msra.mxu0 0.0
        %4353 = vmatprep.subr.mxu0 0.0
        %4354 = vmatpush1.msra.mxu0 0.0
        %4355 = vmatprep.subr.mxu0 0.0
        %4356 = vmatpush1.msra.mxu0 0.0
        %4357 = vmatprep.subr.mxu0 0.0
        %4358 = vmatpush1.msra.mxu0 0.0
        %4359 = vmatprep.subr.mxu0 0.0
        %4360 = vmatpush1.msra.mxu0 0.0
        %4361 = vmatprep.subr.mxu0 0.0
        %4362 = vmatpush1.msra.mxu0 0.0
        %4363 = vmatprep.subr.mxu0 0.0
        %4364 = vmatpush1.msra.mxu0 0.0
        %4365 = vmatprep.subr.mxu0 0.0
        %4366 = vmatpush1.msra.mxu0 0.0
        %4367 = vmatprep.subr.mxu0 0.0
        %4368 = vmatpush1.msra.mxu0 0.0
        %4369 = vmatprep.subr.mxu0 0.0
        %4370 = vmatpush1.msra.mxu0 0.0
        %4371 = vmatprep.subr.mxu0 0.0
        %4372 = vmatpush1.msra.mxu0 0.0
        %4373 = vmatprep.subr.mxu0 0.0
        %4374 = vmatpush1.msra.mxu0 0.0
        %4375 = vmatprep.subr.mxu0 0.0
        %4376 = vmatpush1.msra.mxu0 0.0
        %4377 = vmatprep.subr.mxu0 0.0
        %4378 = vmatpush1.msra.mxu0 0.0
        %4379 = vmatprep.subr.mxu0 0.0
        %4380 = vmatpush1.msra.mxu0 0.0
        %4381 = vmatprep.subr.mxu0 0.0
        %4382 = vmatpush1.msra.mxu0 0.0
        %4383 = vmatprep.subr.mxu0 0.0
        %4384 = vmatpush1.msra.mxu0 0.0
        %4385 = vmatprep.subr.mxu0 0.0
        %4386 = vmatpush1.msra.mxu0 0.0
        %4387 = vmatprep.subr.mxu0 0.0
        %4388 = vmatpush1.msra.mxu0 0.0
        %4389 = vmatprep.subr.mxu0 0.0
        %4390 = vmatpush1.msra.mxu0 0.0
        %4391 = vmatprep.subr.mxu0 0.0
        %4392 = vmatpush1.msra.mxu0 0.0
        %4393 = vmatprep.subr.mxu0 0.0
        %4394 = vmatpush1.msra.mxu0 0.0
        %4395 = vmatprep.subr.mxu0 0.0
        %4396 = vmatpush1.msra.mxu0 0.0
        %4397 = vmatprep.subr.mxu0 0.0
        %4398 = vmatpush1.msra.mxu0 0.0
        %4399 = vmatprep.subr.mxu0 0.0
        %4400 = vmatpush1.msra.mxu0 0.0
        %4401 = vmatprep.subr.mxu0 0.0
        %4402 = vmatpush1.msra.mxu0 0.0
        %4403 = vmatprep.subr.mxu0 0.0
        %4404 = vmatpush1.msra.mxu0 0.0
        %4405 = vmatprep.mubr.f32.mxu0 0.0
        %4406 = vmatmul.mubr.f32.gmra.mrb[0].mxu0 %v4339
        %v4407 = vpop.f32.mrb[0].mxu0
        %v4408 = vadd.f32 %v401, %v4407
        %v4409 = vpop.f32.mrb[0].mxu0
        %v4410 = vadd.f32 %v405, %v4409
        %4411 = vdwg.mxu0
        %s4412 = scalar_lea.vmem [#allocation2], 200
        %4413 = vst [vmem:[%s4412] sm:$0xff] %v4410
        %v4414 = vmul.f32 %v4408, %v4408
        %4415 = vmatprep.subr.mxu0 0.0
        %4416 = vmatpush1.msra.mxu0 %v376
        %4417 = vmatprep.subr.mxu0 0.0
        %4418 = vmatpush1.msra.mxu0 %v377
        %4419 = vmatprep.subr.mxu0 0.0
        %4420 = vmatpush1.msra.mxu0 %v378
        %4421 = vmatprep.subr.mxu0 0.0
        %4422 = vmatpush1.msra.mxu0 %v379
        %4423 = vmatprep.subr.mxu0 0.0
        %4424 = vmatpush1.msra.mxu0 %v380
        %4425 = vmatprep.subr.mxu0 0.0
        %4426 = vmatpush1.msra.mxu0 %v381
        %4427 = vmatprep.subr.mxu0 0.0
        %4428 = vmatpush1.msra.mxu0 %v382
        %4429 = vmatprep.subr.mxu0 0.0
        %4430 = vmatpush1.msra.mxu0 %v383
        %4431 = vmatprep.subr.mxu0 0.0
        %4432 = vmatpush1.msra.mxu0 %v384
        %4433 = vmatprep.subr.mxu0 0.0
        %4434 = vmatpush1.msra.mxu0 %v385
        %4435 = vmatprep.subr.mxu0 0.0
        %4436 = vmatpush1.msra.mxu0 %v386
        %4437 = vmatprep.subr.mxu0 0.0
        %4438 = vmatpush1.msra.mxu0 %v387
        %4439 = vmatprep.subr.mxu0 0.0
        %4440 = vmatpush1.msra.mxu0 %v388
        %4441 = vmatprep.subr.mxu0 0.0
        %4442 = vmatpush1.msra.mxu0 %v389
        %4443 = vmatprep.subr.mxu0 0.0
        %4444 = vmatpush1.msra.mxu0 %v390
        %4445 = vmatprep.subr.mxu0 0.0
        %4446 = vmatpush1.msra.mxu0 %v391
        %4447 = vmatprep.subr.mxu0 0.0
        %4448 = vmatpush1.msra.mxu0 0.0
        %4449 = vmatprep.subr.mxu0 0.0
        %4450 = vmatpush1.msra.mxu0 0.0
        %4451 = vmatprep.subr.mxu0 0.0
        %4452 = vmatpush1.msra.mxu0 0.0
        %4453 = vmatprep.subr.mxu0 0.0
        %4454 = vmatpush1.msra.mxu0 0.0
        %4455 = vmatprep.subr.mxu0 0.0
        %4456 = vmatpush1.msra.mxu0 0.0
        %4457 = vmatprep.subr.mxu0 0.0
        %4458 = vmatpush1.msra.mxu0 0.0
        %4459 = vmatprep.subr.mxu0 0.0
        %4460 = vmatpush1.msra.mxu0 0.0
        %4461 = vmatprep.subr.mxu0 0.0
        %4462 = vmatpush1.msra.mxu0 0.0
        %4463 = vmatprep.subr.mxu0 0.0
        %4464 = vmatpush1.msra.mxu0 0.0
        %4465 = vmatprep.subr.mxu0 0.0
        %4466 = vmatpush1.msra.mxu0 0.0
        %4467 = vmatprep.subr.mxu0 0.0
        %4468 = vmatpush1.msra.mxu0 0.0
        %4469 = vmatprep.subr.mxu0 0.0
        %4470 = vmatpush1.msra.mxu0 0.0
        %4471 = vmatprep.subr.mxu0 0.0
        %4472 = vmatpush1.msra.mxu0 0.0
        %4473 = vmatprep.subr.mxu0 0.0
        %4474 = vmatpush1.msra.mxu0 0.0
        %4475 = vmatprep.subr.mxu0 0.0
        %4476 = vmatpush1.msra.mxu0 0.0
        %4477 = vmatprep.subr.mxu0 0.0
        %4478 = vmatpush1.msra.mxu0 0.0
        %4479 = vmatprep.mubr.f32.mxu0 0.0
        %4480 = vmatmul.mubr.f32.gmra.mrb[0].mxu0 %v4414
        %v4481 = vpop.f32.mrb[0].mxu0
        %v4482 = vadd.f32 0.0, %v4481
        %v4483 = vpop.f32.mrb[0].mxu0
        %4484 = vdwg.mxu0
        %v4485 = vsub.f32 %v559, %v4482
        %s4486 = scalar_lea.vmem [#allocation3], 200
        %4487 = vst [vmem:[%s4486] sm:$0xff] %v4485
        %s4488 = scalar_lea.vmem %s318, 208 [#allocation4]
        %v4489 = vld [vmem:[%s4488] sm:$0xff]
        %s4490 = scalar_lea.vmem [#allocation7], 832
        %v4491 = vld [vmem:[%s4490] sm:$0xff]
        %v4492 = vld [vmem:[%s4490 + $0x8] sm:$0xff]
        %v4493 = vld [vmem:[%s4490 + $0x10] sm:$0xff]
        %v4494 = vld [vmem:[%s4490 + $0x18] sm:$0xff]
        %v4496 = vsel %vm408, %v4489, 0
        %4498 = vmatprep.subr.mxu0 %v4492
        %4499 = vmatpush1.msra.mxu0 %v4491
        %4500 = vmatprep.subr.mxu0 %v4494
        %4501 = vmatpush1.msra.mxu0 %v4493
        %4502 = vmatprep.subr.mxu0 0.0
        %4503 = vmatpush1.msra.mxu0 0.0
        %4504 = vmatprep.subr.mxu0 0.0
        %4505 = vmatpush1.msra.mxu0 0.0
        %4506 = vmatprep.subr.mxu0 0.0
        %4507 = vmatpush1.msra.mxu0 0.0
        %4508 = vmatprep.subr.mxu0 0.0
        %4509 = vmatpush1.msra.mxu0 0.0
        %4510 = vmatprep.subr.mxu0 0.0
        %4511 = vmatpush1.msra.mxu0 0.0
        %4512 = vmatprep.subr.mxu0 0.0
        %4513 = vmatpush1.msra.mxu0 0.0
        %4514 = vmatprep.subr.mxu0 0.0
        %4515 = vmatpush1.msra.mxu0 0.0
        %4516 = vmatprep.subr.mxu0 0.0
        %4517 = vmatpush1.msra.mxu0 0.0
        %4518 = vmatprep.subr.mxu0 0.0
        %4519 = vmatpush1.msra.mxu0 0.0
        %4520 = vmatprep.subr.mxu0 0.0
        %4521 = vmatpush1.msra.mxu0 0.0
        %4522 = vmatprep.subr.mxu0 0.0
        %4523 = vmatpush1.msra.mxu0 0.0
        %4524 = vmatprep.subr.mxu0 0.0
        %4525 = vmatpush1.msra.mxu0 0.0
        %4526 = vmatprep.subr.mxu0 0.0
        %4527 = vmatpush1.msra.mxu0 0.0
        %4528 = vmatprep.subr.mxu0 0.0
        %4529 = vmatpush1.msra.mxu0 0.0
        %4530 = vmatprep.subr.mxu0 0.0
        %4531 = vmatpush1.msra.mxu0 0.0
        %4532 = vmatprep.subr.mxu0 0.0
        %4533 = vmatpush1.msra.mxu0 0.0
        %4534 = vmatprep.subr.mxu0 0.0
        %4535 = vmatpush1.msra.mxu0 0.0
        %4536 = vmatprep.subr.mxu0 0.0
        %4537 = vmatpush1.msra.mxu0 0.0
        %4538 = vmatprep.subr.mxu0 0.0
        %4539 = vmatpush1.msra.mxu0 0.0
        %4540 = vmatprep.subr.mxu0 0.0
        %4541 = vmatpush1.msra.mxu0 0.0
        %4542 = vmatprep.subr.mxu0 0.0
        %4543 = vmatpush1.msra.mxu0 0.0
        %4544 = vmatprep.subr.mxu0 0.0
        %4545 = vmatpush1.msra.mxu0 0.0
        %4546 = vmatprep.subr.mxu0 0.0
        %4547 = vmatpush1.msra.mxu0 0.0
        %4548 = vmatprep.subr.mxu0 0.0
        %4549 = vmatpush1.msra.mxu0 0.0
        %4550 = vmatprep.subr.mxu0 0.0
        %4551 = vmatpush1.msra.mxu0 0.0
        %4552 = vmatprep.subr.mxu0 0.0
        %4553 = vmatpush1.msra.mxu0 0.0
        %4554 = vmatprep.subr.mxu0 0.0
        %4555 = vmatpush1.msra.mxu0 0.0
        %4556 = vmatprep.subr.mxu0 0.0
        %4557 = vmatpush1.msra.mxu0 0.0
        %4558 = vmatprep.subr.mxu0 0.0
        %4559 = vmatpush1.msra.mxu0 0.0
        %4560 = vmatprep.subr.mxu0 0.0
        %4561 = vmatpush1.msra.mxu0 0.0
        %4562 = vmatprep.mubr.f32.mxu0 0.0
        %4563 = vmatmul.mubr.f32.gmra.mrb[0].mxu0 %v4496
        %v4564 = vpop.f32.mrb[0].mxu0
        %v4565 = vadd.f32 %v401, %v4564
        %v4566 = vpop.f32.mrb[0].mxu0
        %v4567 = vadd.f32 %v405, %v4566
        %4568 = vdwg.mxu0
        %s4569 = scalar_lea.vmem [#allocation2], 208
        %4570 = vst [vmem:[%s4569] sm:$0xff] %v4567
        %v4571 = vmul.f32 %v4565, %v4565
        %4572 = vmatprep.subr.mxu0 0.0
        %4573 = vmatpush1.msra.mxu0 %v376
        %4574 = vmatprep.subr.mxu0 0.0
        %4575 = vmatpush1.msra.mxu0 %v377
        %4576 = vmatprep.subr.mxu0 0.0
        %4577 = vmatpush1.msra.mxu0 %v378
        %4578 = vmatprep.subr.mxu0 0.0
        %4579 = vmatpush1.msra.mxu0 %v379
        %4580 = vmatprep.subr.mxu0 0.0
        %4581 = vmatpush1.msra.mxu0 %v380
        %4582 = vmatprep.subr.mxu0 0.0
        %4583 = vmatpush1.msra.mxu0 %v381
        %4584 = vmatprep.subr.mxu0 0.0
        %4585 = vmatpush1.msra.mxu0 %v382
        %4586 = vmatprep.subr.mxu0 0.0
        %4587 = vmatpush1.msra.mxu0 %v383
        %4588 = vmatprep.subr.mxu0 0.0
        %4589 = vmatpush1.msra.mxu0 %v384
        %4590 = vmatprep.subr.mxu0 0.0
        %4591 = vmatpush1.msra.mxu0 %v385
        %4592 = vmatprep.subr.mxu0 0.0
        %4593 = vmatpush1.msra.mxu0 %v386
        %4594 = vmatprep.subr.mxu0 0.0
        %4595 = vmatpush1.msra.mxu0 %v387
        %4596 = vmatprep.subr.mxu0 0.0
        %4597 = vmatpush1.msra.mxu0 %v388
        %4598 = vmatprep.subr.mxu0 0.0
        %4599 = vmatpush1.msra.mxu0 %v389
        %4600 = vmatprep.subr.mxu0 0.0
        %4601 = vmatpush1.msra.mxu0 %v390
        %4602 = vmatprep.subr.mxu0 0.0
        %4603 = vmatpush1.msra.mxu0 %v391
        %4604 = vmatprep.subr.mxu0 0.0
        %4605 = vmatpush1.msra.mxu0 0.0
        %4606 = vmatprep.subr.mxu0 0.0
        %4607 = vmatpush1.msra.mxu0 0.0
        %4608 = vmatprep.subr.mxu0 0.0
        %4609 = vmatpush1.msra.mxu0 0.0
        %4610 = vmatprep.subr.mxu0 0.0
        %4611 = vmatpush1.msra.mxu0 0.0
        %4612 = vmatprep.subr.mxu0 0.0
        %4613 = vmatpush1.msra.mxu0 0.0
        %4614 = vmatprep.subr.mxu0 0.0
        %4615 = vmatpush1.msra.mxu0 0.0
        %4616 = vmatprep.subr.mxu0 0.0
        %4617 = vmatpush1.msra.mxu0 0.0
        %4618 = vmatprep.subr.mxu0 0.0
        %4619 = vmatpush1.msra.mxu0 0.0
        %4620 = vmatprep.subr.mxu0 0.0
        %4621 = vmatpush1.msra.mxu0 0.0
        %4622 = vmatprep.subr.mxu0 0.0
        %4623 = vmatpush1.msra.mxu0 0.0
        %4624 = vmatprep.subr.mxu0 0.0
        %4625 = vmatpush1.msra.mxu0 0.0
        %4626 = vmatprep.subr.mxu0 0.0
        %4627 = vmatpush1.msra.mxu0 0.0
        %4628 = vmatprep.subr.mxu0 0.0
        %4629 = vmatpush1.msra.mxu0 0.0
        %4630 = vmatprep.subr.mxu0 0.0
        %4631 = vmatpush1.msra.mxu0 0.0
        %4632 = vmatprep.subr.mxu0 0.0
        %4633 = vmatpush1.msra.mxu0 0.0
        %4634 = vmatprep.subr.mxu0 0.0
        %4635 = vmatpush1.msra.mxu0 0.0
        %4636 = vmatprep.mubr.f32.mxu0 0.0
        %4637 = vmatmul.mubr.f32.gmra.mrb[0].mxu0 %v4571
        %v4638 = vpop.f32.mrb[0].mxu0
        %v4639 = vadd.f32 0.0, %v4638
        %v4640 = vpop.f32.mrb[0].mxu0
        %4641 = vdwg.mxu0
        %v4642 = vsub.f32 %v559, %v4639
        %s4643 = scalar_lea.vmem [#allocation3], 208
        %4644 = vst [vmem:[%s4643] sm:$0xff] %v4642
        %s4645 = scalar_lea.vmem %s318, 216 [#allocation4]
        %v4646 = vld [vmem:[%s4645] sm:$0xff]
        %s4647 = scalar_lea.vmem [#allocation7], 864
        %v4648 = vld [vmem:[%s4647] sm:$0xff]
        %v4649 = vld [vmem:[%s4647 + $0x8] sm:$0xff]
        %v4650 = vld [vmem:[%s4647 + $0x10] sm:$0xff]
        %v4651 = vld [vmem:[%s4647 + $0x18] sm:$0xff]
        %v4653 = vsel %vm408, %v4646, 0
        %4655 = vmatprep.subr.mxu0 %v4649
        %4656 = vmatpush1.msra.mxu0 %v4648
        %4657 = vmatprep.subr.mxu0 %v4651
        %4658 = vmatpush1.msra.mxu0 %v4650
        %4659 = vmatprep.subr.mxu0 0.0
        %4660 = vmatpush1.msra.mxu0 0.0
        %4661 = vmatprep.subr.mxu0 0.0
        %4662 = vmatpush1.msra.mxu0 0.0
        %4663 = vmatprep.subr.mxu0 0.0
        %4664 = vmatpush1.msra.mxu0 0.0
        %4665 = vmatprep.subr.mxu0 0.0
        %4666 = vmatpush1.msra.mxu0 0.0
        %4667 = vmatprep.subr.mxu0 0.0
        %4668 = vmatpush1.msra.mxu0 0.0
        %4669 = vmatprep.subr.mxu0 0.0
        %4670 = vmatpush1.msra.mxu0 0.0
        %4671 = vmatprep.subr.mxu0 0.0
        %4672 = vmatpush1.msra.mxu0 0.0
        %4673 = vmatprep.subr.mxu0 0.0
        %4674 = vmatpush1.msra.mxu0 0.0
        %4675 = vmatprep.subr.mxu0 0.0
        %4676 = vmatpush1.msra.mxu0 0.0
        %4677 = vmatprep.subr.mxu0 0.0
        %4678 = vmatpush1.msra.mxu0 0.0
        %4679 = vmatprep.subr.mxu0 0.0
        %4680 = vmatpush1.msra.mxu0 0.0
        %4681 = vmatprep.subr.mxu0 0.0
        %4682 = vmatpush1.msra.mxu0 0.0
        %4683 = vmatprep.subr.mxu0 0.0
        %4684 = vmatpush1.msra.mxu0 0.0
        %4685 = vmatprep.subr.mxu0 0.0
        %4686 = vmatpush1.msra.mxu0 0.0
        %4687 = vmatprep.subr.mxu0 0.0
        %4688 = vmatpush1.msra.mxu0 0.0
        %4689 = vmatprep.subr.mxu0 0.0
        %4690 = vmatpush1.msra.mxu0 0.0
        %4691 = vmatprep.subr.mxu0 0.0
        %4692 = vmatpush1.msra.mxu0 0.0
        %4693 = vmatprep.subr.mxu0 0.0
        %4694 = vmatpush1.msra.mxu0 0.0
        %4695 = vmatprep.subr.mxu0 0.0
        %4696 = vmatpush1.msra.mxu0 0.0
        %4697 = vmatprep.subr.mxu0 0.0
        %4698 = vmatpush1.msra.mxu0 0.0
        %4699 = vmatprep.subr.mxu0 0.0
        %4700 = vmatpush1.msra.mxu0 0.0
        %4701 = vmatprep.subr.mxu0 0.0
        %4702 = vmatpush1.msra.mxu0 0.0
        %4703 = vmatprep.subr.mxu0 0.0
        %4704 = vmatpush1.msra.mxu0 0.0
        %4705 = vmatprep.subr.mxu0 0.0
        %4706 = vmatpush1.msra.mxu0 0.0
        %4707 = vmatprep.subr.mxu0 0.0
        %4708 = vmatpush1.msra.mxu0 0.0
        %4709 = vmatprep.subr.mxu0 0.0
        %4710 = vmatpush1.msra.mxu0 0.0
        %4711 = vmatprep.subr.mxu0 0.0
        %4712 = vmatpush1.msra.mxu0 0.0
        %4713 = vmatprep.subr.mxu0 0.0
        %4714 = vmatpush1.msra.mxu0 0.0
        %4715 = vmatprep.subr.mxu0 0.0
        %4716 = vmatpush1.msra.mxu0 0.0
        %4717 = vmatprep.subr.mxu0 0.0
        %4718 = vmatpush1.msra.mxu0 0.0
        %4719 = vmatprep.mubr.f32.mxu0 0.0
        %4720 = vmatmul.mubr.f32.gmra.mrb[0].mxu0 %v4653
        %v4721 = vpop.f32.mrb[0].mxu0
        %v4722 = vadd.f32 %v401, %v4721
        %v4723 = vpop.f32.mrb[0].mxu0
        %v4724 = vadd.f32 %v405, %v4723
        %4725 = vdwg.mxu0
        %s4726 = scalar_lea.vmem [#allocation2], 216
        %4727 = vst [vmem:[%s4726] sm:$0xff] %v4724
        %v4728 = vmul.f32 %v4722, %v4722
        %4729 = vmatprep.subr.mxu0 0.0
        %4730 = vmatpush1.msra.mxu0 %v376
        %4731 = vmatprep.subr.mxu0 0.0
        %4732 = vmatpush1.msra.mxu0 %v377
        %4733 = vmatprep.subr.mxu0 0.0
        %4734 = vmatpush1.msra.mxu0 %v378
        %4735 = vmatprep.subr.mxu0 0.0
        %4736 = vmatpush1.msra.mxu0 %v379
        %4737 = vmatprep.subr.mxu0 0.0
        %4738 = vmatpush1.msra.mxu0 %v380
        %4739 = vmatprep.subr.mxu0 0.0
        %4740 = vmatpush1.msra.mxu0 %v381
        %4741 = vmatprep.subr.mxu0 0.0
        %4742 = vmatpush1.msra.mxu0 %v382
        %4743 = vmatprep.subr.mxu0 0.0
        %4744 = vmatpush1.msra.mxu0 %v383
        %4745 = vmatprep.subr.mxu0 0.0
        %4746 = vmatpush1.msra.mxu0 %v384
        %4747 = vmatprep.subr.mxu0 0.0
        %4748 = vmatpush1.msra.mxu0 %v385
        %4749 = vmatprep.subr.mxu0 0.0
        %4750 = vmatpush1.msra.mxu0 %v386
        %4751 = vmatprep.subr.mxu0 0.0
        %4752 = vmatpush1.msra.mxu0 %v387
        %4753 = vmatprep.subr.mxu0 0.0
        %4754 = vmatpush1.msra.mxu0 %v388
        %4755 = vmatprep.subr.mxu0 0.0
        %4756 = vmatpush1.msra.mxu0 %v389
        %4757 = vmatprep.subr.mxu0 0.0
        %4758 = vmatpush1.msra.mxu0 %v390
        %4759 = vmatprep.subr.mxu0 0.0
        %4760 = vmatpush1.msra.mxu0 %v391
        %4761 = vmatprep.subr.mxu0 0.0
        %4762 = vmatpush1.msra.mxu0 0.0
        %4763 = vmatprep.subr.mxu0 0.0
        %4764 = vmatpush1.msra.mxu0 0.0
        %4765 = vmatprep.subr.mxu0 0.0
        %4766 = vmatpush1.msra.mxu0 0.0
        %4767 = vmatprep.subr.mxu0 0.0
        %4768 = vmatpush1.msra.mxu0 0.0
        %4769 = vmatprep.subr.mxu0 0.0
        %4770 = vmatpush1.msra.mxu0 0.0
        %4771 = vmatprep.subr.mxu0 0.0
        %4772 = vmatpush1.msra.mxu0 0.0
        %4773 = vmatprep.subr.mxu0 0.0
        %4774 = vmatpush1.msra.mxu0 0.0
        %4775 = vmatprep.subr.mxu0 0.0
        %4776 = vmatpush1.msra.mxu0 0.0
        %4777 = vmatprep.subr.mxu0 0.0
        %4778 = vmatpush1.msra.mxu0 0.0
        %4779 = vmatprep.subr.mxu0 0.0
        %4780 = vmatpush1.msra.mxu0 0.0
        %4781 = vmatprep.subr.mxu0 0.0
        %4782 = vmatpush1.msra.mxu0 0.0
        %4783 = vmatprep.subr.mxu0 0.0
        %4784 = vmatpush1.msra.mxu0 0.0
        %4785 = vmatprep.subr.mxu0 0.0
        %4786 = vmatpush1.msra.mxu0 0.0
        %4787 = vmatprep.subr.mxu0 0.0
        %4788 = vmatpush1.msra.mxu0 0.0
        %4789 = vmatprep.subr.mxu0 0.0
        %4790 = vmatpush1.msra.mxu0 0.0
        %4791 = vmatprep.subr.mxu0 0.0
        %4792 = vmatpush1.msra.mxu0 0.0
        %4793 = vmatprep.mubr.f32.mxu0 0.0
        %4794 = vmatmul.mubr.f32.gmra.mrb[0].mxu0 %v4728
        %v4795 = vpop.f32.mrb[0].mxu0
        %v4796 = vadd.f32 0.0, %v4795
        %v4797 = vpop.f32.mrb[0].mxu0
        %4798 = vdwg.mxu0
        %v4799 = vsub.f32 %v559, %v4796
        %s4800 = scalar_lea.vmem [#allocation3], 216
        %4801 = vst [vmem:[%s4800] sm:$0xff] %v4799
        %s4802 = scalar_lea.vmem %s318, 224 [#allocation4]
        %v4803 = vld [vmem:[%s4802] sm:$0xff]
        %s4804 = scalar_lea.vmem [#allocation7], 896
        %v4805 = vld [vmem:[%s4804] sm:$0xff]
        %v4806 = vld [vmem:[%s4804 + $0x8] sm:$0xff]
        %v4807 = vld [vmem:[%s4804 + $0x10] sm:$0xff]
        %v4808 = vld [vmem:[%s4804 + $0x18] sm:$0xff]
        %v4810 = vsel %vm408, %v4803, 0
        %4812 = vmatprep.subr.mxu0 %v4806
        %4813 = vmatpush1.msra.mxu0 %v4805
        %4814 = vmatprep.subr.mxu0 %v4808
        %4815 = vmatpush1.msra.mxu0 %v4807
        %4816 = vmatprep.subr.mxu0 0.0
        %4817 = vmatpush1.msra.mxu0 0.0
        %4818 = vmatprep.subr.mxu0 0.0
        %4819 = vmatpush1.msra.mxu0 0.0
        %4820 = vmatprep.subr.mxu0 0.0
        %4821 = vmatpush1.msra.mxu0 0.0
        %4822 = vmatprep.subr.mxu0 0.0
        %4823 = vmatpush1.msra.mxu0 0.0
        %4824 = vmatprep.subr.mxu0 0.0
        %4825 = vmatpush1.msra.mxu0 0.0
        %4826 = vmatprep.subr.mxu0 0.0
        %4827 = vmatpush1.msra.mxu0 0.0
        %4828 = vmatprep.subr.mxu0 0.0
        %4829 = vmatpush1.msra.mxu0 0.0
        %4830 = vmatprep.subr.mxu0 0.0
        %4831 = vmatpush1.msra.mxu0 0.0
        %4832 = vmatprep.subr.mxu0 0.0
        %4833 = vmatpush1.msra.mxu0 0.0
        %4834 = vmatprep.subr.mxu0 0.0
        %4835 = vmatpush1.msra.mxu0 0.0
        %4836 = vmatprep.subr.mxu0 0.0
        %4837 = vmatpush1.msra.mxu0 0.0
        %4838 = vmatprep.subr.mxu0 0.0
        %4839 = vmatpush1.msra.mxu0 0.0
        %4840 = vmatprep.subr.mxu0 0.0
        %4841 = vmatpush1.msra.mxu0 0.0
        %4842 = vmatprep.subr.mxu0 0.0
        %4843 = vmatpush1.msra.mxu0 0.0
        %4844 = vmatprep.subr.mxu0 0.0
        %4845 = vmatpush1.msra.mxu0 0.0
        %4846 = vmatprep.subr.mxu0 0.0
        %4847 = vmatpush1.msra.mxu0 0.0
        %4848 = vmatprep.subr.mxu0 0.0
        %4849 = vmatpush1.msra.mxu0 0.0
        %4850 = vmatprep.subr.mxu0 0.0
        %4851 = vmatpush1.msra.mxu0 0.0
        %4852 = vmatprep.subr.mxu0 0.0
        %4853 = vmatpush1.msra.mxu0 0.0
        %4854 = vmatprep.subr.mxu0 0.0
        %4855 = vmatpush1.msra.mxu0 0.0
        %4856 = vmatprep.subr.mxu0 0.0
        %4857 = vmatpush1.msra.mxu0 0.0
        %4858 = vmatprep.subr.mxu0 0.0
        %4859 = vmatpush1.msra.mxu0 0.0
        %4860 = vmatprep.subr.mxu0 0.0
        %4861 = vmatpush1.msra.mxu0 0.0
        %4862 = vmatprep.subr.mxu0 0.0
        %4863 = vmatpush1.msra.mxu0 0.0
        %4864 = vmatprep.subr.mxu0 0.0
        %4865 = vmatpush1.msra.mxu0 0.0
        %4866 = vmatprep.subr.mxu0 0.0
        %4867 = vmatpush1.msra.mxu0 0.0
        %4868 = vmatprep.subr.mxu0 0.0
        %4869 = vmatpush1.msra.mxu0 0.0
        %4870 = vmatprep.subr.mxu0 0.0
        %4871 = vmatpush1.msra.mxu0 0.0
        %4872 = vmatprep.subr.mxu0 0.0
        %4873 = vmatpush1.msra.mxu0 0.0
        %4874 = vmatprep.subr.mxu0 0.0
        %4875 = vmatpush1.msra.mxu0 0.0
        %4876 = vmatprep.mubr.f32.mxu0 0.0
        %4877 = vmatmul.mubr.f32.gmra.mrb[0].mxu0 %v4810
        %v4878 = vpop.f32.mrb[0].mxu0
        %v4879 = vadd.f32 %v401, %v4878
        %v4880 = vpop.f32.mrb[0].mxu0
        %v4881 = vadd.f32 %v405, %v4880
        %4882 = vdwg.mxu0
        %s4883 = scalar_lea.vmem [#allocation2], 224
        %4884 = vst [vmem:[%s4883] sm:$0xff] %v4881
        %v4885 = vmul.f32 %v4879, %v4879
        %4886 = vmatprep.subr.mxu0 0.0
        %4887 = vmatpush1.msra.mxu0 %v376
        %4888 = vmatprep.subr.mxu0 0.0
        %4889 = vmatpush1.msra.mxu0 %v377
        %4890 = vmatprep.subr.mxu0 0.0
        %4891 = vmatpush1.msra.mxu0 %v378
        %4892 = vmatprep.subr.mxu0 0.0
        %4893 = vmatpush1.msra.mxu0 %v379
        %4894 = vmatprep.subr.mxu0 0.0
        %4895 = vmatpush1.msra.mxu0 %v380
        %4896 = vmatprep.subr.mxu0 0.0
        %4897 = vmatpush1.msra.mxu0 %v381
        %4898 = vmatprep.subr.mxu0 0.0
        %4899 = vmatpush1.msra.mxu0 %v382
        %4900 = vmatprep.subr.mxu0 0.0
        %4901 = vmatpush1.msra.mxu0 %v383
        %4902 = vmatprep.subr.mxu0 0.0
        %4903 = vmatpush1.msra.mxu0 %v384
        %4904 = vmatprep.subr.mxu0 0.0
        %4905 = vmatpush1.msra.mxu0 %v385
        %4906 = vmatprep.subr.mxu0 0.0
        %4907 = vmatpush1.msra.mxu0 %v386
        %4908 = vmatprep.subr.mxu0 0.0
        %4909 = vmatpush1.msra.mxu0 %v387
        %4910 = vmatprep.subr.mxu0 0.0
        %4911 = vmatpush1.msra.mxu0 %v388
        %4912 = vmatprep.subr.mxu0 0.0
        %4913 = vmatpush1.msra.mxu0 %v389
        %4914 = vmatprep.subr.mxu0 0.0
        %4915 = vmatpush1.msra.mxu0 %v390
        %4916 = vmatprep.subr.mxu0 0.0
        %4917 = vmatpush1.msra.mxu0 %v391
        %4918 = vmatprep.subr.mxu0 0.0
        %4919 = vmatpush1.msra.mxu0 0.0
        %4920 = vmatprep.subr.mxu0 0.0
        %4921 = vmatpush1.msra.mxu0 0.0
        %4922 = vmatprep.subr.mxu0 0.0
        %4923 = vmatpush1.msra.mxu0 0.0
        %4924 = vmatprep.subr.mxu0 0.0
        %4925 = vmatpush1.msra.mxu0 0.0
        %4926 = vmatprep.subr.mxu0 0.0
        %4927 = vmatpush1.msra.mxu0 0.0
        %4928 = vmatprep.subr.mxu0 0.0
        %4929 = vmatpush1.msra.mxu0 0.0
        %4930 = vmatprep.subr.mxu0 0.0
        %4931 = vmatpush1.msra.mxu0 0.0
        %4932 = vmatprep.subr.mxu0 0.0
        %4933 = vmatpush1.msra.mxu0 0.0
        %4934 = vmatprep.subr.mxu0 0.0
        %4935 = vmatpush1.msra.mxu0 0.0
        %4936 = vmatprep.subr.mxu0 0.0
        %4937 = vmatpush1.msra.mxu0 0.0
        %4938 = vmatprep.subr.mxu0 0.0
        %4939 = vmatpush1.msra.mxu0 0.0
        %4940 = vmatprep.subr.mxu0 0.0
        %4941 = vmatpush1.msra.mxu0 0.0
        %4942 = vmatprep.subr.mxu0 0.0
        %4943 = vmatpush1.msra.mxu0 0.0
        %4944 = vmatprep.subr.mxu0 0.0
        %4945 = vmatpush1.msra.mxu0 0.0
        %4946 = vmatprep.subr.mxu0 0.0
        %4947 = vmatpush1.msra.mxu0 0.0
        %4948 = vmatprep.subr.mxu0 0.0
        %4949 = vmatpush1.msra.mxu0 0.0
        %4950 = vmatprep.mubr.f32.mxu0 0.0
        %4951 = vmatmul.mubr.f32.gmra.mrb[0].mxu0 %v4885
        %v4952 = vpop.f32.mrb[0].mxu0
        %v4953 = vadd.f32 0.0, %v4952
        %v4954 = vpop.f32.mrb[0].mxu0
        %4955 = vdwg.mxu0
        %v4956 = vsub.f32 %v559, %v4953
        %s4957 = scalar_lea.vmem [#allocation3], 224
        %4958 = vst [vmem:[%s4957] sm:$0xff] %v4956
        %s4959 = scalar_lea.vmem %s318, 232 [#allocation4]
        %v4960 = vld [vmem:[%s4959] sm:$0xff]
        %s4961 = scalar_lea.vmem [#allocation7], 928
        %v4962 = vld [vmem:[%s4961] sm:$0xff]
        %v4963 = vld [vmem:[%s4961 + $0x8] sm:$0xff]
        %v4964 = vld [vmem:[%s4961 + $0x10] sm:$0xff]
        %v4965 = vld [vmem:[%s4961 + $0x18] sm:$0xff]
        %v4967 = vsel %vm408, %v4960, 0
        %4969 = vmatprep.subr.mxu0 %v4963
        %4970 = vmatpush1.msra.mxu0 %v4962
        %4971 = vmatprep.subr.mxu0 %v4965
        %4972 = vmatpush1.msra.mxu0 %v4964
        %4973 = vmatprep.subr.mxu0 0.0
        %4974 = vmatpush1.msra.mxu0 0.0
        %4975 = vmatprep.subr.mxu0 0.0
        %4976 = vmatpush1.msra.mxu0 0.0
        %4977 = vmatprep.subr.mxu0 0.0
        %4978 = vmatpush1.msra.mxu0 0.0
        %4979 = vmatprep.subr.mxu0 0.0
        %4980 = vmatpush1.msra.mxu0 0.0
        %4981 = vmatprep.subr.mxu0 0.0
        %4982 = vmatpush1.msra.mxu0 0.0
        %4983 = vmatprep.subr.mxu0 0.0
        %4984 = vmatpush1.msra.mxu0 0.0
        %4985 = vmatprep.subr.mxu0 0.0
        %4986 = vmatpush1.msra.mxu0 0.0
        %4987 = vmatprep.subr.mxu0 0.0
        %4988 = vmatpush1.msra.mxu0 0.0
        %4989 = vmatprep.subr.mxu0 0.0
        %4990 = vmatpush1.msra.mxu0 0.0
        %4991 = vmatprep.subr.mxu0 0.0
        %4992 = vmatpush1.msra.mxu0 0.0
        %4993 = vmatprep.subr.mxu0 0.0
        %4994 = vmatpush1.msra.mxu0 0.0
        %4995 = vmatprep.subr.mxu0 0.0
        %4996 = vmatpush1.msra.mxu0 0.0
        %4997 = vmatprep.subr.mxu0 0.0
        %4998 = vmatpush1.msra.mxu0 0.0
        %4999 = vmatprep.subr.mxu0 0.0
        %5000 = vmatpush1.msra.mxu0 0.0
        %5001 = vmatprep.subr.mxu0 0.0
        %5002 = vmatpush1.msra.mxu0 0.0
        %5003 = vmatprep.subr.mxu0 0.0
        %5004 = vmatpush1.msra.mxu0 0.0
        %5005 = vmatprep.subr.mxu0 0.0
        %5006 = vmatpush1.msra.mxu0 0.0
        %5007 = vmatprep.subr.mxu0 0.0
        %5008 = vmatpush1.msra.mxu0 0.0
        %5009 = vmatprep.subr.mxu0 0.0
        %5010 = vmatpush1.msra.mxu0 0.0
        %5011 = vmatprep.subr.mxu0 0.0
        %5012 = vmatpush1.msra.mxu0 0.0
        %5013 = vmatprep.subr.mxu0 0.0
        %5014 = vmatpush1.msra.mxu0 0.0
        %5015 = vmatprep.subr.mxu0 0.0
        %5016 = vmatpush1.msra.mxu0 0.0
        %5017 = vmatprep.subr.mxu0 0.0
        %5018 = vmatpush1.msra.mxu0 0.0
        %5019 = vmatprep.subr.mxu0 0.0
        %5020 = vmatpush1.msra.mxu0 0.0
        %5021 = vmatprep.subr.mxu0 0.0
        %5022 = vmatpush1.msra.mxu0 0.0
        %5023 = vmatprep.subr.mxu0 0.0
        %5024 = vmatpush1.msra.mxu0 0.0
        %5025 = vmatprep.subr.mxu0 0.0
        %5026 = vmatpush1.msra.mxu0 0.0
        %5027 = vmatprep.subr.mxu0 0.0
        %5028 = vmatpush1.msra.mxu0 0.0
        %5029 = vmatprep.subr.mxu0 0.0
        %5030 = vmatpush1.msra.mxu0 0.0
        %5031 = vmatprep.subr.mxu0 0.0
        %5032 = vmatpush1.msra.mxu0 0.0
        %5033 = vmatprep.mubr.f32.mxu0 0.0
        %5034 = vmatmul.mubr.f32.gmra.mrb[0].mxu0 %v4967
        %v5035 = vpop.f32.mrb[0].mxu0
        %v5036 = vadd.f32 %v401, %v5035
        %v5037 = vpop.f32.mrb[0].mxu0
        %v5038 = vadd.f32 %v405, %v5037
        %5039 = vdwg.mxu0
        %s5040 = scalar_lea.vmem [#allocation2], 232
        %5041 = vst [vmem:[%s5040] sm:$0xff] %v5038
        %v5042 = vmul.f32 %v5036, %v5036
        %5043 = vmatprep.subr.mxu0 0.0
        %5044 = vmatpush1.msra.mxu0 %v376
        %5045 = vmatprep.subr.mxu0 0.0
        %5046 = vmatpush1.msra.mxu0 %v377
        %5047 = vmatprep.subr.mxu0 0.0
        %5048 = vmatpush1.msra.mxu0 %v378
        %5049 = vmatprep.subr.mxu0 0.0
        %5050 = vmatpush1.msra.mxu0 %v379
        %5051 = vmatprep.subr.mxu0 0.0
        %5052 = vmatpush1.msra.mxu0 %v380
        %5053 = vmatprep.subr.mxu0 0.0
        %5054 = vmatpush1.msra.mxu0 %v381
        %5055 = vmatprep.subr.mxu0 0.0
        %5056 = vmatpush1.msra.mxu0 %v382
        %5057 = vmatprep.subr.mxu0 0.0
        %5058 = vmatpush1.msra.mxu0 %v383
        %5059 = vmatprep.subr.mxu0 0.0
        %5060 = vmatpush1.msra.mxu0 %v384
        %5061 = vmatprep.subr.mxu0 0.0
        %5062 = vmatpush1.msra.mxu0 %v385
        %5063 = vmatprep.subr.mxu0 0.0
        %5064 = vmatpush1.msra.mxu0 %v386
        %5065 = vmatprep.subr.mxu0 0.0
        %5066 = vmatpush1.msra.mxu0 %v387
        %5067 = vmatprep.subr.mxu0 0.0
        %5068 = vmatpush1.msra.mxu0 %v388
        %5069 = vmatprep.subr.mxu0 0.0
        %5070 = vmatpush1.msra.mxu0 %v389
        %5071 = vmatprep.subr.mxu0 0.0
        %5072 = vmatpush1.msra.mxu0 %v390
        %5073 = vmatprep.subr.mxu0 0.0
        %5074 = vmatpush1.msra.mxu0 %v391
        %5075 = vmatprep.subr.mxu0 0.0
        %5076 = vmatpush1.msra.mxu0 0.0
        %5077 = vmatprep.subr.mxu0 0.0
        %5078 = vmatpush1.msra.mxu0 0.0
        %5079 = vmatprep.subr.mxu0 0.0
        %5080 = vmatpush1.msra.mxu0 0.0
        %5081 = vmatprep.subr.mxu0 0.0
        %5082 = vmatpush1.msra.mxu0 0.0
        %5083 = vmatprep.subr.mxu0 0.0
        %5084 = vmatpush1.msra.mxu0 0.0
        %5085 = vmatprep.subr.mxu0 0.0
        %5086 = vmatpush1.msra.mxu0 0.0
        %5087 = vmatprep.subr.mxu0 0.0
        %5088 = vmatpush1.msra.mxu0 0.0
        %5089 = vmatprep.subr.mxu0 0.0
        %5090 = vmatpush1.msra.mxu0 0.0
        %5091 = vmatprep.subr.mxu0 0.0
        %5092 = vmatpush1.msra.mxu0 0.0
        %5093 = vmatprep.subr.mxu0 0.0
        %5094 = vmatpush1.msra.mxu0 0.0
        %5095 = vmatprep.subr.mxu0 0.0
        %5096 = vmatpush1.msra.mxu0 0.0
        %5097 = vmatprep.subr.mxu0 0.0
        %5098 = vmatpush1.msra.mxu0 0.0
        %5099 = vmatprep.subr.mxu0 0.0
        %5100 = vmatpush1.msra.mxu0 0.0
        %5101 = vmatprep.subr.mxu0 0.0
        %5102 = vmatpush1.msra.mxu0 0.0
        %5103 = vmatprep.subr.mxu0 0.0
        %5104 = vmatpush1.msra.mxu0 0.0
        %5105 = vmatprep.subr.mxu0 0.0
        %5106 = vmatpush1.msra.mxu0 0.0
        %5107 = vmatprep.mubr.f32.mxu0 0.0
        %5108 = vmatmul.mubr.f32.gmra.mrb[0].mxu0 %v5042
        %v5109 = vpop.f32.mrb[0].mxu0
        %v5110 = vadd.f32 0.0, %v5109
        %v5111 = vpop.f32.mrb[0].mxu0
        %5112 = vdwg.mxu0
        %v5113 = vsub.f32 %v559, %v5110
        %s5114 = scalar_lea.vmem [#allocation3], 232
        %5115 = vst [vmem:[%s5114] sm:$0xff] %v5113
        %s5116 = scalar_lea.vmem %s318, 240 [#allocation4]
        %v5117 = vld [vmem:[%s5116] sm:$0xff]
        %s5118 = scalar_lea.vmem [#allocation7], 960
        %v5119 = vld [vmem:[%s5118] sm:$0xff]
        %v5120 = vld [vmem:[%s5118 + $0x8] sm:$0xff]
        %v5121 = vld [vmem:[%s5118 + $0x10] sm:$0xff]
        %v5122 = vld [vmem:[%s5118 + $0x18] sm:$0xff]
        %v5124 = vsel %vm408, %v5117, 0
        %5126 = vmatprep.subr.mxu0 %v5120
        %5127 = vmatpush1.msra.mxu0 %v5119
        %5128 = vmatprep.subr.mxu0 %v5122
        %5129 = vmatpush1.msra.mxu0 %v5121
        %5130 = vmatprep.subr.mxu0 0.0
        %5131 = vmatpush1.msra.mxu0 0.0
        %5132 = vmatprep.subr.mxu0 0.0
        %5133 = vmatpush1.msra.mxu0 0.0
        %5134 = vmatprep.subr.mxu0 0.0
        %5135 = vmatpush1.msra.mxu0 0.0
        %5136 = vmatprep.subr.mxu0 0.0
        %5137 = vmatpush1.msra.mxu0 0.0
        %5138 = vmatprep.subr.mxu0 0.0
        %5139 = vmatpush1.msra.mxu0 0.0
        %5140 = vmatprep.subr.mxu0 0.0
        %5141 = vmatpush1.msra.mxu0 0.0
        %5142 = vmatprep.subr.mxu0 0.0
        %5143 = vmatpush1.msra.mxu0 0.0
        %5144 = vmatprep.subr.mxu0 0.0
        %5145 = vmatpush1.msra.mxu0 0.0
        %5146 = vmatprep.subr.mxu0 0.0
        %5147 = vmatpush1.msra.mxu0 0.0
        %5148 = vmatprep.subr.mxu0 0.0
        %5149 = vmatpush1.msra.mxu0 0.0
        %5150 = vmatprep.subr.mxu0 0.0
        %5151 = vmatpush1.msra.mxu0 0.0
        %5152 = vmatprep.subr.mxu0 0.0
        %5153 = vmatpush1.msra.mxu0 0.0
        %5154 = vmatprep.subr.mxu0 0.0
        %5155 = vmatpush1.msra.mxu0 0.0
        %5156 = vmatprep.subr.mxu0 0.0
        %5157 = vmatpush1.msra.mxu0 0.0
        %5158 = vmatprep.subr.mxu0 0.0
        %5159 = vmatpush1.msra.mxu0 0.0
        %5160 = vmatprep.subr.mxu0 0.0
        %5161 = vmatpush1.msra.mxu0 0.0
        %5162 = vmatprep.subr.mxu0 0.0
        %5163 = vmatpush1.msra.mxu0 0.0
        %5164 = vmatprep.subr.mxu0 0.0
        %5165 = vmatpush1.msra.mxu0 0.0
        %5166 = vmatprep.subr.mxu0 0.0
        %5167 = vmatpush1.msra.mxu0 0.0
        %5168 = vmatprep.subr.mxu0 0.0
        %5169 = vmatpush1.msra.mxu0 0.0
        %5170 = vmatprep.subr.mxu0 0.0
        %5171 = vmatpush1.msra.mxu0 0.0
        %5172 = vmatprep.subr.mxu0 0.0
        %5173 = vmatpush1.msra.mxu0 0.0
        %5174 = vmatprep.subr.mxu0 0.0
        %5175 = vmatpush1.msra.mxu0 0.0
        %5176 = vmatprep.subr.mxu0 0.0
        %5177 = vmatpush1.msra.mxu0 0.0
        %5178 = vmatprep.subr.mxu0 0.0
        %5179 = vmatpush1.msra.mxu0 0.0
        %5180 = vmatprep.subr.mxu0 0.0
        %5181 = vmatpush1.msra.mxu0 0.0
        %5182 = vmatprep.subr.mxu0 0.0
        %5183 = vmatpush1.msra.mxu0 0.0
        %5184 = vmatprep.subr.mxu0 0.0
        %5185 = vmatpush1.msra.mxu0 0.0
        %5186 = vmatprep.subr.mxu0 0.0
        %5187 = vmatpush1.msra.mxu0 0.0
        %5188 = vmatprep.subr.mxu0 0.0
        %5189 = vmatpush1.msra.mxu0 0.0
        %5190 = vmatprep.mubr.f32.mxu0 0.0
        %5191 = vmatmul.mubr.f32.gmra.mrb[0].mxu0 %v5124
        %v5192 = vpop.f32.mrb[0].mxu0
        %v5193 = vadd.f32 %v401, %v5192
        %v5194 = vpop.f32.mrb[0].mxu0
        %v5195 = vadd.f32 %v405, %v5194
        %5196 = vdwg.mxu0
        %s5197 = scalar_lea.vmem [#allocation2], 240
        %5198 = vst [vmem:[%s5197] sm:$0xff] %v5195
        %v5199 = vmul.f32 %v5193, %v5193
        %5200 = vmatprep.subr.mxu0 0.0
        %5201 = vmatpush1.msra.mxu0 %v376
        %5202 = vmatprep.subr.mxu0 0.0
        %5203 = vmatpush1.msra.mxu0 %v377
        %5204 = vmatprep.subr.mxu0 0.0
        %5205 = vmatpush1.msra.mxu0 %v378
        %5206 = vmatprep.subr.mxu0 0.0
        %5207 = vmatpush1.msra.mxu0 %v379
        %5208 = vmatprep.subr.mxu0 0.0
        %5209 = vmatpush1.msra.mxu0 %v380
        %5210 = vmatprep.subr.mxu0 0.0
        %5211 = vmatpush1.msra.mxu0 %v381
        %5212 = vmatprep.subr.mxu0 0.0
        %5213 = vmatpush1.msra.mxu0 %v382
        %5214 = vmatprep.subr.mxu0 0.0
        %5215 = vmatpush1.msra.mxu0 %v383
        %5216 = vmatprep.subr.mxu0 0.0
        %5217 = vmatpush1.msra.mxu0 %v384
        %5218 = vmatprep.subr.mxu0 0.0
        %5219 = vmatpush1.msra.mxu0 %v385
        %5220 = vmatprep.subr.mxu0 0.0
        %5221 = vmatpush1.msra.mxu0 %v386
        %5222 = vmatprep.subr.mxu0 0.0
        %5223 = vmatpush1.msra.mxu0 %v387
        %5224 = vmatprep.subr.mxu0 0.0
        %5225 = vmatpush1.msra.mxu0 %v388
        %5226 = vmatprep.subr.mxu0 0.0
        %5227 = vmatpush1.msra.mxu0 %v389
        %5228 = vmatprep.subr.mxu0 0.0
        %5229 = vmatpush1.msra.mxu0 %v390
        %5230 = vmatprep.subr.mxu0 0.0
        %5231 = vmatpush1.msra.mxu0 %v391
        %5232 = vmatprep.subr.mxu0 0.0
        %5233 = vmatpush1.msra.mxu0 0.0
        %5234 = vmatprep.subr.mxu0 0.0
        %5235 = vmatpush1.msra.mxu0 0.0
        %5236 = vmatprep.subr.mxu0 0.0
        %5237 = vmatpush1.msra.mxu0 0.0
        %5238 = vmatprep.subr.mxu0 0.0
        %5239 = vmatpush1.msra.mxu0 0.0
        %5240 = vmatprep.subr.mxu0 0.0
        %5241 = vmatpush1.msra.mxu0 0.0
        %5242 = vmatprep.subr.mxu0 0.0
        %5243 = vmatpush1.msra.mxu0 0.0
        %5244 = vmatprep.subr.mxu0 0.0
        %5245 = vmatpush1.msra.mxu0 0.0
        %5246 = vmatprep.subr.mxu0 0.0
        %5247 = vmatpush1.msra.mxu0 0.0
        %5248 = vmatprep.subr.mxu0 0.0
        %5249 = vmatpush1.msra.mxu0 0.0
        %5250 = vmatprep.subr.mxu0 0.0
        %5251 = vmatpush1.msra.mxu0 0.0
        %5252 = vmatprep.subr.mxu0 0.0
        %5253 = vmatpush1.msra.mxu0 0.0
        %5254 = vmatprep.subr.mxu0 0.0
        %5255 = vmatpush1.msra.mxu0 0.0
        %5256 = vmatprep.subr.mxu0 0.0
        %5257 = vmatpush1.msra.mxu0 0.0
        %5258 = vmatprep.subr.mxu0 0.0
        %5259 = vmatpush1.msra.mxu0 0.0
        %5260 = vmatprep.subr.mxu0 0.0
        %5261 = vmatpush1.msra.mxu0 0.0
        %5262 = vmatprep.subr.mxu0 0.0
        %5263 = vmatpush1.msra.mxu0 0.0
        %5264 = vmatprep.mubr.f32.mxu0 0.0
        %5265 = vmatmul.mubr.f32.gmra.mrb[0].mxu0 %v5199
        %v5266 = vpop.f32.mrb[0].mxu0
        %v5267 = vadd.f32 0.0, %v5266
        %v5268 = vpop.f32.mrb[0].mxu0
        %5269 = vdwg.mxu0
        %v5270 = vsub.f32 %v559, %v5267
        %s5271 = scalar_lea.vmem [#allocation3], 240
        %5272 = vst [vmem:[%s5271] sm:$0xff] %v5270
        %s5273 = scalar_lea.vmem %s318, 248 [#allocation4]
        %v5274 = vld [vmem:[%s5273] sm:$0xff]
        %s5275 = scalar_lea.vmem [#allocation7], 992
        %v5276 = vld [vmem:[%s5275] sm:$0xff]
        %v5277 = vld [vmem:[%s5275 + $0x8] sm:$0xff]
        %v5278 = vld [vmem:[%s5275 + $0x10] sm:$0xff]
        %v5279 = vld [vmem:[%s5275 + $0x18] sm:$0xff]
        %v5281 = vsel %vm408, %v5274, 0
        %5283 = vmatprep.subr.mxu0 %v5277
        %5284 = vmatpush1.msra.mxu0 %v5276
        %5285 = vmatprep.subr.mxu0 %v5279
        %5286 = vmatpush1.msra.mxu0 %v5278
        %5287 = vmatprep.subr.mxu0 0.0
        %5288 = vmatpush1.msra.mxu0 0.0
        %5289 = vmatprep.subr.mxu0 0.0
        %5290 = vmatpush1.msra.mxu0 0.0
        %5291 = vmatprep.subr.mxu0 0.0
        %5292 = vmatpush1.msra.mxu0 0.0
        %5293 = vmatprep.subr.mxu0 0.0
        %5294 = vmatpush1.msra.mxu0 0.0
        %5295 = vmatprep.subr.mxu0 0.0
        %5296 = vmatpush1.msra.mxu0 0.0
        %5297 = vmatprep.subr.mxu0 0.0
        %5298 = vmatpush1.msra.mxu0 0.0
        %5299 = vmatprep.subr.mxu0 0.0
        %5300 = vmatpush1.msra.mxu0 0.0
        %5301 = vmatprep.subr.mxu0 0.0
        %5302 = vmatpush1.msra.mxu0 0.0
        %5303 = vmatprep.subr.mxu0 0.0
        %5304 = vmatpush1.msra.mxu0 0.0
        %5305 = vmatprep.subr.mxu0 0.0
        %5306 = vmatpush1.msra.mxu0 0.0
        %5307 = vmatprep.subr.mxu0 0.0
        %5308 = vmatpush1.msra.mxu0 0.0
        %5309 = vmatprep.subr.mxu0 0.0
        %5310 = vmatpush1.msra.mxu0 0.0
        %5311 = vmatprep.subr.mxu0 0.0
        %5312 = vmatpush1.msra.mxu0 0.0
        %5313 = vmatprep.subr.mxu0 0.0
        %5314 = vmatpush1.msra.mxu0 0.0
        %5315 = vmatprep.subr.mxu0 0.0
        %5316 = vmatpush1.msra.mxu0 0.0
        %5317 = vmatprep.subr.mxu0 0.0
        %5318 = vmatpush1.msra.mxu0 0.0
        %5319 = vmatprep.subr.mxu0 0.0
        %5320 = vmatpush1.msra.mxu0 0.0
        %5321 = vmatprep.subr.mxu0 0.0
        %5322 = vmatpush1.msra.mxu0 0.0
        %5323 = vmatprep.subr.mxu0 0.0
        %5324 = vmatpush1.msra.mxu0 0.0
        %5325 = vmatprep.subr.mxu0 0.0
        %5326 = vmatpush1.msra.mxu0 0.0
        %5327 = vmatprep.subr.mxu0 0.0
        %5328 = vmatpush1.msra.mxu0 0.0
        %5329 = vmatprep.subr.mxu0 0.0
        %5330 = vmatpush1.msra.mxu0 0.0
        %5331 = vmatprep.subr.mxu0 0.0
        %5332 = vmatpush1.msra.mxu0 0.0
        %5333 = vmatprep.subr.mxu0 0.0
        %5334 = vmatpush1.msra.mxu0 0.0
        %5335 = vmatprep.subr.mxu0 0.0
        %5336 = vmatpush1.msra.mxu0 0.0
        %5337 = vmatprep.subr.mxu0 0.0
        %5338 = vmatpush1.msra.mxu0 0.0
        %5339 = vmatprep.subr.mxu0 0.0
        %5340 = vmatpush1.msra.mxu0 0.0
        %5341 = vmatprep.subr.mxu0 0.0
        %5342 = vmatpush1.msra.mxu0 0.0
        %5343 = vmatprep.subr.mxu0 0.0
        %5344 = vmatpush1.msra.mxu0 0.0
        %5345 = vmatprep.subr.mxu0 0.0
        %5346 = vmatpush1.msra.mxu0 0.0
        %5347 = vmatprep.mubr.f32.mxu0 0.0
        %5348 = vmatmul.mubr.f32.gmra.mrb[0].mxu0 %v5281
        %v5349 = vpop.f32.mrb[0].mxu0
        %v5350 = vadd.f32 %v401, %v5349
        %v5351 = vpop.f32.mrb[0].mxu0
        %v5352 = vadd.f32 %v405, %v5351
        %5353 = vdwg.mxu0
        %s5354 = scalar_lea.vmem [#allocation2], 248
        %5355 = vst [vmem:[%s5354] sm:$0xff] %v5352
        %v5356 = vmul.f32 %v5350, %v5350
        %5357 = vmatprep.subr.mxu0 0.0
        %5358 = vmatpush1.msra.mxu0 %v376
        %5359 = vmatprep.subr.mxu0 0.0
        %5360 = vmatpush1.msra.mxu0 %v377
        %5361 = vmatprep.subr.mxu0 0.0
        %5362 = vmatpush1.msra.mxu0 %v378
        %5363 = vmatprep.subr.mxu0 0.0
        %5364 = vmatpush1.msra.mxu0 %v379
        %5365 = vmatprep.subr.mxu0 0.0
        %5366 = vmatpush1.msra.mxu0 %v380
        %5367 = vmatprep.subr.mxu0 0.0
        %5368 = vmatpush1.msra.mxu0 %v381
        %5369 = vmatprep.subr.mxu0 0.0
        %5370 = vmatpush1.msra.mxu0 %v382
        %5371 = vmatprep.subr.mxu0 0.0
        %5372 = vmatpush1.msra.mxu0 %v383
        %5373 = vmatprep.subr.mxu0 0.0
        %5374 = vmatpush1.msra.mxu0 %v384
        %5375 = vmatprep.subr.mxu0 0.0
        %5376 = vmatpush1.msra.mxu0 %v385
        %5377 = vmatprep.subr.mxu0 0.0
        %5378 = vmatpush1.msra.mxu0 %v386
        %5379 = vmatprep.subr.mxu0 0.0
        %5380 = vmatpush1.msra.mxu0 %v387
        %5381 = vmatprep.subr.mxu0 0.0
        %5382 = vmatpush1.msra.mxu0 %v388
        %5383 = vmatprep.subr.mxu0 0.0
        %5384 = vmatpush1.msra.mxu0 %v389
        %5385 = vmatprep.subr.mxu0 0.0
        %5386 = vmatpush1.msra.mxu0 %v390
        %5387 = vmatprep.subr.mxu0 0.0
        %5388 = vmatpush1.msra.mxu0 %v391
        %5389 = vmatprep.subr.mxu0 0.0
        %5390 = vmatpush1.msra.mxu0 0.0
        %5391 = vmatprep.subr.mxu0 0.0
        %5392 = vmatpush1.msra.mxu0 0.0
        %5393 = vmatprep.subr.mxu0 0.0
        %5394 = vmatpush1.msra.mxu0 0.0
        %5395 = vmatprep.subr.mxu0 0.0
        %5396 = vmatpush1.msra.mxu0 0.0
        %5397 = vmatprep.subr.mxu0 0.0
        %5398 = vmatpush1.msra.mxu0 0.0
        %5399 = vmatprep.subr.mxu0 0.0
        %5400 = vmatpush1.msra.mxu0 0.0
        %5401 = vmatprep.subr.mxu0 0.0
        %5402 = vmatpush1.msra.mxu0 0.0
        %5403 = vmatprep.subr.mxu0 0.0
        %5404 = vmatpush1.msra.mxu0 0.0
        %5405 = vmatprep.subr.mxu0 0.0
        %5406 = vmatpush1.msra.mxu0 0.0
        %5407 = vmatprep.subr.mxu0 0.0
        %5408 = vmatpush1.msra.mxu0 0.0
        %5409 = vmatprep.subr.mxu0 0.0
        %5410 = vmatpush1.msra.mxu0 0.0
        %5411 = vmatprep.subr.mxu0 0.0
        %5412 = vmatpush1.msra.mxu0 0.0
        %5413 = vmatprep.subr.mxu0 0.0
        %5414 = vmatpush1.msra.mxu0 0.0
        %5415 = vmatprep.subr.mxu0 0.0
        %5416 = vmatpush1.msra.mxu0 0.0
        %5417 = vmatprep.subr.mxu0 0.0
        %5418 = vmatpush1.msra.mxu0 0.0
        %5419 = vmatprep.subr.mxu0 0.0
        %5420 = vmatpush1.msra.mxu0 0.0
        %5421 = vmatprep.mubr.f32.mxu0 0.0
        %5422 = vmatmul.mubr.f32.gmra.mrb[0].mxu0 %v5356
        %v5423 = vpop.f32.mrb[0].mxu0
        %v5424 = vadd.f32 0.0, %v5423
        %v5425 = vpop.f32.mrb[0].mxu0
        %5426 = vdwg.mxu0
        %v5427 = vsub.f32 %v559, %v5424
        %s5428 = scalar_lea.vmem [#allocation3], 248
        %5429 = vst [vmem:[%s5428] sm:$0xff] %v5427
        %s5430 = scalar_lea.vmem %s318, 256 [#allocation4]
        %v5431 = vld [vmem:[%s5430] sm:$0xff]
        %s5432 = scalar_lea.vmem [#allocation7], 1024
        %v5433 = vld [vmem:[%s5432] sm:$0xff]
        %v5434 = vld [vmem:[%s5432 + $0x8] sm:$0xff]
        %v5435 = vld [vmem:[%s5432 + $0x10] sm:$0xff]
        %v5436 = vld [vmem:[%s5432 + $0x18] sm:$0xff]
        %v5438 = vsel %vm408, %v5431, 0
        %5440 = vmatprep.subr.mxu0 %v5434
        %5441 = vmatpush1.msra.mxu0 %v5433
        %5442 = vmatprep.subr.mxu0 %v5436
        %5443 = vmatpush1.msra.mxu0 %v5435
        %5444 = vmatprep.subr.mxu0 0.0
        %5445 = vmatpush1.msra.mxu0 0.0
        %5446 = vmatprep.subr.mxu0 0.0
        %5447 = vmatpush1.msra.mxu0 0.0
        %5448 = vmatprep.subr.mxu0 0.0
        %5449 = vmatpush1.msra.mxu0 0.0
        %5450 = vmatprep.subr.mxu0 0.0
        %5451 = vmatpush1.msra.mxu0 0.0
        %5452 = vmatprep.subr.mxu0 0.0
        %5453 = vmatpush1.msra.mxu0 0.0
        %5454 = vmatprep.subr.mxu0 0.0
        %5455 = vmatpush1.msra.mxu0 0.0
        %5456 = vmatprep.subr.mxu0 0.0
        %5457 = vmatpush1.msra.mxu0 0.0
        %5458 = vmatprep.subr.mxu0 0.0
        %5459 = vmatpush1.msra.mxu0 0.0
        %5460 = vmatprep.subr.mxu0 0.0
        %5461 = vmatpush1.msra.mxu0 0.0
        %5462 = vmatprep.subr.mxu0 0.0
        %5463 = vmatpush1.msra.mxu0 0.0
        %5464 = vmatprep.subr.mxu0 0.0
        %5465 = vmatpush1.msra.mxu0 0.0
        %5466 = vmatprep.subr.mxu0 0.0
        %5467 = vmatpush1.msra.mxu0 0.0
        %5468 = vmatprep.subr.mxu0 0.0
        %5469 = vmatpush1.msra.mxu0 0.0
        %5470 = vmatprep.subr.mxu0 0.0
        %5471 = vmatpush1.msra.mxu0 0.0
        %5472 = vmatprep.subr.mxu0 0.0
        %5473 = vmatpush1.msra.mxu0 0.0
        %5474 = vmatprep.subr.mxu0 0.0
        %5475 = vmatpush1.msra.mxu0 0.0
        %5476 = vmatprep.subr.mxu0 0.0
        %5477 = vmatpush1.msra.mxu0 0.0
        %5478 = vmatprep.subr.mxu0 0.0
        %5479 = vmatpush1.msra.mxu0 0.0
        %5480 = vmatprep.subr.mxu0 0.0
        %5481 = vmatpush1.msra.mxu0 0.0
        %5482 = vmatprep.subr.mxu0 0.0
        %5483 = vmatpush1.msra.mxu0 0.0
        %5484 = vmatprep.subr.mxu0 0.0
        %5485 = vmatpush1.msra.mxu0 0.0
        %5486 = vmatprep.subr.mxu0 0.0
        %5487 = vmatpush1.msra.mxu0 0.0
        %5488 = vmatprep.subr.mxu0 0.0
        %5489 = vmatpush1.msra.mxu0 0.0
        %5490 = vmatprep.subr.mxu0 0.0
        %5491 = vmatpush1.msra.mxu0 0.0
        %5492 = vmatprep.subr.mxu0 0.0
        %5493 = vmatpush1.msra.mxu0 0.0
        %5494 = vmatprep.subr.mxu0 0.0
        %5495 = vmatpush1.msra.mxu0 0.0
        %5496 = vmatprep.subr.mxu0 0.0
        %5497 = vmatpush1.msra.mxu0 0.0
        %5498 = vmatprep.subr.mxu0 0.0
        %5499 = vmatpush1.msra.mxu0 0.0
        %5500 = vmatprep.subr.mxu0 0.0
        %5501 = vmatpush1.msra.mxu0 0.0
        %5502 = vmatprep.subr.mxu0 0.0
        %5503 = vmatpush1.msra.mxu0 0.0
        %5504 = vmatprep.mubr.f32.mxu0 0.0
        %5505 = vmatmul.mubr.f32.gmra.mrb[0].mxu0 %v5438
        %v5506 = vpop.f32.mrb[0].mxu0
        %v5507 = vadd.f32 %v401, %v5506
        %v5508 = vpop.f32.mrb[0].mxu0
        %v5509 = vadd.f32 %v405, %v5508
        %5510 = vdwg.mxu0
        %s5511 = scalar_lea.vmem [#allocation2], 256
        %5512 = vst [vmem:[%s5511] sm:$0xff] %v5509
        %v5513 = vmul.f32 %v5507, %v5507
        %5514 = vmatprep.subr.mxu0 0.0
        %5515 = vmatpush1.msra.mxu0 %v376
        %5516 = vmatprep.subr.mxu0 0.0
        %5517 = vmatpush1.msra.mxu0 %v377
        %5518 = vmatprep.subr.mxu0 0.0
        %5519 = vmatpush1.msra.mxu0 %v378
        %5520 = vmatprep.subr.mxu0 0.0
        %5521 = vmatpush1.msra.mxu0 %v379
        %5522 = vmatprep.subr.mxu0 0.0
        %5523 = vmatpush1.msra.mxu0 %v380
        %5524 = vmatprep.subr.mxu0 0.0
        %5525 = vmatpush1.msra.mxu0 %v381
        %5526 = vmatprep.subr.mxu0 0.0
        %5527 = vmatpush1.msra.mxu0 %v382
        %5528 = vmatprep.subr.mxu0 0.0
        %5529 = vmatpush1.msra.mxu0 %v383
        %5530 = vmatprep.subr.mxu0 0.0
        %5531 = vmatpush1.msra.mxu0 %v384
        %5532 = vmatprep.subr.mxu0 0.0
        %5533 = vmatpush1.msra.mxu0 %v385
        %5534 = vmatprep.subr.mxu0 0.0
        %5535 = vmatpush1.msra.mxu0 %v386
        %5536 = vmatprep.subr.mxu0 0.0
        %5537 = vmatpush1.msra.mxu0 %v387
        %5538 = vmatprep.subr.mxu0 0.0
        %5539 = vmatpush1.msra.mxu0 %v388
        %5540 = vmatprep.subr.mxu0 0.0
        %5541 = vmatpush1.msra.mxu0 %v389
        %5542 = vmatprep.subr.mxu0 0.0
        %5543 = vmatpush1.msra.mxu0 %v390
        %5544 = vmatprep.subr.mxu0 0.0
        %5545 = vmatpush1.msra.mxu0 %v391
        %5546 = vmatprep.subr.mxu0 0.0
        %5547 = vmatpush1.msra.mxu0 0.0
        %5548 = vmatprep.subr.mxu0 0.0
        %5549 = vmatpush1.msra.mxu0 0.0
        %5550 = vmatprep.subr.mxu0 0.0
        %5551 = vmatpush1.msra.mxu0 0.0
        %5552 = vmatprep.subr.mxu0 0.0
        %5553 = vmatpush1.msra.mxu0 0.0
        %5554 = vmatprep.subr.mxu0 0.0
        %5555 = vmatpush1.msra.mxu0 0.0
        %5556 = vmatprep.subr.mxu0 0.0
        %5557 = vmatpush1.msra.mxu0 0.0
        %5558 = vmatprep.subr.mxu0 0.0
        %5559 = vmatpush1.msra.mxu0 0.0
        %5560 = vmatprep.subr.mxu0 0.0
        %5561 = vmatpush1.msra.mxu0 0.0
        %5562 = vmatprep.subr.mxu0 0.0
        %5563 = vmatpush1.msra.mxu0 0.0
        %5564 = vmatprep.subr.mxu0 0.0
        %5565 = vmatpush1.msra.mxu0 0.0
        %5566 = vmatprep.subr.mxu0 0.0
        %5567 = vmatpush1.msra.mxu0 0.0
        %5568 = vmatprep.subr.mxu0 0.0
        %5569 = vmatpush1.msra.mxu0 0.0
        %5570 = vmatprep.subr.mxu0 0.0
        %5571 = vmatpush1.msra.mxu0 0.0
        %5572 = vmatprep.subr.mxu0 0.0
        %5573 = vmatpush1.msra.mxu0 0.0
        %5574 = vmatprep.subr.mxu0 0.0
        %5575 = vmatpush1.msra.mxu0 0.0
        %5576 = vmatprep.subr.mxu0 0.0
        %5577 = vmatpush1.msra.mxu0 0.0
        %5578 = vmatprep.mubr.f32.mxu0 0.0
        %5579 = vmatmul.mubr.f32.gmra.mrb[0].mxu0 %v5513
        %v5580 = vpop.f32.mrb[0].mxu0
        %v5581 = vadd.f32 0.0, %v5580
        %v5582 = vpop.f32.mrb[0].mxu0
        %5583 = vdwg.mxu0
        %v5584 = vsub.f32 %v559, %v5581
        %s5585 = scalar_lea.vmem [#allocation3], 256
        %5586 = vst [vmem:[%s5585] sm:$0xff] %v5584
        %s5587 = scalar_lea.vmem %s318, 264 [#allocation4]
        %v5588 = vld [vmem:[%s5587] sm:$0xff]
        %s5589 = scalar_lea.vmem [#allocation7], 1056
        %v5590 = vld [vmem:[%s5589] sm:$0xff]
        %v5591 = vld [vmem:[%s5589 + $0x8] sm:$0xff]
        %v5592 = vld [vmem:[%s5589 + $0x10] sm:$0xff]
        %v5593 = vld [vmem:[%s5589 + $0x18] sm:$0xff]
        %v5595 = vsel %vm408, %v5588, 0
        %5597 = vmatprep.subr.mxu0 %v5591
        %5598 = vmatpush1.msra.mxu0 %v5590
        %5599 = vmatprep.subr.mxu0 %v5593
        %5600 = vmatpush1.msra.mxu0 %v5592
        %5601 = vmatprep.subr.mxu0 0.0
        %5602 = vmatpush1.msra.mxu0 0.0
        %5603 = vmatprep.subr.mxu0 0.0
        %5604 = vmatpush1.msra.mxu0 0.0
        %5605 = vmatprep.subr.mxu0 0.0
        %5606 = vmatpush1.msra.mxu0 0.0
        %5607 = vmatprep.subr.mxu0 0.0
        %5608 = vmatpush1.msra.mxu0 0.0
        %5609 = vmatprep.subr.mxu0 0.0
        %5610 = vmatpush1.msra.mxu0 0.0
        %5611 = vmatprep.subr.mxu0 0.0
        %5612 = vmatpush1.msra.mxu0 0.0
        %5613 = vmatprep.subr.mxu0 0.0
        %5614 = vmatpush1.msra.mxu0 0.0
        %5615 = vmatprep.subr.mxu0 0.0
        %5616 = vmatpush1.msra.mxu0 0.0
        %5617 = vmatprep.subr.mxu0 0.0
        %5618 = vmatpush1.msra.mxu0 0.0
        %5619 = vmatprep.subr.mxu0 0.0
        %5620 = vmatpush1.msra.mxu0 0.0
        %5621 = vmatprep.subr.mxu0 0.0
        %5622 = vmatpush1.msra.mxu0 0.0
        %5623 = vmatprep.subr.mxu0 0.0
        %5624 = vmatpush1.msra.mxu0 0.0
        %5625 = vmatprep.subr.mxu0 0.0
        %5626 = vmatpush1.msra.mxu0 0.0
        %5627 = vmatprep.subr.mxu0 0.0
        %5628 = vmatpush1.msra.mxu0 0.0
        %5629 = vmatprep.subr.mxu0 0.0
        %5630 = vmatpush1.msra.mxu0 0.0
        %5631 = vmatprep.subr.mxu0 0.0
        %5632 = vmatpush1.msra.mxu0 0.0
        %5633 = vmatprep.subr.mxu0 0.0
        %5634 = vmatpush1.msra.mxu0 0.0
        %5635 = vmatprep.subr.mxu0 0.0
        %5636 = vmatpush1.msra.mxu0 0.0
        %5637 = vmatprep.subr.mxu0 0.0
        %5638 = vmatpush1.msra.mxu0 0.0
        %5639 = vmatprep.subr.mxu0 0.0
        %5640 = vmatpush1.msra.mxu0 0.0
        %5641 = vmatprep.subr.mxu0 0.0
        %5642 = vmatpush1.msra.mxu0 0.0
        %5643 = vmatprep.subr.mxu0 0.0
        %5644 = vmatpush1.msra.mxu0 0.0
        %5645 = vmatprep.subr.mxu0 0.0
        %5646 = vmatpush1.msra.mxu0 0.0
        %5647 = vmatprep.subr.mxu0 0.0
        %5648 = vmatpush1.msra.mxu0 0.0
        %5649 = vmatprep.subr.mxu0 0.0
        %5650 = vmatpush1.msra.mxu0 0.0
        %5651 = vmatprep.subr.mxu0 0.0
        %5652 = vmatpush1.msra.mxu0 0.0
        %5653 = vmatprep.subr.mxu0 0.0
        %5654 = vmatpush1.msra.mxu0 0.0
        %5655 = vmatprep.subr.mxu0 0.0
        %5656 = vmatpush1.msra.mxu0 0.0
        %5657 = vmatprep.subr.mxu0 0.0
        %5658 = vmatpush1.msra.mxu0 0.0
        %5659 = vmatprep.subr.mxu0 0.0
        %5660 = vmatpush1.msra.mxu0 0.0
        %5661 = vmatprep.mubr.f32.mxu0 0.0
        %5662 = vmatmul.mubr.f32.gmra.mrb[0].mxu0 %v5595
        %v5663 = vpop.f32.mrb[0].mxu0
        %v5664 = vadd.f32 %v401, %v5663
        %v5665 = vpop.f32.mrb[0].mxu0
        %v5666 = vadd.f32 %v405, %v5665
        %5667 = vdwg.mxu0
        %s5668 = scalar_lea.vmem [#allocation2], 264
        %5669 = vst [vmem:[%s5668] sm:$0xff] %v5666
        %v5670 = vmul.f32 %v5664, %v5664
        %5671 = vmatprep.subr.mxu0 0.0
        %5672 = vmatpush1.msra.mxu0 %v376
        %5673 = vmatprep.subr.mxu0 0.0
        %5674 = vmatpush1.msra.mxu0 %v377
        %5675 = vmatprep.subr.mxu0 0.0
        %5676 = vmatpush1.msra.mxu0 %v378
        %5677 = vmatprep.subr.mxu0 0.0
        %5678 = vmatpush1.msra.mxu0 %v379
        %5679 = vmatprep.subr.mxu0 0.0
        %5680 = vmatpush1.msra.mxu0 %v380
        %5681 = vmatprep.subr.mxu0 0.0
        %5682 = vmatpush1.msra.mxu0 %v381
        %5683 = vmatprep.subr.mxu0 0.0
        %5684 = vmatpush1.msra.mxu0 %v382
        %5685 = vmatprep.subr.mxu0 0.0
        %5686 = vmatpush1.msra.mxu0 %v383
        %5687 = vmatprep.subr.mxu0 0.0
        %5688 = vmatpush1.msra.mxu0 %v384
        %5689 = vmatprep.subr.mxu0 0.0
        %5690 = vmatpush1.msra.mxu0 %v385
        %5691 = vmatprep.subr.mxu0 0.0
        %5692 = vmatpush1.msra.mxu0 %v386
        %5693 = vmatprep.subr.mxu0 0.0
        %5694 = vmatpush1.msra.mxu0 %v387
        %5695 = vmatprep.subr.mxu0 0.0
        %5696 = vmatpush1.msra.mxu0 %v388
        %5697 = vmatprep.subr.mxu0 0.0
        %5698 = vmatpush1.msra.mxu0 %v389
        %5699 = vmatprep.subr.mxu0 0.0
        %5700 = vmatpush1.msra.mxu0 %v390
        %5701 = vmatprep.subr.mxu0 0.0
        %5702 = vmatpush1.msra.mxu0 %v391
        %5703 = vmatprep.subr.mxu0 0.0
        %5704 = vmatpush1.msra.mxu0 0.0
        %5705 = vmatprep.subr.mxu0 0.0
        %5706 = vmatpush1.msra.mxu0 0.0
        %5707 = vmatprep.subr.mxu0 0.0
        %5708 = vmatpush1.msra.mxu0 0.0
        %5709 = vmatprep.subr.mxu0 0.0
        %5710 = vmatpush1.msra.mxu0 0.0
        %5711 = vmatprep.subr.mxu0 0.0
        %5712 = vmatpush1.msra.mxu0 0.0
        %5713 = vmatprep.subr.mxu0 0.0
        %5714 = vmatpush1.msra.mxu0 0.0
        %5715 = vmatprep.subr.mxu0 0.0
        %5716 = vmatpush1.msra.mxu0 0.0
        %5717 = vmatprep.subr.mxu0 0.0
        %5718 = vmatpush1.msra.mxu0 0.0
        %5719 = vmatprep.subr.mxu0 0.0
        %5720 = vmatpush1.msra.mxu0 0.0
        %5721 = vmatprep.subr.mxu0 0.0
        %5722 = vmatpush1.msra.mxu0 0.0
        %5723 = vmatprep.subr.mxu0 0.0
        %5724 = vmatpush1.msra.mxu0 0.0
        %5725 = vmatprep.subr.mxu0 0.0
        %5726 = vmatpush1.msra.mxu0 0.0
        %5727 = vmatprep.subr.mxu0 0.0
        %5728 = vmatpush1.msra.mxu0 0.0
        %5729 = vmatprep.subr.mxu0 0.0
        %5730 = vmatpush1.msra.mxu0 0.0
        %5731 = vmatprep.subr.mxu0 0.0
        %5732 = vmatpush1.msra.mxu0 0.0
        %5733 = vmatprep.subr.mxu0 0.0
        %5734 = vmatpush1.msra.mxu0 0.0
        %5735 = vmatprep.mubr.f32.mxu0 0.0
        %5736 = vmatmul.mubr.f32.gmra.mrb[0].mxu0 %v5670
        %v5737 = vpop.f32.mrb[0].mxu0
        %v5738 = vadd.f32 0.0, %v5737
        %v5739 = vpop.f32.mrb[0].mxu0
        %5740 = vdwg.mxu0
        %v5741 = vsub.f32 %v559, %v5738
        %s5742 = scalar_lea.vmem [#allocation3], 264
        %5743 = vst [vmem:[%s5742] sm:$0xff] %v5741
        %s5744 = scalar_lea.vmem %s318, 272 [#allocation4]
        %v5745 = vld [vmem:[%s5744] sm:$0xff]
        %s5746 = scalar_lea.vmem [#allocation7], 1088
        %v5747 = vld [vmem:[%s5746] sm:$0xff]
        %v5748 = vld [vmem:[%s5746 + $0x8] sm:$0xff]
        %v5749 = vld [vmem:[%s5746 + $0x10] sm:$0xff]
        %v5750 = vld [vmem:[%s5746 + $0x18] sm:$0xff]
        %v5752 = vsel %vm408, %v5745, 0
        %5754 = vmatprep.subr.mxu0 %v5748
        %5755 = vmatpush1.msra.mxu0 %v5747
        %5756 = vmatprep.subr.mxu0 %v5750
        %5757 = vmatpush1.msra.mxu0 %v5749
        %5758 = vmatprep.subr.mxu0 0.0
        %5759 = vmatpush1.msra.mxu0 0.0
        %5760 = vmatprep.subr.mxu0 0.0
        %5761 = vmatpush1.msra.mxu0 0.0
        %5762 = vmatprep.subr.mxu0 0.0
        %5763 = vmatpush1.msra.mxu0 0.0
        %5764 = vmatprep.subr.mxu0 0.0
        %5765 = vmatpush1.msra.mxu0 0.0
        %5766 = vmatprep.subr.mxu0 0.0
        %5767 = vmatpush1.msra.mxu0 0.0
        %5768 = vmatprep.subr.mxu0 0.0
        %5769 = vmatpush1.msra.mxu0 0.0
        %5770 = vmatprep.subr.mxu0 0.0
        %5771 = vmatpush1.msra.mxu0 0.0
        %5772 = vmatprep.subr.mxu0 0.0
        %5773 = vmatpush1.msra.mxu0 0.0
        %5774 = vmatprep.subr.mxu0 0.0
        %5775 = vmatpush1.msra.mxu0 0.0
        %5776 = vmatprep.subr.mxu0 0.0
        %5777 = vmatpush1.msra.mxu0 0.0
        %5778 = vmatprep.subr.mxu0 0.0
        %5779 = vmatpush1.msra.mxu0 0.0
        %5780 = vmatprep.subr.mxu0 0.0
        %5781 = vmatpush1.msra.mxu0 0.0
        %5782 = vmatprep.subr.mxu0 0.0
        %5783 = vmatpush1.msra.mxu0 0.0
        %5784 = vmatprep.subr.mxu0 0.0
        %5785 = vmatpush1.msra.mxu0 0.0
        %5786 = vmatprep.subr.mxu0 0.0
        %5787 = vmatpush1.msra.mxu0 0.0
        %5788 = vmatprep.subr.mxu0 0.0
        %5789 = vmatpush1.msra.mxu0 0.0
        %5790 = vmatprep.subr.mxu0 0.0
        %5791 = vmatpush1.msra.mxu0 0.0
        %5792 = vmatprep.subr.mxu0 0.0
        %5793 = vmatpush1.msra.mxu0 0.0
        %5794 = vmatprep.subr.mxu0 0.0
        %5795 = vmatpush1.msra.mxu0 0.0
        %5796 = vmatprep.subr.mxu0 0.0
        %5797 = vmatpush1.msra.mxu0 0.0
        %5798 = vmatprep.subr.mxu0 0.0
        %5799 = vmatpush1.msra.mxu0 0.0
        %5800 = vmatprep.subr.mxu0 0.0
        %5801 = vmatpush1.msra.mxu0 0.0
        %5802 = vmatprep.subr.mxu0 0.0
        %5803 = vmatpush1.msra.mxu0 0.0
        %5804 = vmatprep.subr.mxu0 0.0
        %5805 = vmatpush1.msra.mxu0 0.0
        %5806 = vmatprep.subr.mxu0 0.0
        %5807 = vmatpush1.msra.mxu0 0.0
        %5808 = vmatprep.subr.mxu0 0.0
        %5809 = vmatpush1.msra.mxu0 0.0
        %5810 = vmatprep.subr.mxu0 0.0
        %5811 = vmatpush1.msra.mxu0 0.0
        %5812 = vmatprep.subr.mxu0 0.0
        %5813 = vmatpush1.msra.mxu0 0.0
        %5814 = vmatprep.subr.mxu0 0.0
        %5815 = vmatpush1.msra.mxu0 0.0
        %5816 = vmatprep.subr.mxu0 0.0
        %5817 = vmatpush1.msra.mxu0 0.0
        %5818 = vmatprep.mubr.f32.mxu0 0.0
        %5819 = vmatmul.mubr.f32.gmra.mrb[0].mxu0 %v5752
        %v5820 = vpop.f32.mrb[0].mxu0
        %v5821 = vadd.f32 %v401, %v5820
        %v5822 = vpop.f32.mrb[0].mxu0
        %v5823 = vadd.f32 %v405, %v5822
        %5824 = vdwg.mxu0
        %s5825 = scalar_lea.vmem [#allocation2], 272
        %5826 = vst [vmem:[%s5825] sm:$0xff] %v5823
        %v5827 = vmul.f32 %v5821, %v5821
        %5828 = vmatprep.subr.mxu0 0.0
        %5829 = vmatpush1.msra.mxu0 %v376
        %5830 = vmatprep.subr.mxu0 0.0
        %5831 = vmatpush1.msra.mxu0 %v377
        %5832 = vmatprep.subr.mxu0 0.0
        %5833 = vmatpush1.msra.mxu0 %v378
        %5834 = vmatprep.subr.mxu0 0.0
        %5835 = vmatpush1.msra.mxu0 %v379
        %5836 = vmatprep.subr.mxu0 0.0
        %5837 = vmatpush1.msra.mxu0 %v380
        %5838 = vmatprep.subr.mxu0 0.0
        %5839 = vmatpush1.msra.mxu0 %v381
        %5840 = vmatprep.subr.mxu0 0.0
        %5841 = vmatpush1.msra.mxu0 %v382
        %5842 = vmatprep.subr.mxu0 0.0
        %5843 = vmatpush1.msra.mxu0 %v383
        %5844 = vmatprep.subr.mxu0 0.0
        %5845 = vmatpush1.msra.mxu0 %v384
        %5846 = vmatprep.subr.mxu0 0.0
        %5847 = vmatpush1.msra.mxu0 %v385
        %5848 = vmatprep.subr.mxu0 0.0
        %5849 = vmatpush1.msra.mxu0 %v386
        %5850 = vmatprep.subr.mxu0 0.0
        %5851 = vmatpush1.msra.mxu0 %v387
        %5852 = vmatprep.subr.mxu0 0.0
        %5853 = vmatpush1.msra.mxu0 %v388
        %5854 = vmatprep.subr.mxu0 0.0
        %5855 = vmatpush1.msra.mxu0 %v389
        %5856 = vmatprep.subr.mxu0 0.0
        %5857 = vmatpush1.msra.mxu0 %v390
        %5858 = vmatprep.subr.mxu0 0.0
        %5859 = vmatpush1.msra.mxu0 %v391
        %5860 = vmatprep.subr.mxu0 0.0
        %5861 = vmatpush1.msra.mxu0 0.0
        %5862 = vmatprep.subr.mxu0 0.0
        %5863 = vmatpush1.msra.mxu0 0.0
        %5864 = vmatprep.subr.mxu0 0.0
        %5865 = vmatpush1.msra.mxu0 0.0
        %5866 = vmatprep.subr.mxu0 0.0
        %5867 = vmatpush1.msra.mxu0 0.0
        %5868 = vmatprep.subr.mxu0 0.0
        %5869 = vmatpush1.msra.mxu0 0.0
        %5870 = vmatprep.subr.mxu0 0.0
        %5871 = vmatpush1.msra.mxu0 0.0
        %5872 = vmatprep.subr.mxu0 0.0
        %5873 = vmatpush1.msra.mxu0 0.0
        %5874 = vmatprep.subr.mxu0 0.0
        %5875 = vmatpush1.msra.mxu0 0.0
        %5876 = vmatprep.subr.mxu0 0.0
        %5877 = vmatpush1.msra.mxu0 0.0
        %5878 = vmatprep.subr.mxu0 0.0
        %5879 = vmatpush1.msra.mxu0 0.0
        %5880 = vmatprep.subr.mxu0 0.0
        %5881 = vmatpush1.msra.mxu0 0.0
        %5882 = vmatprep.subr.mxu0 0.0
        %5883 = vmatpush1.msra.mxu0 0.0
        %5884 = vmatprep.subr.mxu0 0.0
        %5885 = vmatpush1.msra.mxu0 0.0
        %5886 = vmatprep.subr.mxu0 0.0
        %5887 = vmatpush1.msra.mxu0 0.0
        %5888 = vmatprep.subr.mxu0 0.0
        %5889 = vmatpush1.msra.mxu0 0.0
        %5890 = vmatprep.subr.mxu0 0.0
        %5891 = vmatpush1.msra.mxu0 0.0
        %5892 = vmatprep.mubr.f32.mxu0 0.0
        %5893 = vmatmul.mubr.f32.gmra.mrb[0].mxu0 %v5827
        %v5894 = vpop.f32.mrb[0].mxu0
        %v5895 = vadd.f32 0.0, %v5894
        %v5896 = vpop.f32.mrb[0].mxu0
        %5897 = vdwg.mxu0
        %v5898 = vsub.f32 %v559, %v5895
        %s5899 = scalar_lea.vmem [#allocation3], 272
        %5900 = vst [vmem:[%s5899] sm:$0xff] %v5898
        %s5901 = scalar_lea.vmem %s318, 280 [#allocation4]
        %v5902 = vld [vmem:[%s5901] sm:$0xff]
        %s5903 = scalar_lea.vmem [#allocation7], 1120
        %v5904 = vld [vmem:[%s5903] sm:$0xff]
        %v5905 = vld [vmem:[%s5903 + $0x8] sm:$0xff]
        %v5906 = vld [vmem:[%s5903 + $0x10] sm:$0xff]
        %v5907 = vld [vmem:[%s5903 + $0x18] sm:$0xff]
        %v5909 = vsel %vm408, %v5902, 0
        %5911 = vmatprep.subr.mxu0 %v5905
        %5912 = vmatpush1.msra.mxu0 %v5904
        %5913 = vmatprep.subr.mxu0 %v5907
        %5914 = vmatpush1.msra.mxu0 %v5906
        %5915 = vmatprep.subr.mxu0 0.0
        %5916 = vmatpush1.msra.mxu0 0.0
        %5917 = vmatprep.subr.mxu0 0.0
        %5918 = vmatpush1.msra.mxu0 0.0
        %5919 = vmatprep.subr.mxu0 0.0
        %5920 = vmatpush1.msra.mxu0 0.0
        %5921 = vmatprep.subr.mxu0 0.0
        %5922 = vmatpush1.msra.mxu0 0.0
        %5923 = vmatprep.subr.mxu0 0.0
        %5924 = vmatpush1.msra.mxu0 0.0
        %5925 = vmatprep.subr.mxu0 0.0
        %5926 = vmatpush1.msra.mxu0 0.0
        %5927 = vmatprep.subr.mxu0 0.0
        %5928 = vmatpush1.msra.mxu0 0.0
        %5929 = vmatprep.subr.mxu0 0.0
        %5930 = vmatpush1.msra.mxu0 0.0
        %5931 = vmatprep.subr.mxu0 0.0
        %5932 = vmatpush1.msra.mxu0 0.0
        %5933 = vmatprep.subr.mxu0 0.0
        %5934 = vmatpush1.msra.mxu0 0.0
        %5935 = vmatprep.subr.mxu0 0.0
        %5936 = vmatpush1.msra.mxu0 0.0
        %5937 = vmatprep.subr.mxu0 0.0
        %5938 = vmatpush1.msra.mxu0 0.0
        %5939 = vmatprep.subr.mxu0 0.0
        %5940 = vmatpush1.msra.mxu0 0.0
        %5941 = vmatprep.subr.mxu0 0.0
        %5942 = vmatpush1.msra.mxu0 0.0
        %5943 = vmatprep.subr.mxu0 0.0
        %5944 = vmatpush1.msra.mxu0 0.0
        %5945 = vmatprep.subr.mxu0 0.0
        %5946 = vmatpush1.msra.mxu0 0.0
        %5947 = vmatprep.subr.mxu0 0.0
        %5948 = vmatpush1.msra.mxu0 0.0
        %5949 = vmatprep.subr.mxu0 0.0
        %5950 = vmatpush1.msra.mxu0 0.0
        %5951 = vmatprep.subr.mxu0 0.0
        %5952 = vmatpush1.msra.mxu0 0.0
        %5953 = vmatprep.subr.mxu0 0.0
        %5954 = vmatpush1.msra.mxu0 0.0
        %5955 = vmatprep.subr.mxu0 0.0
        %5956 = vmatpush1.msra.mxu0 0.0
        %5957 = vmatprep.subr.mxu0 0.0
        %5958 = vmatpush1.msra.mxu0 0.0
        %5959 = vmatprep.subr.mxu0 0.0
        %5960 = vmatpush1.msra.mxu0 0.0
        %5961 = vmatprep.subr.mxu0 0.0
        %5962 = vmatpush1.msra.mxu0 0.0
        %5963 = vmatprep.subr.mxu0 0.0
        %5964 = vmatpush1.msra.mxu0 0.0
        %5965 = vmatprep.subr.mxu0 0.0
        %5966 = vmatpush1.msra.mxu0 0.0
        %5967 = vmatprep.subr.mxu0 0.0
        %5968 = vmatpush1.msra.mxu0 0.0
        %5969 = vmatprep.subr.mxu0 0.0
        %5970 = vmatpush1.msra.mxu0 0.0
        %5971 = vmatprep.subr.mxu0 0.0
        %5972 = vmatpush1.msra.mxu0 0.0
        %5973 = vmatprep.subr.mxu0 0.0
        %5974 = vmatpush1.msra.mxu0 0.0
        %5975 = vmatprep.mubr.f32.mxu0 0.0
        %5976 = vmatmul.mubr.f32.gmra.mrb[0].mxu0 %v5909
        %v5977 = vpop.f32.mrb[0].mxu0
        %v5978 = vadd.f32 %v401, %v5977
        %v5979 = vpop.f32.mrb[0].mxu0
        %v5980 = vadd.f32 %v405, %v5979
        %5981 = vdwg.mxu0
        %s5982 = scalar_lea.vmem [#allocation2], 280
        %5983 = vst [vmem:[%s5982] sm:$0xff] %v5980
        %v5984 = vmul.f32 %v5978, %v5978
        %5985 = vmatprep.subr.mxu0 0.0
        %5986 = vmatpush1.msra.mxu0 %v376
        %5987 = vmatprep.subr.mxu0 0.0
        %5988 = vmatpush1.msra.mxu0 %v377
        %5989 = vmatprep.subr.mxu0 0.0
        %5990 = vmatpush1.msra.mxu0 %v378
        %5991 = vmatprep.subr.mxu0 0.0
        %5992 = vmatpush1.msra.mxu0 %v379
        %5993 = vmatprep.subr.mxu0 0.0
        %5994 = vmatpush1.msra.mxu0 %v380
        %5995 = vmatprep.subr.mxu0 0.0
        %5996 = vmatpush1.msra.mxu0 %v381
        %5997 = vmatprep.subr.mxu0 0.0
        %5998 = vmatpush1.msra.mxu0 %v382
        %5999 = vmatprep.subr.mxu0 0.0
        %6000 = vmatpush1.msra.mxu0 %v383
        %6001 = vmatprep.subr.mxu0 0.0
        %6002 = vmatpush1.msra.mxu0 %v384
        %6003 = vmatprep.subr.mxu0 0.0
        %6004 = vmatpush1.msra.mxu0 %v385
        %6005 = vmatprep.subr.mxu0 0.0
        %6006 = vmatpush1.msra.mxu0 %v386
        %6007 = vmatprep.subr.mxu0 0.0
        %6008 = vmatpush1.msra.mxu0 %v387
        %6009 = vmatprep.subr.mxu0 0.0
        %6010 = vmatpush1.msra.mxu0 %v388
        %6011 = vmatprep.subr.mxu0 0.0
        %6012 = vmatpush1.msra.mxu0 %v389
        %6013 = vmatprep.subr.mxu0 0.0
        %6014 = vmatpush1.msra.mxu0 %v390
        %6015 = vmatprep.subr.mxu0 0.0
        %6016 = vmatpush1.msra.mxu0 %v391
        %6017 = vmatprep.subr.mxu0 0.0
        %6018 = vmatpush1.msra.mxu0 0.0
        %6019 = vmatprep.subr.mxu0 0.0
        %6020 = vmatpush1.msra.mxu0 0.0
        %6021 = vmatprep.subr.mxu0 0.0
        %6022 = vmatpush1.msra.mxu0 0.0
        %6023 = vmatprep.subr.mxu0 0.0
        %6024 = vmatpush1.msra.mxu0 0.0
        %6025 = vmatprep.subr.mxu0 0.0
        %6026 = vmatpush1.msra.mxu0 0.0
        %6027 = vmatprep.subr.mxu0 0.0
        %6028 = vmatpush1.msra.mxu0 0.0
        %6029 = vmatprep.subr.mxu0 0.0
        %6030 = vmatpush1.msra.mxu0 0.0
        %6031 = vmatprep.subr.mxu0 0.0
        %6032 = vmatpush1.msra.mxu0 0.0
        %6033 = vmatprep.subr.mxu0 0.0
        %6034 = vmatpush1.msra.mxu0 0.0
        %6035 = vmatprep.subr.mxu0 0.0
        %6036 = vmatpush1.msra.mxu0 0.0
        %6037 = vmatprep.subr.mxu0 0.0
        %6038 = vmatpush1.msra.mxu0 0.0
        %6039 = vmatprep.subr.mxu0 0.0
        %6040 = vmatpush1.msra.mxu0 0.0
        %6041 = vmatprep.subr.mxu0 0.0
        %6042 = vmatpush1.msra.mxu0 0.0
        %6043 = vmatprep.subr.mxu0 0.0
        %6044 = vmatpush1.msra.mxu0 0.0
        %6045 = vmatprep.subr.mxu0 0.0
        %6046 = vmatpush1.msra.mxu0 0.0
        %6047 = vmatprep.subr.mxu0 0.0
        %6048 = vmatpush1.msra.mxu0 0.0
        %6049 = vmatprep.mubr.f32.mxu0 0.0
        %6050 = vmatmul.mubr.f32.gmra.mrb[0].mxu0 %v5984
        %v6051 = vpop.f32.mrb[0].mxu0
        %v6052 = vadd.f32 0.0, %v6051
        %v6053 = vpop.f32.mrb[0].mxu0
        %6054 = vdwg.mxu0
        %v6055 = vsub.f32 %v559, %v6052
        %s6056 = scalar_lea.vmem [#allocation3], 280
        %6057 = vst [vmem:[%s6056] sm:$0xff] %v6055
        %v6058 = vld [vmem:[#allocation3] sm:$0xff]
        %v6059 = vld [vmem:[#allocation3 + $0x8] sm:$0xff]
        %v6060 = vld [vmem:[#allocation3 + $0x10] sm:$0xff]
        %v6061 = vld [vmem:[#allocation3 + $0x18] sm:$0xff]
        %v6062 = vld [vmem:[#allocation3 + $0x20] sm:$0xff]
        %v6063 = vld [vmem:[#allocation3 + $0x28] sm:$0xff]
        %v6064 = vld [vmem:[#allocation3 + $0x30] sm:$0xff]
        %v6065 = vld [vmem:[#allocation3 + $0x38] sm:$0xff]
        %v6066 = vld [vmem:[#allocation3 + $0x40] sm:$0xff]
        %v6067 = vld [vmem:[#allocation3 + $0x48] sm:$0xff]
        %v6068 = vld [vmem:[#allocation3 + $0x50] sm:$0xff]
        %v6069 = vld [vmem:[#allocation3 + $0x58] sm:$0xff]
        %v6070 = vld [vmem:[#allocation3 + $0x60] sm:$0xff]
        %v6071 = vld [vmem:[#allocation3 + $0x68] sm:$0xff]
        %v6072 = vld [vmem:[#allocation3 + $0x70] sm:$0xff]
        %v6073 = vld [vmem:[#allocation3 + $0x78] sm:$0xff]
        %v6074 = vld [vmem:[#allocation3 + $0x80] sm:$0xff]
        %v6075 = vld [vmem:[#allocation3 + $0x88] sm:$0xff]
        %v6076 = vld [vmem:[#allocation3 + $0x90] sm:$0xff]
        %v6077 = vld [vmem:[#allocation3 + $0x98] sm:$0xff]
        %v6078 = vld [vmem:[#allocation3 + $0xa0] sm:$0xff]
        %v6079 = vld [vmem:[#allocation3 + $0xa8] sm:$0xff]
        %v6080 = vld [vmem:[#allocation3 + $0xb0] sm:$0xff]
        %v6081 = vld [vmem:[#allocation3 + $0xb8] sm:$0xff]
        %v6082 = vld [vmem:[#allocation3 + $0xc0] sm:$0xff]
        %v6083 = vld [vmem:[#allocation3 + $0xc8] sm:$0xff]
        %v6084 = vld [vmem:[#allocation3 + $0xd0] sm:$0xff]
        %v6085 = vld [vmem:[#allocation3 + $0xd8] sm:$0xff]
        %v6086 = vld [vmem:[#allocation3 + $0xe0] sm:$0xff]
        %v6087 = vld [vmem:[#allocation3 + $0xe8] sm:$0xff]
        %v6088 = vld [vmem:[#allocation3 + $0xf0] sm:$0xff]
        %v6089 = vld [vmem:[#allocation3 + $0xf8] sm:$0xff]
        %v6090 = vld [vmem:[#allocation3 + $0x100] sm:$0xff]
        %v6091 = vld [vmem:[#allocation3 + $0x108] sm:$0xff]
        %v6092 = vld [vmem:[#allocation3 + $0x110] sm:$0xff]
        %v6093 = vld [vmem:[#allocation3 + $0x118] sm:$0xff]
        %v6094 = vmax.f32 %v6058, %v6062
        %v6095 = vmax.f32 %v6059, %v6063
        %v6096 = vmax.f32 %v6060, %v6064
        %v6097 = vmax.f32 %v6061, %v6065
        %v6098 = vmax.f32 %v6094, %v6066
        %v6099 = vmax.f32 %v6095, %v6067
        %v6100 = vmax.f32 %v6096, %v6068
        %v6101 = vmax.f32 %v6097, %v6069
        %v6102 = vmax.f32 %v6098, %v6070
        %v6103 = vmax.f32 %v6099, %v6071
        %v6104 = vmax.f32 %v6100, %v6072
        %v6105 = vmax.f32 %v6101, %v6073
        %v6106 = vmax.f32 %v6102, %v6074
        %v6107 = vmax.f32 %v6103, %v6075
        %v6108 = vmax.f32 %v6104, %v6076
        %v6109 = vmax.f32 %v6105, %v6077
        %v6110 = vmax.f32 %v6106, %v6078
        %v6111 = vmax.f32 %v6107, %v6079
        %v6112 = vmax.f32 %v6108, %v6080
        %v6113 = vmax.f32 %v6109, %v6081
        %v6114 = vmax.f32 %v6110, %v6082
        %v6115 = vmax.f32 %v6111, %v6083
        %v6116 = vmax.f32 %v6112, %v6084
        %v6117 = vmax.f32 %v6113, %v6085
        %v6118 = vmax.f32 %v6114, %v6086
        %v6119 = vmax.f32 %v6115, %v6087
        %v6120 = vmax.f32 %v6116, %v6088
        %v6121 = vmax.f32 %v6117, %v6089
        %v6122 = vmax.f32 %v6118, %v6090
        %v6123 = vmax.f32 %v6119, %v6091
        %v6124 = vmax.f32 %v6120, %v6092
        %v6125 = vmax.f32 %v6121, %v6093
        %v6126 = vmax.f32 %v6122, %v6123
        %v6127 = vmax.f32 %v6124, %v6125
        %v6128 = vmax.f32 %v6126, %v6127
        %v6129 = vsub.f32 %v6058, %v6128
        %v6130 = vsub.f32 %v6059, %v6128
        %v6131 = vsub.f32 %v6060, %v6128
        %v6132 = vsub.f32 %v6061, %v6128
        %v6133 = vsub.f32 %v6062, %v6128
        %v6134 = vsub.f32 %v6063, %v6128
        %v6135 = vsub.f32 %v6064, %v6128
        %v6136 = vsub.f32 %v6065, %v6128
        %v6137 = vsub.f32 %v6066, %v6128
        %v6138 = vsub.f32 %v6067, %v6128
        %v6139 = vsub.f32 %v6068, %v6128
        %v6140 = vsub.f32 %v6069, %v6128
        %v6141 = vsub.f32 %v6070, %v6128
        %v6142 = vsub.f32 %v6071, %v6128
        %v6143 = vsub.f32 %v6072, %v6128
        %v6144 = vsub.f32 %v6073, %v6128
        %v6145 = vsub.f32 %v6074, %v6128
        %v6146 = vsub.f32 %v6075, %v6128
        %v6147 = vsub.f32 %v6076, %v6128
        %v6148 = vsub.f32 %v6077, %v6128
        %v6149 = vsub.f32 %v6078, %v6128
        %v6150 = vsub.f32 %v6079, %v6128
        %v6151 = vsub.f32 %v6080, %v6128
        %v6152 = vsub.f32 %v6081, %v6128
        %v6153 = vsub.f32 %v6082, %v6128
        %v6154 = vsub.f32 %v6083, %v6128
        %v6155 = vsub.f32 %v6084, %v6128
        %v6156 = vsub.f32 %v6085, %v6128
        %v6157 = vsub.f32 %v6086, %v6128
        %v6158 = vsub.f32 %v6087, %v6128
        %v6159 = vsub.f32 %v6088, %v6128
        %v6160 = vsub.f32 %v6089, %v6128
        %v6161 = vsub.f32 %v6090, %v6128
        %v6162 = vsub.f32 %v6091, %v6128
        %v6163 = vsub.f32 %v6092, %v6128
        %v6164 = vsub.f32 %v6093, %v6128
        %v6165 = vmul.f32 %v6129, 1.442695
        %v6166 = vpow.pop %v6165
        %v6167 = vmul.f32 %v6130, 1.442695
        %v6168 = vpow.pop %v6167
        %v6169 = vmul.f32 %v6131, 1.442695
        %v6170 = vpow.pop %v6169
        %v6171 = vmul.f32 %v6132, 1.442695
        %v6172 = vpow.pop %v6171
        %v6173 = vmul.f32 %v6133, 1.442695
        %v6174 = vpow.pop %v6173
        %v6175 = vmul.f32 %v6134, 1.442695
        %v6176 = vpow.pop %v6175
        %v6177 = vmul.f32 %v6135, 1.442695
        %v6178 = vpow.pop %v6177
        %v6179 = vmul.f32 %v6136, 1.442695
        %v6180 = vpow.pop %v6179
        %v6181 = vmul.f32 %v6137, 1.442695
        %v6182 = vpow.pop %v6181
        %v6183 = vmul.f32 %v6138, 1.442695
        %v6184 = vpow.pop %v6183
        %v6185 = vmul.f32 %v6139, 1.442695
        %v6186 = vpow.pop %v6185
        %v6187 = vmul.f32 %v6140, 1.442695
        %v6188 = vpow.pop %v6187
        %v6189 = vmul.f32 %v6141, 1.442695
        %v6190 = vpow.pop %v6189
        %v6191 = vmul.f32 %v6142, 1.442695
        %v6192 = vpow.pop %v6191
        %v6193 = vmul.f32 %v6143, 1.442695
        %v6194 = vpow.pop %v6193
        %v6195 = vmul.f32 %v6144, 1.442695
        %v6196 = vpow.pop %v6195
        %v6197 = vmul.f32 %v6145, 1.442695
        %v6198 = vpow.pop %v6197
        %v6199 = vmul.f32 %v6146, 1.442695
        %v6200 = vpow.pop %v6199
        %v6201 = vmul.f32 %v6147, 1.442695
        %v6202 = vpow.pop %v6201
        %v6203 = vmul.f32 %v6148, 1.442695
        %v6204 = vpow.pop %v6203
        %v6205 = vmul.f32 %v6149, 1.442695
        %v6206 = vpow.pop %v6205
        %v6207 = vmul.f32 %v6150, 1.442695
        %v6208 = vpow.pop %v6207
        %v6209 = vmul.f32 %v6151, 1.442695
        %v6210 = vpow.pop %v6209
        %v6211 = vmul.f32 %v6152, 1.442695
        %v6212 = vpow.pop %v6211
        %v6213 = vmul.f32 %v6153, 1.442695
        %v6214 = vpow.pop %v6213
        %v6215 = vmul.f32 %v6154, 1.442695
        %v6216 = vpow.pop %v6215
        %v6217 = vmul.f32 %v6155, 1.442695
        %v6218 = vpow.pop %v6217
        %v6219 = vmul.f32 %v6156, 1.442695
        %v6220 = vpow.pop %v6219
        %v6221 = vmul.f32 %v6157, 1.442695
        %v6222 = vpow.pop %v6221
        %v6223 = vmul.f32 %v6158, 1.442695
        %v6224 = vpow.pop %v6223
        %v6225 = vmul.f32 %v6159, 1.442695
        %v6226 = vpow.pop %v6225
        %v6227 = vmul.f32 %v6160, 1.442695
        %v6228 = vpow.pop %v6227
        %v6229 = vmul.f32 %v6161, 1.442695
        %v6230 = vpow.pop %v6229
        %v6231 = vmul.f32 %v6162, 1.442695
        %v6232 = vpow.pop %v6231
        %v6233 = vmul.f32 %v6163, 1.442695
        %v6234 = vpow.pop %v6233
        %v6235 = vmul.f32 %v6164, 1.442695
        %v6236 = vpow.pop %v6235
        %v6237 = vadd.f32 %v6166, %v6168
        %v6238 = vadd.f32 %v6237, %v6170
        %v6239 = vadd.f32 %v6238, %v6172
        %v6240 = vadd.f32 %v6239, %v6174
        %v6241 = vadd.f32 %v6240, %v6176
        %v6242 = vadd.f32 %v6241, %v6178
        %v6243 = vadd.f32 %v6242, %v6180
        %v6244 = vadd.f32 %v6243, %v6182
        %v6245 = vadd.f32 %v6244, %v6184
        %v6246 = vadd.f32 %v6245, %v6186
        %v6247 = vadd.f32 %v6246, %v6188
        %v6248 = vadd.f32 %v6247, %v6190
        %v6249 = vadd.f32 %v6248, %v6192
        %v6250 = vadd.f32 %v6249, %v6194
        %v6251 = vadd.f32 %v6250, %v6196
        %v6252 = vadd.f32 %v6251, %v6198
        %v6253 = vadd.f32 %v6252, %v6200
        %v6254 = vadd.f32 %v6253, %v6202
        %v6255 = vadd.f32 %v6254, %v6204
        %v6256 = vadd.f32 %v6255, %v6206
        %v6257 = vadd.f32 %v6256, %v6208
        %v6258 = vadd.f32 %v6257, %v6210
        %v6259 = vadd.f32 %v6258, %v6212
        %v6260 = vadd.f32 %v6259, %v6214
        %v6261 = vadd.f32 %v6260, %v6216
        %v6262 = vadd.f32 %v6261, %v6218
        %v6263 = vadd.f32 %v6262, %v6220
        %v6264 = vadd.f32 %v6263, %v6222
        %v6265 = vadd.f32 %v6264, %v6224
        %v6266 = vadd.f32 %v6265, %v6226
        %v6267 = vadd.f32 %v6266, %v6228
        %v6268 = vadd.f32 %v6267, %v6230
        %v6269 = vadd.f32 %v6268, %v6232
        %v6270 = vadd.f32 %v6269, %v6234
        %v6271 = vadd.f32 %v6270, %v6236
        %v6272 = vrcp.pop %v6271
        %v6273 = vmul.f32 %v6166, %v6272
        %v6274 = vmul.f32 %v6168, %v6272
        %v6275 = vmul.f32 %v6170, %v6272
        %v6276 = vmul.f32 %v6172, %v6272
        %v6277 = vmul.f32 %v6174, %v6272
        %v6278 = vmul.f32 %v6176, %v6272
        %v6279 = vmul.f32 %v6178, %v6272
        %v6280 = vmul.f32 %v6180, %v6272
        %v6281 = vmul.f32 %v6182, %v6272
        %v6282 = vmul.f32 %v6184, %v6272
        %v6283 = vmul.f32 %v6186, %v6272
        %v6284 = vmul.f32 %v6188, %v6272
        %v6285 = vmul.f32 %v6190, %v6272
        %v6286 = vmul.f32 %v6192, %v6272
        %v6287 = vmul.f32 %v6194, %v6272
        %v6288 = vmul.f32 %v6196, %v6272
        %v6289 = vmul.f32 %v6198, %v6272
        %v6290 = vmul.f32 %v6200, %v6272
        %v6291 = vmul.f32 %v6202, %v6272
        %v6292 = vmul.f32 %v6204, %v6272
        %v6293 = vmul.f32 %v6206, %v6272
        %v6294 = vmul.f32 %v6208, %v6272
        %v6295 = vmul.f32 %v6210, %v6272
        %v6296 = vmul.f32 %v6212, %v6272
        %v6297 = vmul.f32 %v6214, %v6272
        %v6298 = vmul.f32 %v6216, %v6272
        %v6299 = vmul.f32 %v6218, %v6272
        %v6300 = vmul.f32 %v6220, %v6272
        %v6301 = vmul.f32 %v6222, %v6272
        %v6302 = vmul.f32 %v6224, %v6272
        %v6303 = vmul.f32 %v6226, %v6272
        %v6304 = vmul.f32 %v6228, %v6272
        %v6305 = vmul.f32 %v6230, %v6272
        %v6306 = vmul.f32 %v6232, %v6272
        %v6307 = vmul.f32 %v6234, %v6272
        %v6308 = vmul.f32 %v6236, %v6272
        %v6309 = vld [vmem:[#allocation10] sm:$0x1]
        %v6310 = vld [vmem:[#allocation2] sm:$0xff]
        %v6311 = vld [vmem:[#allocation2 + $0x8] sm:$0xff]
        %v6312 = vld [vmem:[#allocation2 + $0x10] sm:$0xff]
        %v6313 = vld [vmem:[#allocation2 + $0x18] sm:$0xff]
        %v6314 = vld [vmem:[#allocation2 + $0x20] sm:$0xff]
        %v6315 = vld [vmem:[#allocation2 + $0x28] sm:$0xff]
        %v6316 = vld [vmem:[#allocation2 + $0x30] sm:$0xff]
        %v6317 = vld [vmem:[#allocation2 + $0x38] sm:$0xff]
        %v6318 = vld [vmem:[#allocation2 + $0x40] sm:$0xff]
        %v6319 = vld [vmem:[#allocation2 + $0x48] sm:$0xff]
        %v6320 = vld [vmem:[#allocation2 + $0x50] sm:$0xff]
        %v6321 = vld [vmem:[#allocation2 + $0x58] sm:$0xff]
        %v6322 = vld [vmem:[#allocation2 + $0x60] sm:$0xff]
        %v6323 = vld [vmem:[#allocation2 + $0x68] sm:$0xff]
        %v6324 = vld [vmem:[#allocation2 + $0x70] sm:$0xff]
        %v6325 = vld [vmem:[#allocation2 + $0x78] sm:$0xff]
        %v6326 = vld [vmem:[#allocation2 + $0x80] sm:$0xff]
        %v6327 = vld [vmem:[#allocation2 + $0x88] sm:$0xff]
        %v6328 = vld [vmem:[#allocation2 + $0x90] sm:$0xff]
        %v6329 = vld [vmem:[#allocation2 + $0x98] sm:$0xff]
        %v6330 = vld [vmem:[#allocation2 + $0xa0] sm:$0xff]
        %v6331 = vld [vmem:[#allocation2 + $0xa8] sm:$0xff]
        %v6332 = vld [vmem:[#allocation2 + $0xb0] sm:$0xff]
        %v6333 = vld [vmem:[#allocation2 + $0xb8] sm:$0xff]
        %v6334 = vld [vmem:[#allocation2 + $0xc0] sm:$0xff]
        %v6335 = vld [vmem:[#allocation2 + $0xc8] sm:$0xff]
        %v6336 = vld [vmem:[#allocation2 + $0xd0] sm:$0xff]
        %v6337 = vld [vmem:[#allocation2 + $0xd8] sm:$0xff]
        %v6338 = vld [vmem:[#allocation2 + $0xe0] sm:$0xff]
        %v6339 = vld [vmem:[#allocation2 + $0xe8] sm:$0xff]
        %v6340 = vld [vmem:[#allocation2 + $0xf0] sm:$0xff]
        %v6341 = vld [vmem:[#allocation2 + $0xf8] sm:$0xff]
        %v6342 = vld [vmem:[#allocation2 + $0x100] sm:$0xff]
        %v6343 = vld [vmem:[#allocation2 + $0x108] sm:$0xff]
        %v6344 = vld [vmem:[#allocation2 + $0x110] sm:$0xff]
        %v6345 = vld [vmem:[#allocation2 + $0x118] sm:$0xff]
        %v6346 = vmul.f32 %v6273, %v6310
        %v6347 = vmul.f32 %v6274, %v6311
        %v6348 = vmul.f32 %v6275, %v6312
        %v6349 = vmul.f32 %v6276, %v6313
        %v6350 = vmul.f32 %v6277, %v6314
        %v6351 = vmul.f32 %v6278, %v6315
        %v6352 = vmul.f32 %v6279, %v6316
        %v6353 = vmul.f32 %v6280, %v6317
        %v6354 = vmul.f32 %v6281, %v6318
        %v6355 = vmul.f32 %v6282, %v6319
        %v6356 = vmul.f32 %v6283, %v6320
        %v6357 = vmul.f32 %v6284, %v6321
        %v6358 = vmul.f32 %v6285, %v6322
        %v6359 = vmul.f32 %v6286, %v6323
        %v6360 = vmul.f32 %v6287, %v6324
        %v6361 = vmul.f32 %v6288, %v6325
        %v6362 = vmul.f32 %v6289, %v6326
        %v6363 = vmul.f32 %v6290, %v6327
        %v6364 = vmul.f32 %v6291, %v6328
        %v6365 = vmul.f32 %v6292, %v6329
        %v6366 = vmul.f32 %v6293, %v6330
        %v6367 = vmul.f32 %v6294, %v6331
        %v6368 = vmul.f32 %v6295, %v6332
        %v6369 = vmul.f32 %v6296, %v6333
        %v6370 = vmul.f32 %v6297, %v6334
        %v6371 = vmul.f32 %v6298, %v6335
        %v6372 = vmul.f32 %v6299, %v6336
        %v6373 = vmul.f32 %v6300, %v6337
        %v6374 = vmul.f32 %v6301, %v6338
        %v6375 = vmul.f32 %v6302, %v6339
        %v6376 = vmul.f32 %v6303, %v6340
        %v6377 = vmul.f32 %v6304, %v6341
        %v6378 = vmul.f32 %v6305, %v6342
        %v6379 = vmul.f32 %v6306, %v6343
        %v6380 = vmul.f32 %v6307, %v6344
        %v6381 = vmul.f32 %v6308, %v6345
        %v6382 = vadd.f32 %v6346, %v6347
        %v6383 = vadd.f32 %v6382, %v6348
        %v6384 = vadd.f32 %v6383, %v6349
        %v6385 = vadd.f32 %v6384, %v6350
        %v6386 = vadd.f32 %v6385, %v6351
        %v6387 = vadd.f32 %v6386, %v6352
        %v6388 = vadd.f32 %v6387, %v6353
        %v6389 = vadd.f32 %v6388, %v6354
        %v6390 = vadd.f32 %v6389, %v6355
        %v6391 = vadd.f32 %v6390, %v6356
        %v6392 = vadd.f32 %v6391, %v6357
        %v6393 = vadd.f32 %v6392, %v6358
        %v6394 = vadd.f32 %v6393, %v6359
        %v6395 = vadd.f32 %v6394, %v6360
        %v6396 = vadd.f32 %v6395, %v6361
        %v6397 = vadd.f32 %v6396, %v6362
        %v6398 = vadd.f32 %v6397, %v6363
        %v6399 = vadd.f32 %v6398, %v6364
        %v6400 = vadd.f32 %v6399, %v6365
        %v6401 = vadd.f32 %v6400, %v6366
        %v6402 = vadd.f32 %v6401, %v6367
        %v6403 = vadd.f32 %v6402, %v6368
        %v6404 = vadd.f32 %v6403, %v6369
        %v6405 = vadd.f32 %v6404, %v6370
        %v6406 = vadd.f32 %v6405, %v6371
        %v6407 = vadd.f32 %v6406, %v6372
        %v6408 = vadd.f32 %v6407, %v6373
        %v6409 = vadd.f32 %v6408, %v6374
        %v6410 = vadd.f32 %v6409, %v6375
        %v6411 = vadd.f32 %v6410, %v6376
        %v6412 = vadd.f32 %v6411, %v6377
        %v6413 = vadd.f32 %v6412, %v6378
        %v6414 = vadd.f32 %v6413, %v6379
        %v6415 = vadd.f32 %v6414, %v6380
        %v6416 = vadd.f32 %v6415, %v6381
        %v6418 = vlaneseq
        %v6419 = vshrl.u32 %v6418, 7
        %v6420 = vsub.s32 0, %v6419
        %v6421 = vrot.slane %v6309, %v6420
        %v6423 = vadd.f32 %v6421, %v6416
        %6424 = vst [vmem:[%s366] sm:$0xff] %v6423
        %v6425 = vlaneseq
        %v6426 = vshrl.u32 %v6425, 7
        %s6427 = smul.u32 %s31, 8
        %v6428 = vstv %s6427
        %v6429 = vadd.s32 %v6426, %v6428
        %vm6430 = vcmp.lt.s32.totalorder %v6429, 18
        %v6431 = vsel %vm6430, 1, 0
        %v6432 = vcvt.s32.f32 %v6431
        %v6433 = vmul.f32 %v6423, %v6432
        %v6434 = vrot.slane %v6433, 4
        %v6435 = vadd.f32 %v6433, %v6434
        %v6436 = vrot.slane %v6435, 2
        %v6437 = vadd.f32 %v6435, %v6436
        %v6438 = vrot.slane %v6437, 1
        %v6439 = vadd.f32 %v6437, %v6438
        %v6440 = vmul.f32 %v6433, %v6423
        %v6441 = vrot.slane %v6440, 4
        %v6442 = vadd.f32 %v6440, %v6441
        %v6443 = vrot.slane %v6442, 2
        %v6444 = vadd.f32 %v6442, %v6443
        %v6445 = vrot.slane %v6444, 1
        %v6446 = vadd.f32 %v6444, %v6445
        %vm6447 = vcmask 1040384
        %v6448 = vsel %vm6447, %v6439, %v6446
        %6449 = vst [vmem:[%s373] sm:$0x3] %v6448
        %s6450 = sand.u32 %s170, 1
        %s6451 = scalar_lea.sflag [#allocation6], %s6450
        %s6452 = sand.u32 %s170, 1
        %s6453 = smul.addr %s6452, 8
        %s6454 = scalar_lea.vmem [#allocation15], %s6453
        %s6455 = sand.u32 %s196, 1
        %s6456 = scalar_lea.sflag [#allocation17], %s6455
        %s6457 = sand.u32 %s196, 1
        %s6458 = smul.addr %s6457, 2
        %s6459 = scalar_lea.vmem [#allocation16], %s6458
        // Predicated region
        $region69: #{tpu_custom_call.1} parent=43 // pred_check
          %p6460 = pneg %p180
        $region70: #{tpu_custom_call.1} parent=43 // pred_check_branch
          %6462 = sbr.rel (%p6460) target = $region72
        $region71: #{tpu_custom_call.1} parent=43 // pred_region
          %s6464 = ssub.s32 128, 128
          %6465 = vsyncadd %s6451, %s6464
          %s6466 = smul.addr %s31, 128
          %s6467 = scalar_lea.hbm %s6, %s6466
          %s6469 = sshll.u32 %s6454, 4
          %s6470 = int_to_ptr.vmem [resolvable:$true] %s6469
          %6472 = dma.vmem_to_hbm [thread:$0]  %s6470, 128, %s6467, %s6451
        $region72: #{tpu_custom_call.1} parent=43 // pred_fallthru
          _
        // Predicated region
        $region73: #{tpu_custom_call.1} parent=43 // pred_check
          %p6473 = pneg %p206
        $region74: #{tpu_custom_call.1} parent=43 // pred_check_branch
          %6475 = sbr.rel (%p6473) target = $region76
        $region75: #{tpu_custom_call.1} parent=43 // pred_region
          %s6477 = ssub.s32 32, 32
          %6478 = vsyncadd %s6456, %s6477
          %s6479 = smul.addr %s31, 32
          %s6480 = scalar_lea.hbm %s7, %s6479
          %s6482 = sshll.u32 %s6459, 4
          %s6483 = int_to_ptr.vmem [resolvable:$true] %s6482
          %6485 = dma.vmem_to_hbm [thread:$0]  %s6483, 32, %s6480, %s6456
        $region76: #{tpu_custom_call.1} parent=43 // pred_fallthru
          _
      $region44: #{tpu_custom_call.1} parent=5 // pred_fallthru
        _
      %p6486 = scmp.le.s32.totalorder 2, %s26
      // Predicated region
      $region77: #{tpu_custom_call.1} parent=5 // pred_check
        %p6487 = pneg %p6486
      $region78: #{tpu_custom_call.1} parent=5 // pred_check_branch
        %6489 = sbr.rel (%p6487) target = $region80
      $region79: #{tpu_custom_call.1} parent=5 // pred_region
        %s6490 = ssub.s32 %s26, 2
        // Predicated region
        $region81: #{tpu_custom_call.1} parent=79 // pred_check
          %p6491 = pneg %p186
        $region82: #{tpu_custom_call.1} parent=79 // pred_check_branch
          %6493 = sbr.rel (%p6491) target = $region84
        $region83: #{tpu_custom_call.1} parent=79 // pred_region
          %s6494 = sand.u32 %s171, 1
          %s6495 = scalar_lea.sflag [#allocation6], %s6494
          %s6496 = sand.u32 %s171, 1
          %s6497 = smul.addr %s6496, 8
          %s6498 = scalar_lea.vmem [#allocation15], %s6497
          %6499 = dma.done %s6495, 128
        $region84: #{tpu_custom_call.1} parent=79 // pred_fallthru
          _
        // Predicated region
        $region85: #{tpu_custom_call.1} parent=79 // pred_check
          %p6500 = pneg %p212
        $region86: #{tpu_custom_call.1} parent=79 // pred_check_branch
          %6502 = sbr.rel (%p6500) target = $region88
        $region87: #{tpu_custom_call.1} parent=79 // pred_region
          %s6503 = sand.u32 %s197, 1
          %s6504 = scalar_lea.sflag [#allocation17], %s6503
          %s6505 = sand.u32 %s197, 1
          %s6506 = smul.addr %s6505, 2
          %s6507 = scalar_lea.vmem [#allocation16], %s6506
          %6508 = dma.done %s6504, 32
        $region88: #{tpu_custom_call.1} parent=79 // pred_fallthru
          _
      $region80: #{tpu_custom_call.1} parent=5 // pred_fallthru
        _
    $region6: #{tpu_custom_call.1} parent=1 // loop_footer
      %s30 = sadd.s32 1, %s26
    $region7: #{tpu_custom_call.1} parent=1 // loop_footer_branch
      %25 = sbr.rel target = $region3
    $region8: #{tpu_custom_call.1} parent=1 // loop_exit
      _
    %6509 = vsyncpa [#allocation5], 1
    %s6510 = scalar_lea.sflag [#allocation5], 1
    %6511 = vsyncpa %s6510, 1
    %6512 = vsyncpa [#allocation8], 1
    %6513 = vsyncpa [#allocation11], 1
    %6514 = vsyncpa [#allocation14], 1
    %6515 = vsyncpa [#allocation6], 1
    %s6516 = scalar_lea.sflag [#allocation6], 1
    %6517 = vsyncpa %s6516, 1
    %6518 = vsyncpa [#allocation17], 1
    %s6519 = scalar_lea.sflag [#allocation17], 1
    %6520 = vsyncpa %s6519, 1

</llo_original>
